<compile_context>
chip_gen: v7x
topology: tpu7x:2x2x1
jax: 0.10.0
libtpu: 0.0.40
codegen_flags: <defaults>
</compile_context>

<pallas_src>
import functools
import math

import numpy as np

import jax
import jax.numpy as jnp
from jax.experimental import pallas as pl
from jax.experimental.pallas import tpu as pltpu


# --------------------------------------------------------------------------
# The single fused kernel
# --------------------------------------------------------------------------
def _feudal_kernel(cursor_ref, mask_ref, x_ref,
                   m_hx_ref, m_cx_ref, w_h_ref, w_c_ref, goals_ref, states_ref,
                   c1w_ref, c1b_ref, c2w_ref, c2b_ref, c3w_ref, c3b_ref,
                   pw_ref, pb_ref,
                   msw_ref, msb_ref, mw_ref, mb_ref, ww_ref, wb_ref,
                   hw_ref, hb_ref, phi_ref, sel_ref, nbias_ref,
                   heads_out_ref, m_hx_out_ref, m_cx_out_ref,
                   w_h_out_ref, w_c_out_ref, goals_out_ref, states_out_ref,
                   s1_ref, s2_ref, s3_ref,
                   *, batch, c, num_actions, k_dim):
    B = batch
    f32 = jnp.float32
    bf16 = jnp.bfloat16

    # ---------------- Perception: banded block-Toeplitz convolutions -------
    # Feature maps are stored as (H*B, W*C); a valid stride-1 conv is kh
    # matmuls where the kernel's W offsets are folded into a banded weight.
    def conv_layer(in_ref, w_ref, b_ref, kh, h_out):
        rows = h_out * B
        acc = jnp.dot(in_ref[0:rows, :].astype(bf16), w_ref[0],
                      preferred_element_type=f32)
        for i in range(1, kh):
            acc = acc + jnp.dot(in_ref[i * B:i * B + rows, :].astype(bf16),
                                w_ref[i], preferred_element_type=f32)
        return jnp.maximum(acc + b_ref[...], 0.0)

    s1_ref[...] = conv_layer(x_ref, c1w_ref, c1b_ref, 3, 8)    # (8B, 8*16)
    s2_ref[...] = conv_layer(s1_ref, c2w_ref, c2b_ref, 2, 7)   # (7B, 7*32)
    s3_ref[...] = conv_layer(s2_ref, c3w_ref, c3b_ref, 2, 6)   # (6B, 6*64)

    # 2304 -> 256 linear + ReLU as 6 matmuls over per-height slabs of conv3.
    zacc = jnp.dot(s3_ref[0:B, :].astype(bf16), pw_ref[0],
                   preferred_element_type=f32)
    for h in range(1, 6):
        zacc = zacc + jnp.dot(s3_ref[h * B:(h + 1) * B, :].astype(bf16),
                              pw_ref[h], preferred_element_type=f32)
    z = jnp.maximum(zacc + pb_ref[...], 0.0)                   # (B, 256)
    z_bf = z.astype(bf16)

    # ---------------- Manager: Mspace + dilated LSTM + goal ----------------
    m_state = jnp.maximum(
        jnp.dot(z_bf, msw_ref[...], preferred_element_type=f32) + msb_ref[...],
        0.0)                                                   # (B, 256)

    cur = cursor_ref[0]
    m_hx_all = m_hx_ref[...]                                   # (c, B, 256)
    h_cur = m_hx_ref[cur]                                      # (B, 256)
    c_cur = m_cx_ref[cur]
    hx_sum = jnp.sum(m_hx_all, axis=0)

    # LSTM cell (gate order i, f, g, o); input & recurrent matmuls fused.
    lstm_in = jnp.concatenate([m_state, h_cur], axis=1).astype(bf16)  # (B,512)
    gates = (jnp.dot(lstm_in, mw_ref[...], preferred_element_type=f32)
             + mb_ref[...])                                    # (B, 1024)
    Hm = 256
    ig = jax.nn.sigmoid(gates[:, 0:Hm])
    fg = jax.nn.sigmoid(gates[:, Hm:2 * Hm])
    gg = jnp.tanh(gates[:, 2 * Hm:3 * Hm])
    og = jax.nn.sigmoid(gates[:, 3 * Hm:4 * Hm])
    c_new = fg * c_cur + ig * gg
    h_new = og * jnp.tanh(c_new)

    # write back: bulk copy + overwrite the cursor slot (dynamic index)
    m_hx_out_ref[...] = m_hx_all
    m_cx_out_ref[...] = m_cx_ref[...]
    m_hx_out_ref[cur] = h_new
    m_cx_out_ref[cur] = c_new

    # goal_hat = (h_new + sum_{j != cursor} old_hx[j]) / c ; goal = F.normalize
    goal_hat = (h_new + (hx_sum - h_cur)) * (1.0 / c)
    ss = jnp.sum(goal_hat * goal_hat, axis=-1, keepdims=True)
    goal = goal_hat * jax.lax.rsqrt(jnp.maximum(ss, 1e-24))

    # ---------------- goals / states windows (mask, shift, append) ---------
    mask_b = mask_ref[...][None]                               # (1, B, 1)
    old_goals = goals_ref[1:c + 1, :, :] * mask_b              # (c, B, 256)
    gsum = goal + jnp.sum(old_goals, axis=0)                   # worker goal sum
    goals_out_ref[0:c, :, :] = old_goals
    goals_out_ref[c] = goal
    states_out_ref[0:c, :, :] = states_ref[1:c + 1, :, :]
    states_out_ref[c] = m_state

    # ---------------- Worker LSTM (hidden = 8 * 16 = 128) ------------------
    w_h = w_h_ref[...]
    w_c = w_c_ref[...]
    wlstm_in = jnp.concatenate([z, w_h], axis=1).astype(bf16)  # (B, 384)
    wgates = (jnp.dot(wlstm_in, ww_ref[...], preferred_element_type=f32)
              + wb_ref[...])                                   # (B, 512)
    Hw = num_actions * k_dim
    wi = jax.nn.sigmoid(wgates[:, 0:Hw])
    wf = jax.nn.sigmoid(wgates[:, Hw:2 * Hw])
    wg = jnp.tanh(wgates[:, 2 * Hw:3 * Hw])
    wo = jax.nn.sigmoid(wgates[:, 3 * Hw:4 * Hw])
    w_c_new = wf * w_c + wi * wg
    w_h_new = wo * jnp.tanh(w_c_new)
    w_h_out_ref[...] = w_h_new
    w_c_out_ref[...] = w_c_new

    # ---------------- critics + policy head (lane-dense (B,128) slab) ------
    heads = (jnp.dot(z_bf, hw_ref[...], preferred_element_type=f32)
             + hb_ref[...])                                    # cols 0/1 = critics, rest 0
    wtile = jnp.dot(gsum.astype(bf16), phi_ref[...],
                    preferred_element_type=f32)                # (B,128) = phi(gsum) tiled x8
    prod = w_h_new * wtile
    logits = (jnp.dot(prod, sel_ref[...], preferred_element_type=f32)
              + nbias_ref[...])                                # logits in cols 2..9, -1e30 else
    mx = jnp.max(logits, axis=-1, keepdims=True)
    ex = jnp.exp(logits - mx)                                  # exactly 0 outside cols 2..9
    pi = ex / jnp.sum(ex, axis=-1, keepdims=True)
    heads_out_ref[...] = heads + pi                            # single unmasked store


# --------------------------------------------------------------------------
# Parameter init (PyTorch-style uniform bounds; pre-packed for the kernel)
# --------------------------------------------------------------------------
def init_params(key, c):
    del c  # layer sizes do not depend on the dilation
    keys = jax.random.split(key, 24)
    it = iter(keys)

    def U(shape, fan_in):
        bound = 1.0 / math.sqrt(fan_in)
        return jax.random.uniform(next(it), shape, jnp.float32, -bound, bound)

    # Raw conv weights (Cout, Cin, kh, kw) / biases, PyTorch fan-in bounds.
    c1w, c1b = U((16, 7, 3, 3), 7 * 9), U((16,), 7 * 9)
    c2w, c2b = U((32, 16, 2, 2), 16 * 4), U((32,), 16 * 4)
    c3w, c3b = U((64, 32, 2, 2), 32 * 4), U((64,), 32 * 4)

    def banded(w, w_in, w_out):
        # (Cout,Cin,kh,kw) -> (kh, Win*Cin, Wout*Cout) banded block-Toeplitz
        # so a valid stride-1 conv becomes kh matmuls on (H*B, W*C) maps.
        w = np.asarray(w)
        cout, cin, kh, kw = w.shape
        big = np.zeros((kh, w_in * cin, w_out * cout), np.float32)
        for i in range(kh):
            for j in range(kw):
                blk = w[:, :, i, j].T                          # (Cin, Cout)
                for wo in range(w_out):
                    wi = wo + j
                    big[i, wi * cin:(wi + 1) * cin,
                        wo * cout:(wo + 1) * cout] = blk
        return jnp.asarray(big, jnp.bfloat16)

    def tiled_bias(b, w_out):
        return jnp.asarray(np.tile(np.asarray(b), w_out)[None, :], jnp.float32)

    p = {}
    p['conv1_w'], p['conv1_b'] = banded(c1w, 10, 8), tiled_bias(c1b, 8)   # (3,70,128)
    p['conv2_w'], p['conv2_b'] = banded(c2w, 8, 7), tiled_bias(c2b, 7)    # (2,128,224)
    p['conv3_w'], p['conv3_b'] = banded(c3w, 7, 6), tiled_bias(c3b, 6)    # (2,224,384)

    # 2304 -> 256 linear stored as 6 per-height (384,256) slabs (bf16).
    p['perc_w'] = U((6, 384, 256), 2304).astype(jnp.bfloat16)
    p['perc_b'] = U((1, 256), 2304)

    # Manager
    p['mspace_w'] = U((256, 256), 256).astype(jnp.bfloat16)
    p['mspace_b'] = U((1, 256), 256)
    p['mrnn_w'] = U((512, 1024), 256).astype(jnp.bfloat16)     # [x ; h] -> (i,f,g,o)
    p['mrnn_b'] = U((1, 1024), 256) + U((1, 1024), 256)        # b_ih + b_hh
    # Worker
    p['wrnn_w'] = U((384, 512), 128).astype(jnp.bfloat16)      # [z ; h] -> (i,f,g,o)
    p['wrnn_b'] = U((1, 512), 128) + U((1, 512), 128)

    # phi (256 -> 16, no bias), pre-tiled x8 along the output so that
    # (gsum @ phi_tiled)[b, a*16 + k] == phi(gsum)[b, k].
    phi = U((256, 16), 256)
    p['phi_w'] = jnp.tile(phi, (1, 8)).astype(jnp.bfloat16)

    # Lane-dense head slab: col0 = manager critic, col1 = worker critic,
    # cols 2..9 receive the policy probabilities (weights/bias zero there).
    m_cw, m_cb = U((256, 1), 256), U((1, 1), 256)
    w_cw, w_cb = U((256, 1), 256), U((1, 1), 256)
    p['heads_w'] = jnp.concatenate(
        [m_cw, w_cw, jnp.zeros((256, 126), jnp.float32)], axis=1).astype(jnp.bfloat16)
    p['heads_b'] = jnp.concatenate(
        [m_cb, w_cb, jnp.zeros((1, 126), jnp.float32)], axis=1)

    # Policy-head constants: group-sum selector landing the 8 logits in
    # columns 2..9, plus a -1e30 bias elsewhere so row-softmax is exact 0.
    sel = np.zeros((128, 128), np.float32)
    for a in range(8):
        sel[a * 16:(a + 1) * 16, 2 + a] = 1.0
    p['sel'] = jnp.asarray(sel)
    nb = np.full((1, 128), -1e30, np.float32)
    nb[0, 2:10] = 0.0
    p['negbias'] = jnp.asarray(nb)
    return p


# --------------------------------------------------------------------------
# Forward: one fused pallas_call per step (single jit)
# --------------------------------------------------------------------------
@functools.partial(jax.jit, static_argnames=("c",))
def feudal_forward(params, x, manager_hidden, worker_hidden, states, goals,
                   mask, *, c):
    B = x.shape[0]
    cursor, m_hx, m_cx = manager_hidden          # m_hx/m_cx: (c, B, 256)
    w_h, w_c = worker_hidden

    # NCHW -> (H*B, W*Cin) layout expected by the banded-conv matmuls.
    x2d = jnp.transpose(x, (2, 0, 3, 1)).reshape(10 * B, 10 * 7)

    vm = pl.BlockSpec(memory_space=pltpu.MemorySpace.VMEM)
    outs = pl.pallas_call(
        functools.partial(_feudal_kernel, batch=B, c=c, num_actions=8, k_dim=16),
        out_shape=(
            jax.ShapeDtypeStruct((B, 128), jnp.float32),        # heads slab
            jax.ShapeDtypeStruct((c, B, 256), jnp.float32),     # new m_hx
            jax.ShapeDtypeStruct((c, B, 256), jnp.float32),     # new m_cx
            jax.ShapeDtypeStruct((B, 128), jnp.float32),        # new w_h
            jax.ShapeDtypeStruct((B, 128), jnp.float32),        # new w_c
            jax.ShapeDtypeStruct((c + 1, B, 256), jnp.float32), # new goals
            jax.ShapeDtypeStruct((c + 1, B, 256), jnp.float32), # new states
        ),
        in_specs=[pl.BlockSpec(memory_space=pltpu.MemorySpace.SMEM)] + [vm] * 27,
        out_specs=(vm,) * 7,
        scratch_shapes=[pltpu.VMEM((8 * B, 128), jnp.float32),
                        pltpu.VMEM((7 * B, 224), jnp.float32),
                        pltpu.VMEM((6 * B, 384), jnp.float32)],
        compiler_params=pltpu.CompilerParams(vmem_limit_bytes=32 * 1024 * 1024),
    )(jnp.reshape(cursor, (1,)).astype(jnp.int32),
      jnp.reshape(mask, (B, 1)).astype(jnp.float32),
      x2d, m_hx, m_cx, w_h, w_c, goals, states,
      params['conv1_w'], params['conv1_b'],
      params['conv2_w'], params['conv2_b'],
      params['conv3_w'], params['conv3_b'],
      params['perc_w'], params['perc_b'],
      params['mspace_w'], params['mspace_b'],
      params['mrnn_w'], params['mrnn_b'],
      params['wrnn_w'], params['wrnn_b'],
      params['heads_w'], params['heads_b'],
      params['phi_w'], params['sel'], params['negbias'])

    (heads, m_hx_out, m_cx_out, w_h_out, w_c_out,
     goals_out, states_out) = outs

    manager_value = heads[:, 0:1]
    worker_value = heads[:, 1:2]
    worker_pi = heads[:, 2:10]

    new_cursor = (cursor + 1) % c
    manager_hidden = (new_cursor, m_hx_out, m_cx_out)
    worker_hidden = (w_h_out, w_c_out)
    return (manager_value, manager_hidden, worker_pi, worker_value,
            worker_hidden, states_out, goals_out)


# --------------------------------- main ------------------------------------
if __name__ == "__main__":
    key = jax.random.PRNGKey(0)
    c = 3          # dilation / horizon
    B = 2          # batch
    k_par, k_x, k_mh, k_mc, k_wh, k_wc, k_s, k_g = jax.random.split(key, 8)

    params = init_params(k_par, c)

    # Spatial size 10 so 64*6*6 = 2304 matches the perception Linear.
    x = jax.random.normal(k_x, (B, 7, 10, 10), jnp.float32)

    # NOTE: manager hidden is carried dilation-major as (c, B, 256)
    # (equivalent to PyTorch's (B, c, 256), just a fixed layout convention).
    manager_hidden = (jnp.array(0, jnp.int32),
                      0.1 * jax.random.normal(k_mh, (c, B, 256), jnp.float32),
                      0.1 * jax.random.normal(k_mc, (c, B, 256), jnp.float32))
    worker_hidden = (0.1 * jax.random.normal(k_wh, (B, 128), jnp.float32),
                     0.1 * jax.random.normal(k_wc, (B, 128), jnp.float32))
    # Fixed-shape (c+1, B, 256) carries replace the Python lists of the
    # reference implementation (goals[i] <-> goals_arr[i]).
    states = 0.1 * jax.random.normal(k_s, (c + 1, B, 256), jnp.float32)
    goals = 0.1 * jax.random.normal(k_g, (c + 1, B, 256), jnp.float32)
    mask = jnp.array([1.0, 0.0], jnp.float32)

    out = feudal_forward(params, x, manager_hidden, worker_hidden,
                         states, goals, mask, c=c)
    jax.tree_util.tree_map(jax.block_until_ready, out)
    print("KERNEL_OK")
</pallas_src>

<mosaic_0001>
module attributes {stable_mosaic.version = 11 : i64} {
  func.func @_feudal_kernel(%arg0: memref<1xi32, #tpu.memory_space<smem>>, %arg1: memref<2x1xf32, #tpu.memory_space<vmem>>, %arg2: memref<20x70xf32, #tpu.memory_space<vmem>>, %arg3: memref<3x2x256xf32, #tpu.memory_space<vmem>>, %arg4: memref<3x2x256xf32, #tpu.memory_space<vmem>>, %arg5: memref<2x128xf32, #tpu.memory_space<vmem>>, %arg6: memref<2x128xf32, #tpu.memory_space<vmem>>, %arg7: memref<4x2x256xf32, #tpu.memory_space<vmem>>, %arg8: memref<4x2x256xf32, #tpu.memory_space<vmem>>, %arg9: memref<3x70x128xbf16, #tpu.memory_space<vmem>>, %arg10: memref<1x128xf32, #tpu.memory_space<vmem>>, %arg11: memref<2x128x224xbf16, #tpu.memory_space<vmem>>, %arg12: memref<1x224xf32, #tpu.memory_space<vmem>>, %arg13: memref<2x224x384xbf16, #tpu.memory_space<vmem>>, %arg14: memref<1x384xf32, #tpu.memory_space<vmem>>, %arg15: memref<6x384x256xbf16, #tpu.memory_space<vmem>>, %arg16: memref<1x256xf32, #tpu.memory_space<vmem>>, %arg17: memref<256x256xbf16, #tpu.memory_space<vmem>>, %arg18: memref<1x256xf32, #tpu.memory_space<vmem>>, %arg19: memref<512x1024xbf16, #tpu.memory_space<vmem>>, %arg20: memref<1x1024xf32, #tpu.memory_space<vmem>>, %arg21: memref<384x512xbf16, #tpu.memory_space<vmem>>, %arg22: memref<1x512xf32, #tpu.memory_space<vmem>>, %arg23: memref<256x128xbf16, #tpu.memory_space<vmem>>, %arg24: memref<1x128xf32, #tpu.memory_space<vmem>>, %arg25: memref<256x128xbf16, #tpu.memory_space<vmem>>, %arg26: memref<128x128xf32, #tpu.memory_space<vmem>>, %arg27: memref<1x128xf32, #tpu.memory_space<vmem>>, %arg28: memref<2x128xf32, #tpu.memory_space<vmem>>, %arg29: memref<3x2x256xf32, #tpu.memory_space<vmem>>, %arg30: memref<3x2x256xf32, #tpu.memory_space<vmem>>, %arg31: memref<2x128xf32, #tpu.memory_space<vmem>>, %arg32: memref<2x128xf32, #tpu.memory_space<vmem>>, %arg33: memref<4x2x256xf32, #tpu.memory_space<vmem>>, %arg34: memref<4x2x256xf32, #tpu.memory_space<vmem>>, %arg35: memref<16x128xf32, #tpu.memory_space<vmem>>, %arg36: memref<14x224xf32, #tpu.memory_space<vmem>>, %arg37: memref<12x384xf32, #tpu.memory_space<vmem>>) attributes {dimension_semantics = [], scalar_prefetch = 0 : i64, scratch_operands = 3 : i64, tpu.core_type = #tpu.core_type<tc>} {
    %c0 = arith.constant 0 : index
    %c0_0 = arith.constant 0 : index
    %0 = vector.load %arg2[%c0, %c0_0] : memref<20x70xf32, #tpu.memory_space<vmem>>, vector<16x70xf32>
    %1 = arith.truncf %0 : vector<16x70xf32> to vector<16x70xbf16>
    %c0_1 = arith.constant 0 : index
    %c0_2 = arith.constant 0 : index
    %c0_3 = arith.constant 0 : index
    %2 = vector.load %arg9[%c0_1, %c0_2, %c0_3] : memref<3x70x128xbf16, #tpu.memory_space<vmem>>, vector<1x70x128xbf16>
    %3 = vector.shape_cast %2 : vector<1x70x128xbf16> to vector<70x128xbf16>
    %cst = arith.constant dense<0.000000e+00> : vector<16x128xf32>
    %4 = tpu.matmul %1, %3, %cst {dimension_numbers = #tpu.dot_dimension_numbers<[1], [0], [0], [1], [0, 0, 1, 1], [], []>} : vector<16x70xbf16>, vector<70x128xbf16>, vector<16x128xf32> -> vector<16x128xf32>
    %c2 = arith.constant 2 : index
    %c0_4 = arith.constant 0 : index
    %5 = vector.load %arg2[%c2, %c0_4] : memref<20x70xf32, #tpu.memory_space<vmem>>, vector<16x70xf32>
    %6 = arith.truncf %5 : vector<16x70xf32> to vector<16x70xbf16>
    %c1 = arith.constant 1 : index
    %c0_5 = arith.constant 0 : index
    %c0_6 = arith.constant 0 : index
    %7 = vector.load %arg9[%c1, %c0_5, %c0_6] : memref<3x70x128xbf16, #tpu.memory_space<vmem>>, vector<1x70x128xbf16>
    %8 = vector.shape_cast %7 : vector<1x70x128xbf16> to vector<70x128xbf16>
    %cst_7 = arith.constant dense<0.000000e+00> : vector<16x128xf32>
    %9 = tpu.matmul %6, %8, %cst_7 {dimension_numbers = #tpu.dot_dimension_numbers<[1], [0], [0], [1], [0, 0, 1, 1], [], []>} : vector<16x70xbf16>, vector<70x128xbf16>, vector<16x128xf32> -> vector<16x128xf32>
    %10 = arith.addf %4, %9 : vector<16x128xf32>
    %c4 = arith.constant 4 : index
    %c0_8 = arith.constant 0 : index
    %11 = vector.load %arg2[%c4, %c0_8] : memref<20x70xf32, #tpu.memory_space<vmem>>, vector<16x70xf32>
    %12 = arith.truncf %11 : vector<16x70xf32> to vector<16x70xbf16>
    %c2_9 = arith.constant 2 : index
    %c0_10 = arith.constant 0 : index
    %c0_11 = arith.constant 0 : index
    %13 = vector.load %arg9[%c2_9, %c0_10, %c0_11] : memref<3x70x128xbf16, #tpu.memory_space<vmem>>, vector<1x70x128xbf16>
    %14 = vector.shape_cast %13 : vector<1x70x128xbf16> to vector<70x128xbf16>
    %cst_12 = arith.constant dense<0.000000e+00> : vector<16x128xf32>
    %15 = tpu.matmul %12, %14, %cst_12 {dimension_numbers = #tpu.dot_dimension_numbers<[1], [0], [0], [1], [0, 0, 1, 1], [], []>} : vector<16x70xbf16>, vector<70x128xbf16>, vector<16x128xf32> -> vector<16x128xf32>
    %16 = arith.addf %10, %15 : vector<16x128xf32>
    %c0_13 = arith.constant 0 : index
    %c0_14 = arith.constant 0 : index
    %17 = vector.load %arg10[%c0_13, %c0_14] : memref<1x128xf32, #tpu.memory_space<vmem>>, vector<1x128xf32>
    %18 = vector.broadcast %17 : vector<1x128xf32> to vector<16x128xf32>
    %19 = arith.addf %16, %18 : vector<16x128xf32>
    %cst_15 = arith.constant 0.000000e+00 : f32
    %20 = vector.broadcast %cst_15 : f32 to vector<16x128xf32>
    %21 = arith.maximumf %19, %20 : vector<16x128xf32>
    %c0_16 = arith.constant 0 : index
    %c0_17 = arith.constant 0 : index
    %22 = vector.load %arg35[%c0_16, %c0_17] : memref<16x128xf32, #tpu.memory_space<vmem>>, vector<16x128xf32>
    tpu.vector_store %arg35[%c0_16, %c0_17], %21 {strides = array<i32>} : memref<16x128xf32, #tpu.memory_space<vmem>>, vector<16x128xf32>,
    %c0_18 = arith.constant 0 : index
    %c0_19 = arith.constant 0 : index
    %23 = vector.load %arg35[%c0_18, %c0_19] : memref<16x128xf32, #tpu.memory_space<vmem>>, vector<14x128xf32>
    %24 = arith.truncf %23 : vector<14x128xf32> to vector<14x128xbf16>
    %c0_20 = arith.constant 0 : index
    %c0_21 = arith.constant 0 : index
    %c0_22 = arith.constant 0 : index
    %25 = vector.load %arg11[%c0_20, %c0_21, %c0_22] : memref<2x128x224xbf16, #tpu.memory_space<vmem>>, vector<1x128x224xbf16>
    %26 = vector.shape_cast %25 : vector<1x128x224xbf16> to vector<128x224xbf16>
    %cst_23 = arith.constant dense<0.000000e+00> : vector<14x224xf32>
    %27 = tpu.matmul %24, %26, %cst_23 {dimension_numbers = #tpu.dot_dimension_numbers<[1], [0], [0], [1], [0, 0, 1, 1], [], []>} : vector<14x128xbf16>, vector<128x224xbf16>, vector<14x224xf32> -> vector<14x224xf32>
    %c2_24 = arith.constant 2 : index
    %c0_25 = arith.constant 0 : index
    %28 = vector.load %arg35[%c2_24, %c0_25] : memref<16x128xf32, #tpu.memory_space<vmem>>, vector<14x128xf32>
    %29 = arith.truncf %28 : vector<14x128xf32> to vector<14x128xbf16>
    %c1_26 = arith.constant 1 : index
    %c0_27 = arith.constant 0 : index
    %c0_28 = arith.constant 0 : index
    %30 = vector.load %arg11[%c1_26, %c0_27, %c0_28] : memref<2x128x224xbf16, #tpu.memory_space<vmem>>, vector<1x128x224xbf16>
    %31 = vector.shape_cast %30 : vector<1x128x224xbf16> to vector<128x224xbf16>
    %cst_29 = arith.constant dense<0.000000e+00> : vector<14x224xf32>
    %32 = tpu.matmul %29, %31, %cst_29 {dimension_numbers = #tpu.dot_dimension_numbers<[1], [0], [0], [1], [0, 0, 1, 1], [], []>} : vector<14x128xbf16>, vector<128x224xbf16>, vector<14x224xf32> -> vector<14x224xf32>
    %33 = arith.addf %27, %32 : vector<14x224xf32>
    %c0_30 = arith.constant 0 : index
    %c0_31 = arith.constant 0 : index
    %34 = vector.load %arg12[%c0_30, %c0_31] : memref<1x224xf32, #tpu.memory_space<vmem>>, vector<1x224xf32>
    %35 = vector.broadcast %34 : vector<1x224xf32> to vector<14x224xf32>
    %36 = arith.addf %33, %35 : vector<14x224xf32>
    %cst_32 = arith.constant 0.000000e+00 : f32
    %37 = vector.broadcast %cst_32 : f32 to vector<14x224xf32>
    %38 = arith.maximumf %36, %37 : vector<14x224xf32>
    %c0_33 = arith.constant 0 : index
    %c0_34 = arith.constant 0 : index
    %39 = vector.load %arg36[%c0_33, %c0_34] : memref<14x224xf32, #tpu.memory_space<vmem>>, vector<14x224xf32>
    tpu.vector_store %arg36[%c0_33, %c0_34], %38 {strides = array<i32>} : memref<14x224xf32, #tpu.memory_space<vmem>>, vector<14x224xf32>,
    %c0_35 = arith.constant 0 : index
    %c0_36 = arith.constant 0 : index
    %40 = vector.load %arg36[%c0_35, %c0_36] : memref<14x224xf32, #tpu.memory_space<vmem>>, vector<12x224xf32>
    %41 = arith.truncf %40 : vector<12x224xf32> to vector<12x224xbf16>
    %c0_37 = arith.constant 0 : index
    %c0_38 = arith.constant 0 : index
    %c0_39 = arith.constant 0 : index
    %42 = vector.load %arg13[%c0_37, %c0_38, %c0_39] : memref<2x224x384xbf16, #tpu.memory_space<vmem>>, vector<1x224x384xbf16>
    %43 = vector.shape_cast %42 : vector<1x224x384xbf16> to vector<224x384xbf16>
    %cst_40 = arith.constant dense<0.000000e+00> : vector<12x384xf32>
    %44 = tpu.matmul %41, %43, %cst_40 {dimension_numbers = #tpu.dot_dimension_numbers<[1], [0], [0], [1], [0, 0, 1, 1], [], []>} : vector<12x224xbf16>, vector<224x384xbf16>, vector<12x384xf32> -> vector<12x384xf32>
    %c2_41 = arith.constant 2 : index
    %c0_42 = arith.constant 0 : index
    %45 = vector.load %arg36[%c2_41, %c0_42] : memref<14x224xf32, #tpu.memory_space<vmem>>, vector<12x224xf32>
    %46 = arith.truncf %45 : vector<12x224xf32> to vector<12x224xbf16>
    %c1_43 = arith.constant 1 : index
    %c0_44 = arith.constant 0 : index
    %c0_45 = arith.constant 0 : index
    %47 = vector.load %arg13[%c1_43, %c0_44, %c0_45] : memref<2x224x384xbf16, #tpu.memory_space<vmem>>, vector<1x224x384xbf16>
    %48 = vector.shape_cast %47 : vector<1x224x384xbf16> to vector<224x384xbf16>
    %cst_46 = arith.constant dense<0.000000e+00> : vector<12x384xf32>
    %49 = tpu.matmul %46, %48, %cst_46 {dimension_numbers = #tpu.dot_dimension_numbers<[1], [0], [0], [1], [0, 0, 1, 1], [], []>} : vector<12x224xbf16>, vector<224x384xbf16>, vector<12x384xf32> -> vector<12x384xf32>
    %50 = arith.addf %44, %49 : vector<12x384xf32>
    %c0_47 = arith.constant 0 : index
    %c0_48 = arith.constant 0 : index
    %51 = vector.load %arg14[%c0_47, %c0_48] : memref<1x384xf32, #tpu.memory_space<vmem>>, vector<1x384xf32>
    %52 = vector.broadcast %51 : vector<1x384xf32> to vector<12x384xf32>
    %53 = arith.addf %50, %52 : vector<12x384xf32>
    %cst_49 = arith.constant 0.000000e+00 : f32
    %54 = vector.broadcast %cst_49 : f32 to vector<12x384xf32>
    %55 = arith.maximumf %53, %54 : vector<12x384xf32>
    %c0_50 = arith.constant 0 : index
    %c0_51 = arith.constant 0 : index
    %56 = vector.load %arg37[%c0_50, %c0_51] : memref<12x384xf32, #tpu.memory_space<vmem>>, vector<12x384xf32>
    tpu.vector_store %arg37[%c0_50, %c0_51], %55 {strides = array<i32>} : memref<12x384xf32, #tpu.memory_space<vmem>>, vector<12x384xf32>,
    %c0_52 = arith.constant 0 : index
    %c0_53 = arith.constant 0 : index
    %57 = vector.load %arg37[%c0_52, %c0_53] : memref<12x384xf32, #tpu.memory_space<vmem>>, vector<2x384xf32>
    %58 = arith.truncf %57 : vector<2x384xf32> to vector<2x384xbf16>
    %c0_54 = arith.constant 0 : index
    %c0_55 = arith.constant 0 : index
    %c0_56 = arith.constant 0 : index
    %59 = vector.load %arg15[%c0_54, %c0_55, %c0_56] : memref<6x384x256xbf16, #tpu.memory_space<vmem>>, vector<1x384x256xbf16>
    %60 = vector.shape_cast %59 : vector<1x384x256xbf16> to vector<384x256xbf16>
    %cst_57 = arith.constant dense<0.000000e+00> : vector<2x256xf32>
    %61 = tpu.matmul %58, %60, %cst_57 {dimension_numbers = #tpu.dot_dimension_numbers<[1], [0], [0], [1], [0, 0, 1, 1], [], []>} : vector<2x384xbf16>, vector<384x256xbf16>, vector<2x256xf32> -> vector<2x256xf32>
    %c2_58 = arith.constant 2 : index
    %c0_59 = arith.constant 0 : index
    %62 = vector.load %arg37[%c2_58, %c0_59] : memref<12x384xf32, #tpu.memory_space<vmem>>, vector<2x384xf32>
    %63 = arith.truncf %62 : vector<2x384xf32> to vector<2x384xbf16>
    %c1_60 = arith.constant 1 : index
    %c0_61 = arith.constant 0 : index
    %c0_62 = arith.constant 0 : index
    %64 = vector.load %arg15[%c1_60, %c0_61, %c0_62] : memref<6x384x256xbf16, #tpu.memory_space<vmem>>, vector<1x384x256xbf16>
    %65 = vector.shape_cast %64 : vector<1x384x256xbf16> to vector<384x256xbf16>
    %cst_63 = arith.constant dense<0.000000e+00> : vector<2x256xf32>
    %66 = tpu.matmul %63, %65, %cst_63 {dimension_numbers = #tpu.dot_dimension_numbers<[1], [0], [0], [1], [0, 0, 1, 1], [], []>} : vector<2x384xbf16>, vector<384x256xbf16>, vector<2x256xf32> -> vector<2x256xf32>
    %67 = arith.addf %61, %66 : vector<2x256xf32>
    %c4_64 = arith.constant 4 : index
    %c0_65 = arith.constant 0 : index
    %68 = vector.load %arg37[%c4_64, %c0_65] : memref<12x384xf32, #tpu.memory_space<vmem>>, vector<2x384xf32>
    %69 = arith.truncf %68 : vector<2x384xf32> to vector<2x384xbf16>
    %c2_66 = arith.constant 2 : index
    %c0_67 = arith.constant 0 : index
    %c0_68 = arith.constant 0 : index
    %70 = vector.load %arg15[%c2_66, %c0_67, %c0_68] : memref<6x384x256xbf16, #tpu.memory_space<vmem>>, vector<1x384x256xbf16>
    %71 = vector.shape_cast %70 : vector<1x384x256xbf16> to vector<384x256xbf16>
    %cst_69 = arith.constant dense<0.000000e+00> : vector<2x256xf32>
    %72 = tpu.matmul %69, %71, %cst_69 {dimension_numbers = #tpu.dot_dimension_numbers<[1], [0], [0], [1], [0, 0, 1, 1], [], []>} : vector<2x384xbf16>, vector<384x256xbf16>, vector<2x256xf32> -> vector<2x256xf32>
    %73 = arith.addf %67, %72 : vector<2x256xf32>
    %c6 = arith.constant 6 : index
    %c0_70 = arith.constant 0 : index
    %74 = vector.load %arg37[%c6, %c0_70] : memref<12x384xf32, #tpu.memory_space<vmem>>, vector<2x384xf32>
    %75 = arith.truncf %74 : vector<2x384xf32> to vector<2x384xbf16>
    %c3 = arith.constant 3 : index
    %c0_71 = arith.constant 0 : index
    %c0_72 = arith.constant 0 : index
    %76 = vector.load %arg15[%c3, %c0_71, %c0_72] : memref<6x384x256xbf16, #tpu.memory_space<vmem>>, vector<1x384x256xbf16>
    %77 = vector.shape_cast %76 : vector<1x384x256xbf16> to vector<384x256xbf16>
    %cst_73 = arith.constant dense<0.000000e+00> : vector<2x256xf32>
    %78 = tpu.matmul %75, %77, %cst_73 {dimension_numbers = #tpu.dot_dimension_numbers<[1], [0], [0], [1], [0, 0, 1, 1], [], []>} : vector<2x384xbf16>, vector<384x256xbf16>, vector<2x256xf32> -> vector<2x256xf32>
    %79 = arith.addf %73, %78 : vector<2x256xf32>
    %c8 = arith.constant 8 : index
    %c0_74 = arith.constant 0 : index
    %80 = vector.load %arg37[%c8, %c0_74] : memref<12x384xf32, #tpu.memory_space<vmem>>, vector<2x384xf32>
    %81 = arith.truncf %80 : vector<2x384xf32> to vector<2x384xbf16>
    %c4_75 = arith.constant 4 : index
    %c0_76 = arith.constant 0 : index
    %c0_77 = arith.constant 0 : index
    %82 = vector.load %arg15[%c4_75, %c0_76, %c0_77] : memref<6x384x256xbf16, #tpu.memory_space<vmem>>, vector<1x384x256xbf16>
    %83 = vector.shape_cast %82 : vector<1x384x256xbf16> to vector<384x256xbf16>
    %cst_78 = arith.constant dense<0.000000e+00> : vector<2x256xf32>
    %84 = tpu.matmul %81, %83, %cst_78 {dimension_numbers = #tpu.dot_dimension_numbers<[1], [0], [0], [1], [0, 0, 1, 1], [], []>} : vector<2x384xbf16>, vector<384x256xbf16>, vector<2x256xf32> -> vector<2x256xf32>
    %85 = arith.addf %79, %84 : vector<2x256xf32>
    %c10 = arith.constant 10 : index
    %c0_79 = arith.constant 0 : index
    %86 = vector.load %arg37[%c10, %c0_79] : memref<12x384xf32, #tpu.memory_space<vmem>>, vector<2x384xf32>
    %87 = arith.truncf %86 : vector<2x384xf32> to vector<2x384xbf16>
    %c5 = arith.constant 5 : index
    %c0_80 = arith.constant 0 : index
    %c0_81 = arith.constant 0 : index
    %88 = vector.load %arg15[%c5, %c0_80, %c0_81] : memref<6x384x256xbf16, #tpu.memory_space<vmem>>, vector<1x384x256xbf16>
    %89 = vector.shape_cast %88 : vector<1x384x256xbf16> to vector<384x256xbf16>
    %cst_82 = arith.constant dense<0.000000e+00> : vector<2x256xf32>
    %90 = tpu.matmul %87, %89, %cst_82 {dimension_numbers = #tpu.dot_dimension_numbers<[1], [0], [0], [1], [0, 0, 1, 1], [], []>} : vector<2x384xbf16>, vector<384x256xbf16>, vector<2x256xf32> -> vector<2x256xf32>
    %91 = arith.addf %85, %90 : vector<2x256xf32>
    %c0_83 = arith.constant 0 : index
    %c0_84 = arith.constant 0 : index
    %92 = vector.load %arg16[%c0_83, %c0_84] : memref<1x256xf32, #tpu.memory_space<vmem>>, vector<1x256xf32>
    %93 = vector.broadcast %92 : vector<1x256xf32> to vector<2x256xf32>
    %94 = arith.addf %91, %93 : vector<2x256xf32>
    %cst_85 = arith.constant 0.000000e+00 : f32
    %95 = vector.broadcast %cst_85 : f32 to vector<2x256xf32>
    %96 = arith.maximumf %94, %95 : vector<2x256xf32>
    %97 = arith.truncf %96 : vector<2x256xf32> to vector<2x256xbf16>
    %c0_86 = arith.constant 0 : index
    %c0_87 = arith.constant 0 : index
    %98 = vector.load %arg17[%c0_86, %c0_87] : memref<256x256xbf16, #tpu.memory_space<vmem>>, vector<256x256xbf16>
    %cst_88 = arith.constant dense<0.000000e+00> : vector<2x256xf32>
    %99 = tpu.matmul %97, %98, %cst_88 {dimension_numbers = #tpu.dot_dimension_numbers<[1], [0], [0], [1], [0, 0, 1, 1], [], []>} : vector<2x256xbf16>, vector<256x256xbf16>, vector<2x256xf32> -> vector<2x256xf32>
    %c0_89 = arith.constant 0 : index
    %c0_90 = arith.constant 0 : index
    %100 = vector.load %arg18[%c0_89, %c0_90] : memref<1x256xf32, #tpu.memory_space<vmem>>, vector<1x256xf32>
    %101 = vector.broadcast %100 : vector<1x256xf32> to vector<2x256xf32>
    %102 = arith.addf %99, %101 : vector<2x256xf32>
    %cst_91 = arith.constant 0.000000e+00 : f32
    %103 = vector.broadcast %cst_91 : f32 to vector<2x256xf32>
    %104 = arith.maximumf %102, %103 : vector<2x256xf32>
    %c0_92 = arith.constant 0 : index
    %105 = memref.load %arg0[%c0_92] : memref<1xi32, #tpu.memory_space<smem>>
    %c0_93 = arith.constant 0 : index
    %c0_94 = arith.constant 0 : index
    %c0_95 = arith.constant 0 : index
    %106 = vector.load %arg3[%c0_93, %c0_94, %c0_95] : memref<3x2x256xf32, #tpu.memory_space<vmem>>, vector<3x2x256xf32>
    %107 = arith.index_cast %105 : i32 to index
    %c0_96 = arith.constant 0 : index
    %c0_97 = arith.constant 0 : index
    %108 = vector.load %arg3[%107, %c0_96, %c0_97] : memref<3x2x256xf32, #tpu.memory_space<vmem>>, vector<1x2x256xf32>
    %109 = vector.shape_cast %108 : vector<1x2x256xf32> to vector<2x256xf32>
    %110 = arith.index_cast %105 : i32 to index
    %c0_98 = arith.constant 0 : index
    %c0_99 = arith.constant 0 : index
    %111 = vector.load %arg4[%110, %c0_98, %c0_99] : memref<3x2x256xf32, #tpu.memory_space<vmem>>, vector<1x2x256xf32>
    %112 = vector.shape_cast %111 : vector<1x2x256xf32> to vector<2x256xf32>
    %cst_100 = arith.constant dense<0.000000e+00> : vector<2x256xf32>
    %113 = vector.multi_reduction <add>, %106, %cst_100 [0] : vector<3x2x256xf32> to vector<2x256xf32>
    %114 = tpu.concatenate %104, %109 in 1 : vector<2x256xf32>, vector<2x256xf32> -> vector<2x512xf32>
    %115 = arith.truncf %114 : vector<2x512xf32> to vector<2x512xbf16>
    %c0_101 = arith.constant 0 : index
    %c0_102 = arith.constant 0 : index
    %116 = vector.load %arg19[%c0_101, %c0_102] : memref<512x1024xbf16, #tpu.memory_space<vmem>>, vector<512x1024xbf16>
    %cst_103 = arith.constant dense<0.000000e+00> : vector<2x1024xf32>
    %117 = tpu.matmul %115, %116, %cst_103 {dimension_numbers = #tpu.dot_dimension_numbers<[1], [0], [0], [1], [0, 0, 1, 1], [], []>} : vector<2x512xbf16>, vector<512x1024xbf16>, vector<2x1024xf32> -> vector<2x1024xf32>
    %c0_104 = arith.constant 0 : index
    %c0_105 = arith.constant 0 : index
    %118 = vector.load %arg20[%c0_104, %c0_105] : memref<1x1024xf32, #tpu.memory_space<vmem>>, vector<1x1024xf32>
    %119 = vector.broadcast %118 : vector<1x1024xf32> to vector<2x1024xf32>
    %120 = arith.addf %117, %119 : vector<2x1024xf32>
    %121 = vector.extract_strided_slice %120 {offsets = [0, 0], sizes = [2, 256], strides = [1, 1]} : vector<2x1024xf32> to vector<2x256xf32>
    %122 = arith.negf %121 : vector<2x256xf32>
    %123 = math.exp %122 : vector<2x256xf32>
    %cst_106 = arith.constant 1.000000e+00 : f32
    %124 = vector.broadcast %cst_106 : f32 to vector<2x256xf32>
    %125 = arith.addf %124, %123 : vector<2x256xf32>
    %126 = arith.divf %124, %125 : vector<2x256xf32>
    %127 = vector.extract_strided_slice %120 {offsets = [0, 256], sizes = [2, 256], strides = [1, 1]} : vector<2x1024xf32> to vector<2x256xf32>
    %128 = arith.negf %127 : vector<2x256xf32>
    %129 = math.exp %128 : vector<2x256xf32>
    %cst_107 = arith.constant 1.000000e+00 : f32
    %130 = vector.broadcast %cst_107 : f32 to vector<2x256xf32>
    %131 = arith.addf %130, %129 : vector<2x256xf32>
    %132 = arith.divf %130, %131 : vector<2x256xf32>
    %133 = vector.extract_strided_slice %120 {offsets = [0, 512], sizes = [2, 256], strides = [1, 1]} : vector<2x1024xf32> to vector<2x256xf32>
    %134 = math.tanh %133 : vector<2x256xf32>
    %135 = vector.extract_strided_slice %120 {offsets = [0, 768], sizes = [2, 256], strides = [1, 1]} : vector<2x1024xf32> to vector<2x256xf32>
    %136 = arith.negf %135 : vector<2x256xf32>
    %137 = math.exp %136 : vector<2x256xf32>
    %cst_108 = arith.constant 1.000000e+00 : f32
    %138 = vector.broadcast %cst_108 : f32 to vector<2x256xf32>
    %139 = arith.addf %138, %137 : vector<2x256xf32>
    %140 = arith.divf %138, %139 : vector<2x256xf32>
    %141 = arith.mulf %132, %112 : vector<2x256xf32>
    %142 = arith.mulf %126, %134 : vector<2x256xf32>
    %143 = arith.addf %141, %142 : vector<2x256xf32>
    %144 = math.tanh %143 : vector<2x256xf32>
    %145 = arith.mulf %140, %144 : vector<2x256xf32>
    %c0_109 = arith.constant 0 : index
    %c0_110 = arith.constant 0 : index
    %c0_111 = arith.constant 0 : index
    %146 = vector.load %arg29[%c0_109, %c0_110, %c0_111] : memref<3x2x256xf32, #tpu.memory_space<vmem>>, vector<3x2x256xf32>
    tpu.vector_store %arg29[%c0_109, %c0_110, %c0_111], %106 {strides = array<i32>} : memref<3x2x256xf32, #tpu.memory_space<vmem>>, vector<3x2x256xf32>,
    %c0_112 = arith.constant 0 : index
    %c0_113 = arith.constant 0 : index
    %c0_114 = arith.constant 0 : index
    %147 = vector.load %arg4[%c0_112, %c0_113, %c0_114] : memref<3x2x256xf32, #tpu.memory_space<vmem>>, vector<3x2x256xf32>
    %c0_115 = arith.constant 0 : index
    %c0_116 = arith.constant 0 : index
    %c0_117 = arith.constant 0 : index
    %148 = vector.load %arg30[%c0_115, %c0_116, %c0_117] : memref<3x2x256xf32, #tpu.memory_space<vmem>>, vector<3x2x256xf32>
    tpu.vector_store %arg30[%c0_115, %c0_116, %c0_117], %147 {strides = array<i32>} : memref<3x2x256xf32, #tpu.memory_space<vmem>>, vector<3x2x256xf32>,
    %149 = arith.index_cast %105 : i32 to index
    %c0_118 = arith.constant 0 : index
    %c0_119 = arith.constant 0 : index
    %150 = vector.load %arg29[%149, %c0_118, %c0_119] : memref<3x2x256xf32, #tpu.memory_space<vmem>>, vector<1x2x256xf32>
    %151 = vector.shape_cast %150 : vector<1x2x256xf32> to vector<2x256xf32>
    %152 = vector.shape_cast %145 : vector<2x256xf32> to vector<1x2x256xf32>
    tpu.vector_store %arg29[%149, %c0_118, %c0_119], %152 {strides = array<i32>} : memref<3x2x256xf32, #tpu.memory_space<vmem>>, vector<1x2x256xf32>,
    %153 = arith.index_cast %105 : i32 to index
    %c0_120 = arith.constant 0 : index
    %c0_121 = arith.constant 0 : index
    %154 = vector.load %arg30[%153, %c0_120, %c0_121] : memref<3x2x256xf32, #tpu.memory_space<vmem>>, vector<1x2x256xf32>
    %155 = vector.shape_cast %154 : vector<1x2x256xf32> to vector<2x256xf32>
    %156 = vector.shape_cast %143 : vector<2x256xf32> to vector<1x2x256xf32>
    tpu.vector_store %arg30[%153, %c0_120, %c0_121], %156 {strides = array<i32>} : memref<3x2x256xf32, #tpu.memory_space<vmem>>, vector<1x2x256xf32>,
    %157 = arith.subf %113, %109 : vector<2x256xf32>
    %158 = arith.addf %145, %157 : vector<2x256xf32>
    %cst_122 = arith.constant 0.333333343 : f32
    %159 = vector.broadcast %cst_122 : f32 to vector<2x256xf32>
    %160 = arith.mulf %158, %159 : vector<2x256xf32>
    %161 = arith.mulf %160, %160 : vector<2x256xf32>
    %cst_123 = arith.constant dense<0.000000e+00> : vector<2xf32>
    %162 = vector.multi_reduction <add>, %161, %cst_123 [1] : vector<2x256xf32> to vector<2xf32>
    %163 = vector.shape_cast %162 : vector<2xf32> to vector<2x1xf32>
    %cst_124 = arith.constant 1.000000e-24 : f32
    %164 = vector.broadcast %cst_124 : f32 to vector<2x1xf32>
    %165 = arith.maximumf %163, %164 : vector<2x1xf32>
    %166 = math.rsqrt %165 : vector<2x1xf32>
    %167 = vector.broadcast %166 : vector<2x1xf32> to vector<2x256xf32>
    %168 = arith.mulf %160, %167 : vector<2x256xf32>
    %c0_125 = arith.constant 0 : index
    %c0_126 = arith.constant 0 : index
    %169 = vector.load %arg1[%c0_125, %c0_126] : memref<2x1xf32, #tpu.memory_space<vmem>>, vector<2x1xf32>
    %170 = vector.shape_cast %169 : vector<2x1xf32> to vector<1x2x1xf32>
    %c1_127 = arith.constant 1 : index
    %c0_128 = arith.constant 0 : index
    %c0_129 = arith.constant 0 : index
    %171 = vector.load %arg7[%c1_127, %c0_128, %c0_129] : memref<4x2x256xf32, #tpu.memory_space<vmem>>, vector<3x2x256xf32>
    %172 = vector.broadcast %170 : vector<1x2x1xf32> to vector<3x2x256xf32>
    %173 = arith.mulf %171, %172 : vector<3x2x256xf32>
    %cst_130 = arith.constant dense<0.000000e+00> : vector<2x256xf32>
    %174 = vector.multi_reduction <add>, %173, %cst_130 [0] : vector<3x2x256xf32> to vector<2x256xf32>
    %175 = arith.addf %168, %174 : vector<2x256xf32>
    %c0_131 = arith.constant 0 : index
    %c0_132 = arith.constant 0 : index
    %c0_133 = arith.constant 0 : index
    %176 = vector.load %arg33[%c0_131, %c0_132, %c0_133] : memref<4x2x256xf32, #tpu.memory_space<vmem>>, vector<3x2x256xf32>
    tpu.vector_store %arg33[%c0_131, %c0_132, %c0_133], %173 {strides = array<i32>} : memref<4x2x256xf32, #tpu.memory_space<vmem>>, vector<3x2x256xf32>,
    %c3_134 = arith.constant 3 : index
    %c0_135 = arith.constant 0 : index
    %c0_136 = arith.constant 0 : index
    %177 = vector.load %arg33[%c3_134, %c0_135, %c0_136] : memref<4x2x256xf32, #tpu.memory_space<vmem>>, vector<1x2x256xf32>
    %178 = vector.shape_cast %177 : vector<1x2x256xf32> to vector<2x256xf32>
    %179 = vector.shape_cast %168 : vector<2x256xf32> to vector<1x2x256xf32>
    tpu.vector_store %arg33[%c3_134, %c0_135, %c0_136], %179 {strides = array<i32>} : memref<4x2x256xf32, #tpu.memory_space<vmem>>, vector<1x2x256xf32>,
    %c1_137 = arith.constant 1 : index
    %c0_138 = arith.constant 0 : index
    %c0_139 = arith.constant 0 : index
    %180 = vector.load %arg8[%c1_137, %c0_138, %c0_139] : memref<4x2x256xf32, #tpu.memory_space<vmem>>, vector<3x2x256xf32>
    %c0_140 = arith.constant 0 : index
    %c0_141 = arith.constant 0 : index
    %c0_142 = arith.constant 0 : index
    %181 = vector.load %arg34[%c0_140, %c0_141, %c0_142] : memref<4x2x256xf32, #tpu.memory_space<vmem>>, vector<3x2x256xf32>
    tpu.vector_store %arg34[%c0_140, %c0_141, %c0_142], %180 {strides = array<i32>} : memref<4x2x256xf32, #tpu.memory_space<vmem>>, vector<3x2x256xf32>,
    %c3_143 = arith.constant 3 : index
    %c0_144 = arith.constant 0 : index
    %c0_145 = arith.constant 0 : index
    %182 = vector.load %arg34[%c3_143, %c0_144, %c0_145] : memref<4x2x256xf32, #tpu.memory_space<vmem>>, vector<1x2x256xf32>
    %183 = vector.shape_cast %182 : vector<1x2x256xf32> to vector<2x256xf32>
    %184 = vector.shape_cast %104 : vector<2x256xf32> to vector<1x2x256xf32>
    tpu.vector_store %arg34[%c3_143, %c0_144, %c0_145], %184 {strides = array<i32>} : memref<4x2x256xf32, #tpu.memory_space<vmem>>, vector<1x2x256xf32>,
    %c0_146 = arith.constant 0 : index
    %c0_147 = arith.constant 0 : index
    %185 = vector.load %arg5[%c0_146, %c0_147] : memref<2x128xf32, #tpu.memory_space<vmem>>, vector<2x128xf32>
    %c0_148 = arith.constant 0 : index
    %c0_149 = arith.constant 0 : index
    %186 = vector.load %arg6[%c0_148, %c0_149] : memref<2x128xf32, #tpu.memory_space<vmem>>, vector<2x128xf32>
    %187 = tpu.concatenate %96, %185 in 1 : vector<2x256xf32>, vector<2x128xf32> -> vector<2x384xf32>
    %188 = arith.truncf %187 : vector<2x384xf32> to vector<2x384xbf16>
    %c0_150 = arith.constant 0 : index
    %c0_151 = arith.constant 0 : index
    %189 = vector.load %arg21[%c0_150, %c0_151] : memref<384x512xbf16, #tpu.memory_space<vmem>>, vector<384x512xbf16>
    %cst_152 = arith.constant dense<0.000000e+00> : vector<2x512xf32>
    %190 = tpu.matmul %188, %189, %cst_152 {dimension_numbers = #tpu.dot_dimension_numbers<[1], [0], [0], [1], [0, 0, 1, 1], [], []>} : vector<2x384xbf16>, vector<384x512xbf16>, vector<2x512xf32> -> vector<2x512xf32>
    %c0_153 = arith.constant 0 : index
    %c0_154 = arith.constant 0 : index
    %191 = vector.load %arg22[%c0_153, %c0_154] : memref<1x512xf32, #tpu.memory_space<vmem>>, vector<1x512xf32>
    %192 = vector.broadcast %191 : vector<1x512xf32> to vector<2x512xf32>
    %193 = arith.addf %190, %192 : vector<2x512xf32>
    %194 = vector.extract_strided_slice %193 {offsets = [0, 0], sizes = [2, 128], strides = [1, 1]} : vector<2x512xf32> to vector<2x128xf32>
    %195 = arith.negf %194 : vector<2x128xf32>
    %196 = math.exp %195 : vector<2x128xf32>
    %cst_155 = arith.constant 1.000000e+00 : f32
    %197 = vector.broadcast %cst_155 : f32 to vector<2x128xf32>
    %198 = arith.addf %197, %196 : vector<2x128xf32>
    %199 = arith.divf %197, %198 : vector<2x128xf32>
    %200 = vector.extract_strided_slice %193 {offsets = [0, 128], sizes = [2, 128], strides = [1, 1]} : vector<2x512xf32> to vector<2x128xf32>
    %201 = arith.negf %200 : vector<2x128xf32>
    %202 = math.exp %201 : vector<2x128xf32>
    %cst_156 = arith.constant 1.000000e+00 : f32
    %203 = vector.broadcast %cst_156 : f32 to vector<2x128xf32>
    %204 = arith.addf %203, %202 : vector<2x128xf32>
    %205 = arith.divf %203, %204 : vector<2x128xf32>
    %206 = vector.extract_strided_slice %193 {offsets = [0, 256], sizes = [2, 128], strides = [1, 1]} : vector<2x512xf32> to vector<2x128xf32>
    %207 = math.tanh %206 : vector<2x128xf32>
    %208 = vector.extract_strided_slice %193 {offsets = [0, 384], sizes = [2, 128], strides = [1, 1]} : vector<2x512xf32> to vector<2x128xf32>
    %209 = arith.negf %208 : vector<2x128xf32>
    %210 = math.exp %209 : vector<2x128xf32>
    %cst_157 = arith.constant 1.000000e+00 : f32
    %211 = vector.broadcast %cst_157 : f32 to vector<2x128xf32>
    %212 = arith.addf %211, %210 : vector<2x128xf32>
    %213 = arith.divf %211, %212 : vector<2x128xf32>
    %214 = arith.mulf %205, %186 : vector<2x128xf32>
    %215 = arith.mulf %199, %207 : vector<2x128xf32>
    %216 = arith.addf %214, %215 : vector<2x128xf32>
    %217 = math.tanh %216 : vector<2x128xf32>
    %218 = arith.mulf %213, %217 : vector<2x128xf32>
    %c0_158 = arith.constant 0 : index
    %c0_159 = arith.constant 0 : index
    %219 = vector.load %arg31[%c0_158, %c0_159] : memref<2x128xf32, #tpu.memory_space<vmem>>, vector<2x128xf32>
    tpu.vector_store %arg31[%c0_158, %c0_159], %218 {strides = array<i32>} : memref<2x128xf32, #tpu.memory_space<vmem>>, vector<2x128xf32>,
    %c0_160 = arith.constant 0 : index
    %c0_161 = arith.constant 0 : index
    %220 = vector.load %arg32[%c0_160, %c0_161] : memref<2x128xf32, #tpu.memory_space<vmem>>, vector<2x128xf32>
    tpu.vector_store %arg32[%c0_160, %c0_161], %216 {strides = array<i32>} : memref<2x128xf32, #tpu.memory_space<vmem>>, vector<2x128xf32>,
    %c0_162 = arith.constant 0 : index
    %c0_163 = arith.constant 0 : index
    %221 = vector.load %arg23[%c0_162, %c0_163] : memref<256x128xbf16, #tpu.memory_space<vmem>>, vector<256x128xbf16>
    %cst_164 = arith.constant dense<0.000000e+00> : vector<2x128xf32>
    %222 = tpu.matmul %97, %221, %cst_164 {dimension_numbers = #tpu.dot_dimension_numbers<[1], [0], [0], [1], [0, 0, 1, 1], [], []>} : vector<2x256xbf16>, vector<256x128xbf16>, vector<2x128xf32> -> vector<2x128xf32>
    %c0_165 = arith.constant 0 : index
    %c0_166 = arith.constant 0 : index
    %223 = vector.load %arg24[%c0_165, %c0_166] : memref<1x128xf32, #tpu.memory_space<vmem>>, vector<1x128xf32>
    %224 = vector.broadcast %223 : vector<1x128xf32> to vector<2x128xf32>
    %225 = arith.addf %222, %224 : vector<2x128xf32>
    %226 = arith.truncf %175 : vector<2x256xf32> to vector<2x256xbf16>
    %c0_167 = arith.constant 0 : index
    %c0_168 = arith.constant 0 : index
    %227 = vector.load %arg25[%c0_167, %c0_168] : memref<256x128xbf16, #tpu.memory_space<vmem>>, vector<256x128xbf16>
    %cst_169 = arith.constant dense<0.000000e+00> : vector<2x128xf32>
    %228 = tpu.matmul %226, %227, %cst_169 {dimension_numbers = #tpu.dot_dimension_numbers<[1], [0], [0], [1], [0, 0, 1, 1], [], []>} : vector<2x256xbf16>, vector<256x128xbf16>, vector<2x128xf32> -> vector<2x128xf32>
    %229 = arith.mulf %218, %228 : vector<2x128xf32>
    %c0_170 = arith.constant 0 : index
    %c0_171 = arith.constant 0 : index
    %230 = vector.load %arg26[%c0_170, %c0_171] : memref<128x128xf32, #tpu.memory_space<vmem>>, vector<128x128xf32>
    %cst_172 = arith.constant dense<0.000000e+00> : vector<2x128xf32>
    %231 = tpu.matmul %229, %230, %cst_172 {dimension_numbers = #tpu.dot_dimension_numbers<[1], [0], [0], [1], [0, 0, 1, 1], [], []>} : vector<2x128xf32>, vector<128x128xf32>, vector<2x128xf32> -> vector<2x128xf32>
    %c0_173 = arith.constant 0 : index
    %c0_174 = arith.constant 0 : index
    %232 = vector.load %arg27[%c0_173, %c0_174] : memref<1x128xf32, #tpu.memory_space<vmem>>, vector<1x128xf32>
    %233 = vector.broadcast %232 : vector<1x128xf32> to vector<2x128xf32>
    %234 = arith.addf %231, %233 : vector<2x128xf32>
    %cst_175 = arith.constant dense<0xFF800000> : vector<2xf32>
    %235 = vector.multi_reduction <maximumf>, %234, %cst_175 [1] : vector<2x128xf32> to vector<2xf32>
    %236 = vector.shape_cast %235 : vector<2xf32> to vector<2x1xf32>
    %237 = vector.broadcast %236 : vector<2x1xf32> to vector<2x128xf32>
    %238 = arith.subf %234, %237 : vector<2x128xf32>
    %239 = math.exp %238 : vector<2x128xf32>
    %cst_176 = arith.constant dense<0.000000e+00> : vector<2xf32>
    %240 = vector.multi_reduction <add>, %239, %cst_176 [1] : vector<2x128xf32> to vector<2xf32>
    %241 = vector.shape_cast %240 : vector<2xf32> to vector<2x1xf32>
    %242 = vector.broadcast %241 : vector<2x1xf32> to vector<2x128xf32>
    %243 = arith.divf %239, %242 : vector<2x128xf32>
    %244 = arith.addf %225, %243 : vector<2x128xf32>
    %c0_177 = arith.constant 0 : index
    %c0_178 = arith.constant 0 : index
    %245 = vector.load %arg28[%c0_177, %c0_178] : memref<2x128xf32, #tpu.memory_space<vmem>>, vector<2x128xf32>
    tpu.vector_store %arg28[%c0_177, %c0_178], %244 {strides = array<i32>} : memref<2x128xf32, #tpu.memory_space<vmem>>, vector<2x128xf32>,
    return
  }
}

</mosaic_0001>

<llo_original>
// kernel: feudal_forward.1
$region0: #{feudal_forward.1}
  #allocation0 [shape = 'u32[]', space=smem, size = 0x4, offset = 0x4, fixed_abs, tag = 'smem constant byte address 0x4 - core index']
  #allocation1 [shape = 'u32[144,128]{1,0:T(1,128)}', space=vmem, size = 0x12000, scoped, tag = 'internal scratch']
  #allocation2 [shape = 'f32[16,128]{1,0:T(8,128)}', space=vmem, size = 0x2000, scoped, tag = 'scratch operand']
  #allocation3 [shape = 'f32[14,224]{1,0:T(8,128)}', space=vmem, size = 0x4000, scoped, tag = 'scratch operand']
  #allocation4 [shape = 'f32[12,384]{1,0:T(8,128)}', space=vmem, size = 0x6000, scoped, tag = 'scratch operand']
  #allocation5 [shape = 's32[1]{0:T(128)S(6)}', space=smem, size = 0x200, scoped, tag = 'scoped memory for feudal_forward.1']
  %s0 = inlined_call_operand.smem [shape: u32[35], index: -1, kind: input, shape index: {}]
  %s1 = sld [smem:[%s0]]
  %s2 = scalar_lea.smem %s0, 1
  %s3 = sld [smem:[%s2]]
  %s4 = scalar_lea.smem %s0, 2
  %s5 = sld [smem:[%s4]]
  %s6 = scalar_lea.smem %s0, 3
  %s7 = sld [smem:[%s6]]
  %s8 = scalar_lea.smem %s0, 4
  %s9 = sld [smem:[%s8]]
  %s10 = scalar_lea.smem %s0, 5
  %s11 = sld [smem:[%s10]]
  %s12 = scalar_lea.smem %s0, 6
  %s13 = sld [smem:[%s12]]
  %s14 = scalar_lea.smem %s0, 7
  %s15 = sld [smem:[%s14]]
  %s16 = scalar_lea.smem %s0, 8
  %s17 = sld [smem:[%s16]]
  %s18 = scalar_lea.smem %s0, 9
  %s19 = sld [smem:[%s18]]
  %s20 = scalar_lea.smem %s0, 10
  %s21 = sld [smem:[%s20]]
  %s22 = scalar_lea.smem %s0, 11
  %s23 = sld [smem:[%s22]]
  %s24 = scalar_lea.smem %s0, 12
  %s25 = sld [smem:[%s24]]
  %s26 = scalar_lea.smem %s0, 13
  %s27 = sld [smem:[%s26]]
  %s28 = scalar_lea.smem %s0, 14
  %s29 = sld [smem:[%s28]]
  %s30 = scalar_lea.smem %s0, 15
  %s31 = sld [smem:[%s30]]
  %s32 = scalar_lea.smem %s0, 16
  %s33 = sld [smem:[%s32]]
  %s34 = scalar_lea.smem %s0, 17
  %s35 = sld [smem:[%s34]]
  %s36 = scalar_lea.smem %s0, 18
  %s37 = sld [smem:[%s36]]
  %s38 = scalar_lea.smem %s0, 19
  %s39 = sld [smem:[%s38]]
  %s40 = scalar_lea.smem %s0, 20
  %s41 = sld [smem:[%s40]]
  %s42 = scalar_lea.smem %s0, 21
  %s43 = sld [smem:[%s42]]
  %s44 = scalar_lea.smem %s0, 22
  %s45 = sld [smem:[%s44]]
  %s46 = scalar_lea.smem %s0, 23
  %s47 = sld [smem:[%s46]]
  %s48 = scalar_lea.smem %s0, 24
  %s49 = sld [smem:[%s48]]
  %s50 = scalar_lea.smem %s0, 25
  %s51 = sld [smem:[%s50]]
  %s52 = scalar_lea.smem %s0, 26
  %s53 = sld [smem:[%s52]]
  %s54 = scalar_lea.smem %s0, 27
  %s55 = sld [smem:[%s54]]
  %s56 = scalar_lea.smem %s0, 28
  %s57 = sld [smem:[%s56]]
  %s58 = scalar_lea.smem %s0, 29
  %s59 = sld [smem:[%s58]]
  %s60 = scalar_lea.smem %s0, 30
  %s61 = sld [smem:[%s60]]
  %s62 = scalar_lea.smem %s0, 31
  %s63 = sld [smem:[%s62]]
  %s64 = scalar_lea.smem %s0, 32
  %s65 = sld [smem:[%s64]]
  %s66 = scalar_lea.smem %s0, 33
  %s67 = sld [smem:[%s66]]
  %s68 = scalar_lea.smem %s0, 34
  %s69 = sld [smem:[%s68]]
  %70 = xla_tuple %s57, %s59, %s61, %s63, %s65, %s67, %s69
  %s71 = sld [smem:[#allocation0]]
  $region266: #{feudal_forward.1} parent=0
    _
  %s73 = ssub.s32 1, %s71
  %s74 = scalar_select 0, %s73, %s71
  %75 = sst [smem:[#allocation5]] %s1
  $region1: #{feudal_forward.1} parent=0
    #allocation6 [shape = 'u8[6144]{0}', space=vmem, size = 0x1800, scoped, tag = 'input window, operand 3, single buffered']
    #allocation7 [shape = 's32[1]{0}', space=sflag, size = 0x4, scoped, tag = 'scoped memory for feudal_forward.1']
    #allocation8 [shape = 's32[1]{0}', space=sflag, size = 0x4, scoped, tag = 'scoped memory for feudal_forward.1']
    #allocation9 [shape = 'u8[6144]{0}', space=vmem, size = 0x1800, scoped, tag = 'input window, operand 4, single buffered']
    #allocation10 [shape = 's32[1]{0}', space=sflag, size = 0x4, scoped, tag = 'scoped memory for feudal_forward.1']
    #allocation11 [shape = 'u8[1024]{0}', space=vmem, size = 0x400, scoped, tag = 'input window, operand 5, single buffered']
    #allocation12 [shape = 'u8[1024]{0}', space=vmem, size = 0x400, scoped, tag = 'input window, operand 6, single buffered']
    #allocation13 [shape = 's32[1]{0}', space=sflag, size = 0x4, scoped, tag = 'scoped memory for feudal_forward.1']
    #allocation14 [shape = 'u8[8192]{0}', space=vmem, size = 0x2000, scoped, tag = 'input window, operand 7, single buffered']
    #allocation15 [shape = 'u8[8192]{0}', space=vmem, size = 0x2000, scoped, tag = 'input window, operand 8, single buffered']
    #allocation16 [shape = 's32[1]{0}', space=sflag, size = 0x4, scoped, tag = 'scoped memory for feudal_forward.1']
    #allocation17 [shape = 'u8[55296]{0}', space=vmem, size = 0xd800, scoped, tag = 'input window, operand 9, single buffered']
    #allocation18 [shape = 'u8[512]{0}', space=vmem, size = 0x400, scoped, tag = 'input window, operand 10, single buffered']
    #allocation19 [shape = 's32[1]{0}', space=sflag, size = 0x4, scoped, tag = 'scoped memory for feudal_forward.1']
    #allocation20 [shape = 'u8[1024]{0}', space=vmem, size = 0x400, scoped, tag = 'input window, operand 12, single buffered']
    #allocation21 [shape = 'u8[344064]{0}', space=vmem, size = 0x54000, scoped, tag = 'input window, operand 13, single buffered']
    #allocation22 [shape = 's32[1]{0}', space=sflag, size = 0x4, scoped, tag = 'scoped memory for feudal_forward.1']
    #allocation23 [shape = 'u8[1536]{0}', space=vmem, size = 0x800, scoped, tag = 'input window, operand 14, single buffered']
    #allocation24 [shape = 'u8[1179648]{0}', space=vmem, size = 0x120000, scoped, tag = 'input window, operand 15, single buffered']
    #allocation25 [shape = 's32[1]{0}', space=sflag, size = 0x4, scoped, tag = 'scoped memory for feudal_forward.1']
    #allocation26 [shape = 'u8[1024]{0}', space=vmem, size = 0x400, scoped, tag = 'input window, operand 16, single buffered']
    #allocation27 [shape = 'u8[131072]{0}', space=vmem, size = 0x20000, scoped, tag = 'input window, operand 17, single buffered']
    #allocation28 [shape = 's32[1]{0}', space=sflag, size = 0x4, scoped, tag = 'scoped memory for feudal_forward.1']
    #allocation29 [shape = 'u8[1024]{0}', space=vmem, size = 0x400, scoped, tag = 'input window, operand 18, single buffered']
    #allocation30 [shape = 'u8[1048576]{0}', space=vmem, size = 0x100000, scoped, tag = 'input window, operand 19, single buffered']
    #allocation31 [shape = 's32[1]{0}', space=sflag, size = 0x4, scoped, tag = 'scoped memory for feudal_forward.1']
    #allocation32 [shape = 'u8[4096]{0}', space=vmem, size = 0x1000, scoped, tag = 'input window, operand 20, single buffered']
    #allocation33 [shape = 'u8[393216]{0}', space=vmem, size = 0x60000, scoped, tag = 'input window, operand 21, single buffered']
    #allocation34 [shape = 's32[1]{0}', space=sflag, size = 0x4, scoped, tag = 'scoped memory for feudal_forward.1']
    #allocation35 [shape = 'u8[2048]{0}', space=vmem, size = 0x800, scoped, tag = 'input window, operand 22, single buffered']
    #allocation36 [shape = 'u8[65536]{0}', space=vmem, size = 0x10000, scoped, tag = 'input window, operand 23, single buffered']
    #allocation37 [shape = 's32[1]{0}', space=sflag, size = 0x4, scoped, tag = 'scoped memory for feudal_forward.1']
    #allocation38 [shape = 'u8[512]{0}', space=vmem, size = 0x400, scoped, tag = 'input window, operand 24, single buffered']
    #allocation39 [shape = 'u8[65536]{0}', space=vmem, size = 0x10000, scoped, tag = 'input window, operand 25, single buffered']
    #allocation40 [shape = 's32[1]{0}', space=sflag, size = 0x4, scoped, tag = 'scoped memory for feudal_forward.1']
    #allocation41 [shape = 'u8[65536]{0}', space=vmem, size = 0x10000, scoped, tag = 'input window, operand 26, single buffered']
    #allocation42 [shape = 'u8[512]{0}', space=vmem, size = 0x400, scoped, tag = 'input window, operand 27, single buffered']
    #allocation43 [shape = 's32[1]{0}', space=sflag, size = 0x4, scoped, tag = 'scoped memory for feudal_forward.1']
    #allocation44 [shape = 'u8[6144]{0}', space=vmem, size = 0x1800, scoped, tag = 'output window, operand 1, single buffered']
    #allocation45 [shape = 'u8[6144]{0}', space=vmem, size = 0x1800, scoped, tag = 'output window, operand 2, single buffered']
    #allocation46 [shape = 's32[1]{0}', space=sflag, size = 0x4, scoped, tag = 'scoped memory for feudal_forward.1']
    #allocation47 [shape = 'u8[1024]{0}', space=vmem, size = 0x400, scoped, tag = 'output window, operand 3, single buffered']
    #allocation48 [shape = 'u8[1024]{0}', space=vmem, size = 0x400, scoped, tag = 'output window, operand 4, single buffered']
    #allocation49 [shape = 's32[1]{0}', space=sflag, size = 0x4, scoped, tag = 'scoped memory for feudal_forward.1']
    #allocation50 [shape = 'u8[8192]{0}', space=vmem, size = 0x2000, scoped, tag = 'output window, operand 5, single buffered']
    #allocation51 [shape = 'u8[8192]{0}', space=vmem, size = 0x2000, scoped, tag = 'output window, operand 6, single buffered']
    #allocation52 [shape = 's32[1]{0}', space=sflag, size = 0x4, scoped, tag = 'scoped memory for feudal_forward.1']
    %76 = vsyncpa [#allocation7], 0
    %77 = vsyncpa [#allocation10], 0
    %78 = vsyncpa [#allocation13], 0
    %79 = vsyncpa [#allocation16], 0
    %80 = vsyncpa [#allocation19], 0
    %81 = vsyncpa [#allocation22], 0
    %82 = vsyncpa [#allocation25], 0
    %83 = vsyncpa [#allocation28], 0
    %84 = vsyncpa [#allocation31], 0
    %85 = vsyncpa [#allocation34], 0
    %86 = vsyncpa [#allocation37], 0
    %87 = vsyncpa [#allocation40], 0
    %88 = vsyncpa [#allocation43], 0
    %89 = vsyncpa [#allocation8], 0
    %90 = vsyncpa [#allocation46], 0
    %91 = vsyncpa [#allocation49], 0
    %92 = vsyncpa [#allocation52], 0
    // Predicated region
    $region2: #{feudal_forward.1} parent=1 // pred_check
      _
    $region3: #{feudal_forward.1} parent=1 // pred_check_branch
      %94 = sbr.rel (0) target = $region5
    $region4: #{feudal_forward.1} parent=1 // pred_region
      _
    $region5: #{feudal_forward.1} parent=1 // pred_fallthru
      _
    // Predicated region
    $region6: #{feudal_forward.1} parent=1 // pred_check
      _
    $region7: #{feudal_forward.1} parent=1 // pred_check_branch
      %96 = sbr.rel (0) target = $region9
    $region8: #{feudal_forward.1} parent=1 // pred_region
      _
    $region9: #{feudal_forward.1} parent=1 // pred_fallthru
      _
    // Predicated region
    $region10: #{feudal_forward.1} parent=1 // pred_check
      _
    $region11: #{feudal_forward.1} parent=1 // pred_check_branch
      %98 = sbr.rel (0) target = $region13
    $region12: #{feudal_forward.1} parent=1 // pred_region
      _
    $region13: #{feudal_forward.1} parent=1 // pred_fallthru
      _
    // Predicated region
    $region14: #{feudal_forward.1} parent=1 // pred_check
      _
    $region15: #{feudal_forward.1} parent=1 // pred_check_branch
      %100 = sbr.rel (0) target = $region17
    $region16: #{feudal_forward.1} parent=1 // pred_region
      %s102 = ssub.s32 192, 192
      %103 = vsyncadd [#allocation7], %s102
      %s104 = sshll.u32 [#allocation6], 4
      %s105 = int_to_ptr.vmem [resolvable:$true] %s104
      %110 = dma.hbm_to_vmem [thread:$0]  %s7, 192, %s105, [#allocation7], 64, 64, 4
    $region17: #{feudal_forward.1} parent=1 // pred_fallthru
      _
    // Predicated region
    $region18: #{feudal_forward.1} parent=1 // pred_check
      _
    $region19: #{feudal_forward.1} parent=1 // pred_check_branch
      %112 = sbr.rel (0) target = $region21
    $region20: #{feudal_forward.1} parent=1 // pred_region
      %s114 = ssub.s32 192, 192
      %115 = vsyncadd [#allocation10], %s114
      %s116 = sshll.u32 [#allocation9], 4
      %s117 = int_to_ptr.vmem [resolvable:$true] %s116
      %122 = dma.hbm_to_vmem [thread:$0]  %s9, 192, %s117, [#allocation10], 64, 64, 4
    $region21: #{feudal_forward.1} parent=1 // pred_fallthru
      _
    // Predicated region
    $region22: #{feudal_forward.1} parent=1 // pred_check
      _
    $region23: #{feudal_forward.1} parent=1 // pred_check_branch
      %124 = sbr.rel (0) target = $region25
    $region24: #{feudal_forward.1} parent=1 // pred_region
      %s126 = ssub.s32 32, 32
      %127 = vsyncadd [#allocation10], %s126
      %s129 = sshll.u32 [#allocation11], 4
      %s130 = int_to_ptr.vmem [resolvable:$true] %s129
      %132 = dma.hbm_to_vmem [thread:$0]  %s11, 32, %s130, [#allocation10]
    $region25: #{feudal_forward.1} parent=1 // pred_fallthru
      _
    // Predicated region
    $region26: #{feudal_forward.1} parent=1 // pred_check
      _
    $region27: #{feudal_forward.1} parent=1 // pred_check_branch
      %134 = sbr.rel (0) target = $region29
    $region28: #{feudal_forward.1} parent=1 // pred_region
      %s136 = ssub.s32 32, 32
      %137 = vsyncadd [#allocation13], %s136
      %s139 = sshll.u32 [#allocation12], 4
      %s140 = int_to_ptr.vmem [resolvable:$true] %s139
      %142 = dma.hbm_to_vmem [thread:$0]  %s13, 32, %s140, [#allocation13]
    $region29: #{feudal_forward.1} parent=1 // pred_fallthru
      _
    // Predicated region
    $region30: #{feudal_forward.1} parent=1 // pred_check
      _
    $region31: #{feudal_forward.1} parent=1 // pred_check_branch
      %144 = sbr.rel (0) target = $region33
    $region32: #{feudal_forward.1} parent=1 // pred_region
      %s146 = ssub.s32 256, 256
      %147 = vsyncadd [#allocation13], %s146
      %s148 = sshll.u32 [#allocation14], 4
      %s149 = int_to_ptr.vmem [resolvable:$true] %s148
      %154 = dma.hbm_to_vmem [thread:$0]  %s15, 256, %s149, [#allocation13], 64, 64, 4
    $region33: #{feudal_forward.1} parent=1 // pred_fallthru
      _
    // Predicated region
    $region34: #{feudal_forward.1} parent=1 // pred_check
      _
    $region35: #{feudal_forward.1} parent=1 // pred_check_branch
      %156 = sbr.rel (0) target = $region37
    $region36: #{feudal_forward.1} parent=1 // pred_region
      %s158 = ssub.s32 256, 256
      %159 = vsyncadd [#allocation16], %s158
      %s160 = sshll.u32 [#allocation15], 4
      %s161 = int_to_ptr.vmem [resolvable:$true] %s160
      %166 = dma.hbm_to_vmem [thread:$0]  %s17, 256, %s161, [#allocation16], 64, 64, 4
    $region37: #{feudal_forward.1} parent=1 // pred_fallthru
      _
    // Predicated region
    $region38: #{feudal_forward.1} parent=1 // pred_check
      _
    $region39: #{feudal_forward.1} parent=1 // pred_check_branch
      %168 = sbr.rel (0) target = $region41
    $region40: #{feudal_forward.1} parent=1 // pred_region
      %s170 = ssub.s32 1728, 1728
      %171 = vsyncadd [#allocation16], %s170
      %s172 = sshll.u32 [#allocation17], 4
      %s173 = int_to_ptr.vmem [resolvable:$true] %s172
      %178 = dma.hbm_to_vmem [thread:$0]  %s19, 1728, %s173, [#allocation16], 64, 64, 4
    $region41: #{feudal_forward.1} parent=1 // pred_fallthru
      _
    // Predicated region
    $region42: #{feudal_forward.1} parent=1 // pred_check
      _
    $region43: #{feudal_forward.1} parent=1 // pred_check_branch
      %180 = sbr.rel (0) target = $region45
    $region44: #{feudal_forward.1} parent=1 // pred_region
      %s182 = ssub.s32 16, 16
      %183 = vsyncadd [#allocation19], %s182
      %s185 = sshll.u32 [#allocation18], 4
      %s186 = int_to_ptr.vmem [resolvable:$true] %s185
      %188 = dma.hbm_to_vmem [thread:$0]  %s21, 16, %s186, [#allocation19]
    $region45: #{feudal_forward.1} parent=1 // pred_fallthru
      _
    // Predicated region
    $region46: #{feudal_forward.1} parent=1 // pred_check
      _
    $region47: #{feudal_forward.1} parent=1 // pred_check_branch
      %190 = sbr.rel (0) target = $region49
    $region48: #{feudal_forward.1} parent=1 // pred_region
      _
    $region49: #{feudal_forward.1} parent=1 // pred_fallthru
      _
    // Predicated region
    $region50: #{feudal_forward.1} parent=1 // pred_check
      _
    $region51: #{feudal_forward.1} parent=1 // pred_check_branch
      %192 = sbr.rel (0) target = $region53
    $region52: #{feudal_forward.1} parent=1 // pred_region
      %s194 = ssub.s32 32, 32
      %195 = vsyncadd [#allocation19], %s194
      %s197 = sshll.u32 [#allocation20], 4
      %s198 = int_to_ptr.vmem [resolvable:$true] %s197
      %200 = dma.hbm_to_vmem [thread:$0]  %s25, 32, %s198, [#allocation19]
    $region53: #{feudal_forward.1} parent=1 // pred_fallthru
      _
    // Predicated region
    $region54: #{feudal_forward.1} parent=1 // pred_check
      _
    $region55: #{feudal_forward.1} parent=1 // pred_check_branch
      %202 = sbr.rel (0) target = $region57
    $region56: #{feudal_forward.1} parent=1 // pred_region
      %s204 = ssub.s32 10752, 10752
      %205 = vsyncadd [#allocation22], %s204
      %s206 = sshll.u32 [#allocation21], 4
      %s207 = int_to_ptr.vmem [resolvable:$true] %s206
      %212 = dma.hbm_to_vmem [thread:$0]  %s27, 10752, %s207, [#allocation22], 192, 192, 12
    $region57: #{feudal_forward.1} parent=1 // pred_fallthru
      _
    // Predicated region
    $region58: #{feudal_forward.1} parent=1 // pred_check
      _
    $region59: #{feudal_forward.1} parent=1 // pred_check_branch
      %214 = sbr.rel (0) target = $region61
    $region60: #{feudal_forward.1} parent=1 // pred_region
      %s216 = ssub.s32 48, 48
      %217 = vsyncadd [#allocation22], %s216
      %s219 = sshll.u32 [#allocation23], 4
      %s220 = int_to_ptr.vmem [resolvable:$true] %s219
      %222 = dma.hbm_to_vmem [thread:$0]  %s29, 48, %s220, [#allocation22]
    $region61: #{feudal_forward.1} parent=1 // pred_fallthru
      _
    // Predicated region
    $region62: #{feudal_forward.1} parent=1 // pred_check
      _
    $region63: #{feudal_forward.1} parent=1 // pred_check_branch
      %224 = sbr.rel (0) target = $region65
    $region64: #{feudal_forward.1} parent=1 // pred_region
      %s226 = ssub.s32 36864, 36864
      %227 = vsyncadd [#allocation25], %s226
      %s228 = sshll.u32 [#allocation24], 4
      %s229 = int_to_ptr.vmem [resolvable:$true] %s228
      %234 = dma.hbm_to_vmem [thread:$0]  %s31, 36864, %s229, [#allocation25], 128, 128, 8
    $region65: #{feudal_forward.1} parent=1 // pred_fallthru
      _
    // Predicated region
    $region66: #{feudal_forward.1} parent=1 // pred_check
      _
    $region67: #{feudal_forward.1} parent=1 // pred_check_branch
      %236 = sbr.rel (0) target = $region69
    $region68: #{feudal_forward.1} parent=1 // pred_region
      %s238 = ssub.s32 32, 32
      %239 = vsyncadd [#allocation25], %s238
      %s241 = sshll.u32 [#allocation26], 4
      %s242 = int_to_ptr.vmem [resolvable:$true] %s241
      %244 = dma.hbm_to_vmem [thread:$0]  %s33, 32, %s242, [#allocation25]
    $region69: #{feudal_forward.1} parent=1 // pred_fallthru
      _
    // Predicated region
    $region70: #{feudal_forward.1} parent=1 // pred_check
      _
    $region71: #{feudal_forward.1} parent=1 // pred_check_branch
      %246 = sbr.rel (0) target = $region73
    $region72: #{feudal_forward.1} parent=1 // pred_region
      %s248 = ssub.s32 4096, 4096
      %249 = vsyncadd [#allocation28], %s248
      %s250 = sshll.u32 [#allocation27], 4
      %s251 = int_to_ptr.vmem [resolvable:$true] %s250
      %256 = dma.hbm_to_vmem [thread:$0]  %s35, 4096, %s251, [#allocation28], 128, 128, 8
    $region73: #{feudal_forward.1} parent=1 // pred_fallthru
      _
    // Predicated region
    $region74: #{feudal_forward.1} parent=1 // pred_check
      _
    $region75: #{feudal_forward.1} parent=1 // pred_check_branch
      %258 = sbr.rel (0) target = $region77
    $region76: #{feudal_forward.1} parent=1 // pred_region
      %s260 = ssub.s32 32, 32
      %261 = vsyncadd [#allocation28], %s260
      %s263 = sshll.u32 [#allocation29], 4
      %s264 = int_to_ptr.vmem [resolvable:$true] %s263
      %266 = dma.hbm_to_vmem [thread:$0]  %s37, 32, %s264, [#allocation28]
    $region77: #{feudal_forward.1} parent=1 // pred_fallthru
      _
    // Predicated region
    $region78: #{feudal_forward.1} parent=1 // pred_check
      _
    $region79: #{feudal_forward.1} parent=1 // pred_check_branch
      %268 = sbr.rel (0) target = $region81
    $region80: #{feudal_forward.1} parent=1 // pred_region
      %s270 = ssub.s32 32768, 32768
      %271 = vsyncadd [#allocation31], %s270
      %s272 = sshll.u32 [#allocation30], 4
      %s273 = int_to_ptr.vmem [resolvable:$true] %s272
      %278 = dma.hbm_to_vmem [thread:$0]  %s39, 32768, %s273, [#allocation31], 512, 512, 32
    $region81: #{feudal_forward.1} parent=1 // pred_fallthru
      _
    // Predicated region
    $region82: #{feudal_forward.1} parent=1 // pred_check
      _
    $region83: #{feudal_forward.1} parent=1 // pred_check_branch
      %280 = sbr.rel (0) target = $region85
    $region84: #{feudal_forward.1} parent=1 // pred_region
      %s282 = ssub.s32 128, 128
      %283 = vsyncadd [#allocation31], %s282
      %s285 = sshll.u32 [#allocation32], 4
      %s286 = int_to_ptr.vmem [resolvable:$true] %s285
      %288 = dma.hbm_to_vmem [thread:$0]  %s41, 128, %s286, [#allocation31]
    $region85: #{feudal_forward.1} parent=1 // pred_fallthru
      _
    // Predicated region
    $region86: #{feudal_forward.1} parent=1 // pred_check
      _
    $region87: #{feudal_forward.1} parent=1 // pred_check_branch
      %290 = sbr.rel (0) target = $region89
    $region88: #{feudal_forward.1} parent=1 // pred_region
      %s292 = ssub.s32 12288, 12288
      %293 = vsyncadd [#allocation34], %s292
      %s294 = sshll.u32 [#allocation33], 4
      %s295 = int_to_ptr.vmem [resolvable:$true] %s294
      %300 = dma.hbm_to_vmem [thread:$0]  %s43, 12288, %s295, [#allocation34], 256, 256, 16
    $region89: #{feudal_forward.1} parent=1 // pred_fallthru
      _
    // Predicated region
    $region90: #{feudal_forward.1} parent=1 // pred_check
      _
    $region91: #{feudal_forward.1} parent=1 // pred_check_branch
      %302 = sbr.rel (0) target = $region93
    $region92: #{feudal_forward.1} parent=1 // pred_region
      %s304 = ssub.s32 64, 64
      %305 = vsyncadd [#allocation34], %s304
      %s307 = sshll.u32 [#allocation35], 4
      %s308 = int_to_ptr.vmem [resolvable:$true] %s307
      %310 = dma.hbm_to_vmem [thread:$0]  %s45, 64, %s308, [#allocation34]
    $region93: #{feudal_forward.1} parent=1 // pred_fallthru
      _
    // Predicated region
    $region94: #{feudal_forward.1} parent=1 // pred_check
      _
    $region95: #{feudal_forward.1} parent=1 // pred_check_branch
      %312 = sbr.rel (0) target = $region97
    $region96: #{feudal_forward.1} parent=1 // pred_region
      %s314 = ssub.s32 2048, 2048
      %315 = vsyncadd [#allocation37], %s314
      %s316 = sshll.u32 [#allocation36], 4
      %s317 = int_to_ptr.vmem [resolvable:$true] %s316
      %322 = dma.hbm_to_vmem [thread:$0]  %s47, 2048, %s317, [#allocation37], 64, 64, 4
    $region97: #{feudal_forward.1} parent=1 // pred_fallthru
      _
    // Predicated region
    $region98: #{feudal_forward.1} parent=1 // pred_check
      _
    $region99: #{feudal_forward.1} parent=1 // pred_check_branch
      %324 = sbr.rel (0) target = $region101
    $region100: #{feudal_forward.1} parent=1 // pred_region
      %s326 = ssub.s32 16, 16
      %327 = vsyncadd [#allocation37], %s326
      %s329 = sshll.u32 [#allocation38], 4
      %s330 = int_to_ptr.vmem [resolvable:$true] %s329
      %332 = dma.hbm_to_vmem [thread:$0]  %s49, 16, %s330, [#allocation37]
    $region101: #{feudal_forward.1} parent=1 // pred_fallthru
      _
    // Predicated region
    $region102: #{feudal_forward.1} parent=1 // pred_check
      _
    $region103: #{feudal_forward.1} parent=1 // pred_check_branch
      %334 = sbr.rel (0) target = $region105
    $region104: #{feudal_forward.1} parent=1 // pred_region
      %s336 = ssub.s32 2048, 2048
      %337 = vsyncadd [#allocation40], %s336
      %s338 = sshll.u32 [#allocation39], 4
      %s339 = int_to_ptr.vmem [resolvable:$true] %s338
      %344 = dma.hbm_to_vmem [thread:$0]  %s51, 2048, %s339, [#allocation40], 64, 64, 4
    $region105: #{feudal_forward.1} parent=1 // pred_fallthru
      _
    // Predicated region
    $region106: #{feudal_forward.1} parent=1 // pred_check
      _
    $region107: #{feudal_forward.1} parent=1 // pred_check_branch
      %346 = sbr.rel (0) target = $region109
    $region108: #{feudal_forward.1} parent=1 // pred_region
      %s348 = ssub.s32 2048, 2048
      %349 = vsyncadd [#allocation40], %s348
      %s350 = sshll.u32 [#allocation41], 4
      %s351 = int_to_ptr.vmem [resolvable:$true] %s350
      %356 = dma.hbm_to_vmem [thread:$0]  %s53, 2048, %s351, [#allocation40], 128, 128, 8
    $region109: #{feudal_forward.1} parent=1 // pred_fallthru
      _
    // Predicated region
    $region110: #{feudal_forward.1} parent=1 // pred_check
      _
    $region111: #{feudal_forward.1} parent=1 // pred_check_branch
      %358 = sbr.rel (0) target = $region113
    $region112: #{feudal_forward.1} parent=1 // pred_region
      %s360 = ssub.s32 16, 16
      %361 = vsyncadd [#allocation43], %s360
      %s363 = sshll.u32 [#allocation42], 4
      %s364 = int_to_ptr.vmem [resolvable:$true] %s363
      %366 = dma.hbm_to_vmem [thread:$0]  %s55, 16, %s364, [#allocation43]
    $region113: #{feudal_forward.1} parent=1 // pred_fallthru
      _
    // Predicated region
    $region114: #{feudal_forward.1} parent=1 // pred_check
      _
    $region115: #{feudal_forward.1} parent=1 // pred_check_branch
      %368 = sbr.rel (0) target = $region117
    $region116: #{feudal_forward.1} parent=1 // pred_region
      %369 = dma.done [#allocation7], 192
    $region117: #{feudal_forward.1} parent=1 // pred_fallthru
      _
    // Predicated region
    $region118: #{feudal_forward.1} parent=1 // pred_check
      _
    $region119: #{feudal_forward.1} parent=1 // pred_check_branch
      %371 = sbr.rel (0) target = $region121
    $region120: #{feudal_forward.1} parent=1 // pred_region
      %372 = dma.done [#allocation10], 192
    $region121: #{feudal_forward.1} parent=1 // pred_fallthru
      _
    // Predicated region
    $region122: #{feudal_forward.1} parent=1 // pred_check
      _
    $region123: #{feudal_forward.1} parent=1 // pred_check_branch
      %374 = sbr.rel (0) target = $region125
    $region124: #{feudal_forward.1} parent=1 // pred_region
      %375 = dma.done [#allocation10], 32
    $region125: #{feudal_forward.1} parent=1 // pred_fallthru
      _
    // Predicated region
    $region126: #{feudal_forward.1} parent=1 // pred_check
      _
    $region127: #{feudal_forward.1} parent=1 // pred_check_branch
      %377 = sbr.rel (0) target = $region129
    $region128: #{feudal_forward.1} parent=1 // pred_region
      %378 = dma.done [#allocation13], 32
    $region129: #{feudal_forward.1} parent=1 // pred_fallthru
      _
    // Predicated region
    $region130: #{feudal_forward.1} parent=1 // pred_check
      _
    $region131: #{feudal_forward.1} parent=1 // pred_check_branch
      %380 = sbr.rel (0) target = $region133
    $region132: #{feudal_forward.1} parent=1 // pred_region
      %381 = dma.done [#allocation13], 256
    $region133: #{feudal_forward.1} parent=1 // pred_fallthru
      _
    // Predicated region
    $region134: #{feudal_forward.1} parent=1 // pred_check
      _
    $region135: #{feudal_forward.1} parent=1 // pred_check_branch
      %383 = sbr.rel (0) target = $region137
    $region136: #{feudal_forward.1} parent=1 // pred_region
      %384 = dma.done [#allocation16], 256
    $region137: #{feudal_forward.1} parent=1 // pred_fallthru
      _
    // Predicated region
    $region138: #{feudal_forward.1} parent=1 // pred_check
      _
    $region139: #{feudal_forward.1} parent=1 // pred_check_branch
      %386 = sbr.rel (0) target = $region141
    $region140: #{feudal_forward.1} parent=1 // pred_region
      %387 = dma.done [#allocation16], 1728
    $region141: #{feudal_forward.1} parent=1 // pred_fallthru
      _
    // Predicated region
    $region142: #{feudal_forward.1} parent=1 // pred_check
      _
    $region143: #{feudal_forward.1} parent=1 // pred_check_branch
      %389 = sbr.rel (0) target = $region145
    $region144: #{feudal_forward.1} parent=1 // pred_region
      %390 = dma.done [#allocation19], 16
    $region145: #{feudal_forward.1} parent=1 // pred_fallthru
      _
    // Predicated region
    $region146: #{feudal_forward.1} parent=1 // pred_check
      _
    $region147: #{feudal_forward.1} parent=1 // pred_check_branch
      %392 = sbr.rel (0) target = $region149
    $region148: #{feudal_forward.1} parent=1 // pred_region
      %393 = dma.done [#allocation19], 32
    $region149: #{feudal_forward.1} parent=1 // pred_fallthru
      _
    // Predicated region
    $region150: #{feudal_forward.1} parent=1 // pred_check
      _
    $region151: #{feudal_forward.1} parent=1 // pred_check_branch
      %395 = sbr.rel (0) target = $region153
    $region152: #{feudal_forward.1} parent=1 // pred_region
      %396 = dma.done [#allocation22], 10752
    $region153: #{feudal_forward.1} parent=1 // pred_fallthru
      _
    // Predicated region
    $region154: #{feudal_forward.1} parent=1 // pred_check
      _
    $region155: #{feudal_forward.1} parent=1 // pred_check_branch
      %398 = sbr.rel (0) target = $region157
    $region156: #{feudal_forward.1} parent=1 // pred_region
      %399 = dma.done [#allocation22], 48
    $region157: #{feudal_forward.1} parent=1 // pred_fallthru
      _
    // Predicated region
    $region158: #{feudal_forward.1} parent=1 // pred_check
      _
    $region159: #{feudal_forward.1} parent=1 // pred_check_branch
      %401 = sbr.rel (0) target = $region161
    $region160: #{feudal_forward.1} parent=1 // pred_region
      %402 = dma.done [#allocation25], 36864
    $region161: #{feudal_forward.1} parent=1 // pred_fallthru
      _
    // Predicated region
    $region162: #{feudal_forward.1} parent=1 // pred_check
      _
    $region163: #{feudal_forward.1} parent=1 // pred_check_branch
      %404 = sbr.rel (0) target = $region165
    $region164: #{feudal_forward.1} parent=1 // pred_region
      %405 = dma.done [#allocation25], 32
    $region165: #{feudal_forward.1} parent=1 // pred_fallthru
      _
    // Predicated region
    $region166: #{feudal_forward.1} parent=1 // pred_check
      _
    $region167: #{feudal_forward.1} parent=1 // pred_check_branch
      %407 = sbr.rel (0) target = $region169
    $region168: #{feudal_forward.1} parent=1 // pred_region
      %408 = dma.done [#allocation28], 4096
    $region169: #{feudal_forward.1} parent=1 // pred_fallthru
      _
    // Predicated region
    $region170: #{feudal_forward.1} parent=1 // pred_check
      _
    $region171: #{feudal_forward.1} parent=1 // pred_check_branch
      %410 = sbr.rel (0) target = $region173
    $region172: #{feudal_forward.1} parent=1 // pred_region
      %411 = dma.done [#allocation28], 32
    $region173: #{feudal_forward.1} parent=1 // pred_fallthru
      _
    // Predicated region
    $region174: #{feudal_forward.1} parent=1 // pred_check
      _
    $region175: #{feudal_forward.1} parent=1 // pred_check_branch
      %413 = sbr.rel (0) target = $region177
    $region176: #{feudal_forward.1} parent=1 // pred_region
      %414 = dma.done [#allocation31], 32768
    $region177: #{feudal_forward.1} parent=1 // pred_fallthru
      _
    // Predicated region
    $region178: #{feudal_forward.1} parent=1 // pred_check
      _
    $region179: #{feudal_forward.1} parent=1 // pred_check_branch
      %416 = sbr.rel (0) target = $region181
    $region180: #{feudal_forward.1} parent=1 // pred_region
      %417 = dma.done [#allocation31], 128
    $region181: #{feudal_forward.1} parent=1 // pred_fallthru
      _
    // Predicated region
    $region182: #{feudal_forward.1} parent=1 // pred_check
      _
    $region183: #{feudal_forward.1} parent=1 // pred_check_branch
      %419 = sbr.rel (0) target = $region185
    $region184: #{feudal_forward.1} parent=1 // pred_region
      %420 = dma.done [#allocation34], 12288
    $region185: #{feudal_forward.1} parent=1 // pred_fallthru
      _
    // Predicated region
    $region186: #{feudal_forward.1} parent=1 // pred_check
      _
    $region187: #{feudal_forward.1} parent=1 // pred_check_branch
      %422 = sbr.rel (0) target = $region189
    $region188: #{feudal_forward.1} parent=1 // pred_region
      %423 = dma.done [#allocation34], 64
    $region189: #{feudal_forward.1} parent=1 // pred_fallthru
      _
    // Predicated region
    $region190: #{feudal_forward.1} parent=1 // pred_check
      _
    $region191: #{feudal_forward.1} parent=1 // pred_check_branch
      %425 = sbr.rel (0) target = $region193
    $region192: #{feudal_forward.1} parent=1 // pred_region
      %426 = dma.done [#allocation37], 2048
    $region193: #{feudal_forward.1} parent=1 // pred_fallthru
      _
    // Predicated region
    $region194: #{feudal_forward.1} parent=1 // pred_check
      _
    $region195: #{feudal_forward.1} parent=1 // pred_check_branch
      %428 = sbr.rel (0) target = $region197
    $region196: #{feudal_forward.1} parent=1 // pred_region
      %429 = dma.done [#allocation37], 16
    $region197: #{feudal_forward.1} parent=1 // pred_fallthru
      _
    // Predicated region
    $region198: #{feudal_forward.1} parent=1 // pred_check
      _
    $region199: #{feudal_forward.1} parent=1 // pred_check_branch
      %431 = sbr.rel (0) target = $region201
    $region200: #{feudal_forward.1} parent=1 // pred_region
      %432 = dma.done [#allocation40], 2048
    $region201: #{feudal_forward.1} parent=1 // pred_fallthru
      _
    // Predicated region
    $region202: #{feudal_forward.1} parent=1 // pred_check
      _
    $region203: #{feudal_forward.1} parent=1 // pred_check_branch
      %434 = sbr.rel (0) target = $region205
    $region204: #{feudal_forward.1} parent=1 // pred_region
      %435 = dma.done [#allocation40], 2048
    $region205: #{feudal_forward.1} parent=1 // pred_fallthru
      _
    // Predicated region
    $region206: #{feudal_forward.1} parent=1 // pred_check
      _
    $region207: #{feudal_forward.1} parent=1 // pred_check_branch
      %437 = sbr.rel (0) target = $region209
    $region208: #{feudal_forward.1} parent=1 // pred_region
      %438 = dma.done [#allocation43], 16
    $region209: #{feudal_forward.1} parent=1 // pred_fallthru
      _
    %v440 = vld [vmem:[%s5] sm:$0xff]
    %v441 = vld [vmem:[%s5 + $0x8] sm:$0xff]
    %v442 = vpack.c.bf16 %v441, %v440
    %v443 = vld [vmem:[#allocation17] sm:$0xf]
    %v444 = vld [vmem:[#allocation17 + $0x4] sm:$0xf]
    %v445 = vld [vmem:[#allocation17 + $0x8] sm:$0xf]
    %v446 = vld [vmem:[#allocation17 + $0xc] sm:$0xf]
    %v447 = vld [vmem:[#allocation17 + $0x10] sm:$0xf]
    %v448 = vld [vmem:[#allocation17 + $0x14] sm:$0xf]
    %v449 = vld [vmem:[#allocation17 + $0x18] sm:$0xf]
    %v450 = vld [vmem:[#allocation17 + $0x1c] sm:$0xf]
    %v451 = vld [vmem:[#allocation17 + $0x20] sm:$0x7]
    %v452 = vld [vmem:[%s5 + $0x2] sm:$0xff]
    %v453 = vld [vmem:[%s5 + $0xa] sm:$0xff]
    %v454 = vpack.c.bf16 %v453, %v452
    %s455 = scalar_lea.vmem [#allocation17], 36
    %v456 = vld [vmem:[%s455] sm:$0xf]
    %v457 = vld [vmem:[%s455 + $0x4] sm:$0xf]
    %v458 = vld [vmem:[%s455 + $0x8] sm:$0xf]
    %v459 = vld [vmem:[%s455 + $0xc] sm:$0xf]
    %v460 = vld [vmem:[%s455 + $0x10] sm:$0xf]
    %v461 = vld [vmem:[%s455 + $0x14] sm:$0xf]
    %v462 = vld [vmem:[%s455 + $0x18] sm:$0xf]
    %v463 = vld [vmem:[%s455 + $0x1c] sm:$0xf]
    %v464 = vld [vmem:[%s455 + $0x20] sm:$0x7]
    %v474 = vunpack.c.l.b16 %v456
    %v475 = vunpack.c.l.b16 %v457
    %v476 = vunpack.c.l.b16 %v458
    %v477 = vunpack.c.l.b16 %v459
    %v478 = vunpack.c.l.b16 %v460
    %v479 = vunpack.c.l.b16 %v461
    %v480 = vunpack.c.l.b16 %v462
    %v481 = vunpack.c.l.b16 %v463
    %v482 = vunpack.c.l.b16 %v464
    %v483 = vpack.c.b16 %v475, %v474
    %v484 = vpack.c.b16 %v477, %v476
    %v485 = vpack.c.b16 %v479, %v478
    %v486 = vpack.c.b16 %v481, %v480
    %v487 = vpack.c.b16 %v482, %v482
    %vm492 = vcmask 572416
    %v494 = vsel %vm492, %v454, 0
    %vm496 = vcmask 1042432
    %v498 = vsel %vm496, %v487, 0
    %500 = vmatprep.subr.bf16.mxu0 0
    %501 = vmatpush1.bf16.msra.mxu0 %v483
    %502 = vmatprep.subr.bf16.mxu0 0
    %503 = vmatpush1.bf16.msra.mxu0 %v484
    %504 = vmatprep.subr.bf16.mxu0 0
    %505 = vmatpush1.bf16.msra.mxu0 %v485
    %506 = vmatprep.subr.bf16.mxu0 0
    %507 = vmatpush1.bf16.msra.mxu0 %v486
    %508 = vmatprep.subr.bf16.mxu0 0
    %509 = vmatpush1.bf16.msra.mxu0 %v498
    %510 = vmatprep.subr.bf16.mxu0 0
    %511 = vmatpush1.bf16.msra.mxu0 0
    %512 = vmatprep.subr.bf16.mxu0 0
    %513 = vmatpush1.bf16.msra.mxu0 0
    %514 = vmatprep.subr.bf16.mxu0 0
    %515 = vmatpush1.bf16.msra.mxu0 0
    %516 = vmatprep.subr.bf16.mxu0 0
    %517 = vmatpush1.bf16.msra.mxu0 0
    %518 = vmatprep.subr.bf16.mxu0 0
    %519 = vmatpush1.bf16.msra.mxu0 0
    %520 = vmatprep.subr.bf16.mxu0 0
    %521 = vmatpush1.bf16.msra.mxu0 0
    %522 = vmatprep.subr.bf16.mxu0 0
    %523 = vmatpush1.bf16.msra.mxu0 0
    %524 = vmatprep.subr.bf16.mxu0 0
    %525 = vmatpush1.bf16.msra.mxu0 0
    %526 = vmatprep.subr.bf16.mxu0 0
    %527 = vmatpush1.bf16.msra.mxu0 0
    %528 = vmatprep.subr.bf16.mxu0 0
    %529 = vmatpush1.bf16.msra.mxu0 0
    %530 = vmatprep.subr.bf16.mxu0 0
    %531 = vmatpush1.bf16.msra.mxu0 0
    %532 = vmatprep.mubr.bf16.mxu0 0
    %533 = vmatmul.mubr.bf16.gmra.mrb[0].mxu0 %v494
    %v534 = vpop.f32.mrb[0].mxu0
    %v535 = vadd.f32 0.0, %v534
    %v536 = vpop.f32.mrb[0].mxu0
    %v537 = vpop.f32.mrb[0].mxu0
    %v538 = vadd.f32 0.0, %v537
    %v539 = vpop.f32.mrb[0].mxu0
    %540 = vdwg.mxu0
    %v550 = vunpack.c.l.b16 %v443
    %v551 = vunpack.c.l.b16 %v444
    %v552 = vunpack.c.l.b16 %v445
    %v553 = vunpack.c.l.b16 %v446
    %v554 = vunpack.c.l.b16 %v447
    %v555 = vunpack.c.l.b16 %v448
    %v556 = vunpack.c.l.b16 %v449
    %v557 = vunpack.c.l.b16 %v450
    %v558 = vunpack.c.l.b16 %v451
    %v559 = vpack.c.b16 %v551, %v550
    %v560 = vpack.c.b16 %v553, %v552
    %v561 = vpack.c.b16 %v555, %v554
    %v562 = vpack.c.b16 %v557, %v556
    %v563 = vpack.c.b16 %v558, %v558
    %v569 = vsel %vm492, %v442, 0
    %v572 = vsel %vm496, %v563, 0
    %574 = vmatprep.subr.bf16.mxu0 0
    %575 = vmatpush1.bf16.msra.mxu0 %v559
    %576 = vmatprep.subr.bf16.mxu0 0
    %577 = vmatpush1.bf16.msra.mxu0 %v560
    %578 = vmatprep.subr.bf16.mxu0 0
    %579 = vmatpush1.bf16.msra.mxu0 %v561
    %580 = vmatprep.subr.bf16.mxu0 0
    %581 = vmatpush1.bf16.msra.mxu0 %v562
    %582 = vmatprep.subr.bf16.mxu0 0
    %583 = vmatpush1.bf16.msra.mxu0 %v572
    %584 = vmatprep.subr.bf16.mxu0 0
    %585 = vmatpush1.bf16.msra.mxu0 0
    %586 = vmatprep.subr.bf16.mxu0 0
    %587 = vmatpush1.bf16.msra.mxu0 0
    %588 = vmatprep.subr.bf16.mxu0 0
    %589 = vmatpush1.bf16.msra.mxu0 0
    %590 = vmatprep.subr.bf16.mxu0 0
    %591 = vmatpush1.bf16.msra.mxu0 0
    %592 = vmatprep.subr.bf16.mxu0 0
    %593 = vmatpush1.bf16.msra.mxu0 0
    %594 = vmatprep.subr.bf16.mxu0 0
    %595 = vmatpush1.bf16.msra.mxu0 0
    %596 = vmatprep.subr.bf16.mxu0 0
    %597 = vmatpush1.bf16.msra.mxu0 0
    %598 = vmatprep.subr.bf16.mxu0 0
    %599 = vmatpush1.bf16.msra.mxu0 0
    %600 = vmatprep.subr.bf16.mxu0 0
    %601 = vmatpush1.bf16.msra.mxu0 0
    %602 = vmatprep.subr.bf16.mxu0 0
    %603 = vmatpush1.bf16.msra.mxu0 0
    %604 = vmatprep.subr.bf16.mxu0 0
    %605 = vmatpush1.bf16.msra.mxu0 0
    %606 = vmatprep.mubr.bf16.mxu0 0
    %607 = vmatmul.mubr.bf16.gmra.mrb[0].mxu0 %v569
    %v608 = vpop.f32.mrb[0].mxu0
    %v609 = vadd.f32 %v535, %v608
    %v610 = vpop.f32.mrb[0].mxu0
    %v611 = vpop.f32.mrb[0].mxu0
    %v612 = vadd.f32 %v538, %v611
    %v613 = vpop.f32.mrb[0].mxu0
    %614 = vdwg.mxu0
    %v615 = vld [vmem:[%s5 + $0x4] sm:$0xff]
    %v616 = vld [vmem:[%s5 + $0xc] sm:$0xff]
    %v617 = vpack.c.bf16 %v616, %v615
    %s618 = scalar_lea.vmem [#allocation17], 72
    %v619 = vld [vmem:[%s618] sm:$0xf]
    %v620 = vld [vmem:[%s618 + $0x4] sm:$0xf]
    %v621 = vld [vmem:[%s618 + $0x8] sm:$0xf]
    %v622 = vld [vmem:[%s618 + $0xc] sm:$0xf]
    %v623 = vld [vmem:[%s618 + $0x10] sm:$0xf]
    %v624 = vld [vmem:[%s618 + $0x14] sm:$0xf]
    %v625 = vld [vmem:[%s618 + $0x18] sm:$0xf]
    %v626 = vld [vmem:[%s618 + $0x1c] sm:$0xf]
    %v627 = vld [vmem:[%s618 + $0x20] sm:$0x7]
    %v637 = vunpack.c.l.b16 %v619
    %v638 = vunpack.c.l.b16 %v620
    %v639 = vunpack.c.l.b16 %v621
    %v640 = vunpack.c.l.b16 %v622
    %v641 = vunpack.c.l.b16 %v623
    %v642 = vunpack.c.l.b16 %v624
    %v643 = vunpack.c.l.b16 %v625
    %v644 = vunpack.c.l.b16 %v626
    %v645 = vunpack.c.l.b16 %v627
    %v646 = vpack.c.b16 %v638, %v637
    %v647 = vpack.c.b16 %v640, %v639
    %v648 = vpack.c.b16 %v642, %v641
    %v649 = vpack.c.b16 %v644, %v643
    %v650 = vpack.c.b16 %v645, %v645
    %v656 = vsel %vm492, %v617, 0
    %v659 = vsel %vm496, %v650, 0
    %661 = vmatprep.subr.bf16.mxu0 0
    %662 = vmatpush1.bf16.msra.mxu0 %v646
    %663 = vmatprep.subr.bf16.mxu0 0
    %664 = vmatpush1.bf16.msra.mxu0 %v647
    %665 = vmatprep.subr.bf16.mxu0 0
    %666 = vmatpush1.bf16.msra.mxu0 %v648
    %667 = vmatprep.subr.bf16.mxu0 0
    %668 = vmatpush1.bf16.msra.mxu0 %v649
    %669 = vmatprep.subr.bf16.mxu0 0
    %670 = vmatpush1.bf16.msra.mxu0 %v659
    %671 = vmatprep.subr.bf16.mxu0 0
    %672 = vmatpush1.bf16.msra.mxu0 0
    %673 = vmatprep.subr.bf16.mxu0 0
    %674 = vmatpush1.bf16.msra.mxu0 0
    %675 = vmatprep.subr.bf16.mxu0 0
    %676 = vmatpush1.bf16.msra.mxu0 0
    %677 = vmatprep.subr.bf16.mxu0 0
    %678 = vmatpush1.bf16.msra.mxu0 0
    %679 = vmatprep.subr.bf16.mxu0 0
    %680 = vmatpush1.bf16.msra.mxu0 0
    %681 = vmatprep.subr.bf16.mxu0 0
    %682 = vmatpush1.bf16.msra.mxu0 0
    %683 = vmatprep.subr.bf16.mxu0 0
    %684 = vmatpush1.bf16.msra.mxu0 0
    %685 = vmatprep.subr.bf16.mxu0 0
    %686 = vmatpush1.bf16.msra.mxu0 0
    %687 = vmatprep.subr.bf16.mxu0 0
    %688 = vmatpush1.bf16.msra.mxu0 0
    %689 = vmatprep.subr.bf16.mxu0 0
    %690 = vmatpush1.bf16.msra.mxu0 0
    %691 = vmatprep.subr.bf16.mxu0 0
    %692 = vmatpush1.bf16.msra.mxu0 0
    %693 = vmatprep.mubr.bf16.mxu0 0
    %694 = vmatmul.mubr.bf16.gmra.mrb[0].mxu0 %v656
    %v695 = vpop.f32.mrb[0].mxu0
    %v696 = vadd.f32 0.0, %v695
    %v697 = vpop.f32.mrb[0].mxu0
    %v698 = vpop.f32.mrb[0].mxu0
    %v699 = vadd.f32 0.0, %v698
    %v700 = vpop.f32.mrb[0].mxu0
    %701 = vdwg.mxu0
    %v702 = vadd.f32 %v609, %v696
    %v703 = vadd.f32 %v612, %v699
    %v704 = vld [vmem:[#allocation18] sm:$0x1]
    %v706 = vlaneseq
    %v707 = vshrl.u32 %v706, 7
    %v708 = vsub.s32 0, %v707
    %v709 = vrot.slane %v704, %v708
    %v711 = vadd.f32 %v702, %v709
    %v712 = vadd.f32 %v703, %v709
    %v713 = vmax.f32 %v711, 0.0
    %v714 = vmax.f32 %v712, 0.0
    %715 = vst [vmem:[#allocation2] sm:$0xff] %v713
    %716 = vst [vmem:[#allocation2 + $0x8] sm:$0xff] %v714
    %v717 = vld [vmem:[#allocation2] sm:$0xff]
    %v718 = vld [vmem:[#allocation2 + $0x8] sm:$0x3f]
    %v719 = vpack.c.bf16 %v718, %v717
    %v720 = vld [vmem:[%s23] sm:$0xff]
    %v721 = vld [vmem:[%s23 + $0x8] sm:$0xff]
    %v722 = vld [vmem:[%s23 + $0x10] sm:$0xff]
    %v723 = vld [vmem:[%s23 + $0x18] sm:$0xff]
    %v724 = vld [vmem:[%s23 + $0x20] sm:$0xff]
    %v725 = vld [vmem:[%s23 + $0x28] sm:$0xff]
    %v726 = vld [vmem:[%s23 + $0x30] sm:$0xff]
    %v727 = vld [vmem:[%s23 + $0x38] sm:$0xff]
    %v728 = vld [vmem:[%s23 + $0x40] sm:$0xff]
    %v729 = vld [vmem:[%s23 + $0x48] sm:$0xff]
    %v730 = vld [vmem:[%s23 + $0x50] sm:$0xff]
    %v731 = vld [vmem:[%s23 + $0x58] sm:$0xff]
    %v732 = vld [vmem:[%s23 + $0x60] sm:$0xff]
    %v733 = vld [vmem:[%s23 + $0x68] sm:$0xff]
    %v734 = vld [vmem:[%s23 + $0x70] sm:$0xff]
    %v735 = vld [vmem:[%s23 + $0x78] sm:$0xff]
    %v736 = vld [vmem:[#allocation2 + $0x2] sm:$0xff]
    %v737 = vld [vmem:[#allocation2 + $0xa] sm:$0x3f]
    %v738 = vpack.c.bf16 %v737, %v736
    %s739 = scalar_lea.vmem %s23, 128
    %v740 = vld [vmem:[%s739] sm:$0xff]
    %v741 = vld [vmem:[%s739 + $0x8] sm:$0xff]
    %v742 = vld [vmem:[%s739 + $0x10] sm:$0xff]
    %v743 = vld [vmem:[%s739 + $0x18] sm:$0xff]
    %v744 = vld [vmem:[%s739 + $0x20] sm:$0xff]
    %v745 = vld [vmem:[%s739 + $0x28] sm:$0xff]
    %v746 = vld [vmem:[%s739 + $0x30] sm:$0xff]
    %v747 = vld [vmem:[%s739 + $0x38] sm:$0xff]
    %v748 = vld [vmem:[%s739 + $0x40] sm:$0xff]
    %v749 = vld [vmem:[%s739 + $0x48] sm:$0xff]
    %v750 = vld [vmem:[%s739 + $0x50] sm:$0xff]
    %v751 = vld [vmem:[%s739 + $0x58] sm:$0xff]
    %v752 = vld [vmem:[%s739 + $0x60] sm:$0xff]
    %v753 = vld [vmem:[%s739 + $0x68] sm:$0xff]
    %v754 = vld [vmem:[%s739 + $0x70] sm:$0xff]
    %v755 = vld [vmem:[%s739 + $0x78] sm:$0xff]
    %v772 = vunpack.c.l.b16 %v740
    %v773 = vunpack.c.h.b16 %v740
    %v774 = vunpack.c.l.b16 %v741
    %v775 = vunpack.c.h.b16 %v741
    %v776 = vunpack.c.l.b16 %v742
    %v777 = vunpack.c.h.b16 %v742
    %v778 = vunpack.c.l.b16 %v743
    %v779 = vunpack.c.h.b16 %v743
    %v780 = vunpack.c.l.b16 %v744
    %v781 = vunpack.c.h.b16 %v744
    %v782 = vunpack.c.l.b16 %v745
    %v783 = vunpack.c.h.b16 %v745
    %v784 = vunpack.c.l.b16 %v746
    %v785 = vunpack.c.h.b16 %v746
    %v786 = vunpack.c.l.b16 %v747
    %v787 = vunpack.c.h.b16 %v747
    %v788 = vunpack.c.l.b16 %v748
    %v789 = vunpack.c.h.b16 %v748
    %v790 = vunpack.c.l.b16 %v749
    %v791 = vunpack.c.h.b16 %v749
    %v792 = vunpack.c.l.b16 %v750
    %v793 = vunpack.c.h.b16 %v750
    %v794 = vunpack.c.l.b16 %v751
    %v795 = vunpack.c.h.b16 %v751
    %v796 = vunpack.c.l.b16 %v752
    %v797 = vunpack.c.h.b16 %v752
    %v798 = vunpack.c.l.b16 %v753
    %v799 = vunpack.c.h.b16 %v753
    %v800 = vunpack.c.l.b16 %v754
    %v801 = vunpack.c.h.b16 %v754
    %v802 = vunpack.c.l.b16 %v755
    %v803 = vunpack.c.h.b16 %v755
    %v804 = vpack.c.b16 %v774, %v772
    %v805 = vpack.c.b16 %v775, %v773
    %v806 = vpack.c.b16 %v778, %v776
    %v807 = vpack.c.b16 %v779, %v777
    %v808 = vpack.c.b16 %v782, %v780
    %v809 = vpack.c.b16 %v783, %v781
    %v810 = vpack.c.b16 %v786, %v784
    %v811 = vpack.c.b16 %v787, %v785
    %v812 = vpack.c.b16 %v790, %v788
    %v813 = vpack.c.b16 %v791, %v789
    %v814 = vpack.c.b16 %v794, %v792
    %v815 = vpack.c.b16 %v795, %v793
    %v816 = vpack.c.b16 %v798, %v796
    %v817 = vpack.c.b16 %v799, %v797
    %v818 = vpack.c.b16 %v802, %v800
    %v819 = vpack.c.b16 %v803, %v801
    %836 = vmatprep.subr.bf16.mxu0 %v805
    %837 = vmatpush1.bf16.msra.mxu0 %v804
    %838 = vmatprep.subr.bf16.mxu0 %v807
    %839 = vmatpush1.bf16.msra.mxu0 %v806
    %840 = vmatprep.subr.bf16.mxu0 %v809
    %841 = vmatpush1.bf16.msra.mxu0 %v808
    %842 = vmatprep.subr.bf16.mxu0 %v811
    %843 = vmatpush1.bf16.msra.mxu0 %v810
    %844 = vmatprep.subr.bf16.mxu0 %v813
    %845 = vmatpush1.bf16.msra.mxu0 %v812
    %846 = vmatprep.subr.bf16.mxu0 %v815
    %847 = vmatpush1.bf16.msra.mxu0 %v814
    %848 = vmatprep.subr.bf16.mxu0 %v817
    %849 = vmatpush1.bf16.msra.mxu0 %v816
    %850 = vmatprep.subr.bf16.mxu0 %v819
    %851 = vmatpush1.bf16.msra.mxu0 %v818
    %852 = vmatprep.subr.bf16.mxu0 0
    %853 = vmatpush1.bf16.msra.mxu0 0
    %854 = vmatprep.subr.bf16.mxu0 0
    %855 = vmatpush1.bf16.msra.mxu0 0
    %856 = vmatprep.subr.bf16.mxu0 0
    %857 = vmatpush1.bf16.msra.mxu0 0
    %858 = vmatprep.subr.bf16.mxu0 0
    %859 = vmatpush1.bf16.msra.mxu0 0
    %860 = vmatprep.subr.bf16.mxu0 0
    %861 = vmatpush1.bf16.msra.mxu0 0
    %862 = vmatprep.subr.bf16.mxu0 0
    %863 = vmatpush1.bf16.msra.mxu0 0
    %864 = vmatprep.subr.bf16.mxu0 0
    %865 = vmatpush1.bf16.msra.mxu0 0
    %866 = vmatprep.subr.bf16.mxu0 0
    %867 = vmatpush1.bf16.msra.mxu0 0
    %868 = vmatprep.mubr.bf16.mxu0 0
    %869 = vmatmul.mubr.bf16.gmra.mrb[0].mxu0 %v738
    %v870 = vpop.f32.mrb[0].mxu0
    %v871 = vadd.f32 0.0, %v870
    %v872 = vpop.f32.mrb[0].mxu0
    %v873 = vadd.f32 0.0, %v872
    %v874 = vpop.f32.mrb[0].mxu0
    %v875 = vadd.f32 0.0, %v874
    %v876 = vpop.f32.mrb[0].mxu0
    %v877 = vadd.f32 0.0, %v876
    %878 = vdwg.mxu0
    %v895 = vunpack.c.l.b16 %v720
    %v896 = vunpack.c.h.b16 %v720
    %v897 = vunpack.c.l.b16 %v721
    %v898 = vunpack.c.h.b16 %v721
    %v899 = vunpack.c.l.b16 %v722
    %v900 = vunpack.c.h.b16 %v722
    %v901 = vunpack.c.l.b16 %v723
    %v902 = vunpack.c.h.b16 %v723
    %v903 = vunpack.c.l.b16 %v724
    %v904 = vunpack.c.h.b16 %v724
    %v905 = vunpack.c.l.b16 %v725
    %v906 = vunpack.c.h.b16 %v725
    %v907 = vunpack.c.l.b16 %v726
    %v908 = vunpack.c.h.b16 %v726
    %v909 = vunpack.c.l.b16 %v727
    %v910 = vunpack.c.h.b16 %v727
    %v911 = vunpack.c.l.b16 %v728
    %v912 = vunpack.c.h.b16 %v728
    %v913 = vunpack.c.l.b16 %v729
    %v914 = vunpack.c.h.b16 %v729
    %v915 = vunpack.c.l.b16 %v730
    %v916 = vunpack.c.h.b16 %v730
    %v917 = vunpack.c.l.b16 %v731
    %v918 = vunpack.c.h.b16 %v731
    %v919 = vunpack.c.l.b16 %v732
    %v920 = vunpack.c.h.b16 %v732
    %v921 = vunpack.c.l.b16 %v733
    %v922 = vunpack.c.h.b16 %v733
    %v923 = vunpack.c.l.b16 %v734
    %v924 = vunpack.c.h.b16 %v734
    %v925 = vunpack.c.l.b16 %v735
    %v926 = vunpack.c.h.b16 %v735
    %v927 = vpack.c.b16 %v897, %v895
    %v928 = vpack.c.b16 %v898, %v896
    %v929 = vpack.c.b16 %v901, %v899
    %v930 = vpack.c.b16 %v902, %v900
    %v931 = vpack.c.b16 %v905, %v903
    %v932 = vpack.c.b16 %v906, %v904
    %v933 = vpack.c.b16 %v909, %v907
    %v934 = vpack.c.b16 %v910, %v908
    %v935 = vpack.c.b16 %v913, %v911
    %v936 = vpack.c.b16 %v914, %v912
    %v937 = vpack.c.b16 %v917, %v915
    %v938 = vpack.c.b16 %v918, %v916
    %v939 = vpack.c.b16 %v921, %v919
    %v940 = vpack.c.b16 %v922, %v920
    %v941 = vpack.c.b16 %v925, %v923
    %v942 = vpack.c.b16 %v926, %v924
    %959 = vmatprep.subr.bf16.mxu0 %v928
    %960 = vmatpush1.bf16.msra.mxu0 %v927
    %961 = vmatprep.subr.bf16.mxu0 %v930
    %962 = vmatpush1.bf16.msra.mxu0 %v929
    %963 = vmatprep.subr.bf16.mxu0 %v932
    %964 = vmatpush1.bf16.msra.mxu0 %v931
    %965 = vmatprep.subr.bf16.mxu0 %v934
    %966 = vmatpush1.bf16.msra.mxu0 %v933
    %967 = vmatprep.subr.bf16.mxu0 %v936
    %968 = vmatpush1.bf16.msra.mxu0 %v935
    %969 = vmatprep.subr.bf16.mxu0 %v938
    %970 = vmatpush1.bf16.msra.mxu0 %v937
    %971 = vmatprep.subr.bf16.mxu0 %v940
    %972 = vmatpush1.bf16.msra.mxu0 %v939
    %973 = vmatprep.subr.bf16.mxu0 %v942
    %974 = vmatpush1.bf16.msra.mxu0 %v941
    %975 = vmatprep.subr.bf16.mxu0 0
    %976 = vmatpush1.bf16.msra.mxu0 0
    %977 = vmatprep.subr.bf16.mxu0 0
    %978 = vmatpush1.bf16.msra.mxu0 0
    %979 = vmatprep.subr.bf16.mxu0 0
    %980 = vmatpush1.bf16.msra.mxu0 0
    %981 = vmatprep.subr.bf16.mxu0 0
    %982 = vmatpush1.bf16.msra.mxu0 0
    %983 = vmatprep.subr.bf16.mxu0 0
    %984 = vmatpush1.bf16.msra.mxu0 0
    %985 = vmatprep.subr.bf16.mxu0 0
    %986 = vmatpush1.bf16.msra.mxu0 0
    %987 = vmatprep.subr.bf16.mxu0 0
    %988 = vmatpush1.bf16.msra.mxu0 0
    %989 = vmatprep.subr.bf16.mxu0 0
    %990 = vmatpush1.bf16.msra.mxu0 0
    %991 = vmatprep.mubr.bf16.mxu0 0
    %992 = vmatmul.mubr.bf16.gmra.mrb[0].mxu0 %v719
    %v993 = vpop.f32.mrb[0].mxu0
    %v994 = vadd.f32 %v871, %v993
    %v995 = vpop.f32.mrb[0].mxu0
    %v996 = vadd.f32 %v873, %v995
    %v997 = vpop.f32.mrb[0].mxu0
    %v998 = vadd.f32 %v875, %v997
    %v999 = vpop.f32.mrb[0].mxu0
    %v1000 = vadd.f32 %v877, %v999
    %1001 = vdwg.mxu0
    %v1002 = vld [vmem:[#allocation20] sm:$0x3]
    %v1004 = vlaneseq
    %v1005 = vshrl.u32 %v1004, 7
    %v1006 = vsub.s32 0, %v1005
    %v1007 = vrot.slane %v1002, %v1006
    %v1008 = vlaneseq
    %v1009 = vshrl.u32 %v1008, 7
    %v1010 = vsub.s32 1, %v1009
    %v1011 = vrot.slane %v1002, %v1010
    %v1014 = vadd.f32 %v994, %v1007
    %v1015 = vadd.f32 %v996, %v1011
    %v1016 = vadd.f32 %v998, %v1007
    %v1017 = vadd.f32 %v1000, %v1011
    %v1018 = vmax.f32 %v1014, 0.0
    %v1019 = vmax.f32 %v1015, 0.0
    %v1020 = vmax.f32 %v1016, 0.0
    %v1021 = vmax.f32 %v1017, 0.0
    %1022 = vst [vmem:[#allocation3] sm:$0xff] %v1018
    %vm1023 = vcmask 785408
    %1024 = vst.msk [vmem:[#allocation3 + $0x8] sm:$0xff] %vm1023, %v1019
    %1025 = vst [vmem:[#allocation3 + $0x10] sm:$0x3f] %v1020
    %vm1026 = vcmask 783360
    %1027 = vst.msk [vmem:[#allocation3 + $0x18] sm:$0x3f] %vm1026, %v1021
    %v1028 = vld [vmem:[#allocation3] sm:$0xff]
    %v1029 = vld [vmem:[#allocation3 + $0x8] sm:$0xff]
    %v1030 = vld [vmem:[#allocation3 + $0x10] sm:$0xf]
    %v1031 = vld [vmem:[#allocation3 + $0x18] sm:$0xf]
    %v1032 = vpack.c.bf16 %v1030, %v1028
    %v1033 = vpack.c.bf16 %v1031, %v1029
    %v1034 = vld [vmem:[#allocation21] sm:$0xff]
    %v1035 = vld [vmem:[#allocation21 + $0x8] sm:$0xf]
    %v1036 = vld [vmem:[#allocation21 + $0xc] sm:$0xff]
    %v1037 = vld [vmem:[#allocation21 + $0x14] sm:$0xf]
    %v1038 = vld [vmem:[#allocation21 + $0x18] sm:$0xff]
    %v1039 = vld [vmem:[#allocation21 + $0x20] sm:$0xf]
    %v1040 = vld [vmem:[#allocation21 + $0x24] sm:$0xff]
    %v1041 = vld [vmem:[#allocation21 + $0x2c] sm:$0xf]
    %v1042 = vld [vmem:[#allocation21 + $0x30] sm:$0xff]
    %v1043 = vld [vmem:[#allocation21 + $0x38] sm:$0xf]
    %v1044 = vld [vmem:[#allocation21 + $0x3c] sm:$0xff]
    %v1045 = vld [vmem:[#allocation21 + $0x44] sm:$0xf]
    %v1046 = vld [vmem:[#allocation21 + $0x48] sm:$0xff]
    %v1047 = vld [vmem:[#allocation21 + $0x50] sm:$0xf]
    %v1048 = vld [vmem:[#allocation21 + $0x54] sm:$0xff]
    %v1049 = vld [vmem:[#allocation21 + $0x5c] sm:$0xf]
    %v1050 = vld [vmem:[#allocation21 + $0x60] sm:$0xff]
    %v1051 = vld [vmem:[#allocation21 + $0x68] sm:$0xf]
    %v1052 = vld [vmem:[#allocation21 + $0x6c] sm:$0xff]
    %v1053 = vld [vmem:[#allocation21 + $0x74] sm:$0xf]
    %v1054 = vld [vmem:[#allocation21 + $0x78] sm:$0xff]
    %v1055 = vld [vmem:[#allocation21 + $0x80] sm:$0xf]
    %v1056 = vld [vmem:[#allocation21 + $0x84] sm:$0xff]
    %v1057 = vld [vmem:[#allocation21 + $0x8c] sm:$0xf]
    %v1058 = vld [vmem:[#allocation21 + $0x90] sm:$0xff]
    %v1059 = vld [vmem:[#allocation21 + $0x98] sm:$0xf]
    %v1060 = vld [vmem:[#allocation21 + $0x9c] sm:$0xff]
    %v1061 = vld [vmem:[#allocation21 + $0xa4] sm:$0xf]
    %v1062 = vld [vmem:[#allocation21 + $0xa8] sm:$0xff]
    %v1063 = vld [vmem:[#allocation21 + $0xb0] sm:$0xf]
    %v1064 = vld [vmem:[#allocation21 + $0xb4] sm:$0xff]
    %v1065 = vld [vmem:[#allocation21 + $0xbc] sm:$0xf]
    %v1066 = vld [vmem:[#allocation21 + $0xc0] sm:$0xff]
    %v1067 = vld [vmem:[#allocation21 + $0xc8] sm:$0xf]
    %v1068 = vld [vmem:[#allocation21 + $0xcc] sm:$0xff]
    %v1069 = vld [vmem:[#allocation21 + $0xd4] sm:$0xf]
    %v1070 = vld [vmem:[#allocation21 + $0xd8] sm:$0xff]
    %v1071 = vld [vmem:[#allocation21 + $0xe0] sm:$0xf]
    %v1072 = vld [vmem:[#allocation21 + $0xe4] sm:$0xff]
    %v1073 = vld [vmem:[#allocation21 + $0xec] sm:$0xf]
    %v1074 = vld [vmem:[#allocation21 + $0xf0] sm:$0xff]
    %v1075 = vld [vmem:[#allocation21 + $0xf8] sm:$0xf]
    %v1076 = vld [vmem:[#allocation21 + $0xfc] sm:$0xff]
    %v1077 = vld [vmem:[#allocation21 + $0x104] sm:$0xf]
    %v1078 = vld [vmem:[#allocation21 + $0x108] sm:$0xff]
    %v1079 = vld [vmem:[#allocation21 + $0x110] sm:$0xf]
    %v1080 = vld [vmem:[#allocation21 + $0x114] sm:$0xff]
    %v1081 = vld [vmem:[#allocation21 + $0x11c] sm:$0xf]
    %v1082 = vld [vmem:[#allocation21 + $0x120] sm:$0xff]
    %v1083 = vld [vmem:[#allocation21 + $0x128] sm:$0xf]
    %v1084 = vld [vmem:[#allocation21 + $0x12c] sm:$0xff]
    %v1085 = vld [vmem:[#allocation21 + $0x134] sm:$0xf]
    %v1086 = vld [vmem:[#allocation21 + $0x138] sm:$0xff]
    %v1087 = vld [vmem:[#allocation21 + $0x140] sm:$0xf]
    %v1088 = vld [vmem:[#allocation21 + $0x144] sm:$0xff]
    %v1089 = vld [vmem:[#allocation21 + $0x14c] sm:$0xf]
    %v1090 = vld [vmem:[#allocation3] sm:$0xfc]
    %v1091 = vld [vmem:[#allocation3 + $0x8] sm:$0xfc]
    %v1092 = vld [vmem:[#allocation3 + $0x10] sm:$0x3f]
    %v1093 = vld [vmem:[#allocation3 + $0x18] sm:$0x3f]
    %v1094 = vpack.c.bf16 %v1092, %v1090
    %v1095 = vpack.c.bf16 %v1093, %v1091
    %s1096 = scalar_lea.vmem [#allocation21], 336
    %v1097 = vld [vmem:[%s1096] sm:$0xff]
    %v1098 = vld [vmem:[%s1096 + $0x8] sm:$0xf]
    %v1099 = vld [vmem:[%s1096 + $0xc] sm:$0xff]
    %v1100 = vld [vmem:[%s1096 + $0x14] sm:$0xf]
    %v1101 = vld [vmem:[%s1096 + $0x18] sm:$0xff]
    %v1102 = vld [vmem:[%s1096 + $0x20] sm:$0xf]
    %v1103 = vld [vmem:[%s1096 + $0x24] sm:$0xff]
    %v1104 = vld [vmem:[%s1096 + $0x2c] sm:$0xf]
    %v1105 = vld [vmem:[%s1096 + $0x30] sm:$0xff]
    %v1106 = vld [vmem:[%s1096 + $0x38] sm:$0xf]
    %v1107 = vld [vmem:[%s1096 + $0x3c] sm:$0xff]
    %v1108 = vld [vmem:[%s1096 + $0x44] sm:$0xf]
    %v1109 = vld [vmem:[%s1096 + $0x48] sm:$0xff]
    %v1110 = vld [vmem:[%s1096 + $0x50] sm:$0xf]
    %v1111 = vld [vmem:[%s1096 + $0x54] sm:$0xff]
    %v1112 = vld [vmem:[%s1096 + $0x5c] sm:$0xf]
    %v1113 = vld [vmem:[%s1096 + $0x60] sm:$0xff]
    %v1114 = vld [vmem:[%s1096 + $0x68] sm:$0xf]
    %v1115 = vld [vmem:[%s1096 + $0x6c] sm:$0xff]
    %v1116 = vld [vmem:[%s1096 + $0x74] sm:$0xf]
    %v1117 = vld [vmem:[%s1096 + $0x78] sm:$0xff]
    %v1118 = vld [vmem:[%s1096 + $0x80] sm:$0xf]
    %v1119 = vld [vmem:[%s1096 + $0x84] sm:$0xff]
    %v1120 = vld [vmem:[%s1096 + $0x8c] sm:$0xf]
    %v1121 = vld [vmem:[%s1096 + $0x90] sm:$0xff]
    %v1122 = vld [vmem:[%s1096 + $0x98] sm:$0xf]
    %v1123 = vld [vmem:[%s1096 + $0x9c] sm:$0xff]
    %v1124 = vld [vmem:[%s1096 + $0xa4] sm:$0xf]
    %v1125 = vld [vmem:[%s1096 + $0xa8] sm:$0xff]
    %v1126 = vld [vmem:[%s1096 + $0xb0] sm:$0xf]
    %v1127 = vld [vmem:[%s1096 + $0xb4] sm:$0xff]
    %v1128 = vld [vmem:[%s1096 + $0xbc] sm:$0xf]
    %v1129 = vld [vmem:[%s1096 + $0xc0] sm:$0xff]
    %v1130 = vld [vmem:[%s1096 + $0xc8] sm:$0xf]
    %v1131 = vld [vmem:[%s1096 + $0xcc] sm:$0xff]
    %v1132 = vld [vmem:[%s1096 + $0xd4] sm:$0xf]
    %v1133 = vld [vmem:[%s1096 + $0xd8] sm:$0xff]
    %v1134 = vld [vmem:[%s1096 + $0xe0] sm:$0xf]
    %v1135 = vld [vmem:[%s1096 + $0xe4] sm:$0xff]
    %v1136 = vld [vmem:[%s1096 + $0xec] sm:$0xf]
    %v1137 = vld [vmem:[%s1096 + $0xf0] sm:$0xff]
    %v1138 = vld [vmem:[%s1096 + $0xf8] sm:$0xf]
    %v1139 = vld [vmem:[%s1096 + $0xfc] sm:$0xff]
    %v1140 = vld [vmem:[%s1096 + $0x104] sm:$0xf]
    %v1141 = vld [vmem:[%s1096 + $0x108] sm:$0xff]
    %v1142 = vld [vmem:[%s1096 + $0x110] sm:$0xf]
    %v1143 = vld [vmem:[%s1096 + $0x114] sm:$0xff]
    %v1144 = vld [vmem:[%s1096 + $0x11c] sm:$0xf]
    %v1145 = vld [vmem:[%s1096 + $0x120] sm:$0xff]
    %v1146 = vld [vmem:[%s1096 + $0x128] sm:$0xf]
    %v1147 = vld [vmem:[%s1096 + $0x12c] sm:$0xff]
    %v1148 = vld [vmem:[%s1096 + $0x134] sm:$0xf]
    %v1149 = vld [vmem:[%s1096 + $0x138] sm:$0xff]
    %v1150 = vld [vmem:[%s1096 + $0x140] sm:$0xf]
    %v1151 = vld [vmem:[%s1096 + $0x144] sm:$0xff]
    %v1152 = vld [vmem:[%s1096 + $0x14c] sm:$0xf]
    %v1155 = vrot.slane %v1094, 1
    %v1156 = vrot.slane %v1095, 1
    %v1214 = vunpack.c.l.b16 %v1097
    %v1215 = vunpack.c.h.b16 %v1097
    %v1216 = vunpack.c.l.b16 %v1098
    %v1217 = vunpack.c.l.b16 %v1099
    %v1218 = vunpack.c.h.b16 %v1099
    %v1219 = vunpack.c.l.b16 %v1100
    %v1220 = vunpack.c.l.b16 %v1101
    %v1221 = vunpack.c.h.b16 %v1101
    %v1222 = vunpack.c.l.b16 %v1102
    %v1223 = vunpack.c.l.b16 %v1103
    %v1224 = vunpack.c.h.b16 %v1103
    %v1225 = vunpack.c.l.b16 %v1104
    %v1226 = vunpack.c.l.b16 %v1105
    %v1227 = vunpack.c.h.b16 %v1105
    %v1228 = vunpack.c.l.b16 %v1106
    %v1229 = vunpack.c.l.b16 %v1107
    %v1230 = vunpack.c.h.b16 %v1107
    %v1231 = vunpack.c.l.b16 %v1108
    %v1232 = vunpack.c.l.b16 %v1109
    %v1233 = vunpack.c.h.b16 %v1109
    %v1234 = vunpack.c.l.b16 %v1110
    %v1235 = vunpack.c.l.b16 %v1111
    %v1236 = vunpack.c.h.b16 %v1111
    %v1237 = vunpack.c.l.b16 %v1112
    %v1238 = vunpack.c.l.b16 %v1113
    %v1239 = vunpack.c.h.b16 %v1113
    %v1240 = vunpack.c.l.b16 %v1114
    %v1241 = vunpack.c.l.b16 %v1115
    %v1242 = vunpack.c.h.b16 %v1115
    %v1243 = vunpack.c.l.b16 %v1116
    %v1244 = vunpack.c.l.b16 %v1117
    %v1245 = vunpack.c.h.b16 %v1117
    %v1246 = vunpack.c.l.b16 %v1118
    %v1247 = vunpack.c.l.b16 %v1119
    %v1248 = vunpack.c.h.b16 %v1119
    %v1249 = vunpack.c.l.b16 %v1120
    %v1250 = vunpack.c.l.b16 %v1121
    %v1251 = vunpack.c.h.b16 %v1121
    %v1252 = vunpack.c.l.b16 %v1122
    %v1253 = vunpack.c.l.b16 %v1123
    %v1254 = vunpack.c.h.b16 %v1123
    %v1255 = vunpack.c.l.b16 %v1124
    %v1256 = vunpack.c.l.b16 %v1125
    %v1257 = vunpack.c.h.b16 %v1125
    %v1258 = vunpack.c.l.b16 %v1126
    %v1259 = vunpack.c.l.b16 %v1127
    %v1260 = vunpack.c.h.b16 %v1127
    %v1261 = vunpack.c.l.b16 %v1128
    %v1262 = vunpack.c.l.b16 %v1129
    %v1263 = vunpack.c.h.b16 %v1129
    %v1264 = vunpack.c.l.b16 %v1130
    %v1265 = vunpack.c.l.b16 %v1131
    %v1266 = vunpack.c.h.b16 %v1131
    %v1267 = vunpack.c.l.b16 %v1132
    %v1268 = vunpack.c.l.b16 %v1133
    %v1269 = vunpack.c.h.b16 %v1133
    %v1270 = vunpack.c.l.b16 %v1134
    %v1271 = vunpack.c.l.b16 %v1135
    %v1272 = vunpack.c.h.b16 %v1135
    %v1273 = vunpack.c.l.b16 %v1136
    %v1274 = vunpack.c.l.b16 %v1137
    %v1275 = vunpack.c.h.b16 %v1137
    %v1276 = vunpack.c.l.b16 %v1138
    %v1277 = vunpack.c.l.b16 %v1139
    %v1278 = vunpack.c.h.b16 %v1139
    %v1279 = vunpack.c.l.b16 %v1140
    %v1280 = vunpack.c.l.b16 %v1141
    %v1281 = vunpack.c.h.b16 %v1141
    %v1282 = vunpack.c.l.b16 %v1142
    %v1283 = vunpack.c.l.b16 %v1143
    %v1284 = vunpack.c.h.b16 %v1143
    %v1285 = vunpack.c.l.b16 %v1144
    %v1286 = vunpack.c.l.b16 %v1145
    %v1287 = vunpack.c.h.b16 %v1145
    %v1288 = vunpack.c.l.b16 %v1146
    %v1289 = vunpack.c.l.b16 %v1147
    %v1290 = vunpack.c.h.b16 %v1147
    %v1291 = vunpack.c.l.b16 %v1148
    %v1292 = vunpack.c.l.b16 %v1149
    %v1293 = vunpack.c.h.b16 %v1149
    %v1294 = vunpack.c.l.b16 %v1150
    %v1295 = vunpack.c.l.b16 %v1151
    %v1296 = vunpack.c.h.b16 %v1151
    %v1297 = vunpack.c.l.b16 %v1152
    %v1298 = vpack.c.b16 %v1217, %v1214
    %v1299 = vpack.c.b16 %v1218, %v1215
    %v1300 = vpack.c.b16 %v1219, %v1216
    %v1301 = vpack.c.b16 %v1223, %v1220
    %v1302 = vpack.c.b16 %v1224, %v1221
    %v1303 = vpack.c.b16 %v1225, %v1222
    %v1304 = vpack.c.b16 %v1229, %v1226
    %v1305 = vpack.c.b16 %v1230, %v1227
    %v1306 = vpack.c.b16 %v1231, %v1228
    %v1307 = vpack.c.b16 %v1235, %v1232
    %v1308 = vpack.c.b16 %v1236, %v1233
    %v1309 = vpack.c.b16 %v1237, %v1234
    %v1310 = vpack.c.b16 %v1241, %v1238
    %v1311 = vpack.c.b16 %v1242, %v1239
    %v1312 = vpack.c.b16 %v1243, %v1240
    %v1313 = vpack.c.b16 %v1247, %v1244
    %v1314 = vpack.c.b16 %v1248, %v1245
    %v1315 = vpack.c.b16 %v1249, %v1246
    %v1316 = vpack.c.b16 %v1253, %v1250
    %v1317 = vpack.c.b16 %v1254, %v1251
    %v1318 = vpack.c.b16 %v1255, %v1252
    %v1319 = vpack.c.b16 %v1259, %v1256
    %v1320 = vpack.c.b16 %v1260, %v1257
    %v1321 = vpack.c.b16 %v1261, %v1258
    %v1322 = vpack.c.b16 %v1265, %v1262
    %v1323 = vpack.c.b16 %v1266, %v1263
    %v1324 = vpack.c.b16 %v1267, %v1264
    %v1325 = vpack.c.b16 %v1271, %v1268
    %v1326 = vpack.c.b16 %v1272, %v1269
    %v1327 = vpack.c.b16 %v1273, %v1270
    %v1328 = vpack.c.b16 %v1277, %v1274
    %v1329 = vpack.c.b16 %v1278, %v1275
    %v1330 = vpack.c.b16 %v1279, %v1276
    %v1331 = vpack.c.b16 %v1283, %v1280
    %v1332 = vpack.c.b16 %v1284, %v1281
    %v1333 = vpack.c.b16 %v1285, %v1282
    %v1334 = vpack.c.b16 %v1289, %v1286
    %v1335 = vpack.c.b16 %v1290, %v1287
    %v1336 = vpack.c.b16 %v1291, %v1288
    %v1337 = vpack.c.b16 %v1295, %v1292
    %v1338 = vpack.c.b16 %v1296, %v1293
    %v1339 = vpack.c.b16 %v1297, %v1294
    %v1383 = vsel %vm1023, %v1156, 0
    %1385 = vmatprep.subr.bf16.mxu0 %v1299
    %1386 = vmatpush1.bf16.msra.mxu0 %v1298
    %1387 = vmatprep.subr.bf16.mxu0 %v1302
    %1388 = vmatpush1.bf16.msra.mxu0 %v1301
    %1389 = vmatprep.subr.bf16.mxu0 %v1305
    %1390 = vmatpush1.bf16.msra.mxu0 %v1304
    %1391 = vmatprep.subr.bf16.mxu0 %v1308
    %1392 = vmatpush1.bf16.msra.mxu0 %v1307
    %1393 = vmatprep.subr.bf16.mxu0 %v1311
    %1394 = vmatpush1.bf16.msra.mxu0 %v1310
    %1395 = vmatprep.subr.bf16.mxu0 %v1314
    %1396 = vmatpush1.bf16.msra.mxu0 %v1313
    %1397 = vmatprep.subr.bf16.mxu0 %v1317
    %1398 = vmatpush1.bf16.msra.mxu0 %v1316
    %1399 = vmatprep.subr.bf16.mxu0 %v1320
    %1400 = vmatpush1.bf16.msra.mxu0 %v1319
    %1401 = vmatprep.subr.bf16.mxu0 %v1323
    %1402 = vmatpush1.bf16.msra.mxu0 %v1322
    %1403 = vmatprep.subr.bf16.mxu0 %v1326
    %1404 = vmatpush1.bf16.msra.mxu0 %v1325
    %1405 = vmatprep.subr.bf16.mxu0 %v1329
    %1406 = vmatpush1.bf16.msra.mxu0 %v1328
    %1407 = vmatprep.subr.bf16.mxu0 %v1332
    %1408 = vmatpush1.bf16.msra.mxu0 %v1331
    %1409 = vmatprep.subr.bf16.mxu0 %v1335
    %1410 = vmatpush1.bf16.msra.mxu0 %v1334
    %1411 = vmatprep.subr.bf16.mxu0 %v1338
    %1412 = vmatpush1.bf16.msra.mxu0 %v1337
    %1413 = vmatprep.subr.bf16.mxu0 0
    %1414 = vmatpush1.bf16.msra.mxu0 0
    %1415 = vmatprep.subr.bf16.mxu0 0
    %1416 = vmatpush1.bf16.msra.mxu0 0
    %1417 = vmatprep.mubr.bf16.mxu0 %v1383
    %1418 = vmatmul.mubr.bf16.gmra.mrb[0].mxu0 %v1155
    %v1419 = vpop.f32.mrb[0].mxu0
    %v1420 = vadd.f32 0.0, %v1419
    %v1421 = vpop.f32.mrb[0].mxu0
    %v1422 = vadd.f32 0.0, %v1421
    %v1423 = vpop.f32.mrb[0].mxu0
    %v1424 = vadd.f32 0.0, %v1423
    %v1425 = vpop.f32.mrb[0].mxu0
    %v1426 = vadd.f32 0.0, %v1425
    %1427 = vdwg.mxu0
    %1428 = vmatprep.subr.bf16.mxu0 0
    %1429 = vmatpush1.bf16.msra.mxu0 %v1300
    %1430 = vmatprep.subr.bf16.mxu0 0
    %1431 = vmatpush1.bf16.msra.mxu0 %v1303
    %1432 = vmatprep.subr.bf16.mxu0 0
    %1433 = vmatpush1.bf16.msra.mxu0 %v1306
    %1434 = vmatprep.subr.bf16.mxu0 0
    %1435 = vmatpush1.bf16.msra.mxu0 %v1309
    %1436 = vmatprep.subr.bf16.mxu0 0
    %1437 = vmatpush1.bf16.msra.mxu0 %v1312
    %1438 = vmatprep.subr.bf16.mxu0 0
    %1439 = vmatpush1.bf16.msra.mxu0 %v1315
    %1440 = vmatprep.subr.bf16.mxu0 0
    %1441 = vmatpush1.bf16.msra.mxu0 %v1318
    %1442 = vmatprep.subr.bf16.mxu0 0
    %1443 = vmatpush1.bf16.msra.mxu0 %v1321
    %1444 = vmatprep.subr.bf16.mxu0 0
    %1445 = vmatpush1.bf16.msra.mxu0 %v1324
    %1446 = vmatprep.subr.bf16.mxu0 0
    %1447 = vmatpush1.bf16.msra.mxu0 %v1327
    %1448 = vmatprep.subr.bf16.mxu0 0
    %1449 = vmatpush1.bf16.msra.mxu0 %v1330
    %1450 = vmatprep.subr.bf16.mxu0 0
    %1451 = vmatpush1.bf16.msra.mxu0 %v1333
    %1452 = vmatprep.subr.bf16.mxu0 0
    %1453 = vmatpush1.bf16.msra.mxu0 %v1336
    %1454 = vmatprep.subr.bf16.mxu0 0
    %1455 = vmatpush1.bf16.msra.mxu0 %v1339
    %1456 = vmatprep.subr.bf16.mxu0 0
    %1457 = vmatpush1.bf16.msra.mxu0 0
    %1458 = vmatprep.subr.bf16.mxu0 0
    %1459 = vmatpush1.bf16.msra.mxu0 0
    %1460 = vmatprep.mubr.bf16.mxu0 %v1383
    %1461 = vmatmul.mubr.bf16.gmra.mrb[0].mxu0 %v1155
    %v1462 = vpop.f32.mrb[0].mxu0
    %v1463 = vadd.f32 0.0, %v1462
    %v1464 = vpop.f32.mrb[0].mxu0
    %v1465 = vpop.f32.mrb[0].mxu0
    %v1466 = vadd.f32 0.0, %v1465
    %v1467 = vpop.f32.mrb[0].mxu0
    %1468 = vdwg.mxu0
    %v1525 = vunpack.c.l.b16 %v1034
    %v1526 = vunpack.c.h.b16 %v1034
    %v1527 = vunpack.c.l.b16 %v1035
    %v1528 = vunpack.c.l.b16 %v1036
    %v1529 = vunpack.c.h.b16 %v1036
    %v1530 = vunpack.c.l.b16 %v1037
    %v1531 = vunpack.c.l.b16 %v1038
    %v1532 = vunpack.c.h.b16 %v1038
    %v1533 = vunpack.c.l.b16 %v1039
    %v1534 = vunpack.c.l.b16 %v1040
    %v1535 = vunpack.c.h.b16 %v1040
    %v1536 = vunpack.c.l.b16 %v1041
    %v1537 = vunpack.c.l.b16 %v1042
    %v1538 = vunpack.c.h.b16 %v1042
    %v1539 = vunpack.c.l.b16 %v1043
    %v1540 = vunpack.c.l.b16 %v1044
    %v1541 = vunpack.c.h.b16 %v1044
    %v1542 = vunpack.c.l.b16 %v1045
    %v1543 = vunpack.c.l.b16 %v1046
    %v1544 = vunpack.c.h.b16 %v1046
    %v1545 = vunpack.c.l.b16 %v1047
    %v1546 = vunpack.c.l.b16 %v1048
    %v1547 = vunpack.c.h.b16 %v1048
    %v1548 = vunpack.c.l.b16 %v1049
    %v1549 = vunpack.c.l.b16 %v1050
    %v1550 = vunpack.c.h.b16 %v1050
    %v1551 = vunpack.c.l.b16 %v1051
    %v1552 = vunpack.c.l.b16 %v1052
    %v1553 = vunpack.c.h.b16 %v1052
    %v1554 = vunpack.c.l.b16 %v1053
    %v1555 = vunpack.c.l.b16 %v1054
    %v1556 = vunpack.c.h.b16 %v1054
    %v1557 = vunpack.c.l.b16 %v1055
    %v1558 = vunpack.c.l.b16 %v1056
    %v1559 = vunpack.c.h.b16 %v1056
    %v1560 = vunpack.c.l.b16 %v1057
    %v1561 = vunpack.c.l.b16 %v1058
    %v1562 = vunpack.c.h.b16 %v1058
    %v1563 = vunpack.c.l.b16 %v1059
    %v1564 = vunpack.c.l.b16 %v1060
    %v1565 = vunpack.c.h.b16 %v1060
    %v1566 = vunpack.c.l.b16 %v1061
    %v1567 = vunpack.c.l.b16 %v1062
    %v1568 = vunpack.c.h.b16 %v1062
    %v1569 = vunpack.c.l.b16 %v1063
    %v1570 = vunpack.c.l.b16 %v1064
    %v1571 = vunpack.c.h.b16 %v1064
    %v1572 = vunpack.c.l.b16 %v1065
    %v1573 = vunpack.c.l.b16 %v1066
    %v1574 = vunpack.c.h.b16 %v1066
    %v1575 = vunpack.c.l.b16 %v1067
    %v1576 = vunpack.c.l.b16 %v1068
    %v1577 = vunpack.c.h.b16 %v1068
    %v1578 = vunpack.c.l.b16 %v1069
    %v1579 = vunpack.c.l.b16 %v1070
    %v1580 = vunpack.c.h.b16 %v1070
    %v1581 = vunpack.c.l.b16 %v1071
    %v1582 = vunpack.c.l.b16 %v1072
    %v1583 = vunpack.c.h.b16 %v1072
    %v1584 = vunpack.c.l.b16 %v1073
    %v1585 = vunpack.c.l.b16 %v1074
    %v1586 = vunpack.c.h.b16 %v1074
    %v1587 = vunpack.c.l.b16 %v1075
    %v1588 = vunpack.c.l.b16 %v1076
    %v1589 = vunpack.c.h.b16 %v1076
    %v1590 = vunpack.c.l.b16 %v1077
    %v1591 = vunpack.c.l.b16 %v1078
    %v1592 = vunpack.c.h.b16 %v1078
    %v1593 = vunpack.c.l.b16 %v1079
    %v1594 = vunpack.c.l.b16 %v1080
    %v1595 = vunpack.c.h.b16 %v1080
    %v1596 = vunpack.c.l.b16 %v1081
    %v1597 = vunpack.c.l.b16 %v1082
    %v1598 = vunpack.c.h.b16 %v1082
    %v1599 = vunpack.c.l.b16 %v1083
    %v1600 = vunpack.c.l.b16 %v1084
    %v1601 = vunpack.c.h.b16 %v1084
    %v1602 = vunpack.c.l.b16 %v1085
    %v1603 = vunpack.c.l.b16 %v1086
    %v1604 = vunpack.c.h.b16 %v1086
    %v1605 = vunpack.c.l.b16 %v1087
    %v1606 = vunpack.c.l.b16 %v1088
    %v1607 = vunpack.c.h.b16 %v1088
    %v1608 = vunpack.c.l.b16 %v1089
    %v1609 = vpack.c.b16 %v1528, %v1525
    %v1610 = vpack.c.b16 %v1529, %v1526
    %v1611 = vpack.c.b16 %v1530, %v1527
    %v1612 = vpack.c.b16 %v1534, %v1531
    %v1613 = vpack.c.b16 %v1535, %v1532
    %v1614 = vpack.c.b16 %v1536, %v1533
    %v1615 = vpack.c.b16 %v1540, %v1537
    %v1616 = vpack.c.b16 %v1541, %v1538
    %v1617 = vpack.c.b16 %v1542, %v1539
    %v1618 = vpack.c.b16 %v1546, %v1543
    %v1619 = vpack.c.b16 %v1547, %v1544
    %v1620 = vpack.c.b16 %v1548, %v1545
    %v1621 = vpack.c.b16 %v1552, %v1549
    %v1622 = vpack.c.b16 %v1553, %v1550
    %v1623 = vpack.c.b16 %v1554, %v1551
    %v1624 = vpack.c.b16 %v1558, %v1555
    %v1625 = vpack.c.b16 %v1559, %v1556
    %v1626 = vpack.c.b16 %v1560, %v1557
    %v1627 = vpack.c.b16 %v1564, %v1561
    %v1628 = vpack.c.b16 %v1565, %v1562
    %v1629 = vpack.c.b16 %v1566, %v1563
    %v1630 = vpack.c.b16 %v1570, %v1567
    %v1631 = vpack.c.b16 %v1571, %v1568
    %v1632 = vpack.c.b16 %v1572, %v1569
    %v1633 = vpack.c.b16 %v1576, %v1573
    %v1634 = vpack.c.b16 %v1577, %v1574
    %v1635 = vpack.c.b16 %v1578, %v1575
    %v1636 = vpack.c.b16 %v1582, %v1579
    %v1637 = vpack.c.b16 %v1583, %v1580
    %v1638 = vpack.c.b16 %v1584, %v1581
    %v1639 = vpack.c.b16 %v1588, %v1585
    %v1640 = vpack.c.b16 %v1589, %v1586
    %v1641 = vpack.c.b16 %v1590, %v1587
    %v1642 = vpack.c.b16 %v1594, %v1591
    %v1643 = vpack.c.b16 %v1595, %v1592
    %v1644 = vpack.c.b16 %v1596, %v1593
    %v1645 = vpack.c.b16 %v1600, %v1597
    %v1646 = vpack.c.b16 %v1601, %v1598
    %v1647 = vpack.c.b16 %v1602, %v1599
    %v1648 = vpack.c.b16 %v1606, %v1603
    %v1649 = vpack.c.b16 %v1607, %v1604
    %v1650 = vpack.c.b16 %v1608, %v1605
    %v1694 = vsel %vm1023, %v1033, 0
    %1696 = vmatprep.subr.bf16.mxu0 %v1610
    %1697 = vmatpush1.bf16.msra.mxu0 %v1609
    %1698 = vmatprep.subr.bf16.mxu0 %v1613
    %1699 = vmatpush1.bf16.msra.mxu0 %v1612
    %1700 = vmatprep.subr.bf16.mxu0 %v1616
    %1701 = vmatpush1.bf16.msra.mxu0 %v1615
    %1702 = vmatprep.subr.bf16.mxu0 %v1619
    %1703 = vmatpush1.bf16.msra.mxu0 %v1618
    %1704 = vmatprep.subr.bf16.mxu0 %v1622
    %1705 = vmatpush1.bf16.msra.mxu0 %v1621
    %1706 = vmatprep.subr.bf16.mxu0 %v1625
    %1707 = vmatpush1.bf16.msra.mxu0 %v1624
    %1708 = vmatprep.subr.bf16.mxu0 %v1628
    %1709 = vmatpush1.bf16.msra.mxu0 %v1627
    %1710 = vmatprep.subr.bf16.mxu0 %v1631
    %1711 = vmatpush1.bf16.msra.mxu0 %v1630
    %1712 = vmatprep.subr.bf16.mxu0 %v1634
    %1713 = vmatpush1.bf16.msra.mxu0 %v1633
    %1714 = vmatprep.subr.bf16.mxu0 %v1637
    %1715 = vmatpush1.bf16.msra.mxu0 %v1636
    %1716 = vmatprep.subr.bf16.mxu0 %v1640
    %1717 = vmatpush1.bf16.msra.mxu0 %v1639
    %1718 = vmatprep.subr.bf16.mxu0 %v1643
    %1719 = vmatpush1.bf16.msra.mxu0 %v1642
    %1720 = vmatprep.subr.bf16.mxu0 %v1646
    %1721 = vmatpush1.bf16.msra.mxu0 %v1645
    %1722 = vmatprep.subr.bf16.mxu0 %v1649
    %1723 = vmatpush1.bf16.msra.mxu0 %v1648
    %1724 = vmatprep.subr.bf16.mxu0 0
    %1725 = vmatpush1.bf16.msra.mxu0 0
    %1726 = vmatprep.subr.bf16.mxu0 0
    %1727 = vmatpush1.bf16.msra.mxu0 0
    %1728 = vmatprep.mubr.bf16.mxu0 %v1694
    %1729 = vmatmul.mubr.bf16.gmra.mrb[0].mxu0 %v1032
    %v1730 = vpop.f32.mrb[0].mxu0
    %v1731 = vadd.f32 %v1420, %v1730
    %v1732 = vpop.f32.mrb[0].mxu0
    %v1733 = vadd.f32 %v1422, %v1732
    %v1734 = vpop.f32.mrb[0].mxu0
    %v1735 = vadd.f32 %v1424, %v1734
    %v1736 = vpop.f32.mrb[0].mxu0
    %v1737 = vadd.f32 %v1426, %v1736
    %1738 = vdwg.mxu0
    %1739 = vmatprep.subr.bf16.mxu0 0
    %1740 = vmatpush1.bf16.msra.mxu0 %v1611
    %1741 = vmatprep.subr.bf16.mxu0 0
    %1742 = vmatpush1.bf16.msra.mxu0 %v1614
    %1743 = vmatprep.subr.bf16.mxu0 0
    %1744 = vmatpush1.bf16.msra.mxu0 %v1617
    %1745 = vmatprep.subr.bf16.mxu0 0
    %1746 = vmatpush1.bf16.msra.mxu0 %v1620
    %1747 = vmatprep.subr.bf16.mxu0 0
    %1748 = vmatpush1.bf16.msra.mxu0 %v1623
    %1749 = vmatprep.subr.bf16.mxu0 0
    %1750 = vmatpush1.bf16.msra.mxu0 %v1626
    %1751 = vmatprep.subr.bf16.mxu0 0
    %1752 = vmatpush1.bf16.msra.mxu0 %v1629
    %1753 = vmatprep.subr.bf16.mxu0 0
    %1754 = vmatpush1.bf16.msra.mxu0 %v1632
    %1755 = vmatprep.subr.bf16.mxu0 0
    %1756 = vmatpush1.bf16.msra.mxu0 %v1635
    %1757 = vmatprep.subr.bf16.mxu0 0
    %1758 = vmatpush1.bf16.msra.mxu0 %v1638
    %1759 = vmatprep.subr.bf16.mxu0 0
    %1760 = vmatpush1.bf16.msra.mxu0 %v1641
    %1761 = vmatprep.subr.bf16.mxu0 0
    %1762 = vmatpush1.bf16.msra.mxu0 %v1644
    %1763 = vmatprep.subr.bf16.mxu0 0
    %1764 = vmatpush1.bf16.msra.mxu0 %v1647
    %1765 = vmatprep.subr.bf16.mxu0 0
    %1766 = vmatpush1.bf16.msra.mxu0 %v1650
    %1767 = vmatprep.subr.bf16.mxu0 0
    %1768 = vmatpush1.bf16.msra.mxu0 0
    %1769 = vmatprep.subr.bf16.mxu0 0
    %1770 = vmatpush1.bf16.msra.mxu0 0
    %1771 = vmatprep.mubr.bf16.mxu0 %v1694
    %1772 = vmatmul.mubr.bf16.gmra.mrb[0].mxu0 %v1032
    %v1773 = vpop.f32.mrb[0].mxu0
    %v1774 = vadd.f32 %v1463, %v1773
    %v1775 = vpop.f32.mrb[0].mxu0
    %v1776 = vpop.f32.mrb[0].mxu0
    %v1777 = vadd.f32 %v1466, %v1776
    %v1778 = vpop.f32.mrb[0].mxu0
    %1779 = vdwg.mxu0
    %v1780 = vld [vmem:[#allocation23] sm:$0x7]
    %v1782 = vlaneseq
    %v1783 = vshrl.u32 %v1782, 7
    %v1784 = vsub.s32 0, %v1783
    %v1785 = vrot.slane %v1780, %v1784
    %v1786 = vlaneseq
    %v1787 = vshrl.u32 %v1786, 7
    %v1788 = vsub.s32 1, %v1787
    %v1789 = vrot.slane %v1780, %v1788
    %v1790 = vlaneseq
    %v1791 = vshrl.u32 %v1790, 7
    %v1792 = vsub.s32 2, %v1791
    %v1793 = vrot.slane %v1780, %v1792
    %v1797 = vadd.f32 %v1731, %v1785
    %v1798 = vadd.f32 %v1733, %v1789
    %v1799 = vadd.f32 %v1774, %v1793
    %v1800 = vadd.f32 %v1735, %v1785
    %v1801 = vadd.f32 %v1737, %v1789
    %v1802 = vadd.f32 %v1777, %v1793
    %v1803 = vmax.f32 %v1797, 0.0
    %v1804 = vmax.f32 %v1798, 0.0
    %v1805 = vmax.f32 %v1799, 0.0
    %v1806 = vmax.f32 %v1800, 0.0
    %v1807 = vmax.f32 %v1801, 0.0
    %v1808 = vmax.f32 %v1802, 0.0
    %1809 = vst [vmem:[#allocation4] sm:$0xff] %v1803
    %1810 = vst [vmem:[#allocation4 + $0x8] sm:$0xff] %v1804
    %1811 = vst [vmem:[#allocation4 + $0x10] sm:$0xff] %v1805
    %1812 = vst [vmem:[#allocation4 + $0x18] sm:$0xf] %v1806
    %1813 = vst [vmem:[#allocation4 + $0x20] sm:$0xf] %v1807
    %1814 = vst [vmem:[#allocation4 + $0x28] sm:$0xf] %v1808
    %v1815 = vld [vmem:[#allocation4] sm:$0x3]
    %v1816 = vld [vmem:[#allocation4 + $0x8] sm:$0x3]
    %v1817 = vld [vmem:[#allocation4 + $0x10] sm:$0x3]
    %v1818 = vpack.c.bf16 %v1815, %v1815
    %v1819 = vpack.c.bf16 %v1816, %v1816
    %v1820 = vpack.c.bf16 %v1817, %v1817
    %v1821 = vld [vmem:[#allocation24] sm:$0xff]
    %v1822 = vld [vmem:[#allocation24 + $0x8] sm:$0xff]
    %v1823 = vld [vmem:[#allocation24 + $0x10] sm:$0xff]
    %v1824 = vld [vmem:[#allocation24 + $0x18] sm:$0xff]
    %v1825 = vld [vmem:[#allocation24 + $0x20] sm:$0xff]
    %v1826 = vld [vmem:[#allocation24 + $0x28] sm:$0xff]
    %v1827 = vld [vmem:[#allocation24 + $0x30] sm:$0xff]
    %v1828 = vld [vmem:[#allocation24 + $0x38] sm:$0xff]
    %v1829 = vld [vmem:[#allocation24 + $0x40] sm:$0xff]
    %v1830 = vld [vmem:[#allocation24 + $0x48] sm:$0xff]
    %v1831 = vld [vmem:[#allocation24 + $0x50] sm:$0xff]
    %v1832 = vld [vmem:[#allocation24 + $0x58] sm:$0xff]
    %v1833 = vld [vmem:[#allocation24 + $0x60] sm:$0xff]
    %v1834 = vld [vmem:[#allocation24 + $0x68] sm:$0xff]
    %v1835 = vld [vmem:[#allocation24 + $0x70] sm:$0xff]
    %v1836 = vld [vmem:[#allocation24 + $0x78] sm:$0xff]
    %v1837 = vld [vmem:[#allocation24 + $0x80] sm:$0xff]
    %v1838 = vld [vmem:[#allocation24 + $0x88] sm:$0xff]
    %v1839 = vld [vmem:[#allocation24 + $0x90] sm:$0xff]
    %v1840 = vld [vmem:[#allocation24 + $0x98] sm:$0xff]
    %v1841 = vld [vmem:[#allocation24 + $0xa0] sm:$0xff]
    %v1842 = vld [vmem:[#allocation24 + $0xa8] sm:$0xff]
    %v1843 = vld [vmem:[#allocation24 + $0xb0] sm:$0xff]
    %v1844 = vld [vmem:[#allocation24 + $0xb8] sm:$0xff]
    %v1845 = vld [vmem:[#allocation24 + $0xc0] sm:$0xff]
    %v1846 = vld [vmem:[#allocation24 + $0xc8] sm:$0xff]
    %v1847 = vld [vmem:[#allocation24 + $0xd0] sm:$0xff]
    %v1848 = vld [vmem:[#allocation24 + $0xd8] sm:$0xff]
    %v1849 = vld [vmem:[#allocation24 + $0xe0] sm:$0xff]
    %v1850 = vld [vmem:[#allocation24 + $0xe8] sm:$0xff]
    %v1851 = vld [vmem:[#allocation24 + $0xf0] sm:$0xff]
    %v1852 = vld [vmem:[#allocation24 + $0xf8] sm:$0xff]
    %v1853 = vld [vmem:[#allocation24 + $0x100] sm:$0xff]
    %v1854 = vld [vmem:[#allocation24 + $0x108] sm:$0xff]
    %v1855 = vld [vmem:[#allocation24 + $0x110] sm:$0xff]
    %v1856 = vld [vmem:[#allocation24 + $0x118] sm:$0xff]
    %v1857 = vld [vmem:[#allocation24 + $0x120] sm:$0xff]
    %v1858 = vld [vmem:[#allocation24 + $0x128] sm:$0xff]
    %v1859 = vld [vmem:[#allocation24 + $0x130] sm:$0xff]
    %v1860 = vld [vmem:[#allocation24 + $0x138] sm:$0xff]
    %v1861 = vld [vmem:[#allocation24 + $0x140] sm:$0xff]
    %v1862 = vld [vmem:[#allocation24 + $0x148] sm:$0xff]
    %v1863 = vld [vmem:[#allocation24 + $0x150] sm:$0xff]
    %v1864 = vld [vmem:[#allocation24 + $0x158] sm:$0xff]
    %v1865 = vld [vmem:[#allocation24 + $0x160] sm:$0xff]
    %v1866 = vld [vmem:[#allocation24 + $0x168] sm:$0xff]
    %v1867 = vld [vmem:[#allocation24 + $0x170] sm:$0xff]
    %v1868 = vld [vmem:[#allocation24 + $0x178] sm:$0xff]
    %v1869 = vld [vmem:[#allocation4] sm:$0xc]
    %v1870 = vld [vmem:[#allocation4 + $0x8] sm:$0xc]
    %v1871 = vld [vmem:[#allocation4 + $0x10] sm:$0xc]
    %v1872 = vpack.c.bf16 %v1869, %v1869
    %v1873 = vpack.c.bf16 %v1870, %v1870
    %v1874 = vpack.c.bf16 %v1871, %v1871
    %s1875 = scalar_lea.vmem [#allocation24], 384
    %v1876 = vld [vmem:[%s1875] sm:$0xff]
    %v1877 = vld [vmem:[%s1875 + $0x8] sm:$0xff]
    %v1878 = vld [vmem:[%s1875 + $0x10] sm:$0xff]
    %v1879 = vld [vmem:[%s1875 + $0x18] sm:$0xff]
    %v1880 = vld [vmem:[%s1875 + $0x20] sm:$0xff]
    %v1881 = vld [vmem:[%s1875 + $0x28] sm:$0xff]
    %v1882 = vld [vmem:[%s1875 + $0x30] sm:$0xff]
    %v1883 = vld [vmem:[%s1875 + $0x38] sm:$0xff]
    %v1884 = vld [vmem:[%s1875 + $0x40] sm:$0xff]
    %v1885 = vld [vmem:[%s1875 + $0x48] sm:$0xff]
    %v1886 = vld [vmem:[%s1875 + $0x50] sm:$0xff]
    %v1887 = vld [vmem:[%s1875 + $0x58] sm:$0xff]
    %v1888 = vld [vmem:[%s1875 + $0x60] sm:$0xff]
    %v1889 = vld [vmem:[%s1875 + $0x68] sm:$0xff]
    %v1890 = vld [vmem:[%s1875 + $0x70] sm:$0xff]
    %v1891 = vld [vmem:[%s1875 + $0x78] sm:$0xff]
    %v1892 = vld [vmem:[%s1875 + $0x80] sm:$0xff]
    %v1893 = vld [vmem:[%s1875 + $0x88] sm:$0xff]
    %v1894 = vld [vmem:[%s1875 + $0x90] sm:$0xff]
    %v1895 = vld [vmem:[%s1875 + $0x98] sm:$0xff]
    %v1896 = vld [vmem:[%s1875 + $0xa0] sm:$0xff]
    %v1897 = vld [vmem:[%s1875 + $0xa8] sm:$0xff]
    %v1898 = vld [vmem:[%s1875 + $0xb0] sm:$0xff]
    %v1899 = vld [vmem:[%s1875 + $0xb8] sm:$0xff]
    %v1900 = vld [vmem:[%s1875 + $0xc0] sm:$0xff]
    %v1901 = vld [vmem:[%s1875 + $0xc8] sm:$0xff]
    %v1902 = vld [vmem:[%s1875 + $0xd0] sm:$0xff]
    %v1903 = vld [vmem:[%s1875 + $0xd8] sm:$0xff]
    %v1904 = vld [vmem:[%s1875 + $0xe0] sm:$0xff]
    %v1905 = vld [vmem:[%s1875 + $0xe8] sm:$0xff]
    %v1906 = vld [vmem:[%s1875 + $0xf0] sm:$0xff]
    %v1907 = vld [vmem:[%s1875 + $0xf8] sm:$0xff]
    %v1908 = vld [vmem:[%s1875 + $0x100] sm:$0xff]
    %v1909 = vld [vmem:[%s1875 + $0x108] sm:$0xff]
    %v1910 = vld [vmem:[%s1875 + $0x110] sm:$0xff]
    %v1911 = vld [vmem:[%s1875 + $0x118] sm:$0xff]
    %v1912 = vld [vmem:[%s1875 + $0x120] sm:$0xff]
    %v1913 = vld [vmem:[%s1875 + $0x128] sm:$0xff]
    %v1914 = vld [vmem:[%s1875 + $0x130] sm:$0xff]
    %v1915 = vld [vmem:[%s1875 + $0x138] sm:$0xff]
    %v1916 = vld [vmem:[%s1875 + $0x140] sm:$0xff]
    %v1917 = vld [vmem:[%s1875 + $0x148] sm:$0xff]
    %v1918 = vld [vmem:[%s1875 + $0x150] sm:$0xff]
    %v1919 = vld [vmem:[%s1875 + $0x158] sm:$0xff]
    %v1920 = vld [vmem:[%s1875 + $0x160] sm:$0xff]
    %v1921 = vld [vmem:[%s1875 + $0x168] sm:$0xff]
    %v1922 = vld [vmem:[%s1875 + $0x170] sm:$0xff]
    %v1923 = vld [vmem:[%s1875 + $0x178] sm:$0xff]
    %v1927 = vrot.slane %v1872, 1
    %v1928 = vrot.slane %v1873, 1
    %v1929 = vrot.slane %v1874, 1
    %v1981 = vunpack.c.l.b16 %v1876
    %v1982 = vunpack.c.h.b16 %v1876
    %v1983 = vunpack.c.l.b16 %v1877
    %v1984 = vunpack.c.h.b16 %v1877
    %v1985 = vunpack.c.l.b16 %v1878
    %v1986 = vunpack.c.h.b16 %v1878
    %v1987 = vunpack.c.l.b16 %v1879
    %v1988 = vunpack.c.h.b16 %v1879
    %v1989 = vunpack.c.l.b16 %v1880
    %v1990 = vunpack.c.h.b16 %v1880
    %v1991 = vunpack.c.l.b16 %v1881
    %v1992 = vunpack.c.h.b16 %v1881
    %v1993 = vunpack.c.l.b16 %v1882
    %v1994 = vunpack.c.h.b16 %v1882
    %v1995 = vunpack.c.l.b16 %v1883
    %v1996 = vunpack.c.h.b16 %v1883
    %v1997 = vunpack.c.l.b16 %v1884
    %v1998 = vunpack.c.h.b16 %v1884
    %v1999 = vunpack.c.l.b16 %v1885
    %v2000 = vunpack.c.h.b16 %v1885
    %v2001 = vunpack.c.l.b16 %v1886
    %v2002 = vunpack.c.h.b16 %v1886
    %v2003 = vunpack.c.l.b16 %v1887
    %v2004 = vunpack.c.h.b16 %v1887
    %v2005 = vunpack.c.l.b16 %v1888
    %v2006 = vunpack.c.h.b16 %v1888
    %v2007 = vunpack.c.l.b16 %v1889
    %v2008 = vunpack.c.h.b16 %v1889
    %v2009 = vunpack.c.l.b16 %v1890
    %v2010 = vunpack.c.h.b16 %v1890
    %v2011 = vunpack.c.l.b16 %v1891
    %v2012 = vunpack.c.h.b16 %v1891
    %v2013 = vunpack.c.l.b16 %v1892
    %v2014 = vunpack.c.h.b16 %v1892
    %v2015 = vunpack.c.l.b16 %v1893
    %v2016 = vunpack.c.h.b16 %v1893
    %v2017 = vunpack.c.l.b16 %v1894
    %v2018 = vunpack.c.h.b16 %v1894
    %v2019 = vunpack.c.l.b16 %v1895
    %v2020 = vunpack.c.h.b16 %v1895
    %v2021 = vunpack.c.l.b16 %v1896
    %v2022 = vunpack.c.h.b16 %v1896
    %v2023 = vunpack.c.l.b16 %v1897
    %v2024 = vunpack.c.h.b16 %v1897
    %v2025 = vunpack.c.l.b16 %v1898
    %v2026 = vunpack.c.h.b16 %v1898
    %v2027 = vunpack.c.l.b16 %v1899
    %v2028 = vunpack.c.h.b16 %v1899
    %v2029 = vunpack.c.l.b16 %v1900
    %v2030 = vunpack.c.h.b16 %v1900
    %v2031 = vunpack.c.l.b16 %v1901
    %v2032 = vunpack.c.h.b16 %v1901
    %v2033 = vunpack.c.l.b16 %v1902
    %v2034 = vunpack.c.h.b16 %v1902
    %v2035 = vunpack.c.l.b16 %v1903
    %v2036 = vunpack.c.h.b16 %v1903
    %v2037 = vunpack.c.l.b16 %v1904
    %v2038 = vunpack.c.h.b16 %v1904
    %v2039 = vunpack.c.l.b16 %v1905
    %v2040 = vunpack.c.h.b16 %v1905
    %v2041 = vunpack.c.l.b16 %v1906
    %v2042 = vunpack.c.h.b16 %v1906
    %v2043 = vunpack.c.l.b16 %v1907
    %v2044 = vunpack.c.h.b16 %v1907
    %v2045 = vunpack.c.l.b16 %v1908
    %v2046 = vunpack.c.h.b16 %v1908
    %v2047 = vunpack.c.l.b16 %v1909
    %v2048 = vunpack.c.h.b16 %v1909
    %v2049 = vunpack.c.l.b16 %v1910
    %v2050 = vunpack.c.h.b16 %v1910
    %v2051 = vunpack.c.l.b16 %v1911
    %v2052 = vunpack.c.h.b16 %v1911
    %v2053 = vunpack.c.l.b16 %v1912
    %v2054 = vunpack.c.h.b16 %v1912
    %v2055 = vunpack.c.l.b16 %v1913
    %v2056 = vunpack.c.h.b16 %v1913
    %v2057 = vunpack.c.l.b16 %v1914
    %v2058 = vunpack.c.h.b16 %v1914
    %v2059 = vunpack.c.l.b16 %v1915
    %v2060 = vunpack.c.h.b16 %v1915
    %v2061 = vunpack.c.l.b16 %v1916
    %v2062 = vunpack.c.h.b16 %v1916
    %v2063 = vunpack.c.l.b16 %v1917
    %v2064 = vunpack.c.h.b16 %v1917
    %v2065 = vunpack.c.l.b16 %v1918
    %v2066 = vunpack.c.h.b16 %v1918
    %v2067 = vunpack.c.l.b16 %v1919
    %v2068 = vunpack.c.h.b16 %v1919
    %v2069 = vunpack.c.l.b16 %v1920
    %v2070 = vunpack.c.h.b16 %v1920
    %v2071 = vunpack.c.l.b16 %v1921
    %v2072 = vunpack.c.h.b16 %v1921
    %v2073 = vunpack.c.l.b16 %v1922
    %v2074 = vunpack.c.h.b16 %v1922
    %v2075 = vunpack.c.l.b16 %v1923
    %v2076 = vunpack.c.h.b16 %v1923
    %v2077 = vpack.c.b16 %v1983, %v1981
    %v2078 = vpack.c.b16 %v1984, %v1982
    %v2079 = vpack.c.b16 %v1987, %v1985
    %v2080 = vpack.c.b16 %v1988, %v1986
    %v2081 = vpack.c.b16 %v1991, %v1989
    %v2082 = vpack.c.b16 %v1992, %v1990
    %v2083 = vpack.c.b16 %v1995, %v1993
    %v2084 = vpack.c.b16 %v1996, %v1994
    %v2085 = vpack.c.b16 %v1999, %v1997
    %v2086 = vpack.c.b16 %v2000, %v1998
    %v2087 = vpack.c.b16 %v2003, %v2001
    %v2088 = vpack.c.b16 %v2004, %v2002
    %v2089 = vpack.c.b16 %v2007, %v2005
    %v2090 = vpack.c.b16 %v2008, %v2006
    %v2091 = vpack.c.b16 %v2011, %v2009
    %v2092 = vpack.c.b16 %v2012, %v2010
    %v2093 = vpack.c.b16 %v2015, %v2013
    %v2094 = vpack.c.b16 %v2016, %v2014
    %v2095 = vpack.c.b16 %v2019, %v2017
    %v2096 = vpack.c.b16 %v2020, %v2018
    %v2097 = vpack.c.b16 %v2023, %v2021
    %v2098 = vpack.c.b16 %v2024, %v2022
    %v2099 = vpack.c.b16 %v2027, %v2025
    %v2100 = vpack.c.b16 %v2028, %v2026
    %v2101 = vpack.c.b16 %v2031, %v2029
    %v2102 = vpack.c.b16 %v2032, %v2030
    %v2103 = vpack.c.b16 %v2035, %v2033
    %v2104 = vpack.c.b16 %v2036, %v2034
    %v2105 = vpack.c.b16 %v2039, %v2037
    %v2106 = vpack.c.b16 %v2040, %v2038
    %v2107 = vpack.c.b16 %v2043, %v2041
    %v2108 = vpack.c.b16 %v2044, %v2042
    %v2109 = vpack.c.b16 %v2047, %v2045
    %v2110 = vpack.c.b16 %v2048, %v2046
    %v2111 = vpack.c.b16 %v2051, %v2049
    %v2112 = vpack.c.b16 %v2052, %v2050
    %v2113 = vpack.c.b16 %v2055, %v2053
    %v2114 = vpack.c.b16 %v2056, %v2054
    %v2115 = vpack.c.b16 %v2059, %v2057
    %v2116 = vpack.c.b16 %v2060, %v2058
    %v2117 = vpack.c.b16 %v2063, %v2061
    %v2118 = vpack.c.b16 %v2064, %v2062
    %v2119 = vpack.c.b16 %v2067, %v2065
    %v2120 = vpack.c.b16 %v2068, %v2066
    %v2121 = vpack.c.b16 %v2071, %v2069
    %v2122 = vpack.c.b16 %v2072, %v2070
    %v2123 = vpack.c.b16 %v2075, %v2073
    %v2124 = vpack.c.b16 %v2076, %v2074
    %2173 = vmatprep.subr.bf16.mxu0 %v2078
    %2174 = vmatpush1.bf16.msra.mxu0 %v2077
    %2175 = vmatprep.subr.bf16.mxu0 %v2080
    %2176 = vmatpush1.bf16.msra.mxu0 %v2079
    %2177 = vmatprep.subr.bf16.mxu0 %v2082
    %2178 = vmatpush1.bf16.msra.mxu0 %v2081
    %2179 = vmatprep.subr.bf16.mxu0 %v2084
    %2180 = vmatpush1.bf16.msra.mxu0 %v2083
    %2181 = vmatprep.subr.bf16.mxu0 %v2086
    %2182 = vmatpush1.bf16.msra.mxu0 %v2085
    %2183 = vmatprep.subr.bf16.mxu0 %v2088
    %2184 = vmatpush1.bf16.msra.mxu0 %v2087
    %2185 = vmatprep.subr.bf16.mxu0 %v2090
    %2186 = vmatpush1.bf16.msra.mxu0 %v2089
    %2187 = vmatprep.subr.bf16.mxu0 %v2092
    %2188 = vmatpush1.bf16.msra.mxu0 %v2091
    %2189 = vmatprep.subr.bf16.mxu0 %v2094
    %2190 = vmatpush1.bf16.msra.mxu0 %v2093
    %2191 = vmatprep.subr.bf16.mxu0 %v2096
    %2192 = vmatpush1.bf16.msra.mxu0 %v2095
    %2193 = vmatprep.subr.bf16.mxu0 %v2098
    %2194 = vmatpush1.bf16.msra.mxu0 %v2097
    %2195 = vmatprep.subr.bf16.mxu0 %v2100
    %2196 = vmatpush1.bf16.msra.mxu0 %v2099
    %2197 = vmatprep.subr.bf16.mxu0 %v2102
    %2198 = vmatpush1.bf16.msra.mxu0 %v2101
    %2199 = vmatprep.subr.bf16.mxu0 %v2104
    %2200 = vmatpush1.bf16.msra.mxu0 %v2103
    %2201 = vmatprep.subr.bf16.mxu0 %v2106
    %2202 = vmatpush1.bf16.msra.mxu0 %v2105
    %2203 = vmatprep.subr.bf16.mxu0 %v2108
    %2204 = vmatpush1.bf16.msra.mxu0 %v2107
    %2205 = vmatprep.mubr.bf16.mxu0 %v1928
    %2206 = vmatmul.mubr.bf16.gmra.mrb[0].mxu0 %v1927
    %v2207 = vpop.f32.mrb[0].mxu0
    %v2208 = vadd.f32 0.0, %v2207
    %v2209 = vpop.f32.mrb[0].mxu0
    %v2210 = vadd.f32 0.0, %v2209
    %v2211 = vpop.f32.mrb[0].mxu0
    %v2212 = vpop.f32.mrb[0].mxu0
    %2213 = vdwg.mxu0
    %2214 = vmatprep.subr.bf16.mxu0 %v2110
    %2215 = vmatpush1.bf16.msra.mxu0 %v2109
    %2216 = vmatprep.subr.bf16.mxu0 %v2112
    %2217 = vmatpush1.bf16.msra.mxu0 %v2111
    %2218 = vmatprep.subr.bf16.mxu0 %v2114
    %2219 = vmatpush1.bf16.msra.mxu0 %v2113
    %2220 = vmatprep.subr.bf16.mxu0 %v2116
    %2221 = vmatpush1.bf16.msra.mxu0 %v2115
    %2222 = vmatprep.subr.bf16.mxu0 %v2118
    %2223 = vmatpush1.bf16.msra.mxu0 %v2117
    %2224 = vmatprep.subr.bf16.mxu0 %v2120
    %2225 = vmatpush1.bf16.msra.mxu0 %v2119
    %2226 = vmatprep.subr.bf16.mxu0 %v2122
    %2227 = vmatpush1.bf16.msra.mxu0 %v2121
    %2228 = vmatprep.subr.bf16.mxu0 %v2124
    %2229 = vmatpush1.bf16.msra.mxu0 %v2123
    %2230 = vmatprep.subr.bf16.mxu0 0
    %2231 = vmatpush1.bf16.msra.mxu0 0
    %2232 = vmatprep.subr.bf16.mxu0 0
    %2233 = vmatpush1.bf16.msra.mxu0 0
    %2234 = vmatprep.subr.bf16.mxu0 0
    %2235 = vmatpush1.bf16.msra.mxu0 0
    %2236 = vmatprep.subr.bf16.mxu0 0
    %2237 = vmatpush1.bf16.msra.mxu0 0
    %2238 = vmatprep.subr.bf16.mxu0 0
    %2239 = vmatpush1.bf16.msra.mxu0 0
    %2240 = vmatprep.subr.bf16.mxu0 0
    %2241 = vmatpush1.bf16.msra.mxu0 0
    %2242 = vmatprep.subr.bf16.mxu0 0
    %2243 = vmatpush1.bf16.msra.mxu0 0
    %2244 = vmatprep.subr.bf16.mxu0 0
    %2245 = vmatpush1.bf16.msra.mxu0 0
    %2246 = vmatprep.mubr.bf16.mxu0 0
    %2247 = vmatmul.mubr.bf16.gmra.mrb[0].mxu0 %v1929
    %v2248 = vpop.f32.mrb[0].mxu0
    %v2249 = vadd.f32 %v2208, %v2248
    %v2250 = vpop.f32.mrb[0].mxu0
    %v2251 = vadd.f32 %v2210, %v2250
    %v2252 = vpop.f32.mrb[0].mxu0
    %v2253 = vpop.f32.mrb[0].mxu0
    %2254 = vdwg.mxu0
    %v2303 = vunpack.c.l.b16 %v1821
    %v2304 = vunpack.c.h.b16 %v1821
    %v2305 = vunpack.c.l.b16 %v1822
    %v2306 = vunpack.c.h.b16 %v1822
    %v2307 = vunpack.c.l.b16 %v1823
    %v2308 = vunpack.c.h.b16 %v1823
    %v2309 = vunpack.c.l.b16 %v1824
    %v2310 = vunpack.c.h.b16 %v1824
    %v2311 = vunpack.c.l.b16 %v1825
    %v2312 = vunpack.c.h.b16 %v1825
    %v2313 = vunpack.c.l.b16 %v1826
    %v2314 = vunpack.c.h.b16 %v1826
    %v2315 = vunpack.c.l.b16 %v1827
    %v2316 = vunpack.c.h.b16 %v1827
    %v2317 = vunpack.c.l.b16 %v1828
    %v2318 = vunpack.c.h.b16 %v1828
    %v2319 = vunpack.c.l.b16 %v1829
    %v2320 = vunpack.c.h.b16 %v1829
    %v2321 = vunpack.c.l.b16 %v1830
    %v2322 = vunpack.c.h.b16 %v1830
    %v2323 = vunpack.c.l.b16 %v1831
    %v2324 = vunpack.c.h.b16 %v1831
    %v2325 = vunpack.c.l.b16 %v1832
    %v2326 = vunpack.c.h.b16 %v1832
    %v2327 = vunpack.c.l.b16 %v1833
    %v2328 = vunpack.c.h.b16 %v1833
    %v2329 = vunpack.c.l.b16 %v1834
    %v2330 = vunpack.c.h.b16 %v1834
    %v2331 = vunpack.c.l.b16 %v1835
    %v2332 = vunpack.c.h.b16 %v1835
    %v2333 = vunpack.c.l.b16 %v1836
    %v2334 = vunpack.c.h.b16 %v1836
    %v2335 = vunpack.c.l.b16 %v1837
    %v2336 = vunpack.c.h.b16 %v1837
    %v2337 = vunpack.c.l.b16 %v1838
    %v2338 = vunpack.c.h.b16 %v1838
    %v2339 = vunpack.c.l.b16 %v1839
    %v2340 = vunpack.c.h.b16 %v1839
    %v2341 = vunpack.c.l.b16 %v1840
    %v2342 = vunpack.c.h.b16 %v1840
    %v2343 = vunpack.c.l.b16 %v1841
    %v2344 = vunpack.c.h.b16 %v1841
    %v2345 = vunpack.c.l.b16 %v1842
    %v2346 = vunpack.c.h.b16 %v1842
    %v2347 = vunpack.c.l.b16 %v1843
    %v2348 = vunpack.c.h.b16 %v1843
    %v2349 = vunpack.c.l.b16 %v1844
    %v2350 = vunpack.c.h.b16 %v1844
    %v2351 = vunpack.c.l.b16 %v1845
    %v2352 = vunpack.c.h.b16 %v1845
    %v2353 = vunpack.c.l.b16 %v1846
    %v2354 = vunpack.c.h.b16 %v1846
    %v2355 = vunpack.c.l.b16 %v1847
    %v2356 = vunpack.c.h.b16 %v1847
    %v2357 = vunpack.c.l.b16 %v1848
    %v2358 = vunpack.c.h.b16 %v1848
    %v2359 = vunpack.c.l.b16 %v1849
    %v2360 = vunpack.c.h.b16 %v1849
    %v2361 = vunpack.c.l.b16 %v1850
    %v2362 = vunpack.c.h.b16 %v1850
    %v2363 = vunpack.c.l.b16 %v1851
    %v2364 = vunpack.c.h.b16 %v1851
    %v2365 = vunpack.c.l.b16 %v1852
    %v2366 = vunpack.c.h.b16 %v1852
    %v2367 = vunpack.c.l.b16 %v1853
    %v2368 = vunpack.c.h.b16 %v1853
    %v2369 = vunpack.c.l.b16 %v1854
    %v2370 = vunpack.c.h.b16 %v1854
    %v2371 = vunpack.c.l.b16 %v1855
    %v2372 = vunpack.c.h.b16 %v1855
    %v2373 = vunpack.c.l.b16 %v1856
    %v2374 = vunpack.c.h.b16 %v1856
    %v2375 = vunpack.c.l.b16 %v1857
    %v2376 = vunpack.c.h.b16 %v1857
    %v2377 = vunpack.c.l.b16 %v1858
    %v2378 = vunpack.c.h.b16 %v1858
    %v2379 = vunpack.c.l.b16 %v1859
    %v2380 = vunpack.c.h.b16 %v1859
    %v2381 = vunpack.c.l.b16 %v1860
    %v2382 = vunpack.c.h.b16 %v1860
    %v2383 = vunpack.c.l.b16 %v1861
    %v2384 = vunpack.c.h.b16 %v1861
    %v2385 = vunpack.c.l.b16 %v1862
    %v2386 = vunpack.c.h.b16 %v1862
    %v2387 = vunpack.c.l.b16 %v1863
    %v2388 = vunpack.c.h.b16 %v1863
    %v2389 = vunpack.c.l.b16 %v1864
    %v2390 = vunpack.c.h.b16 %v1864
    %v2391 = vunpack.c.l.b16 %v1865
    %v2392 = vunpack.c.h.b16 %v1865
    %v2393 = vunpack.c.l.b16 %v1866
    %v2394 = vunpack.c.h.b16 %v1866
    %v2395 = vunpack.c.l.b16 %v1867
    %v2396 = vunpack.c.h.b16 %v1867
    %v2397 = vunpack.c.l.b16 %v1868
    %v2398 = vunpack.c.h.b16 %v1868
    %v2399 = vpack.c.b16 %v2305, %v2303
    %v2400 = vpack.c.b16 %v2306, %v2304
    %v2401 = vpack.c.b16 %v2309, %v2307
    %v2402 = vpack.c.b16 %v2310, %v2308
    %v2403 = vpack.c.b16 %v2313, %v2311
    %v2404 = vpack.c.b16 %v2314, %v2312
    %v2405 = vpack.c.b16 %v2317, %v2315
    %v2406 = vpack.c.b16 %v2318, %v2316
    %v2407 = vpack.c.b16 %v2321, %v2319
    %v2408 = vpack.c.b16 %v2322, %v2320
    %v2409 = vpack.c.b16 %v2325, %v2323
    %v2410 = vpack.c.b16 %v2326, %v2324
    %v2411 = vpack.c.b16 %v2329, %v2327
    %v2412 = vpack.c.b16 %v2330, %v2328
    %v2413 = vpack.c.b16 %v2333, %v2331
    %v2414 = vpack.c.b16 %v2334, %v2332
    %v2415 = vpack.c.b16 %v2337, %v2335
    %v2416 = vpack.c.b16 %v2338, %v2336
    %v2417 = vpack.c.b16 %v2341, %v2339
    %v2418 = vpack.c.b16 %v2342, %v2340
    %v2419 = vpack.c.b16 %v2345, %v2343
    %v2420 = vpack.c.b16 %v2346, %v2344
    %v2421 = vpack.c.b16 %v2349, %v2347
    %v2422 = vpack.c.b16 %v2350, %v2348
    %v2423 = vpack.c.b16 %v2353, %v2351
    %v2424 = vpack.c.b16 %v2354, %v2352
    %v2425 = vpack.c.b16 %v2357, %v2355
    %v2426 = vpack.c.b16 %v2358, %v2356
    %v2427 = vpack.c.b16 %v2361, %v2359
    %v2428 = vpack.c.b16 %v2362, %v2360
    %v2429 = vpack.c.b16 %v2365, %v2363
    %v2430 = vpack.c.b16 %v2366, %v2364
    %v2431 = vpack.c.b16 %v2369, %v2367
    %v2432 = vpack.c.b16 %v2370, %v2368
    %v2433 = vpack.c.b16 %v2373, %v2371
    %v2434 = vpack.c.b16 %v2374, %v2372
    %v2435 = vpack.c.b16 %v2377, %v2375
    %v2436 = vpack.c.b16 %v2378, %v2376
    %v2437 = vpack.c.b16 %v2381, %v2379
    %v2438 = vpack.c.b16 %v2382, %v2380
    %v2439 = vpack.c.b16 %v2385, %v2383
    %v2440 = vpack.c.b16 %v2386, %v2384
    %v2441 = vpack.c.b16 %v2389, %v2387
    %v2442 = vpack.c.b16 %v2390, %v2388
    %v2443 = vpack.c.b16 %v2393, %v2391
    %v2444 = vpack.c.b16 %v2394, %v2392
    %v2445 = vpack.c.b16 %v2397, %v2395
    %v2446 = vpack.c.b16 %v2398, %v2396
    %2495 = vmatprep.subr.bf16.mxu0 %v2400
    %2496 = vmatpush1.bf16.msra.mxu0 %v2399
    %2497 = vmatprep.subr.bf16.mxu0 %v2402
    %2498 = vmatpush1.bf16.msra.mxu0 %v2401
    %2499 = vmatprep.subr.bf16.mxu0 %v2404
    %2500 = vmatpush1.bf16.msra.mxu0 %v2403
    %2501 = vmatprep.subr.bf16.mxu0 %v2406
    %2502 = vmatpush1.bf16.msra.mxu0 %v2405
    %2503 = vmatprep.subr.bf16.mxu0 %v2408
    %2504 = vmatpush1.bf16.msra.mxu0 %v2407
    %2505 = vmatprep.subr.bf16.mxu0 %v2410
    %2506 = vmatpush1.bf16.msra.mxu0 %v2409
    %2507 = vmatprep.subr.bf16.mxu0 %v2412
    %2508 = vmatpush1.bf16.msra.mxu0 %v2411
    %2509 = vmatprep.subr.bf16.mxu0 %v2414
    %2510 = vmatpush1.bf16.msra.mxu0 %v2413
    %2511 = vmatprep.subr.bf16.mxu0 %v2416
    %2512 = vmatpush1.bf16.msra.mxu0 %v2415
    %2513 = vmatprep.subr.bf16.mxu0 %v2418
    %2514 = vmatpush1.bf16.msra.mxu0 %v2417
    %2515 = vmatprep.subr.bf16.mxu0 %v2420
    %2516 = vmatpush1.bf16.msra.mxu0 %v2419
    %2517 = vmatprep.subr.bf16.mxu0 %v2422
    %2518 = vmatpush1.bf16.msra.mxu0 %v2421
    %2519 = vmatprep.subr.bf16.mxu0 %v2424
    %2520 = vmatpush1.bf16.msra.mxu0 %v2423
    %2521 = vmatprep.subr.bf16.mxu0 %v2426
    %2522 = vmatpush1.bf16.msra.mxu0 %v2425
    %2523 = vmatprep.subr.bf16.mxu0 %v2428
    %2524 = vmatpush1.bf16.msra.mxu0 %v2427
    %2525 = vmatprep.subr.bf16.mxu0 %v2430
    %2526 = vmatpush1.bf16.msra.mxu0 %v2429
    %2527 = vmatprep.mubr.bf16.mxu0 %v1819
    %2528 = vmatmul.mubr.bf16.gmra.mrb[0].mxu0 %v1818
    %v2529 = vpop.f32.mrb[0].mxu0
    %v2530 = vadd.f32 %v2249, %v2529
    %v2531 = vpop.f32.mrb[0].mxu0
    %v2532 = vadd.f32 %v2251, %v2531
    %v2533 = vpop.f32.mrb[0].mxu0
    %v2534 = vpop.f32.mrb[0].mxu0
    %2535 = vdwg.mxu0
    %2536 = vmatprep.subr.bf16.mxu0 %v2432
    %2537 = vmatpush1.bf16.msra.mxu0 %v2431
    %2538 = vmatprep.subr.bf16.mxu0 %v2434
    %2539 = vmatpush1.bf16.msra.mxu0 %v2433
    %2540 = vmatprep.subr.bf16.mxu0 %v2436
    %2541 = vmatpush1.bf16.msra.mxu0 %v2435
    %2542 = vmatprep.subr.bf16.mxu0 %v2438
    %2543 = vmatpush1.bf16.msra.mxu0 %v2437
    %2544 = vmatprep.subr.bf16.mxu0 %v2440
    %2545 = vmatpush1.bf16.msra.mxu0 %v2439
    %2546 = vmatprep.subr.bf16.mxu0 %v2442
    %2547 = vmatpush1.bf16.msra.mxu0 %v2441
    %2548 = vmatprep.subr.bf16.mxu0 %v2444
    %2549 = vmatpush1.bf16.msra.mxu0 %v2443
    %2550 = vmatprep.subr.bf16.mxu0 %v2446
    %2551 = vmatpush1.bf16.msra.mxu0 %v2445
    %2552 = vmatprep.subr.bf16.mxu0 0
    %2553 = vmatpush1.bf16.msra.mxu0 0
    %2554 = vmatprep.subr.bf16.mxu0 0
    %2555 = vmatpush1.bf16.msra.mxu0 0
    %2556 = vmatprep.subr.bf16.mxu0 0
    %2557 = vmatpush1.bf16.msra.mxu0 0
    %2558 = vmatprep.subr.bf16.mxu0 0
    %2559 = vmatpush1.bf16.msra.mxu0 0
    %2560 = vmatprep.subr.bf16.mxu0 0
    %2561 = vmatpush1.bf16.msra.mxu0 0
    %2562 = vmatprep.subr.bf16.mxu0 0
    %2563 = vmatpush1.bf16.msra.mxu0 0
    %2564 = vmatprep.subr.bf16.mxu0 0
    %2565 = vmatpush1.bf16.msra.mxu0 0
    %2566 = vmatprep.subr.bf16.mxu0 0
    %2567 = vmatpush1.bf16.msra.mxu0 0
    %2568 = vmatprep.mubr.bf16.mxu0 0
    %2569 = vmatmul.mubr.bf16.gmra.mrb[0].mxu0 %v1820
    %v2570 = vpop.f32.mrb[0].mxu0
    %v2571 = vadd.f32 %v2530, %v2570
    %v2572 = vpop.f32.mrb[0].mxu0
    %v2573 = vadd.f32 %v2532, %v2572
    %v2574 = vpop.f32.mrb[0].mxu0
    %v2575 = vpop.f32.mrb[0].mxu0
    %2576 = vdwg.mxu0
    %v2577 = vld [vmem:[#allocation4] sm:$0x30]
    %v2578 = vld [vmem:[#allocation4 + $0x8] sm:$0x30]
    %v2579 = vld [vmem:[#allocation4 + $0x10] sm:$0x30]
    %v2580 = vpack.c.bf16 %v2577, %v2577
    %v2581 = vpack.c.bf16 %v2578, %v2578
    %v2582 = vpack.c.bf16 %v2579, %v2579
    %s2583 = scalar_lea.vmem [#allocation24], 768
    %v2584 = vld [vmem:[%s2583] sm:$0xff]
    %v2585 = vld [vmem:[%s2583 + $0x8] sm:$0xff]
    %v2586 = vld [vmem:[%s2583 + $0x10] sm:$0xff]
    %v2587 = vld [vmem:[%s2583 + $0x18] sm:$0xff]
    %v2588 = vld [vmem:[%s2583 + $0x20] sm:$0xff]
    %v2589 = vld [vmem:[%s2583 + $0x28] sm:$0xff]
    %v2590 = vld [vmem:[%s2583 + $0x30] sm:$0xff]
    %v2591 = vld [vmem:[%s2583 + $0x38] sm:$0xff]
    %v2592 = vld [vmem:[%s2583 + $0x40] sm:$0xff]
    %v2593 = vld [vmem:[%s2583 + $0x48] sm:$0xff]
    %v2594 = vld [vmem:[%s2583 + $0x50] sm:$0xff]
    %v2595 = vld [vmem:[%s2583 + $0x58] sm:$0xff]
    %v2596 = vld [vmem:[%s2583 + $0x60] sm:$0xff]
    %v2597 = vld [vmem:[%s2583 + $0x68] sm:$0xff]
    %v2598 = vld [vmem:[%s2583 + $0x70] sm:$0xff]
    %v2599 = vld [vmem:[%s2583 + $0x78] sm:$0xff]
    %v2600 = vld [vmem:[%s2583 + $0x80] sm:$0xff]
    %v2601 = vld [vmem:[%s2583 + $0x88] sm:$0xff]
    %v2602 = vld [vmem:[%s2583 + $0x90] sm:$0xff]
    %v2603 = vld [vmem:[%s2583 + $0x98] sm:$0xff]
    %v2604 = vld [vmem:[%s2583 + $0xa0] sm:$0xff]
    %v2605 = vld [vmem:[%s2583 + $0xa8] sm:$0xff]
    %v2606 = vld [vmem:[%s2583 + $0xb0] sm:$0xff]
    %v2607 = vld [vmem:[%s2583 + $0xb8] sm:$0xff]
    %v2608 = vld [vmem:[%s2583 + $0xc0] sm:$0xff]
    %v2609 = vld [vmem:[%s2583 + $0xc8] sm:$0xff]
    %v2610 = vld [vmem:[%s2583 + $0xd0] sm:$0xff]
    %v2611 = vld [vmem:[%s2583 + $0xd8] sm:$0xff]
    %v2612 = vld [vmem:[%s2583 + $0xe0] sm:$0xff]
    %v2613 = vld [vmem:[%s2583 + $0xe8] sm:$0xff]
    %v2614 = vld [vmem:[%s2583 + $0xf0] sm:$0xff]
    %v2615 = vld [vmem:[%s2583 + $0xf8] sm:$0xff]
    %v2616 = vld [vmem:[%s2583 + $0x100] sm:$0xff]
    %v2617 = vld [vmem:[%s2583 + $0x108] sm:$0xff]
    %v2618 = vld [vmem:[%s2583 + $0x110] sm:$0xff]
    %v2619 = vld [vmem:[%s2583 + $0x118] sm:$0xff]
    %v2620 = vld [vmem:[%s2583 + $0x120] sm:$0xff]
    %v2621 = vld [vmem:[%s2583 + $0x128] sm:$0xff]
    %v2622 = vld [vmem:[%s2583 + $0x130] sm:$0xff]
    %v2623 = vld [vmem:[%s2583 + $0x138] sm:$0xff]
    %v2624 = vld [vmem:[%s2583 + $0x140] sm:$0xff]
    %v2625 = vld [vmem:[%s2583 + $0x148] sm:$0xff]
    %v2626 = vld [vmem:[%s2583 + $0x150] sm:$0xff]
    %v2627 = vld [vmem:[%s2583 + $0x158] sm:$0xff]
    %v2628 = vld [vmem:[%s2583 + $0x160] sm:$0xff]
    %v2629 = vld [vmem:[%s2583 + $0x168] sm:$0xff]
    %v2630 = vld [vmem:[%s2583 + $0x170] sm:$0xff]
    %v2631 = vld [vmem:[%s2583 + $0x178] sm:$0xff]
    %v2635 = vrot.slane %v2580, 2
    %v2636 = vrot.slane %v2581, 2
    %v2637 = vrot.slane %v2582, 2
    %v2689 = vunpack.c.l.b16 %v2584
    %v2690 = vunpack.c.h.b16 %v2584
    %v2691 = vunpack.c.l.b16 %v2585
    %v2692 = vunpack.c.h.b16 %v2585
    %v2693 = vunpack.c.l.b16 %v2586
    %v2694 = vunpack.c.h.b16 %v2586
    %v2695 = vunpack.c.l.b16 %v2587
    %v2696 = vunpack.c.h.b16 %v2587
    %v2697 = vunpack.c.l.b16 %v2588
    %v2698 = vunpack.c.h.b16 %v2588
    %v2699 = vunpack.c.l.b16 %v2589
    %v2700 = vunpack.c.h.b16 %v2589
    %v2701 = vunpack.c.l.b16 %v2590
    %v2702 = vunpack.c.h.b16 %v2590
    %v2703 = vunpack.c.l.b16 %v2591
    %v2704 = vunpack.c.h.b16 %v2591
    %v2705 = vunpack.c.l.b16 %v2592
    %v2706 = vunpack.c.h.b16 %v2592
    %v2707 = vunpack.c.l.b16 %v2593
    %v2708 = vunpack.c.h.b16 %v2593
    %v2709 = vunpack.c.l.b16 %v2594
    %v2710 = vunpack.c.h.b16 %v2594
    %v2711 = vunpack.c.l.b16 %v2595
    %v2712 = vunpack.c.h.b16 %v2595
    %v2713 = vunpack.c.l.b16 %v2596
    %v2714 = vunpack.c.h.b16 %v2596
    %v2715 = vunpack.c.l.b16 %v2597
    %v2716 = vunpack.c.h.b16 %v2597
    %v2717 = vunpack.c.l.b16 %v2598
    %v2718 = vunpack.c.h.b16 %v2598
    %v2719 = vunpack.c.l.b16 %v2599
    %v2720 = vunpack.c.h.b16 %v2599
    %v2721 = vunpack.c.l.b16 %v2600
    %v2722 = vunpack.c.h.b16 %v2600
    %v2723 = vunpack.c.l.b16 %v2601
    %v2724 = vunpack.c.h.b16 %v2601
    %v2725 = vunpack.c.l.b16 %v2602
    %v2726 = vunpack.c.h.b16 %v2602
    %v2727 = vunpack.c.l.b16 %v2603
    %v2728 = vunpack.c.h.b16 %v2603
    %v2729 = vunpack.c.l.b16 %v2604
    %v2730 = vunpack.c.h.b16 %v2604
    %v2731 = vunpack.c.l.b16 %v2605
    %v2732 = vunpack.c.h.b16 %v2605
    %v2733 = vunpack.c.l.b16 %v2606
    %v2734 = vunpack.c.h.b16 %v2606
    %v2735 = vunpack.c.l.b16 %v2607
    %v2736 = vunpack.c.h.b16 %v2607
    %v2737 = vunpack.c.l.b16 %v2608
    %v2738 = vunpack.c.h.b16 %v2608
    %v2739 = vunpack.c.l.b16 %v2609
    %v2740 = vunpack.c.h.b16 %v2609
    %v2741 = vunpack.c.l.b16 %v2610
    %v2742 = vunpack.c.h.b16 %v2610
    %v2743 = vunpack.c.l.b16 %v2611
    %v2744 = vunpack.c.h.b16 %v2611
    %v2745 = vunpack.c.l.b16 %v2612
    %v2746 = vunpack.c.h.b16 %v2612
    %v2747 = vunpack.c.l.b16 %v2613
    %v2748 = vunpack.c.h.b16 %v2613
    %v2749 = vunpack.c.l.b16 %v2614
    %v2750 = vunpack.c.h.b16 %v2614
    %v2751 = vunpack.c.l.b16 %v2615
    %v2752 = vunpack.c.h.b16 %v2615
    %v2753 = vunpack.c.l.b16 %v2616
    %v2754 = vunpack.c.h.b16 %v2616
    %v2755 = vunpack.c.l.b16 %v2617
    %v2756 = vunpack.c.h.b16 %v2617
    %v2757 = vunpack.c.l.b16 %v2618
    %v2758 = vunpack.c.h.b16 %v2618
    %v2759 = vunpack.c.l.b16 %v2619
    %v2760 = vunpack.c.h.b16 %v2619
    %v2761 = vunpack.c.l.b16 %v2620
    %v2762 = vunpack.c.h.b16 %v2620
    %v2763 = vunpack.c.l.b16 %v2621
    %v2764 = vunpack.c.h.b16 %v2621
    %v2765 = vunpack.c.l.b16 %v2622
    %v2766 = vunpack.c.h.b16 %v2622
    %v2767 = vunpack.c.l.b16 %v2623
    %v2768 = vunpack.c.h.b16 %v2623
    %v2769 = vunpack.c.l.b16 %v2624
    %v2770 = vunpack.c.h.b16 %v2624
    %v2771 = vunpack.c.l.b16 %v2625
    %v2772 = vunpack.c.h.b16 %v2625
    %v2773 = vunpack.c.l.b16 %v2626
    %v2774 = vunpack.c.h.b16 %v2626
    %v2775 = vunpack.c.l.b16 %v2627
    %v2776 = vunpack.c.h.b16 %v2627
    %v2777 = vunpack.c.l.b16 %v2628
    %v2778 = vunpack.c.h.b16 %v2628
    %v2779 = vunpack.c.l.b16 %v2629
    %v2780 = vunpack.c.h.b16 %v2629
    %v2781 = vunpack.c.l.b16 %v2630
    %v2782 = vunpack.c.h.b16 %v2630
    %v2783 = vunpack.c.l.b16 %v2631
    %v2784 = vunpack.c.h.b16 %v2631
    %v2785 = vpack.c.b16 %v2691, %v2689
    %v2786 = vpack.c.b16 %v2692, %v2690
    %v2787 = vpack.c.b16 %v2695, %v2693
    %v2788 = vpack.c.b16 %v2696, %v2694
    %v2789 = vpack.c.b16 %v2699, %v2697
    %v2790 = vpack.c.b16 %v2700, %v2698
    %v2791 = vpack.c.b16 %v2703, %v2701
    %v2792 = vpack.c.b16 %v2704, %v2702
    %v2793 = vpack.c.b16 %v2707, %v2705
    %v2794 = vpack.c.b16 %v2708, %v2706
    %v2795 = vpack.c.b16 %v2711, %v2709
    %v2796 = vpack.c.b16 %v2712, %v2710
    %v2797 = vpack.c.b16 %v2715, %v2713
    %v2798 = vpack.c.b16 %v2716, %v2714
    %v2799 = vpack.c.b16 %v2719, %v2717
    %v2800 = vpack.c.b16 %v2720, %v2718
    %v2801 = vpack.c.b16 %v2723, %v2721
    %v2802 = vpack.c.b16 %v2724, %v2722
    %v2803 = vpack.c.b16 %v2727, %v2725
    %v2804 = vpack.c.b16 %v2728, %v2726
    %v2805 = vpack.c.b16 %v2731, %v2729
    %v2806 = vpack.c.b16 %v2732, %v2730
    %v2807 = vpack.c.b16 %v2735, %v2733
    %v2808 = vpack.c.b16 %v2736, %v2734
    %v2809 = vpack.c.b16 %v2739, %v2737
    %v2810 = vpack.c.b16 %v2740, %v2738
    %v2811 = vpack.c.b16 %v2743, %v2741
    %v2812 = vpack.c.b16 %v2744, %v2742
    %v2813 = vpack.c.b16 %v2747, %v2745
    %v2814 = vpack.c.b16 %v2748, %v2746
    %v2815 = vpack.c.b16 %v2751, %v2749
    %v2816 = vpack.c.b16 %v2752, %v2750
    %v2817 = vpack.c.b16 %v2755, %v2753
    %v2818 = vpack.c.b16 %v2756, %v2754
    %v2819 = vpack.c.b16 %v2759, %v2757
    %v2820 = vpack.c.b16 %v2760, %v2758
    %v2821 = vpack.c.b16 %v2763, %v2761
    %v2822 = vpack.c.b16 %v2764, %v2762
    %v2823 = vpack.c.b16 %v2767, %v2765
    %v2824 = vpack.c.b16 %v2768, %v2766
    %v2825 = vpack.c.b16 %v2771, %v2769
    %v2826 = vpack.c.b16 %v2772, %v2770
    %v2827 = vpack.c.b16 %v2775, %v2773
    %v2828 = vpack.c.b16 %v2776, %v2774
    %v2829 = vpack.c.b16 %v2779, %v2777
    %v2830 = vpack.c.b16 %v2780, %v2778
    %v2831 = vpack.c.b16 %v2783, %v2781
    %v2832 = vpack.c.b16 %v2784, %v2782
    %2881 = vmatprep.subr.bf16.mxu0 %v2786
    %2882 = vmatpush1.bf16.msra.mxu0 %v2785
    %2883 = vmatprep.subr.bf16.mxu0 %v2788
    %2884 = vmatpush1.bf16.msra.mxu0 %v2787
    %2885 = vmatprep.subr.bf16.mxu0 %v2790
    %2886 = vmatpush1.bf16.msra.mxu0 %v2789
    %2887 = vmatprep.subr.bf16.mxu0 %v2792
    %2888 = vmatpush1.bf16.msra.mxu0 %v2791
    %2889 = vmatprep.subr.bf16.mxu0 %v2794
    %2890 = vmatpush1.bf16.msra.mxu0 %v2793
    %2891 = vmatprep.subr.bf16.mxu0 %v2796
    %2892 = vmatpush1.bf16.msra.mxu0 %v2795
    %2893 = vmatprep.subr.bf16.mxu0 %v2798
    %2894 = vmatpush1.bf16.msra.mxu0 %v2797
    %2895 = vmatprep.subr.bf16.mxu0 %v2800
    %2896 = vmatpush1.bf16.msra.mxu0 %v2799
    %2897 = vmatprep.subr.bf16.mxu0 %v2802
    %2898 = vmatpush1.bf16.msra.mxu0 %v2801
    %2899 = vmatprep.subr.bf16.mxu0 %v2804
    %2900 = vmatpush1.bf16.msra.mxu0 %v2803
    %2901 = vmatprep.subr.bf16.mxu0 %v2806
    %2902 = vmatpush1.bf16.msra.mxu0 %v2805
    %2903 = vmatprep.subr.bf16.mxu0 %v2808
    %2904 = vmatpush1.bf16.msra.mxu0 %v2807
    %2905 = vmatprep.subr.bf16.mxu0 %v2810
    %2906 = vmatpush1.bf16.msra.mxu0 %v2809
    %2907 = vmatprep.subr.bf16.mxu0 %v2812
    %2908 = vmatpush1.bf16.msra.mxu0 %v2811
    %2909 = vmatprep.subr.bf16.mxu0 %v2814
    %2910 = vmatpush1.bf16.msra.mxu0 %v2813
    %2911 = vmatprep.subr.bf16.mxu0 %v2816
    %2912 = vmatpush1.bf16.msra.mxu0 %v2815
    %2913 = vmatprep.mubr.bf16.mxu0 %v2636
    %2914 = vmatmul.mubr.bf16.gmra.mrb[0].mxu0 %v2635
    %v2915 = vpop.f32.mrb[0].mxu0
    %v2916 = vadd.f32 0.0, %v2915
    %v2917 = vpop.f32.mrb[0].mxu0
    %v2918 = vadd.f32 0.0, %v2917
    %v2919 = vpop.f32.mrb[0].mxu0
    %v2920 = vpop.f32.mrb[0].mxu0
    %2921 = vdwg.mxu0
    %2922 = vmatprep.subr.bf16.mxu0 %v2818
    %2923 = vmatpush1.bf16.msra.mxu0 %v2817
    %2924 = vmatprep.subr.bf16.mxu0 %v2820
    %2925 = vmatpush1.bf16.msra.mxu0 %v2819
    %2926 = vmatprep.subr.bf16.mxu0 %v2822
    %2927 = vmatpush1.bf16.msra.mxu0 %v2821
    %2928 = vmatprep.subr.bf16.mxu0 %v2824
    %2929 = vmatpush1.bf16.msra.mxu0 %v2823
    %2930 = vmatprep.subr.bf16.mxu0 %v2826
    %2931 = vmatpush1.bf16.msra.mxu0 %v2825
    %2932 = vmatprep.subr.bf16.mxu0 %v2828
    %2933 = vmatpush1.bf16.msra.mxu0 %v2827
    %2934 = vmatprep.subr.bf16.mxu0 %v2830
    %2935 = vmatpush1.bf16.msra.mxu0 %v2829
    %2936 = vmatprep.subr.bf16.mxu0 %v2832
    %2937 = vmatpush1.bf16.msra.mxu0 %v2831
    %2938 = vmatprep.subr.bf16.mxu0 0
    %2939 = vmatpush1.bf16.msra.mxu0 0
    %2940 = vmatprep.subr.bf16.mxu0 0
    %2941 = vmatpush1.bf16.msra.mxu0 0
    %2942 = vmatprep.subr.bf16.mxu0 0
    %2943 = vmatpush1.bf16.msra.mxu0 0
    %2944 = vmatprep.subr.bf16.mxu0 0
    %2945 = vmatpush1.bf16.msra.mxu0 0
    %2946 = vmatprep.subr.bf16.mxu0 0
    %2947 = vmatpush1.bf16.msra.mxu0 0
    %2948 = vmatprep.subr.bf16.mxu0 0
    %2949 = vmatpush1.bf16.msra.mxu0 0
    %2950 = vmatprep.subr.bf16.mxu0 0
    %2951 = vmatpush1.bf16.msra.mxu0 0
    %2952 = vmatprep.subr.bf16.mxu0 0
    %2953 = vmatpush1.bf16.msra.mxu0 0
    %2954 = vmatprep.mubr.bf16.mxu0 0
    %2955 = vmatmul.mubr.bf16.gmra.mrb[0].mxu0 %v2637
    %v2956 = vpop.f32.mrb[0].mxu0
    %v2957 = vadd.f32 %v2916, %v2956
    %v2958 = vpop.f32.mrb[0].mxu0
    %v2959 = vadd.f32 %v2918, %v2958
    %v2960 = vpop.f32.mrb[0].mxu0
    %v2961 = vpop.f32.mrb[0].mxu0
    %2962 = vdwg.mxu0
    %v2963 = vadd.f32 %v2571, %v2957
    %v2964 = vadd.f32 %v2573, %v2959
    %v2965 = vld [vmem:[#allocation4] sm:$0xc0]
    %v2966 = vld [vmem:[#allocation4 + $0x8] sm:$0xc0]
    %v2967 = vld [vmem:[#allocation4 + $0x10] sm:$0xc0]
    %v2968 = vpack.c.bf16 %v2965, %v2965
    %v2969 = vpack.c.bf16 %v2966, %v2966
    %v2970 = vpack.c.bf16 %v2967, %v2967
    %s2971 = scalar_lea.vmem [#allocation24], 1152
    %v2972 = vld [vmem:[%s2971] sm:$0xff]
    %v2973 = vld [vmem:[%s2971 + $0x8] sm:$0xff]
    %v2974 = vld [vmem:[%s2971 + $0x10] sm:$0xff]
    %v2975 = vld [vmem:[%s2971 + $0x18] sm:$0xff]
    %v2976 = vld [vmem:[%s2971 + $0x20] sm:$0xff]
    %v2977 = vld [vmem:[%s2971 + $0x28] sm:$0xff]
    %v2978 = vld [vmem:[%s2971 + $0x30] sm:$0xff]
    %v2979 = vld [vmem:[%s2971 + $0x38] sm:$0xff]
    %v2980 = vld [vmem:[%s2971 + $0x40] sm:$0xff]
    %v2981 = vld [vmem:[%s2971 + $0x48] sm:$0xff]
    %v2982 = vld [vmem:[%s2971 + $0x50] sm:$0xff]
    %v2983 = vld [vmem:[%s2971 + $0x58] sm:$0xff]
    %v2984 = vld [vmem:[%s2971 + $0x60] sm:$0xff]
    %v2985 = vld [vmem:[%s2971 + $0x68] sm:$0xff]
    %v2986 = vld [vmem:[%s2971 + $0x70] sm:$0xff]
    %v2987 = vld [vmem:[%s2971 + $0x78] sm:$0xff]
    %v2988 = vld [vmem:[%s2971 + $0x80] sm:$0xff]
    %v2989 = vld [vmem:[%s2971 + $0x88] sm:$0xff]
    %v2990 = vld [vmem:[%s2971 + $0x90] sm:$0xff]
    %v2991 = vld [vmem:[%s2971 + $0x98] sm:$0xff]
    %v2992 = vld [vmem:[%s2971 + $0xa0] sm:$0xff]
    %v2993 = vld [vmem:[%s2971 + $0xa8] sm:$0xff]
    %v2994 = vld [vmem:[%s2971 + $0xb0] sm:$0xff]
    %v2995 = vld [vmem:[%s2971 + $0xb8] sm:$0xff]
    %v2996 = vld [vmem:[%s2971 + $0xc0] sm:$0xff]
    %v2997 = vld [vmem:[%s2971 + $0xc8] sm:$0xff]
    %v2998 = vld [vmem:[%s2971 + $0xd0] sm:$0xff]
    %v2999 = vld [vmem:[%s2971 + $0xd8] sm:$0xff]
    %v3000 = vld [vmem:[%s2971 + $0xe0] sm:$0xff]
    %v3001 = vld [vmem:[%s2971 + $0xe8] sm:$0xff]
    %v3002 = vld [vmem:[%s2971 + $0xf0] sm:$0xff]
    %v3003 = vld [vmem:[%s2971 + $0xf8] sm:$0xff]
    %v3004 = vld [vmem:[%s2971 + $0x100] sm:$0xff]
    %v3005 = vld [vmem:[%s2971 + $0x108] sm:$0xff]
    %v3006 = vld [vmem:[%s2971 + $0x110] sm:$0xff]
    %v3007 = vld [vmem:[%s2971 + $0x118] sm:$0xff]
    %v3008 = vld [vmem:[%s2971 + $0x120] sm:$0xff]
    %v3009 = vld [vmem:[%s2971 + $0x128] sm:$0xff]
    %v3010 = vld [vmem:[%s2971 + $0x130] sm:$0xff]
    %v3011 = vld [vmem:[%s2971 + $0x138] sm:$0xff]
    %v3012 = vld [vmem:[%s2971 + $0x140] sm:$0xff]
    %v3013 = vld [vmem:[%s2971 + $0x148] sm:$0xff]
    %v3014 = vld [vmem:[%s2971 + $0x150] sm:$0xff]
    %v3015 = vld [vmem:[%s2971 + $0x158] sm:$0xff]
    %v3016 = vld [vmem:[%s2971 + $0x160] sm:$0xff]
    %v3017 = vld [vmem:[%s2971 + $0x168] sm:$0xff]
    %v3018 = vld [vmem:[%s2971 + $0x170] sm:$0xff]
    %v3019 = vld [vmem:[%s2971 + $0x178] sm:$0xff]
    %v3023 = vrot.slane %v2968, 3
    %v3024 = vrot.slane %v2969, 3
    %v3025 = vrot.slane %v2970, 3
    %v3077 = vunpack.c.l.b16 %v2972
    %v3078 = vunpack.c.h.b16 %v2972
    %v3079 = vunpack.c.l.b16 %v2973
    %v3080 = vunpack.c.h.b16 %v2973
    %v3081 = vunpack.c.l.b16 %v2974
    %v3082 = vunpack.c.h.b16 %v2974
    %v3083 = vunpack.c.l.b16 %v2975
    %v3084 = vunpack.c.h.b16 %v2975
    %v3085 = vunpack.c.l.b16 %v2976
    %v3086 = vunpack.c.h.b16 %v2976
    %v3087 = vunpack.c.l.b16 %v2977
    %v3088 = vunpack.c.h.b16 %v2977
    %v3089 = vunpack.c.l.b16 %v2978
    %v3090 = vunpack.c.h.b16 %v2978
    %v3091 = vunpack.c.l.b16 %v2979
    %v3092 = vunpack.c.h.b16 %v2979
    %v3093 = vunpack.c.l.b16 %v2980
    %v3094 = vunpack.c.h.b16 %v2980
    %v3095 = vunpack.c.l.b16 %v2981
    %v3096 = vunpack.c.h.b16 %v2981
    %v3097 = vunpack.c.l.b16 %v2982
    %v3098 = vunpack.c.h.b16 %v2982
    %v3099 = vunpack.c.l.b16 %v2983
    %v3100 = vunpack.c.h.b16 %v2983
    %v3101 = vunpack.c.l.b16 %v2984
    %v3102 = vunpack.c.h.b16 %v2984
    %v3103 = vunpack.c.l.b16 %v2985
    %v3104 = vunpack.c.h.b16 %v2985
    %v3105 = vunpack.c.l.b16 %v2986
    %v3106 = vunpack.c.h.b16 %v2986
    %v3107 = vunpack.c.l.b16 %v2987
    %v3108 = vunpack.c.h.b16 %v2987
    %v3109 = vunpack.c.l.b16 %v2988
    %v3110 = vunpack.c.h.b16 %v2988
    %v3111 = vunpack.c.l.b16 %v2989
    %v3112 = vunpack.c.h.b16 %v2989
    %v3113 = vunpack.c.l.b16 %v2990
    %v3114 = vunpack.c.h.b16 %v2990
    %v3115 = vunpack.c.l.b16 %v2991
    %v3116 = vunpack.c.h.b16 %v2991
    %v3117 = vunpack.c.l.b16 %v2992
    %v3118 = vunpack.c.h.b16 %v2992
    %v3119 = vunpack.c.l.b16 %v2993
    %v3120 = vunpack.c.h.b16 %v2993
    %v3121 = vunpack.c.l.b16 %v2994
    %v3122 = vunpack.c.h.b16 %v2994
    %v3123 = vunpack.c.l.b16 %v2995
    %v3124 = vunpack.c.h.b16 %v2995
    %v3125 = vunpack.c.l.b16 %v2996
    %v3126 = vunpack.c.h.b16 %v2996
    %v3127 = vunpack.c.l.b16 %v2997
    %v3128 = vunpack.c.h.b16 %v2997
    %v3129 = vunpack.c.l.b16 %v2998
    %v3130 = vunpack.c.h.b16 %v2998
    %v3131 = vunpack.c.l.b16 %v2999
    %v3132 = vunpack.c.h.b16 %v2999
    %v3133 = vunpack.c.l.b16 %v3000
    %v3134 = vunpack.c.h.b16 %v3000
    %v3135 = vunpack.c.l.b16 %v3001
    %v3136 = vunpack.c.h.b16 %v3001
    %v3137 = vunpack.c.l.b16 %v3002
    %v3138 = vunpack.c.h.b16 %v3002
    %v3139 = vunpack.c.l.b16 %v3003
    %v3140 = vunpack.c.h.b16 %v3003
    %v3141 = vunpack.c.l.b16 %v3004
    %v3142 = vunpack.c.h.b16 %v3004
    %v3143 = vunpack.c.l.b16 %v3005
    %v3144 = vunpack.c.h.b16 %v3005
    %v3145 = vunpack.c.l.b16 %v3006
    %v3146 = vunpack.c.h.b16 %v3006
    %v3147 = vunpack.c.l.b16 %v3007
    %v3148 = vunpack.c.h.b16 %v3007
    %v3149 = vunpack.c.l.b16 %v3008
    %v3150 = vunpack.c.h.b16 %v3008
    %v3151 = vunpack.c.l.b16 %v3009
    %v3152 = vunpack.c.h.b16 %v3009
    %v3153 = vunpack.c.l.b16 %v3010
    %v3154 = vunpack.c.h.b16 %v3010
    %v3155 = vunpack.c.l.b16 %v3011
    %v3156 = vunpack.c.h.b16 %v3011
    %v3157 = vunpack.c.l.b16 %v3012
    %v3158 = vunpack.c.h.b16 %v3012
    %v3159 = vunpack.c.l.b16 %v3013
    %v3160 = vunpack.c.h.b16 %v3013
    %v3161 = vunpack.c.l.b16 %v3014
    %v3162 = vunpack.c.h.b16 %v3014
    %v3163 = vunpack.c.l.b16 %v3015
    %v3164 = vunpack.c.h.b16 %v3015
    %v3165 = vunpack.c.l.b16 %v3016
    %v3166 = vunpack.c.h.b16 %v3016
    %v3167 = vunpack.c.l.b16 %v3017
    %v3168 = vunpack.c.h.b16 %v3017
    %v3169 = vunpack.c.l.b16 %v3018
    %v3170 = vunpack.c.h.b16 %v3018
    %v3171 = vunpack.c.l.b16 %v3019
    %v3172 = vunpack.c.h.b16 %v3019
    %v3173 = vpack.c.b16 %v3079, %v3077
    %v3174 = vpack.c.b16 %v3080, %v3078
    %v3175 = vpack.c.b16 %v3083, %v3081
    %v3176 = vpack.c.b16 %v3084, %v3082
    %v3177 = vpack.c.b16 %v3087, %v3085
    %v3178 = vpack.c.b16 %v3088, %v3086
    %v3179 = vpack.c.b16 %v3091, %v3089
    %v3180 = vpack.c.b16 %v3092, %v3090
    %v3181 = vpack.c.b16 %v3095, %v3093
    %v3182 = vpack.c.b16 %v3096, %v3094
    %v3183 = vpack.c.b16 %v3099, %v3097
    %v3184 = vpack.c.b16 %v3100, %v3098
    %v3185 = vpack.c.b16 %v3103, %v3101
    %v3186 = vpack.c.b16 %v3104, %v3102
    %v3187 = vpack.c.b16 %v3107, %v3105
    %v3188 = vpack.c.b16 %v3108, %v3106
    %v3189 = vpack.c.b16 %v3111, %v3109
    %v3190 = vpack.c.b16 %v3112, %v3110
    %v3191 = vpack.c.b16 %v3115, %v3113
    %v3192 = vpack.c.b16 %v3116, %v3114
    %v3193 = vpack.c.b16 %v3119, %v3117
    %v3194 = vpack.c.b16 %v3120, %v3118
    %v3195 = vpack.c.b16 %v3123, %v3121
    %v3196 = vpack.c.b16 %v3124, %v3122
    %v3197 = vpack.c.b16 %v3127, %v3125
    %v3198 = vpack.c.b16 %v3128, %v3126
    %v3199 = vpack.c.b16 %v3131, %v3129
    %v3200 = vpack.c.b16 %v3132, %v3130
    %v3201 = vpack.c.b16 %v3135, %v3133
    %v3202 = vpack.c.b16 %v3136, %v3134
    %v3203 = vpack.c.b16 %v3139, %v3137
    %v3204 = vpack.c.b16 %v3140, %v3138
    %v3205 = vpack.c.b16 %v3143, %v3141
    %v3206 = vpack.c.b16 %v3144, %v3142
    %v3207 = vpack.c.b16 %v3147, %v3145
    %v3208 = vpack.c.b16 %v3148, %v3146
    %v3209 = vpack.c.b16 %v3151, %v3149
    %v3210 = vpack.c.b16 %v3152, %v3150
    %v3211 = vpack.c.b16 %v3155, %v3153
    %v3212 = vpack.c.b16 %v3156, %v3154
    %v3213 = vpack.c.b16 %v3159, %v3157
    %v3214 = vpack.c.b16 %v3160, %v3158
    %v3215 = vpack.c.b16 %v3163, %v3161
    %v3216 = vpack.c.b16 %v3164, %v3162
    %v3217 = vpack.c.b16 %v3167, %v3165
    %v3218 = vpack.c.b16 %v3168, %v3166
    %v3219 = vpack.c.b16 %v3171, %v3169
    %v3220 = vpack.c.b16 %v3172, %v3170
    %3269 = vmatprep.subr.bf16.mxu0 %v3174
    %3270 = vmatpush1.bf16.msra.mxu0 %v3173
    %3271 = vmatprep.subr.bf16.mxu0 %v3176
    %3272 = vmatpush1.bf16.msra.mxu0 %v3175
    %3273 = vmatprep.subr.bf16.mxu0 %v3178
    %3274 = vmatpush1.bf16.msra.mxu0 %v3177
    %3275 = vmatprep.subr.bf16.mxu0 %v3180
    %3276 = vmatpush1.bf16.msra.mxu0 %v3179
    %3277 = vmatprep.subr.bf16.mxu0 %v3182
    %3278 = vmatpush1.bf16.msra.mxu0 %v3181
    %3279 = vmatprep.subr.bf16.mxu0 %v3184
    %3280 = vmatpush1.bf16.msra.mxu0 %v3183
    %3281 = vmatprep.subr.bf16.mxu0 %v3186
    %3282 = vmatpush1.bf16.msra.mxu0 %v3185
    %3283 = vmatprep.subr.bf16.mxu0 %v3188
    %3284 = vmatpush1.bf16.msra.mxu0 %v3187
    %3285 = vmatprep.subr.bf16.mxu0 %v3190
    %3286 = vmatpush1.bf16.msra.mxu0 %v3189
    %3287 = vmatprep.subr.bf16.mxu0 %v3192
    %3288 = vmatpush1.bf16.msra.mxu0 %v3191
    %3289 = vmatprep.subr.bf16.mxu0 %v3194
    %3290 = vmatpush1.bf16.msra.mxu0 %v3193
    %3291 = vmatprep.subr.bf16.mxu0 %v3196
    %3292 = vmatpush1.bf16.msra.mxu0 %v3195
    %3293 = vmatprep.subr.bf16.mxu0 %v3198
    %3294 = vmatpush1.bf16.msra.mxu0 %v3197
    %3295 = vmatprep.subr.bf16.mxu0 %v3200
    %3296 = vmatpush1.bf16.msra.mxu0 %v3199
    %3297 = vmatprep.subr.bf16.mxu0 %v3202
    %3298 = vmatpush1.bf16.msra.mxu0 %v3201
    %3299 = vmatprep.subr.bf16.mxu0 %v3204
    %3300 = vmatpush1.bf16.msra.mxu0 %v3203
    %3301 = vmatprep.mubr.bf16.mxu0 %v3024
    %3302 = vmatmul.mubr.bf16.gmra.mrb[0].mxu0 %v3023
    %v3303 = vpop.f32.mrb[0].mxu0
    %v3304 = vadd.f32 0.0, %v3303
    %v3305 = vpop.f32.mrb[0].mxu0
    %v3306 = vadd.f32 0.0, %v3305
    %v3307 = vpop.f32.mrb[0].mxu0
    %v3308 = vpop.f32.mrb[0].mxu0
    %3309 = vdwg.mxu0
    %3310 = vmatprep.subr.bf16.mxu0 %v3206
    %3311 = vmatpush1.bf16.msra.mxu0 %v3205
    %3312 = vmatprep.subr.bf16.mxu0 %v3208
    %3313 = vmatpush1.bf16.msra.mxu0 %v3207
    %3314 = vmatprep.subr.bf16.mxu0 %v3210
    %3315 = vmatpush1.bf16.msra.mxu0 %v3209
    %3316 = vmatprep.subr.bf16.mxu0 %v3212
    %3317 = vmatpush1.bf16.msra.mxu0 %v3211
    %3318 = vmatprep.subr.bf16.mxu0 %v3214
    %3319 = vmatpush1.bf16.msra.mxu0 %v3213
    %3320 = vmatprep.subr.bf16.mxu0 %v3216
    %3321 = vmatpush1.bf16.msra.mxu0 %v3215
    %3322 = vmatprep.subr.bf16.mxu0 %v3218
    %3323 = vmatpush1.bf16.msra.mxu0 %v3217
    %3324 = vmatprep.subr.bf16.mxu0 %v3220
    %3325 = vmatpush1.bf16.msra.mxu0 %v3219
    %3326 = vmatprep.subr.bf16.mxu0 0
    %3327 = vmatpush1.bf16.msra.mxu0 0
    %3328 = vmatprep.subr.bf16.mxu0 0
    %3329 = vmatpush1.bf16.msra.mxu0 0
    %3330 = vmatprep.subr.bf16.mxu0 0
    %3331 = vmatpush1.bf16.msra.mxu0 0
    %3332 = vmatprep.subr.bf16.mxu0 0
    %3333 = vmatpush1.bf16.msra.mxu0 0
    %3334 = vmatprep.subr.bf16.mxu0 0
    %3335 = vmatpush1.bf16.msra.mxu0 0
    %3336 = vmatprep.subr.bf16.mxu0 0
    %3337 = vmatpush1.bf16.msra.mxu0 0
    %3338 = vmatprep.subr.bf16.mxu0 0
    %3339 = vmatpush1.bf16.msra.mxu0 0
    %3340 = vmatprep.subr.bf16.mxu0 0
    %3341 = vmatpush1.bf16.msra.mxu0 0
    %3342 = vmatprep.mubr.bf16.mxu0 0
    %3343 = vmatmul.mubr.bf16.gmra.mrb[0].mxu0 %v3025
    %v3344 = vpop.f32.mrb[0].mxu0
    %v3345 = vadd.f32 %v3304, %v3344
    %v3346 = vpop.f32.mrb[0].mxu0
    %v3347 = vadd.f32 %v3306, %v3346
    %v3348 = vpop.f32.mrb[0].mxu0
    %v3349 = vpop.f32.mrb[0].mxu0
    %3350 = vdwg.mxu0
    %v3351 = vadd.f32 %v2963, %v3345
    %v3352 = vadd.f32 %v2964, %v3347
    %v3353 = vld [vmem:[#allocation4 + $0x18] sm:$0x3]
    %v3354 = vld [vmem:[#allocation4 + $0x20] sm:$0x3]
    %v3355 = vld [vmem:[#allocation4 + $0x28] sm:$0x3]
    %v3356 = vpack.c.bf16 %v3353, %v3353
    %v3357 = vpack.c.bf16 %v3354, %v3354
    %v3358 = vpack.c.bf16 %v3355, %v3355
    %s3359 = scalar_lea.vmem [#allocation24], 1536
    %v3360 = vld [vmem:[%s3359] sm:$0xff]
    %v3361 = vld [vmem:[%s3359 + $0x8] sm:$0xff]
    %v3362 = vld [vmem:[%s3359 + $0x10] sm:$0xff]
    %v3363 = vld [vmem:[%s3359 + $0x18] sm:$0xff]
    %v3364 = vld [vmem:[%s3359 + $0x20] sm:$0xff]
    %v3365 = vld [vmem:[%s3359 + $0x28] sm:$0xff]
    %v3366 = vld [vmem:[%s3359 + $0x30] sm:$0xff]
    %v3367 = vld [vmem:[%s3359 + $0x38] sm:$0xff]
    %v3368 = vld [vmem:[%s3359 + $0x40] sm:$0xff]
    %v3369 = vld [vmem:[%s3359 + $0x48] sm:$0xff]
    %v3370 = vld [vmem:[%s3359 + $0x50] sm:$0xff]
    %v3371 = vld [vmem:[%s3359 + $0x58] sm:$0xff]
    %v3372 = vld [vmem:[%s3359 + $0x60] sm:$0xff]
    %v3373 = vld [vmem:[%s3359 + $0x68] sm:$0xff]
    %v3374 = vld [vmem:[%s3359 + $0x70] sm:$0xff]
    %v3375 = vld [vmem:[%s3359 + $0x78] sm:$0xff]
    %v3376 = vld [vmem:[%s3359 + $0x80] sm:$0xff]
    %v3377 = vld [vmem:[%s3359 + $0x88] sm:$0xff]
    %v3378 = vld [vmem:[%s3359 + $0x90] sm:$0xff]
    %v3379 = vld [vmem:[%s3359 + $0x98] sm:$0xff]
    %v3380 = vld [vmem:[%s3359 + $0xa0] sm:$0xff]
    %v3381 = vld [vmem:[%s3359 + $0xa8] sm:$0xff]
    %v3382 = vld [vmem:[%s3359 + $0xb0] sm:$0xff]
    %v3383 = vld [vmem:[%s3359 + $0xb8] sm:$0xff]
    %v3384 = vld [vmem:[%s3359 + $0xc0] sm:$0xff]
    %v3385 = vld [vmem:[%s3359 + $0xc8] sm:$0xff]
    %v3386 = vld [vmem:[%s3359 + $0xd0] sm:$0xff]
    %v3387 = vld [vmem:[%s3359 + $0xd8] sm:$0xff]
    %v3388 = vld [vmem:[%s3359 + $0xe0] sm:$0xff]
    %v3389 = vld [vmem:[%s3359 + $0xe8] sm:$0xff]
    %v3390 = vld [vmem:[%s3359 + $0xf0] sm:$0xff]
    %v3391 = vld [vmem:[%s3359 + $0xf8] sm:$0xff]
    %v3392 = vld [vmem:[%s3359 + $0x100] sm:$0xff]
    %v3393 = vld [vmem:[%s3359 + $0x108] sm:$0xff]
    %v3394 = vld [vmem:[%s3359 + $0x110] sm:$0xff]
    %v3395 = vld [vmem:[%s3359 + $0x118] sm:$0xff]
    %v3396 = vld [vmem:[%s3359 + $0x120] sm:$0xff]
    %v3397 = vld [vmem:[%s3359 + $0x128] sm:$0xff]
    %v3398 = vld [vmem:[%s3359 + $0x130] sm:$0xff]
    %v3399 = vld [vmem:[%s3359 + $0x138] sm:$0xff]
    %v3400 = vld [vmem:[%s3359 + $0x140] sm:$0xff]
    %v3401 = vld [vmem:[%s3359 + $0x148] sm:$0xff]
    %v3402 = vld [vmem:[%s3359 + $0x150] sm:$0xff]
    %v3403 = vld [vmem:[%s3359 + $0x158] sm:$0xff]
    %v3404 = vld [vmem:[%s3359 + $0x160] sm:$0xff]
    %v3405 = vld [vmem:[%s3359 + $0x168] sm:$0xff]
    %v3406 = vld [vmem:[%s3359 + $0x170] sm:$0xff]
    %v3407 = vld [vmem:[%s3359 + $0x178] sm:$0xff]
    %v3456 = vunpack.c.l.b16 %v3360
    %v3457 = vunpack.c.h.b16 %v3360
    %v3458 = vunpack.c.l.b16 %v3361
    %v3459 = vunpack.c.h.b16 %v3361
    %v3460 = vunpack.c.l.b16 %v3362
    %v3461 = vunpack.c.h.b16 %v3362
    %v3462 = vunpack.c.l.b16 %v3363
    %v3463 = vunpack.c.h.b16 %v3363
    %v3464 = vunpack.c.l.b16 %v3364
    %v3465 = vunpack.c.h.b16 %v3364
    %v3466 = vunpack.c.l.b16 %v3365
    %v3467 = vunpack.c.h.b16 %v3365
    %v3468 = vunpack.c.l.b16 %v3366
    %v3469 = vunpack.c.h.b16 %v3366
    %v3470 = vunpack.c.l.b16 %v3367
    %v3471 = vunpack.c.h.b16 %v3367
    %v3472 = vunpack.c.l.b16 %v3368
    %v3473 = vunpack.c.h.b16 %v3368
    %v3474 = vunpack.c.l.b16 %v3369
    %v3475 = vunpack.c.h.b16 %v3369
    %v3476 = vunpack.c.l.b16 %v3370
    %v3477 = vunpack.c.h.b16 %v3370
    %v3478 = vunpack.c.l.b16 %v3371
    %v3479 = vunpack.c.h.b16 %v3371
    %v3480 = vunpack.c.l.b16 %v3372
    %v3481 = vunpack.c.h.b16 %v3372
    %v3482 = vunpack.c.l.b16 %v3373
    %v3483 = vunpack.c.h.b16 %v3373
    %v3484 = vunpack.c.l.b16 %v3374
    %v3485 = vunpack.c.h.b16 %v3374
    %v3486 = vunpack.c.l.b16 %v3375
    %v3487 = vunpack.c.h.b16 %v3375
    %v3488 = vunpack.c.l.b16 %v3376
    %v3489 = vunpack.c.h.b16 %v3376
    %v3490 = vunpack.c.l.b16 %v3377
    %v3491 = vunpack.c.h.b16 %v3377
    %v3492 = vunpack.c.l.b16 %v3378
    %v3493 = vunpack.c.h.b16 %v3378
    %v3494 = vunpack.c.l.b16 %v3379
    %v3495 = vunpack.c.h.b16 %v3379
    %v3496 = vunpack.c.l.b16 %v3380
    %v3497 = vunpack.c.h.b16 %v3380
    %v3498 = vunpack.c.l.b16 %v3381
    %v3499 = vunpack.c.h.b16 %v3381
    %v3500 = vunpack.c.l.b16 %v3382
    %v3501 = vunpack.c.h.b16 %v3382
    %v3502 = vunpack.c.l.b16 %v3383
    %v3503 = vunpack.c.h.b16 %v3383
    %v3504 = vunpack.c.l.b16 %v3384
    %v3505 = vunpack.c.h.b16 %v3384
    %v3506 = vunpack.c.l.b16 %v3385
    %v3507 = vunpack.c.h.b16 %v3385
    %v3508 = vunpack.c.l.b16 %v3386
    %v3509 = vunpack.c.h.b16 %v3386
    %v3510 = vunpack.c.l.b16 %v3387
    %v3511 = vunpack.c.h.b16 %v3387
    %v3512 = vunpack.c.l.b16 %v3388
    %v3513 = vunpack.c.h.b16 %v3388
    %v3514 = vunpack.c.l.b16 %v3389
    %v3515 = vunpack.c.h.b16 %v3389
    %v3516 = vunpack.c.l.b16 %v3390
    %v3517 = vunpack.c.h.b16 %v3390
    %v3518 = vunpack.c.l.b16 %v3391
    %v3519 = vunpack.c.h.b16 %v3391
    %v3520 = vunpack.c.l.b16 %v3392
    %v3521 = vunpack.c.h.b16 %v3392
    %v3522 = vunpack.c.l.b16 %v3393
    %v3523 = vunpack.c.h.b16 %v3393
    %v3524 = vunpack.c.l.b16 %v3394
    %v3525 = vunpack.c.h.b16 %v3394
    %v3526 = vunpack.c.l.b16 %v3395
    %v3527 = vunpack.c.h.b16 %v3395
    %v3528 = vunpack.c.l.b16 %v3396
    %v3529 = vunpack.c.h.b16 %v3396
    %v3530 = vunpack.c.l.b16 %v3397
    %v3531 = vunpack.c.h.b16 %v3397
    %v3532 = vunpack.c.l.b16 %v3398
    %v3533 = vunpack.c.h.b16 %v3398
    %v3534 = vunpack.c.l.b16 %v3399
    %v3535 = vunpack.c.h.b16 %v3399
    %v3536 = vunpack.c.l.b16 %v3400
    %v3537 = vunpack.c.h.b16 %v3400
    %v3538 = vunpack.c.l.b16 %v3401
    %v3539 = vunpack.c.h.b16 %v3401
    %v3540 = vunpack.c.l.b16 %v3402
    %v3541 = vunpack.c.h.b16 %v3402
    %v3542 = vunpack.c.l.b16 %v3403
    %v3543 = vunpack.c.h.b16 %v3403
    %v3544 = vunpack.c.l.b16 %v3404
    %v3545 = vunpack.c.h.b16 %v3404
    %v3546 = vunpack.c.l.b16 %v3405
    %v3547 = vunpack.c.h.b16 %v3405
    %v3548 = vunpack.c.l.b16 %v3406
    %v3549 = vunpack.c.h.b16 %v3406
    %v3550 = vunpack.c.l.b16 %v3407
    %v3551 = vunpack.c.h.b16 %v3407
    %v3552 = vpack.c.b16 %v3458, %v3456
    %v3553 = vpack.c.b16 %v3459, %v3457
    %v3554 = vpack.c.b16 %v3462, %v3460
    %v3555 = vpack.c.b16 %v3463, %v3461
    %v3556 = vpack.c.b16 %v3466, %v3464
    %v3557 = vpack.c.b16 %v3467, %v3465
    %v3558 = vpack.c.b16 %v3470, %v3468
    %v3559 = vpack.c.b16 %v3471, %v3469
    %v3560 = vpack.c.b16 %v3474, %v3472
    %v3561 = vpack.c.b16 %v3475, %v3473
    %v3562 = vpack.c.b16 %v3478, %v3476
    %v3563 = vpack.c.b16 %v3479, %v3477
    %v3564 = vpack.c.b16 %v3482, %v3480
    %v3565 = vpack.c.b16 %v3483, %v3481
    %v3566 = vpack.c.b16 %v3486, %v3484
    %v3567 = vpack.c.b16 %v3487, %v3485
    %v3568 = vpack.c.b16 %v3490, %v3488
    %v3569 = vpack.c.b16 %v3491, %v3489
    %v3570 = vpack.c.b16 %v3494, %v3492
    %v3571 = vpack.c.b16 %v3495, %v3493
    %v3572 = vpack.c.b16 %v3498, %v3496
    %v3573 = vpack.c.b16 %v3499, %v3497
    %v3574 = vpack.c.b16 %v3502, %v3500
    %v3575 = vpack.c.b16 %v3503, %v3501
    %v3576 = vpack.c.b16 %v3506, %v3504
    %v3577 = vpack.c.b16 %v3507, %v3505
    %v3578 = vpack.c.b16 %v3510, %v3508
    %v3579 = vpack.c.b16 %v3511, %v3509
    %v3580 = vpack.c.b16 %v3514, %v3512
    %v3581 = vpack.c.b16 %v3515, %v3513
    %v3582 = vpack.c.b16 %v3518, %v3516
    %v3583 = vpack.c.b16 %v3519, %v3517
    %v3584 = vpack.c.b16 %v3522, %v3520
    %v3585 = vpack.c.b16 %v3523, %v3521
    %v3586 = vpack.c.b16 %v3526, %v3524
    %v3587 = vpack.c.b16 %v3527, %v3525
    %v3588 = vpack.c.b16 %v3530, %v3528
    %v3589 = vpack.c.b16 %v3531, %v3529
    %v3590 = vpack.c.b16 %v3534, %v3532
    %v3591 = vpack.c.b16 %v3535, %v3533
    %v3592 = vpack.c.b16 %v3538, %v3536
    %v3593 = vpack.c.b16 %v3539, %v3537
    %v3594 = vpack.c.b16 %v3542, %v3540
    %v3595 = vpack.c.b16 %v3543, %v3541
    %v3596 = vpack.c.b16 %v3546, %v3544
    %v3597 = vpack.c.b16 %v3547, %v3545
    %v3598 = vpack.c.b16 %v3550, %v3548
    %v3599 = vpack.c.b16 %v3551, %v3549
    %3648 = vmatprep.subr.bf16.mxu0 %v3553
    %3649 = vmatpush1.bf16.msra.mxu0 %v3552
    %3650 = vmatprep.subr.bf16.mxu0 %v3555
    %3651 = vmatpush1.bf16.msra.mxu0 %v3554
    %3652 = vmatprep.subr.bf16.mxu0 %v3557
    %3653 = vmatpush1.bf16.msra.mxu0 %v3556
    %3654 = vmatprep.subr.bf16.mxu0 %v3559
    %3655 = vmatpush1.bf16.msra.mxu0 %v3558
    %3656 = vmatprep.subr.bf16.mxu0 %v3561
    %3657 = vmatpush1.bf16.msra.mxu0 %v3560
    %3658 = vmatprep.subr.bf16.mxu0 %v3563
    %3659 = vmatpush1.bf16.msra.mxu0 %v3562
    %3660 = vmatprep.subr.bf16.mxu0 %v3565
    %3661 = vmatpush1.bf16.msra.mxu0 %v3564
    %3662 = vmatprep.subr.bf16.mxu0 %v3567
    %3663 = vmatpush1.bf16.msra.mxu0 %v3566
    %3664 = vmatprep.subr.bf16.mxu0 %v3569
    %3665 = vmatpush1.bf16.msra.mxu0 %v3568
    %3666 = vmatprep.subr.bf16.mxu0 %v3571
    %3667 = vmatpush1.bf16.msra.mxu0 %v3570
    %3668 = vmatprep.subr.bf16.mxu0 %v3573
    %3669 = vmatpush1.bf16.msra.mxu0 %v3572
    %3670 = vmatprep.subr.bf16.mxu0 %v3575
    %3671 = vmatpush1.bf16.msra.mxu0 %v3574
    %3672 = vmatprep.subr.bf16.mxu0 %v3577
    %3673 = vmatpush1.bf16.msra.mxu0 %v3576
    %3674 = vmatprep.subr.bf16.mxu0 %v3579
    %3675 = vmatpush1.bf16.msra.mxu0 %v3578
    %3676 = vmatprep.subr.bf16.mxu0 %v3581
    %3677 = vmatpush1.bf16.msra.mxu0 %v3580
    %3678 = vmatprep.subr.bf16.mxu0 %v3583
    %3679 = vmatpush1.bf16.msra.mxu0 %v3582
    %3680 = vmatprep.mubr.bf16.mxu0 %v3357
    %3681 = vmatmul.mubr.bf16.gmra.mrb[0].mxu0 %v3356
    %v3682 = vpop.f32.mrb[0].mxu0
    %v3683 = vadd.f32 0.0, %v3682
    %v3684 = vpop.f32.mrb[0].mxu0
    %v3685 = vadd.f32 0.0, %v3684
    %v3686 = vpop.f32.mrb[0].mxu0
    %v3687 = vpop.f32.mrb[0].mxu0
    %3688 = vdwg.mxu0
    %3689 = vmatprep.subr.bf16.mxu0 %v3585
    %3690 = vmatpush1.bf16.msra.mxu0 %v3584
    %3691 = vmatprep.subr.bf16.mxu0 %v3587
    %3692 = vmatpush1.bf16.msra.mxu0 %v3586
    %3693 = vmatprep.subr.bf16.mxu0 %v3589
    %3694 = vmatpush1.bf16.msra.mxu0 %v3588
    %3695 = vmatprep.subr.bf16.mxu0 %v3591
    %3696 = vmatpush1.bf16.msra.mxu0 %v3590
    %3697 = vmatprep.subr.bf16.mxu0 %v3593
    %3698 = vmatpush1.bf16.msra.mxu0 %v3592
    %3699 = vmatprep.subr.bf16.mxu0 %v3595
    %3700 = vmatpush1.bf16.msra.mxu0 %v3594
    %3701 = vmatprep.subr.bf16.mxu0 %v3597
    %3702 = vmatpush1.bf16.msra.mxu0 %v3596
    %3703 = vmatprep.subr.bf16.mxu0 %v3599
    %3704 = vmatpush1.bf16.msra.mxu0 %v3598
    %3705 = vmatprep.subr.bf16.mxu0 0
    %3706 = vmatpush1.bf16.msra.mxu0 0
    %3707 = vmatprep.subr.bf16.mxu0 0
    %3708 = vmatpush1.bf16.msra.mxu0 0
    %3709 = vmatprep.subr.bf16.mxu0 0
    %3710 = vmatpush1.bf16.msra.mxu0 0
    %3711 = vmatprep.subr.bf16.mxu0 0
    %3712 = vmatpush1.bf16.msra.mxu0 0
    %3713 = vmatprep.subr.bf16.mxu0 0
    %3714 = vmatpush1.bf16.msra.mxu0 0
    %3715 = vmatprep.subr.bf16.mxu0 0
    %3716 = vmatpush1.bf16.msra.mxu0 0
    %3717 = vmatprep.subr.bf16.mxu0 0
    %3718 = vmatpush1.bf16.msra.mxu0 0
    %3719 = vmatprep.subr.bf16.mxu0 0
    %3720 = vmatpush1.bf16.msra.mxu0 0
    %3721 = vmatprep.mubr.bf16.mxu0 0
    %3722 = vmatmul.mubr.bf16.gmra.mrb[0].mxu0 %v3358
    %v3723 = vpop.f32.mrb[0].mxu0
    %v3724 = vadd.f32 %v3683, %v3723
    %v3725 = vpop.f32.mrb[0].mxu0
    %v3726 = vadd.f32 %v3685, %v3725
    %v3727 = vpop.f32.mrb[0].mxu0
    %v3728 = vpop.f32.mrb[0].mxu0
    %3729 = vdwg.mxu0
    %v3730 = vadd.f32 %v3351, %v3724
    %v3731 = vadd.f32 %v3352, %v3726
    %v3732 = vld [vmem:[#allocation4 + $0x18] sm:$0xc]
    %v3733 = vld [vmem:[#allocation4 + $0x20] sm:$0xc]
    %v3734 = vld [vmem:[#allocation4 + $0x28] sm:$0xc]
    %v3735 = vpack.c.bf16 %v3732, %v3732
    %v3736 = vpack.c.bf16 %v3733, %v3733
    %v3737 = vpack.c.bf16 %v3734, %v3734
    %s3738 = scalar_lea.vmem [#allocation24], 1920
    %v3739 = vld [vmem:[%s3738] sm:$0xff]
    %v3740 = vld [vmem:[%s3738 + $0x8] sm:$0xff]
    %v3741 = vld [vmem:[%s3738 + $0x10] sm:$0xff]
    %v3742 = vld [vmem:[%s3738 + $0x18] sm:$0xff]
    %v3743 = vld [vmem:[%s3738 + $0x20] sm:$0xff]
    %v3744 = vld [vmem:[%s3738 + $0x28] sm:$0xff]
    %v3745 = vld [vmem:[%s3738 + $0x30] sm:$0xff]
    %v3746 = vld [vmem:[%s3738 + $0x38] sm:$0xff]
    %v3747 = vld [vmem:[%s3738 + $0x40] sm:$0xff]
    %v3748 = vld [vmem:[%s3738 + $0x48] sm:$0xff]
    %v3749 = vld [vmem:[%s3738 + $0x50] sm:$0xff]
    %v3750 = vld [vmem:[%s3738 + $0x58] sm:$0xff]
    %v3751 = vld [vmem:[%s3738 + $0x60] sm:$0xff]
    %v3752 = vld [vmem:[%s3738 + $0x68] sm:$0xff]
    %v3753 = vld [vmem:[%s3738 + $0x70] sm:$0xff]
    %v3754 = vld [vmem:[%s3738 + $0x78] sm:$0xff]
    %v3755 = vld [vmem:[%s3738 + $0x80] sm:$0xff]
    %v3756 = vld [vmem:[%s3738 + $0x88] sm:$0xff]
    %v3757 = vld [vmem:[%s3738 + $0x90] sm:$0xff]
    %v3758 = vld [vmem:[%s3738 + $0x98] sm:$0xff]
    %v3759 = vld [vmem:[%s3738 + $0xa0] sm:$0xff]
    %v3760 = vld [vmem:[%s3738 + $0xa8] sm:$0xff]
    %v3761 = vld [vmem:[%s3738 + $0xb0] sm:$0xff]
    %v3762 = vld [vmem:[%s3738 + $0xb8] sm:$0xff]
    %v3763 = vld [vmem:[%s3738 + $0xc0] sm:$0xff]
    %v3764 = vld [vmem:[%s3738 + $0xc8] sm:$0xff]
    %v3765 = vld [vmem:[%s3738 + $0xd0] sm:$0xff]
    %v3766 = vld [vmem:[%s3738 + $0xd8] sm:$0xff]
    %v3767 = vld [vmem:[%s3738 + $0xe0] sm:$0xff]
    %v3768 = vld [vmem:[%s3738 + $0xe8] sm:$0xff]
    %v3769 = vld [vmem:[%s3738 + $0xf0] sm:$0xff]
    %v3770 = vld [vmem:[%s3738 + $0xf8] sm:$0xff]
    %v3771 = vld [vmem:[%s3738 + $0x100] sm:$0xff]
    %v3772 = vld [vmem:[%s3738 + $0x108] sm:$0xff]
    %v3773 = vld [vmem:[%s3738 + $0x110] sm:$0xff]
    %v3774 = vld [vmem:[%s3738 + $0x118] sm:$0xff]
    %v3775 = vld [vmem:[%s3738 + $0x120] sm:$0xff]
    %v3776 = vld [vmem:[%s3738 + $0x128] sm:$0xff]
    %v3777 = vld [vmem:[%s3738 + $0x130] sm:$0xff]
    %v3778 = vld [vmem:[%s3738 + $0x138] sm:$0xff]
    %v3779 = vld [vmem:[%s3738 + $0x140] sm:$0xff]
    %v3780 = vld [vmem:[%s3738 + $0x148] sm:$0xff]
    %v3781 = vld [vmem:[%s3738 + $0x150] sm:$0xff]
    %v3782 = vld [vmem:[%s3738 + $0x158] sm:$0xff]
    %v3783 = vld [vmem:[%s3738 + $0x160] sm:$0xff]
    %v3784 = vld [vmem:[%s3738 + $0x168] sm:$0xff]
    %v3785 = vld [vmem:[%s3738 + $0x170] sm:$0xff]
    %v3786 = vld [vmem:[%s3738 + $0x178] sm:$0xff]
    %v3790 = vrot.slane %v3735, 1
    %v3791 = vrot.slane %v3736, 1
    %v3792 = vrot.slane %v3737, 1
    %v3844 = vunpack.c.l.b16 %v3739
    %v3845 = vunpack.c.h.b16 %v3739
    %v3846 = vunpack.c.l.b16 %v3740
    %v3847 = vunpack.c.h.b16 %v3740
    %v3848 = vunpack.c.l.b16 %v3741
    %v3849 = vunpack.c.h.b16 %v3741
    %v3850 = vunpack.c.l.b16 %v3742
    %v3851 = vunpack.c.h.b16 %v3742
    %v3852 = vunpack.c.l.b16 %v3743
    %v3853 = vunpack.c.h.b16 %v3743
    %v3854 = vunpack.c.l.b16 %v3744
    %v3855 = vunpack.c.h.b16 %v3744
    %v3856 = vunpack.c.l.b16 %v3745
    %v3857 = vunpack.c.h.b16 %v3745
    %v3858 = vunpack.c.l.b16 %v3746
    %v3859 = vunpack.c.h.b16 %v3746
    %v3860 = vunpack.c.l.b16 %v3747
    %v3861 = vunpack.c.h.b16 %v3747
    %v3862 = vunpack.c.l.b16 %v3748
    %v3863 = vunpack.c.h.b16 %v3748
    %v3864 = vunpack.c.l.b16 %v3749
    %v3865 = vunpack.c.h.b16 %v3749
    %v3866 = vunpack.c.l.b16 %v3750
    %v3867 = vunpack.c.h.b16 %v3750
    %v3868 = vunpack.c.l.b16 %v3751
    %v3869 = vunpack.c.h.b16 %v3751
    %v3870 = vunpack.c.l.b16 %v3752
    %v3871 = vunpack.c.h.b16 %v3752
    %v3872 = vunpack.c.l.b16 %v3753
    %v3873 = vunpack.c.h.b16 %v3753
    %v3874 = vunpack.c.l.b16 %v3754
    %v3875 = vunpack.c.h.b16 %v3754
    %v3876 = vunpack.c.l.b16 %v3755
    %v3877 = vunpack.c.h.b16 %v3755
    %v3878 = vunpack.c.l.b16 %v3756
    %v3879 = vunpack.c.h.b16 %v3756
    %v3880 = vunpack.c.l.b16 %v3757
    %v3881 = vunpack.c.h.b16 %v3757
    %v3882 = vunpack.c.l.b16 %v3758
    %v3883 = vunpack.c.h.b16 %v3758
    %v3884 = vunpack.c.l.b16 %v3759
    %v3885 = vunpack.c.h.b16 %v3759
    %v3886 = vunpack.c.l.b16 %v3760
    %v3887 = vunpack.c.h.b16 %v3760
    %v3888 = vunpack.c.l.b16 %v3761
    %v3889 = vunpack.c.h.b16 %v3761
    %v3890 = vunpack.c.l.b16 %v3762
    %v3891 = vunpack.c.h.b16 %v3762
    %v3892 = vunpack.c.l.b16 %v3763
    %v3893 = vunpack.c.h.b16 %v3763
    %v3894 = vunpack.c.l.b16 %v3764
    %v3895 = vunpack.c.h.b16 %v3764
    %v3896 = vunpack.c.l.b16 %v3765
    %v3897 = vunpack.c.h.b16 %v3765
    %v3898 = vunpack.c.l.b16 %v3766
    %v3899 = vunpack.c.h.b16 %v3766
    %v3900 = vunpack.c.l.b16 %v3767
    %v3901 = vunpack.c.h.b16 %v3767
    %v3902 = vunpack.c.l.b16 %v3768
    %v3903 = vunpack.c.h.b16 %v3768
    %v3904 = vunpack.c.l.b16 %v3769
    %v3905 = vunpack.c.h.b16 %v3769
    %v3906 = vunpack.c.l.b16 %v3770
    %v3907 = vunpack.c.h.b16 %v3770
    %v3908 = vunpack.c.l.b16 %v3771
    %v3909 = vunpack.c.h.b16 %v3771
    %v3910 = vunpack.c.l.b16 %v3772
    %v3911 = vunpack.c.h.b16 %v3772
    %v3912 = vunpack.c.l.b16 %v3773
    %v3913 = vunpack.c.h.b16 %v3773
    %v3914 = vunpack.c.l.b16 %v3774
    %v3915 = vunpack.c.h.b16 %v3774
    %v3916 = vunpack.c.l.b16 %v3775
    %v3917 = vunpack.c.h.b16 %v3775
    %v3918 = vunpack.c.l.b16 %v3776
    %v3919 = vunpack.c.h.b16 %v3776
    %v3920 = vunpack.c.l.b16 %v3777
    %v3921 = vunpack.c.h.b16 %v3777
    %v3922 = vunpack.c.l.b16 %v3778
    %v3923 = vunpack.c.h.b16 %v3778
    %v3924 = vunpack.c.l.b16 %v3779
    %v3925 = vunpack.c.h.b16 %v3779
    %v3926 = vunpack.c.l.b16 %v3780
    %v3927 = vunpack.c.h.b16 %v3780
    %v3928 = vunpack.c.l.b16 %v3781
    %v3929 = vunpack.c.h.b16 %v3781
    %v3930 = vunpack.c.l.b16 %v3782
    %v3931 = vunpack.c.h.b16 %v3782
    %v3932 = vunpack.c.l.b16 %v3783
    %v3933 = vunpack.c.h.b16 %v3783
    %v3934 = vunpack.c.l.b16 %v3784
    %v3935 = vunpack.c.h.b16 %v3784
    %v3936 = vunpack.c.l.b16 %v3785
    %v3937 = vunpack.c.h.b16 %v3785
    %v3938 = vunpack.c.l.b16 %v3786
    %v3939 = vunpack.c.h.b16 %v3786
    %v3940 = vpack.c.b16 %v3846, %v3844
    %v3941 = vpack.c.b16 %v3847, %v3845
    %v3942 = vpack.c.b16 %v3850, %v3848
    %v3943 = vpack.c.b16 %v3851, %v3849
    %v3944 = vpack.c.b16 %v3854, %v3852
    %v3945 = vpack.c.b16 %v3855, %v3853
    %v3946 = vpack.c.b16 %v3858, %v3856
    %v3947 = vpack.c.b16 %v3859, %v3857
    %v3948 = vpack.c.b16 %v3862, %v3860
    %v3949 = vpack.c.b16 %v3863, %v3861
    %v3950 = vpack.c.b16 %v3866, %v3864
    %v3951 = vpack.c.b16 %v3867, %v3865
    %v3952 = vpack.c.b16 %v3870, %v3868
    %v3953 = vpack.c.b16 %v3871, %v3869
    %v3954 = vpack.c.b16 %v3874, %v3872
    %v3955 = vpack.c.b16 %v3875, %v3873
    %v3956 = vpack.c.b16 %v3878, %v3876
    %v3957 = vpack.c.b16 %v3879, %v3877
    %v3958 = vpack.c.b16 %v3882, %v3880
    %v3959 = vpack.c.b16 %v3883, %v3881
    %v3960 = vpack.c.b16 %v3886, %v3884
    %v3961 = vpack.c.b16 %v3887, %v3885
    %v3962 = vpack.c.b16 %v3890, %v3888
    %v3963 = vpack.c.b16 %v3891, %v3889
    %v3964 = vpack.c.b16 %v3894, %v3892
    %v3965 = vpack.c.b16 %v3895, %v3893
    %v3966 = vpack.c.b16 %v3898, %v3896
    %v3967 = vpack.c.b16 %v3899, %v3897
    %v3968 = vpack.c.b16 %v3902, %v3900
    %v3969 = vpack.c.b16 %v3903, %v3901
    %v3970 = vpack.c.b16 %v3906, %v3904
    %v3971 = vpack.c.b16 %v3907, %v3905
    %v3972 = vpack.c.b16 %v3910, %v3908
    %v3973 = vpack.c.b16 %v3911, %v3909
    %v3974 = vpack.c.b16 %v3914, %v3912
    %v3975 = vpack.c.b16 %v3915, %v3913
    %v3976 = vpack.c.b16 %v3918, %v3916
    %v3977 = vpack.c.b16 %v3919, %v3917
    %v3978 = vpack.c.b16 %v3922, %v3920
    %v3979 = vpack.c.b16 %v3923, %v3921
    %v3980 = vpack.c.b16 %v3926, %v3924
    %v3981 = vpack.c.b16 %v3927, %v3925
    %v3982 = vpack.c.b16 %v3930, %v3928
    %v3983 = vpack.c.b16 %v3931, %v3929
    %v3984 = vpack.c.b16 %v3934, %v3932
    %v3985 = vpack.c.b16 %v3935, %v3933
    %v3986 = vpack.c.b16 %v3938, %v3936
    %v3987 = vpack.c.b16 %v3939, %v3937
    %4036 = vmatprep.subr.bf16.mxu0 %v3941
    %4037 = vmatpush1.bf16.msra.mxu0 %v3940
    %4038 = vmatprep.subr.bf16.mxu0 %v3943
    %4039 = vmatpush1.bf16.msra.mxu0 %v3942
    %4040 = vmatprep.subr.bf16.mxu0 %v3945
    %4041 = vmatpush1.bf16.msra.mxu0 %v3944
    %4042 = vmatprep.subr.bf16.mxu0 %v3947
    %4043 = vmatpush1.bf16.msra.mxu0 %v3946
    %4044 = vmatprep.subr.bf16.mxu0 %v3949
    %4045 = vmatpush1.bf16.msra.mxu0 %v3948
    %4046 = vmatprep.subr.bf16.mxu0 %v3951
    %4047 = vmatpush1.bf16.msra.mxu0 %v3950
    %4048 = vmatprep.subr.bf16.mxu0 %v3953
    %4049 = vmatpush1.bf16.msra.mxu0 %v3952
    %4050 = vmatprep.subr.bf16.mxu0 %v3955
    %4051 = vmatpush1.bf16.msra.mxu0 %v3954
    %4052 = vmatprep.subr.bf16.mxu0 %v3957
    %4053 = vmatpush1.bf16.msra.mxu0 %v3956
    %4054 = vmatprep.subr.bf16.mxu0 %v3959
    %4055 = vmatpush1.bf16.msra.mxu0 %v3958
    %4056 = vmatprep.subr.bf16.mxu0 %v3961
    %4057 = vmatpush1.bf16.msra.mxu0 %v3960
    %4058 = vmatprep.subr.bf16.mxu0 %v3963
    %4059 = vmatpush1.bf16.msra.mxu0 %v3962
    %4060 = vmatprep.subr.bf16.mxu0 %v3965
    %4061 = vmatpush1.bf16.msra.mxu0 %v3964
    %4062 = vmatprep.subr.bf16.mxu0 %v3967
    %4063 = vmatpush1.bf16.msra.mxu0 %v3966
    %4064 = vmatprep.subr.bf16.mxu0 %v3969
    %4065 = vmatpush1.bf16.msra.mxu0 %v3968
    %4066 = vmatprep.subr.bf16.mxu0 %v3971
    %4067 = vmatpush1.bf16.msra.mxu0 %v3970
    %4068 = vmatprep.mubr.bf16.mxu0 %v3791
    %4069 = vmatmul.mubr.bf16.gmra.mrb[0].mxu0 %v3790
    %v4070 = vpop.f32.mrb[0].mxu0
    %v4071 = vadd.f32 0.0, %v4070
    %v4072 = vpop.f32.mrb[0].mxu0
    %v4073 = vadd.f32 0.0, %v4072
    %v4074 = vpop.f32.mrb[0].mxu0
    %v4075 = vpop.f32.mrb[0].mxu0
    %4076 = vdwg.mxu0
    %4077 = vmatprep.subr.bf16.mxu0 %v3973
    %4078 = vmatpush1.bf16.msra.mxu0 %v3972
    %4079 = vmatprep.subr.bf16.mxu0 %v3975
    %4080 = vmatpush1.bf16.msra.mxu0 %v3974
    %4081 = vmatprep.subr.bf16.mxu0 %v3977
    %4082 = vmatpush1.bf16.msra.mxu0 %v3976
    %4083 = vmatprep.subr.bf16.mxu0 %v3979
    %4084 = vmatpush1.bf16.msra.mxu0 %v3978
    %4085 = vmatprep.subr.bf16.mxu0 %v3981
    %4086 = vmatpush1.bf16.msra.mxu0 %v3980
    %4087 = vmatprep.subr.bf16.mxu0 %v3983
    %4088 = vmatpush1.bf16.msra.mxu0 %v3982
    %4089 = vmatprep.subr.bf16.mxu0 %v3985
    %4090 = vmatpush1.bf16.msra.mxu0 %v3984
    %4091 = vmatprep.subr.bf16.mxu0 %v3987
    %4092 = vmatpush1.bf16.msra.mxu0 %v3986
    %4093 = vmatprep.subr.bf16.mxu0 0
    %4094 = vmatpush1.bf16.msra.mxu0 0
    %4095 = vmatprep.subr.bf16.mxu0 0
    %4096 = vmatpush1.bf16.msra.mxu0 0
    %4097 = vmatprep.subr.bf16.mxu0 0
    %4098 = vmatpush1.bf16.msra.mxu0 0
    %4099 = vmatprep.subr.bf16.mxu0 0
    %4100 = vmatpush1.bf16.msra.mxu0 0
    %4101 = vmatprep.subr.bf16.mxu0 0
    %4102 = vmatpush1.bf16.msra.mxu0 0
    %4103 = vmatprep.subr.bf16.mxu0 0
    %4104 = vmatpush1.bf16.msra.mxu0 0
    %4105 = vmatprep.subr.bf16.mxu0 0
    %4106 = vmatpush1.bf16.msra.mxu0 0
    %4107 = vmatprep.subr.bf16.mxu0 0
    %4108 = vmatpush1.bf16.msra.mxu0 0
    %4109 = vmatprep.mubr.bf16.mxu0 0
    %4110 = vmatmul.mubr.bf16.gmra.mrb[0].mxu0 %v3792
    %v4111 = vpop.f32.mrb[0].mxu0
    %v4112 = vadd.f32 %v4071, %v4111
    %v4113 = vpop.f32.mrb[0].mxu0
    %v4114 = vadd.f32 %v4073, %v4113
    %v4115 = vpop.f32.mrb[0].mxu0
    %v4116 = vpop.f32.mrb[0].mxu0
    %4117 = vdwg.mxu0
    %v4118 = vadd.f32 %v3730, %v4112
    %v4119 = vadd.f32 %v3731, %v4114
    %v4120 = vld [vmem:[#allocation26] sm:$0x3]
    %v4122 = vlaneseq
    %v4123 = vshrl.u32 %v4122, 7
    %v4124 = vsub.s32 0, %v4123
    %v4125 = vrot.slane %v4120, %v4124
    %v4126 = vlaneseq
    %v4127 = vshrl.u32 %v4126, 7
    %v4128 = vsub.s32 1, %v4127
    %v4129 = vrot.slane %v4120, %v4128
    %v4132 = vadd.f32 %v4118, %v4125
    %v4133 = vadd.f32 %v4119, %v4129
    %v4134 = vmax.f32 %v4132, 0.0
    %v4135 = vmax.f32 %v4133, 0.0
    %v4136 = vpack.c.bf16 %v4134, %v4134
    %v4137 = vpack.c.bf16 %v4135, %v4135
    %v4138 = vld [vmem:[#allocation27] sm:$0xff]
    %v4139 = vld [vmem:[#allocation27 + $0x8] sm:$0xff]
    %v4140 = vld [vmem:[#allocation27 + $0x10] sm:$0xff]
    %v4141 = vld [vmem:[#allocation27 + $0x18] sm:$0xff]
    %v4142 = vld [vmem:[#allocation27 + $0x20] sm:$0xff]
    %v4143 = vld [vmem:[#allocation27 + $0x28] sm:$0xff]
    %v4144 = vld [vmem:[#allocation27 + $0x30] sm:$0xff]
    %v4145 = vld [vmem:[#allocation27 + $0x38] sm:$0xff]
    %v4146 = vld [vmem:[#allocation27 + $0x40] sm:$0xff]
    %v4147 = vld [vmem:[#allocation27 + $0x48] sm:$0xff]
    %v4148 = vld [vmem:[#allocation27 + $0x50] sm:$0xff]
    %v4149 = vld [vmem:[#allocation27 + $0x58] sm:$0xff]
    %v4150 = vld [vmem:[#allocation27 + $0x60] sm:$0xff]
    %v4151 = vld [vmem:[#allocation27 + $0x68] sm:$0xff]
    %v4152 = vld [vmem:[#allocation27 + $0x70] sm:$0xff]
    %v4153 = vld [vmem:[#allocation27 + $0x78] sm:$0xff]
    %v4154 = vld [vmem:[#allocation27 + $0x80] sm:$0xff]
    %v4155 = vld [vmem:[#allocation27 + $0x88] sm:$0xff]
    %v4156 = vld [vmem:[#allocation27 + $0x90] sm:$0xff]
    %v4157 = vld [vmem:[#allocation27 + $0x98] sm:$0xff]
    %v4158 = vld [vmem:[#allocation27 + $0xa0] sm:$0xff]
    %v4159 = vld [vmem:[#allocation27 + $0xa8] sm:$0xff]
    %v4160 = vld [vmem:[#allocation27 + $0xb0] sm:$0xff]
    %v4161 = vld [vmem:[#allocation27 + $0xb8] sm:$0xff]
    %v4162 = vld [vmem:[#allocation27 + $0xc0] sm:$0xff]
    %v4163 = vld [vmem:[#allocation27 + $0xc8] sm:$0xff]
    %v4164 = vld [vmem:[#allocation27 + $0xd0] sm:$0xff]
    %v4165 = vld [vmem:[#allocation27 + $0xd8] sm:$0xff]
    %v4166 = vld [vmem:[#allocation27 + $0xe0] sm:$0xff]
    %v4167 = vld [vmem:[#allocation27 + $0xe8] sm:$0xff]
    %v4168 = vld [vmem:[#allocation27 + $0xf0] sm:$0xff]
    %v4169 = vld [vmem:[#allocation27 + $0xf8] sm:$0xff]
    %v4170 = vld [vmem:[#allocation29] sm:$0x3]
    %v4172 = vlaneseq
    %v4173 = vshrl.u32 %v4172, 7
    %v4174 = vsub.s32 0, %v4173
    %v4175 = vrot.slane %v4170, %v4174
    %v4176 = vlaneseq
    %v4177 = vshrl.u32 %v4176, 7
    %v4178 = vsub.s32 1, %v4177
    %v4179 = vrot.slane %v4170, %v4178
    %v4214 = vunpack.c.l.b16 %v4138
    %v4215 = vunpack.c.h.b16 %v4138
    %v4216 = vunpack.c.l.b16 %v4139
    %v4217 = vunpack.c.h.b16 %v4139
    %v4218 = vunpack.c.l.b16 %v4140
    %v4219 = vunpack.c.h.b16 %v4140
    %v4220 = vunpack.c.l.b16 %v4141
    %v4221 = vunpack.c.h.b16 %v4141
    %v4222 = vunpack.c.l.b16 %v4142
    %v4223 = vunpack.c.h.b16 %v4142
    %v4224 = vunpack.c.l.b16 %v4143
    %v4225 = vunpack.c.h.b16 %v4143
    %v4226 = vunpack.c.l.b16 %v4144
    %v4227 = vunpack.c.h.b16 %v4144
    %v4228 = vunpack.c.l.b16 %v4145
    %v4229 = vunpack.c.h.b16 %v4145
    %v4230 = vunpack.c.l.b16 %v4146
    %v4231 = vunpack.c.h.b16 %v4146
    %v4232 = vunpack.c.l.b16 %v4147
    %v4233 = vunpack.c.h.b16 %v4147
    %v4234 = vunpack.c.l.b16 %v4148
    %v4235 = vunpack.c.h.b16 %v4148
    %v4236 = vunpack.c.l.b16 %v4149
    %v4237 = vunpack.c.h.b16 %v4149
    %v4238 = vunpack.c.l.b16 %v4150
    %v4239 = vunpack.c.h.b16 %v4150
    %v4240 = vunpack.c.l.b16 %v4151
    %v4241 = vunpack.c.h.b16 %v4151
    %v4242 = vunpack.c.l.b16 %v4152
    %v4243 = vunpack.c.h.b16 %v4152
    %v4244 = vunpack.c.l.b16 %v4153
    %v4245 = vunpack.c.h.b16 %v4153
    %v4246 = vunpack.c.l.b16 %v4154
    %v4247 = vunpack.c.h.b16 %v4154
    %v4248 = vunpack.c.l.b16 %v4155
    %v4249 = vunpack.c.h.b16 %v4155
    %v4250 = vunpack.c.l.b16 %v4156
    %v4251 = vunpack.c.h.b16 %v4156
    %v4252 = vunpack.c.l.b16 %v4157
    %v4253 = vunpack.c.h.b16 %v4157
    %v4254 = vunpack.c.l.b16 %v4158
    %v4255 = vunpack.c.h.b16 %v4158
    %v4256 = vunpack.c.l.b16 %v4159
    %v4257 = vunpack.c.h.b16 %v4159
    %v4258 = vunpack.c.l.b16 %v4160
    %v4259 = vunpack.c.h.b16 %v4160
    %v4260 = vunpack.c.l.b16 %v4161
    %v4261 = vunpack.c.h.b16 %v4161
    %v4262 = vunpack.c.l.b16 %v4162
    %v4263 = vunpack.c.h.b16 %v4162
    %v4264 = vunpack.c.l.b16 %v4163
    %v4265 = vunpack.c.h.b16 %v4163
    %v4266 = vunpack.c.l.b16 %v4164
    %v4267 = vunpack.c.h.b16 %v4164
    %v4268 = vunpack.c.l.b16 %v4165
    %v4269 = vunpack.c.h.b16 %v4165
    %v4270 = vunpack.c.l.b16 %v4166
    %v4271 = vunpack.c.h.b16 %v4166
    %v4272 = vunpack.c.l.b16 %v4167
    %v4273 = vunpack.c.h.b16 %v4167
    %v4274 = vunpack.c.l.b16 %v4168
    %v4275 = vunpack.c.h.b16 %v4168
    %v4276 = vunpack.c.l.b16 %v4169
    %v4277 = vunpack.c.h.b16 %v4169
    %v4278 = vpack.c.b16 %v4216, %v4214
    %v4279 = vpack.c.b16 %v4217, %v4215
    %v4280 = vpack.c.b16 %v4220, %v4218
    %v4281 = vpack.c.b16 %v4221, %v4219
    %v4282 = vpack.c.b16 %v4224, %v4222
    %v4283 = vpack.c.b16 %v4225, %v4223
    %v4284 = vpack.c.b16 %v4228, %v4226
    %v4285 = vpack.c.b16 %v4229, %v4227
    %v4286 = vpack.c.b16 %v4232, %v4230
    %v4287 = vpack.c.b16 %v4233, %v4231
    %v4288 = vpack.c.b16 %v4236, %v4234
    %v4289 = vpack.c.b16 %v4237, %v4235
    %v4290 = vpack.c.b16 %v4240, %v4238
    %v4291 = vpack.c.b16 %v4241, %v4239
    %v4292 = vpack.c.b16 %v4244, %v4242
    %v4293 = vpack.c.b16 %v4245, %v4243
    %v4294 = vpack.c.b16 %v4248, %v4246
    %v4295 = vpack.c.b16 %v4249, %v4247
    %v4296 = vpack.c.b16 %v4252, %v4250
    %v4297 = vpack.c.b16 %v4253, %v4251
    %v4298 = vpack.c.b16 %v4256, %v4254
    %v4299 = vpack.c.b16 %v4257, %v4255
    %v4300 = vpack.c.b16 %v4260, %v4258
    %v4301 = vpack.c.b16 %v4261, %v4259
    %v4302 = vpack.c.b16 %v4264, %v4262
    %v4303 = vpack.c.b16 %v4265, %v4263
    %v4304 = vpack.c.b16 %v4268, %v4266
    %v4305 = vpack.c.b16 %v4269, %v4267
    %v4306 = vpack.c.b16 %v4272, %v4270
    %v4307 = vpack.c.b16 %v4273, %v4271
    %v4308 = vpack.c.b16 %v4276, %v4274
    %v4309 = vpack.c.b16 %v4277, %v4275
    %4342 = vmatprep.subr.bf16.mxu0 %v4279
    %4343 = vmatpush1.bf16.msra.mxu0 %v4278
    %4344 = vmatprep.subr.bf16.mxu0 %v4281
    %4345 = vmatpush1.bf16.msra.mxu0 %v4280
    %4346 = vmatprep.subr.bf16.mxu0 %v4283
    %4347 = vmatpush1.bf16.msra.mxu0 %v4282
    %4348 = vmatprep.subr.bf16.mxu0 %v4285
    %4349 = vmatpush1.bf16.msra.mxu0 %v4284
    %4350 = vmatprep.subr.bf16.mxu0 %v4287
    %4351 = vmatpush1.bf16.msra.mxu0 %v4286
    %4352 = vmatprep.subr.bf16.mxu0 %v4289
    %4353 = vmatpush1.bf16.msra.mxu0 %v4288
    %4354 = vmatprep.subr.bf16.mxu0 %v4291
    %4355 = vmatpush1.bf16.msra.mxu0 %v4290
    %4356 = vmatprep.subr.bf16.mxu0 %v4293
    %4357 = vmatpush1.bf16.msra.mxu0 %v4292
    %4358 = vmatprep.subr.bf16.mxu0 %v4295
    %4359 = vmatpush1.bf16.msra.mxu0 %v4294
    %4360 = vmatprep.subr.bf16.mxu0 %v4297
    %4361 = vmatpush1.bf16.msra.mxu0 %v4296
    %4362 = vmatprep.subr.bf16.mxu0 %v4299
    %4363 = vmatpush1.bf16.msra.mxu0 %v4298
    %4364 = vmatprep.subr.bf16.mxu0 %v4301
    %4365 = vmatpush1.bf16.msra.mxu0 %v4300
    %4366 = vmatprep.subr.bf16.mxu0 %v4303
    %4367 = vmatpush1.bf16.msra.mxu0 %v4302
    %4368 = vmatprep.subr.bf16.mxu0 %v4305
    %4369 = vmatpush1.bf16.msra.mxu0 %v4304
    %4370 = vmatprep.subr.bf16.mxu0 %v4307
    %4371 = vmatpush1.bf16.msra.mxu0 %v4306
    %4372 = vmatprep.subr.bf16.mxu0 %v4309
    %4373 = vmatpush1.bf16.msra.mxu0 %v4308
    %4374 = vmatprep.mubr.bf16.mxu0 %v4137
    %4375 = vmatmul.mubr.bf16.gmra.mrb[0].mxu0 %v4136
    %v4376 = vpop.f32.mrb[0].mxu0
    %v4377 = vadd.f32 %v4175, %v4376
    %v4378 = vpop.f32.mrb[0].mxu0
    %v4379 = vadd.f32 %v4179, %v4378
    %v4380 = vpop.f32.mrb[0].mxu0
    %v4381 = vpop.f32.mrb[0].mxu0
    %4382 = vdwg.mxu0
    %v4383 = vmax.f32 %v4377, 0.0
    %v4384 = vmax.f32 %v4379, 0.0
    %s4385 = sld [smem:[#allocation5]]
    %v4386 = vld [vmem:[#allocation6] sm:$0xf]
    %v4387 = vld [vmem:[#allocation6 + $0x4] sm:$0xf]
    %v4388 = vld [vmem:[#allocation6 + $0x8] sm:$0xf]
    %s4389 = smul.u32 %s4385, 2
    %s4390 = smul.addr %s4389, 2
    %s4391 = scalar_lea.vmem [#allocation6], %s4390
    %v4392 = vld [vmem:[%s4391] sm:$0xf]
    %s4393 = smul.addr %s4389, 2
    %s4394 = scalar_lea.vmem [#allocation9], %s4393
    %v4395 = vld [vmem:[%s4394] sm:$0xf]
    %v4400 = vunpack.c.l.s4 1983009808
    %v4401 = vunpack.c.0.s8 %v4400
    %v4402 = vlaneseq
    %v4403 = vshrl.u32 %v4402, 7
    %v4404 = vsub.s32 %v4401, %v4403
    %v4405 = vrot.slane %v4386, %v4404
    %v4406 = vcombine.high %v4405, %v4405
    %v4408 = vunpack.c.l.s4 1983009808
    %v4409 = vunpack.c.0.s8 %v4408
    %v4410 = vlaneseq
    %v4411 = vshrl.u32 %v4410, 7
    %v4412 = vsub.s32 %v4409, %v4411
    %v4413 = vrot.slane %v4387, %v4412
    %v4414 = vcombine.high %v4413, %v4413
    %v4416 = vunpack.c.l.s4 1983009808
    %v4417 = vunpack.c.0.s8 %v4416
    %v4418 = vlaneseq
    %v4419 = vshrl.u32 %v4418, 7
    %v4420 = vsub.s32 %v4417, %v4419
    %v4421 = vrot.slane %v4388, %v4420
    %v4422 = vcombine.high %v4421, %v4421
    %vm4429 = vcmask 1041408
    %v4430 = vsel %vm4429, %v4405, 0.0
    %v4431 = vsel %vm4429, %v4413, 0.0
    %v4432 = vadd.f32 %v4430, %v4431
    %v4433 = vsel %vm4429, %v4421, 0.0
    %v4434 = vadd.f32 %v4432, %v4433
    %v4435 = vsel %vm4429, %v4406, 0.0
    %v4436 = vsel %vm4429, %v4414, 0.0
    %v4437 = vadd.f32 %v4435, %v4436
    %v4438 = vsel %vm4429, %v4422, 0.0
    %v4439 = vadd.f32 %v4437, %v4438
    %v4442 = vunpack.c.l.s4 1983009808
    %v4443 = vunpack.c.0.s8 %v4442
    %v4444 = vlaneseq
    %v4445 = vshrl.u32 %v4444, 7
    %v4446 = vsub.s32 %v4443, %v4445
    %v4447 = vrot.slane %v4392, %v4446
    %v4448 = vcombine.high %v4447, %v4447
    %v4451 = vpack.c.bf16 %v4383, %v4383
    %v4452 = vpack.c.bf16 %v4384, %v4384
    %v4453 = vpack.c.bf16 %v4447, %v4447
    %v4454 = vpack.c.bf16 %v4448, %v4448
    %v4455 = vld [vmem:[#allocation30] sm:$0xff]
    %v4456 = vld [vmem:[#allocation30 + $0x8] sm:$0xff]
    %v4457 = vld [vmem:[#allocation30 + $0x10] sm:$0xff]
    %v4458 = vld [vmem:[#allocation30 + $0x18] sm:$0xff]
    %v4459 = vld [vmem:[#allocation30 + $0x20] sm:$0xff]
    %v4460 = vld [vmem:[#allocation30 + $0x28] sm:$0xff]
    %v4461 = vld [vmem:[#allocation30 + $0x30] sm:$0xff]
    %v4462 = vld [vmem:[#allocation30 + $0x38] sm:$0xff]
    %v4463 = vld [vmem:[#allocation30 + $0x40] sm:$0xff]
    %v4464 = vld [vmem:[#allocation30 + $0x48] sm:$0xff]
    %v4465 = vld [vmem:[#allocation30 + $0x50] sm:$0xff]
    %v4466 = vld [vmem:[#allocation30 + $0x58] sm:$0xff]
    %v4467 = vld [vmem:[#allocation30 + $0x60] sm:$0xff]
    %v4468 = vld [vmem:[#allocation30 + $0x68] sm:$0xff]
    %v4469 = vld [vmem:[#allocation30 + $0x70] sm:$0xff]
    %v4470 = vld [vmem:[#allocation30 + $0x78] sm:$0xff]
    %v4471 = vld [vmem:[#allocation30 + $0x80] sm:$0xff]
    %v4472 = vld [vmem:[#allocation30 + $0x88] sm:$0xff]
    %v4473 = vld [vmem:[#allocation30 + $0x90] sm:$0xff]
    %v4474 = vld [vmem:[#allocation30 + $0x98] sm:$0xff]
    %v4475 = vld [vmem:[#allocation30 + $0xa0] sm:$0xff]
    %v4476 = vld [vmem:[#allocation30 + $0xa8] sm:$0xff]
    %v4477 = vld [vmem:[#allocation30 + $0xb0] sm:$0xff]
    %v4478 = vld [vmem:[#allocation30 + $0xb8] sm:$0xff]
    %v4479 = vld [vmem:[#allocation30 + $0xc0] sm:$0xff]
    %v4480 = vld [vmem:[#allocation30 + $0xc8] sm:$0xff]
    %v4481 = vld [vmem:[#allocation30 + $0xd0] sm:$0xff]
    %v4482 = vld [vmem:[#allocation30 + $0xd8] sm:$0xff]
    %v4483 = vld [vmem:[#allocation30 + $0xe0] sm:$0xff]
    %v4484 = vld [vmem:[#allocation30 + $0xe8] sm:$0xff]
    %v4485 = vld [vmem:[#allocation30 + $0xf0] sm:$0xff]
    %v4486 = vld [vmem:[#allocation30 + $0xf8] sm:$0xff]
    %v4487 = vld [vmem:[#allocation30 + $0x100] sm:$0xff]
    %v4488 = vld [vmem:[#allocation30 + $0x108] sm:$0xff]
    %v4489 = vld [vmem:[#allocation30 + $0x110] sm:$0xff]
    %v4490 = vld [vmem:[#allocation30 + $0x118] sm:$0xff]
    %v4491 = vld [vmem:[#allocation30 + $0x120] sm:$0xff]
    %v4492 = vld [vmem:[#allocation30 + $0x128] sm:$0xff]
    %v4493 = vld [vmem:[#allocation30 + $0x130] sm:$0xff]
    %v4494 = vld [vmem:[#allocation30 + $0x138] sm:$0xff]
    %v4495 = vld [vmem:[#allocation30 + $0x140] sm:$0xff]
    %v4496 = vld [vmem:[#allocation30 + $0x148] sm:$0xff]
    %v4497 = vld [vmem:[#allocation30 + $0x150] sm:$0xff]
    %v4498 = vld [vmem:[#allocation30 + $0x158] sm:$0xff]
    %v4499 = vld [vmem:[#allocation30 + $0x160] sm:$0xff]
    %v4500 = vld [vmem:[#allocation30 + $0x168] sm:$0xff]
    %v4501 = vld [vmem:[#allocation30 + $0x170] sm:$0xff]
    %v4502 = vld [vmem:[#allocation30 + $0x178] sm:$0xff]
    %v4503 = vld [vmem:[#allocation30 + $0x180] sm:$0xff]
    %v4504 = vld [vmem:[#allocation30 + $0x188] sm:$0xff]
    %v4505 = vld [vmem:[#allocation30 + $0x190] sm:$0xff]
    %v4506 = vld [vmem:[#allocation30 + $0x198] sm:$0xff]
    %v4507 = vld [vmem:[#allocation30 + $0x1a0] sm:$0xff]
    %v4508 = vld [vmem:[#allocation30 + $0x1a8] sm:$0xff]
    %v4509 = vld [vmem:[#allocation30 + $0x1b0] sm:$0xff]
    %v4510 = vld [vmem:[#allocation30 + $0x1b8] sm:$0xff]
    %v4511 = vld [vmem:[#allocation30 + $0x1c0] sm:$0xff]
    %v4512 = vld [vmem:[#allocation30 + $0x1c8] sm:$0xff]
    %v4513 = vld [vmem:[#allocation30 + $0x1d0] sm:$0xff]
    %v4514 = vld [vmem:[#allocation30 + $0x1d8] sm:$0xff]
    %v4515 = vld [vmem:[#allocation30 + $0x1e0] sm:$0xff]
    %v4516 = vld [vmem:[#allocation30 + $0x1e8] sm:$0xff]
    %v4517 = vld [vmem:[#allocation30 + $0x1f0] sm:$0xff]
    %v4518 = vld [vmem:[#allocation30 + $0x1f8] sm:$0xff]
    %v4519 = vld [vmem:[#allocation30 + $0x200] sm:$0xff]
    %v4520 = vld [vmem:[#allocation30 + $0x208] sm:$0xff]
    %v4521 = vld [vmem:[#allocation30 + $0x210] sm:$0xff]
    %v4522 = vld [vmem:[#allocation30 + $0x218] sm:$0xff]
    %v4523 = vld [vmem:[#allocation30 + $0x220] sm:$0xff]
    %v4524 = vld [vmem:[#allocation30 + $0x228] sm:$0xff]
    %v4525 = vld [vmem:[#allocation30 + $0x230] sm:$0xff]
    %v4526 = vld [vmem:[#allocation30 + $0x238] sm:$0xff]
    %v4527 = vld [vmem:[#allocation30 + $0x240] sm:$0xff]
    %v4528 = vld [vmem:[#allocation30 + $0x248] sm:$0xff]
    %v4529 = vld [vmem:[#allocation30 + $0x250] sm:$0xff]
    %v4530 = vld [vmem:[#allocation30 + $0x258] sm:$0xff]
    %v4531 = vld [vmem:[#allocation30 + $0x260] sm:$0xff]
    %v4532 = vld [vmem:[#allocation30 + $0x268] sm:$0xff]
    %v4533 = vld [vmem:[#allocation30 + $0x270] sm:$0xff]
    %v4534 = vld [vmem:[#allocation30 + $0x278] sm:$0xff]
    %v4535 = vld [vmem:[#allocation30 + $0x280] sm:$0xff]
    %v4536 = vld [vmem:[#allocation30 + $0x288] sm:$0xff]
    %v4537 = vld [vmem:[#allocation30 + $0x290] sm:$0xff]
    %v4538 = vld [vmem:[#allocation30 + $0x298] sm:$0xff]
    %v4539 = vld [vmem:[#allocation30 + $0x2a0] sm:$0xff]
    %v4540 = vld [vmem:[#allocation30 + $0x2a8] sm:$0xff]
    %v4541 = vld [vmem:[#allocation30 + $0x2b0] sm:$0xff]
    %v4542 = vld [vmem:[#allocation30 + $0x2b8] sm:$0xff]
    %v4543 = vld [vmem:[#allocation30 + $0x2c0] sm:$0xff]
    %v4544 = vld [vmem:[#allocation30 + $0x2c8] sm:$0xff]
    %v4545 = vld [vmem:[#allocation30 + $0x2d0] sm:$0xff]
    %v4546 = vld [vmem:[#allocation30 + $0x2d8] sm:$0xff]
    %v4547 = vld [vmem:[#allocation30 + $0x2e0] sm:$0xff]
    %v4548 = vld [vmem:[#allocation30 + $0x2e8] sm:$0xff]
    %v4549 = vld [vmem:[#allocation30 + $0x2f0] sm:$0xff]
    %v4550 = vld [vmem:[#allocation30 + $0x2f8] sm:$0xff]
    %v4551 = vld [vmem:[#allocation30 + $0x300] sm:$0xff]
    %v4552 = vld [vmem:[#allocation30 + $0x308] sm:$0xff]
    %v4553 = vld [vmem:[#allocation30 + $0x310] sm:$0xff]
    %v4554 = vld [vmem:[#allocation30 + $0x318] sm:$0xff]
    %v4555 = vld [vmem:[#allocation30 + $0x320] sm:$0xff]
    %v4556 = vld [vmem:[#allocation30 + $0x328] sm:$0xff]
    %v4557 = vld [vmem:[#allocation30 + $0x330] sm:$0xff]
    %v4558 = vld [vmem:[#allocation30 + $0x338] sm:$0xff]
    %v4559 = vld [vmem:[#allocation30 + $0x340] sm:$0xff]
    %v4560 = vld [vmem:[#allocation30 + $0x348] sm:$0xff]
    %v4561 = vld [vmem:[#allocation30 + $0x350] sm:$0xff]
    %v4562 = vld [vmem:[#allocation30 + $0x358] sm:$0xff]
    %v4563 = vld [vmem:[#allocation30 + $0x360] sm:$0xff]
    %v4564 = vld [vmem:[#allocation30 + $0x368] sm:$0xff]
    %v4565 = vld [vmem:[#allocation30 + $0x370] sm:$0xff]
    %v4566 = vld [vmem:[#allocation30 + $0x378] sm:$0xff]
    %v4567 = vld [vmem:[#allocation30 + $0x380] sm:$0xff]
    %v4568 = vld [vmem:[#allocation30 + $0x388] sm:$0xff]
    %v4569 = vld [vmem:[#allocation30 + $0x390] sm:$0xff]
    %v4570 = vld [vmem:[#allocation30 + $0x398] sm:$0xff]
    %v4571 = vld [vmem:[#allocation30 + $0x3a0] sm:$0xff]
    %v4572 = vld [vmem:[#allocation30 + $0x3a8] sm:$0xff]
    %v4573 = vld [vmem:[#allocation30 + $0x3b0] sm:$0xff]
    %v4574 = vld [vmem:[#allocation30 + $0x3b8] sm:$0xff]
    %v4575 = vld [vmem:[#allocation30 + $0x3c0] sm:$0xff]
    %v4576 = vld [vmem:[#allocation30 + $0x3c8] sm:$0xff]
    %v4577 = vld [vmem:[#allocation30 + $0x3d0] sm:$0xff]
    %v4578 = vld [vmem:[#allocation30 + $0x3d8] sm:$0xff]
    %v4579 = vld [vmem:[#allocation30 + $0x3e0] sm:$0xff]
    %v4580 = vld [vmem:[#allocation30 + $0x3e8] sm:$0xff]
    %v4581 = vld [vmem:[#allocation30 + $0x3f0] sm:$0xff]
    %v4582 = vld [vmem:[#allocation30 + $0x3f8] sm:$0xff]
    %v4583 = vld [vmem:[#allocation30 + $0x400] sm:$0xff]
    %v4584 = vld [vmem:[#allocation30 + $0x408] sm:$0xff]
    %v4585 = vld [vmem:[#allocation30 + $0x410] sm:$0xff]
    %v4586 = vld [vmem:[#allocation30 + $0x418] sm:$0xff]
    %v4587 = vld [vmem:[#allocation30 + $0x420] sm:$0xff]
    %v4588 = vld [vmem:[#allocation30 + $0x428] sm:$0xff]
    %v4589 = vld [vmem:[#allocation30 + $0x430] sm:$0xff]
    %v4590 = vld [vmem:[#allocation30 + $0x438] sm:$0xff]
    %v4591 = vld [vmem:[#allocation30 + $0x440] sm:$0xff]
    %v4592 = vld [vmem:[#allocation30 + $0x448] sm:$0xff]
    %v4593 = vld [vmem:[#allocation30 + $0x450] sm:$0xff]
    %v4594 = vld [vmem:[#allocation30 + $0x458] sm:$0xff]
    %v4595 = vld [vmem:[#allocation30 + $0x460] sm:$0xff]
    %v4596 = vld [vmem:[#allocation30 + $0x468] sm:$0xff]
    %v4597 = vld [vmem:[#allocation30 + $0x470] sm:$0xff]
    %v4598 = vld [vmem:[#allocation30 + $0x478] sm:$0xff]
    %v4599 = vld [vmem:[#allocation30 + $0x480] sm:$0xff]
    %v4600 = vld [vmem:[#allocation30 + $0x488] sm:$0xff]
    %v4601 = vld [vmem:[#allocation30 + $0x490] sm:$0xff]
    %v4602 = vld [vmem:[#allocation30 + $0x498] sm:$0xff]
    %v4603 = vld [vmem:[#allocation30 + $0x4a0] sm:$0xff]
    %v4604 = vld [vmem:[#allocation30 + $0x4a8] sm:$0xff]
    %v4605 = vld [vmem:[#allocation30 + $0x4b0] sm:$0xff]
    %v4606 = vld [vmem:[#allocation30 + $0x4b8] sm:$0xff]
    %v4607 = vld [vmem:[#allocation30 + $0x4c0] sm:$0xff]
    %v4608 = vld [vmem:[#allocation30 + $0x4c8] sm:$0xff]
    %v4609 = vld [vmem:[#allocation30 + $0x4d0] sm:$0xff]
    %v4610 = vld [vmem:[#allocation30 + $0x4d8] sm:$0xff]
    %v4611 = vld [vmem:[#allocation30 + $0x4e0] sm:$0xff]
    %v4612 = vld [vmem:[#allocation30 + $0x4e8] sm:$0xff]
    %v4613 = vld [vmem:[#allocation30 + $0x4f0] sm:$0xff]
    %v4614 = vld [vmem:[#allocation30 + $0x4f8] sm:$0xff]
    %v4615 = vld [vmem:[#allocation30 + $0x500] sm:$0xff]
    %v4616 = vld [vmem:[#allocation30 + $0x508] sm:$0xff]
    %v4617 = vld [vmem:[#allocation30 + $0x510] sm:$0xff]
    %v4618 = vld [vmem:[#allocation30 + $0x518] sm:$0xff]
    %v4619 = vld [vmem:[#allocation30 + $0x520] sm:$0xff]
    %v4620 = vld [vmem:[#allocation30 + $0x528] sm:$0xff]
    %v4621 = vld [vmem:[#allocation30 + $0x530] sm:$0xff]
    %v4622 = vld [vmem:[#allocation30 + $0x538] sm:$0xff]
    %v4623 = vld [vmem:[#allocation30 + $0x540] sm:$0xff]
    %v4624 = vld [vmem:[#allocation30 + $0x548] sm:$0xff]
    %v4625 = vld [vmem:[#allocation30 + $0x550] sm:$0xff]
    %v4626 = vld [vmem:[#allocation30 + $0x558] sm:$0xff]
    %v4627 = vld [vmem:[#allocation30 + $0x560] sm:$0xff]
    %v4628 = vld [vmem:[#allocation30 + $0x568] sm:$0xff]
    %v4629 = vld [vmem:[#allocation30 + $0x570] sm:$0xff]
    %v4630 = vld [vmem:[#allocation30 + $0x578] sm:$0xff]
    %v4631 = vld [vmem:[#allocation30 + $0x580] sm:$0xff]
    %v4632 = vld [vmem:[#allocation30 + $0x588] sm:$0xff]
    %v4633 = vld [vmem:[#allocation30 + $0x590] sm:$0xff]
    %v4634 = vld [vmem:[#allocation30 + $0x598] sm:$0xff]
    %v4635 = vld [vmem:[#allocation30 + $0x5a0] sm:$0xff]
    %v4636 = vld [vmem:[#allocation30 + $0x5a8] sm:$0xff]
    %v4637 = vld [vmem:[#allocation30 + $0x5b0] sm:$0xff]
    %v4638 = vld [vmem:[#allocation30 + $0x5b8] sm:$0xff]
    %v4639 = vld [vmem:[#allocation30 + $0x5c0] sm:$0xff]
    %v4640 = vld [vmem:[#allocation30 + $0x5c8] sm:$0xff]
    %v4641 = vld [vmem:[#allocation30 + $0x5d0] sm:$0xff]
    %v4642 = vld [vmem:[#allocation30 + $0x5d8] sm:$0xff]
    %v4643 = vld [vmem:[#allocation30 + $0x5e0] sm:$0xff]
    %v4644 = vld [vmem:[#allocation30 + $0x5e8] sm:$0xff]
    %v4645 = vld [vmem:[#allocation30 + $0x5f0] sm:$0xff]
    %v4646 = vld [vmem:[#allocation30 + $0x5f8] sm:$0xff]
    %v4647 = vld [vmem:[#allocation30 + $0x600] sm:$0xff]
    %v4648 = vld [vmem:[#allocation30 + $0x608] sm:$0xff]
    %v4649 = vld [vmem:[#allocation30 + $0x610] sm:$0xff]
    %v4650 = vld [vmem:[#allocation30 + $0x618] sm:$0xff]
    %v4651 = vld [vmem:[#allocation30 + $0x620] sm:$0xff]
    %v4652 = vld [vmem:[#allocation30 + $0x628] sm:$0xff]
    %v4653 = vld [vmem:[#allocation30 + $0x630] sm:$0xff]
    %v4654 = vld [vmem:[#allocation30 + $0x638] sm:$0xff]
    %v4655 = vld [vmem:[#allocation30 + $0x640] sm:$0xff]
    %v4656 = vld [vmem:[#allocation30 + $0x648] sm:$0xff]
    %v4657 = vld [vmem:[#allocation30 + $0x650] sm:$0xff]
    %v4658 = vld [vmem:[#allocation30 + $0x658] sm:$0xff]
    %v4659 = vld [vmem:[#allocation30 + $0x660] sm:$0xff]
    %v4660 = vld [vmem:[#allocation30 + $0x668] sm:$0xff]
    %v4661 = vld [vmem:[#allocation30 + $0x670] sm:$0xff]
    %v4662 = vld [vmem:[#allocation30 + $0x678] sm:$0xff]
    %v4663 = vld [vmem:[#allocation30 + $0x680] sm:$0xff]
    %v4664 = vld [vmem:[#allocation30 + $0x688] sm:$0xff]
    %v4665 = vld [vmem:[#allocation30 + $0x690] sm:$0xff]
    %v4666 = vld [vmem:[#allocation30 + $0x698] sm:$0xff]
    %v4667 = vld [vmem:[#allocation30 + $0x6a0] sm:$0xff]
    %v4668 = vld [vmem:[#allocation30 + $0x6a8] sm:$0xff]
    %v4669 = vld [vmem:[#allocation30 + $0x6b0] sm:$0xff]
    %v4670 = vld [vmem:[#allocation30 + $0x6b8] sm:$0xff]
    %v4671 = vld [vmem:[#allocation30 + $0x6c0] sm:$0xff]
    %v4672 = vld [vmem:[#allocation30 + $0x6c8] sm:$0xff]
    %v4673 = vld [vmem:[#allocation30 + $0x6d0] sm:$0xff]
    %v4674 = vld [vmem:[#allocation30 + $0x6d8] sm:$0xff]
    %v4675 = vld [vmem:[#allocation30 + $0x6e0] sm:$0xff]
    %v4676 = vld [vmem:[#allocation30 + $0x6e8] sm:$0xff]
    %v4677 = vld [vmem:[#allocation30 + $0x6f0] sm:$0xff]
    %v4678 = vld [vmem:[#allocation30 + $0x6f8] sm:$0xff]
    %v4679 = vld [vmem:[#allocation30 + $0x700] sm:$0xff]
    %v4680 = vld [vmem:[#allocation30 + $0x708] sm:$0xff]
    %v4681 = vld [vmem:[#allocation30 + $0x710] sm:$0xff]
    %v4682 = vld [vmem:[#allocation30 + $0x718] sm:$0xff]
    %v4683 = vld [vmem:[#allocation30 + $0x720] sm:$0xff]
    %v4684 = vld [vmem:[#allocation30 + $0x728] sm:$0xff]
    %v4685 = vld [vmem:[#allocation30 + $0x730] sm:$0xff]
    %v4686 = vld [vmem:[#allocation30 + $0x738] sm:$0xff]
    %v4687 = vld [vmem:[#allocation30 + $0x740] sm:$0xff]
    %v4688 = vld [vmem:[#allocation30 + $0x748] sm:$0xff]
    %v4689 = vld [vmem:[#allocation30 + $0x750] sm:$0xff]
    %v4690 = vld [vmem:[#allocation30 + $0x758] sm:$0xff]
    %v4691 = vld [vmem:[#allocation30 + $0x760] sm:$0xff]
    %v4692 = vld [vmem:[#allocation30 + $0x768] sm:$0xff]
    %v4693 = vld [vmem:[#allocation30 + $0x770] sm:$0xff]
    %v4694 = vld [vmem:[#allocation30 + $0x778] sm:$0xff]
    %v4695 = vld [vmem:[#allocation30 + $0x780] sm:$0xff]
    %v4696 = vld [vmem:[#allocation30 + $0x788] sm:$0xff]
    %v4697 = vld [vmem:[#allocation30 + $0x790] sm:$0xff]
    %v4698 = vld [vmem:[#allocation30 + $0x798] sm:$0xff]
    %v4699 = vld [vmem:[#allocation30 + $0x7a0] sm:$0xff]
    %v4700 = vld [vmem:[#allocation30 + $0x7a8] sm:$0xff]
    %v4701 = vld [vmem:[#allocation30 + $0x7b0] sm:$0xff]
    %v4702 = vld [vmem:[#allocation30 + $0x7b8] sm:$0xff]
    %v4703 = vld [vmem:[#allocation30 + $0x7c0] sm:$0xff]
    %v4704 = vld [vmem:[#allocation30 + $0x7c8] sm:$0xff]
    %v4705 = vld [vmem:[#allocation30 + $0x7d0] sm:$0xff]
    %v4706 = vld [vmem:[#allocation30 + $0x7d8] sm:$0xff]
    %v4707 = vld [vmem:[#allocation30 + $0x7e0] sm:$0xff]
    %v4708 = vld [vmem:[#allocation30 + $0x7e8] sm:$0xff]
    %v4709 = vld [vmem:[#allocation30 + $0x7f0] sm:$0xff]
    %v4710 = vld [vmem:[#allocation30 + $0x7f8] sm:$0xff]
    %v4711 = vld [vmem:[#allocation32] sm:$0xff]
    %v4713 = vlaneseq
    %v4714 = vshrl.u32 %v4713, 7
    %v4715 = vsub.s32 0, %v4714
    %v4716 = vrot.slane %v4711, %v4715
    %v4717 = vlaneseq
    %v4718 = vshrl.u32 %v4717, 7
    %v4719 = vsub.s32 1, %v4718
    %v4720 = vrot.slane %v4711, %v4719
    %v4721 = vlaneseq
    %v4722 = vshrl.u32 %v4721, 7
    %v4723 = vsub.s32 2, %v4722
    %v4724 = vrot.slane %v4711, %v4723
    %v4725 = vlaneseq
    %v4726 = vshrl.u32 %v4725, 7
    %v4727 = vsub.s32 3, %v4726
    %v4728 = vrot.slane %v4711, %v4727
    %v4729 = vlaneseq
    %v4730 = vshrl.u32 %v4729, 7
    %v4731 = vsub.s32 4, %v4730
    %v4732 = vrot.slane %v4711, %v4731
    %v4733 = vlaneseq
    %v4734 = vshrl.u32 %v4733, 7
    %v4735 = vsub.s32 5, %v4734
    %v4736 = vrot.slane %v4711, %v4735
    %v4737 = vlaneseq
    %v4738 = vshrl.u32 %v4737, 7
    %v4739 = vsub.s32 6, %v4738
    %v4740 = vrot.slane %v4711, %v4739
    %v4741 = vlaneseq
    %v4742 = vshrl.u32 %v4741, 7
    %v4743 = vsub.s32 7, %v4742
    %v4744 = vrot.slane %v4711, %v4743
    %v5009 = vunpack.c.l.b16 %v4455
    %v5010 = vunpack.c.h.b16 %v4455
    %v5011 = vunpack.c.l.b16 %v4456
    %v5012 = vunpack.c.h.b16 %v4456
    %v5013 = vunpack.c.l.b16 %v4457
    %v5014 = vunpack.c.h.b16 %v4457
    %v5015 = vunpack.c.l.b16 %v4458
    %v5016 = vunpack.c.h.b16 %v4458
    %v5017 = vunpack.c.l.b16 %v4459
    %v5018 = vunpack.c.h.b16 %v4459
    %v5019 = vunpack.c.l.b16 %v4460
    %v5020 = vunpack.c.h.b16 %v4460
    %v5021 = vunpack.c.l.b16 %v4461
    %v5022 = vunpack.c.h.b16 %v4461
    %v5023 = vunpack.c.l.b16 %v4462
    %v5024 = vunpack.c.h.b16 %v4462
    %v5025 = vunpack.c.l.b16 %v4463
    %v5026 = vunpack.c.h.b16 %v4463
    %v5027 = vunpack.c.l.b16 %v4464
    %v5028 = vunpack.c.h.b16 %v4464
    %v5029 = vunpack.c.l.b16 %v4465
    %v5030 = vunpack.c.h.b16 %v4465
    %v5031 = vunpack.c.l.b16 %v4466
    %v5032 = vunpack.c.h.b16 %v4466
    %v5033 = vunpack.c.l.b16 %v4467
    %v5034 = vunpack.c.h.b16 %v4467
    %v5035 = vunpack.c.l.b16 %v4468
    %v5036 = vunpack.c.h.b16 %v4468
    %v5037 = vunpack.c.l.b16 %v4469
    %v5038 = vunpack.c.h.b16 %v4469
    %v5039 = vunpack.c.l.b16 %v4470
    %v5040 = vunpack.c.h.b16 %v4470
    %v5041 = vunpack.c.l.b16 %v4471
    %v5042 = vunpack.c.h.b16 %v4471
    %v5043 = vunpack.c.l.b16 %v4472
    %v5044 = vunpack.c.h.b16 %v4472
    %v5045 = vunpack.c.l.b16 %v4473
    %v5046 = vunpack.c.h.b16 %v4473
    %v5047 = vunpack.c.l.b16 %v4474
    %v5048 = vunpack.c.h.b16 %v4474
    %v5049 = vunpack.c.l.b16 %v4475
    %v5050 = vunpack.c.h.b16 %v4475
    %v5051 = vunpack.c.l.b16 %v4476
    %v5052 = vunpack.c.h.b16 %v4476
    %v5053 = vunpack.c.l.b16 %v4477
    %v5054 = vunpack.c.h.b16 %v4477
    %v5055 = vunpack.c.l.b16 %v4478
    %v5056 = vunpack.c.h.b16 %v4478
    %v5057 = vunpack.c.l.b16 %v4479
    %v5058 = vunpack.c.h.b16 %v4479
    %v5059 = vunpack.c.l.b16 %v4480
    %v5060 = vunpack.c.h.b16 %v4480
    %v5061 = vunpack.c.l.b16 %v4481
    %v5062 = vunpack.c.h.b16 %v4481
    %v5063 = vunpack.c.l.b16 %v4482
    %v5064 = vunpack.c.h.b16 %v4482
    %v5065 = vunpack.c.l.b16 %v4483
    %v5066 = vunpack.c.h.b16 %v4483
    %v5067 = vunpack.c.l.b16 %v4484
    %v5068 = vunpack.c.h.b16 %v4484
    %v5069 = vunpack.c.l.b16 %v4485
    %v5070 = vunpack.c.h.b16 %v4485
    %v5071 = vunpack.c.l.b16 %v4486
    %v5072 = vunpack.c.h.b16 %v4486
    %v5073 = vunpack.c.l.b16 %v4487
    %v5074 = vunpack.c.h.b16 %v4487
    %v5075 = vunpack.c.l.b16 %v4488
    %v5076 = vunpack.c.h.b16 %v4488
    %v5077 = vunpack.c.l.b16 %v4489
    %v5078 = vunpack.c.h.b16 %v4489
    %v5079 = vunpack.c.l.b16 %v4490
    %v5080 = vunpack.c.h.b16 %v4490
    %v5081 = vunpack.c.l.b16 %v4491
    %v5082 = vunpack.c.h.b16 %v4491
    %v5083 = vunpack.c.l.b16 %v4492
    %v5084 = vunpack.c.h.b16 %v4492
    %v5085 = vunpack.c.l.b16 %v4493
    %v5086 = vunpack.c.h.b16 %v4493
    %v5087 = vunpack.c.l.b16 %v4494
    %v5088 = vunpack.c.h.b16 %v4494
    %v5089 = vunpack.c.l.b16 %v4495
    %v5090 = vunpack.c.h.b16 %v4495
    %v5091 = vunpack.c.l.b16 %v4496
    %v5092 = vunpack.c.h.b16 %v4496
    %v5093 = vunpack.c.l.b16 %v4497
    %v5094 = vunpack.c.h.b16 %v4497
    %v5095 = vunpack.c.l.b16 %v4498
    %v5096 = vunpack.c.h.b16 %v4498
    %v5097 = vunpack.c.l.b16 %v4499
    %v5098 = vunpack.c.h.b16 %v4499
    %v5099 = vunpack.c.l.b16 %v4500
    %v5100 = vunpack.c.h.b16 %v4500
    %v5101 = vunpack.c.l.b16 %v4501
    %v5102 = vunpack.c.h.b16 %v4501
    %v5103 = vunpack.c.l.b16 %v4502
    %v5104 = vunpack.c.h.b16 %v4502
    %v5105 = vunpack.c.l.b16 %v4503
    %v5106 = vunpack.c.h.b16 %v4503
    %v5107 = vunpack.c.l.b16 %v4504
    %v5108 = vunpack.c.h.b16 %v4504
    %v5109 = vunpack.c.l.b16 %v4505
    %v5110 = vunpack.c.h.b16 %v4505
    %v5111 = vunpack.c.l.b16 %v4506
    %v5112 = vunpack.c.h.b16 %v4506
    %v5113 = vunpack.c.l.b16 %v4507
    %v5114 = vunpack.c.h.b16 %v4507
    %v5115 = vunpack.c.l.b16 %v4508
    %v5116 = vunpack.c.h.b16 %v4508
    %v5117 = vunpack.c.l.b16 %v4509
    %v5118 = vunpack.c.h.b16 %v4509
    %v5119 = vunpack.c.l.b16 %v4510
    %v5120 = vunpack.c.h.b16 %v4510
    %v5121 = vunpack.c.l.b16 %v4511
    %v5122 = vunpack.c.h.b16 %v4511
    %v5123 = vunpack.c.l.b16 %v4512
    %v5124 = vunpack.c.h.b16 %v4512
    %v5125 = vunpack.c.l.b16 %v4513
    %v5126 = vunpack.c.h.b16 %v4513
    %v5127 = vunpack.c.l.b16 %v4514
    %v5128 = vunpack.c.h.b16 %v4514
    %v5129 = vunpack.c.l.b16 %v4515
    %v5130 = vunpack.c.h.b16 %v4515
    %v5131 = vunpack.c.l.b16 %v4516
    %v5132 = vunpack.c.h.b16 %v4516
    %v5133 = vunpack.c.l.b16 %v4517
    %v5134 = vunpack.c.h.b16 %v4517
    %v5135 = vunpack.c.l.b16 %v4518
    %v5136 = vunpack.c.h.b16 %v4518
    %v5137 = vunpack.c.l.b16 %v4519
    %v5138 = vunpack.c.h.b16 %v4519
    %v5139 = vunpack.c.l.b16 %v4520
    %v5140 = vunpack.c.h.b16 %v4520
    %v5141 = vunpack.c.l.b16 %v4521
    %v5142 = vunpack.c.h.b16 %v4521
    %v5143 = vunpack.c.l.b16 %v4522
    %v5144 = vunpack.c.h.b16 %v4522
    %v5145 = vunpack.c.l.b16 %v4523
    %v5146 = vunpack.c.h.b16 %v4523
    %v5147 = vunpack.c.l.b16 %v4524
    %v5148 = vunpack.c.h.b16 %v4524
    %v5149 = vunpack.c.l.b16 %v4525
    %v5150 = vunpack.c.h.b16 %v4525
    %v5151 = vunpack.c.l.b16 %v4526
    %v5152 = vunpack.c.h.b16 %v4526
    %v5153 = vunpack.c.l.b16 %v4527
    %v5154 = vunpack.c.h.b16 %v4527
    %v5155 = vunpack.c.l.b16 %v4528
    %v5156 = vunpack.c.h.b16 %v4528
    %v5157 = vunpack.c.l.b16 %v4529
    %v5158 = vunpack.c.h.b16 %v4529
    %v5159 = vunpack.c.l.b16 %v4530
    %v5160 = vunpack.c.h.b16 %v4530
    %v5161 = vunpack.c.l.b16 %v4531
    %v5162 = vunpack.c.h.b16 %v4531
    %v5163 = vunpack.c.l.b16 %v4532
    %v5164 = vunpack.c.h.b16 %v4532
    %v5165 = vunpack.c.l.b16 %v4533
    %v5166 = vunpack.c.h.b16 %v4533
    %v5167 = vunpack.c.l.b16 %v4534
    %v5168 = vunpack.c.h.b16 %v4534
    %v5169 = vunpack.c.l.b16 %v4535
    %v5170 = vunpack.c.h.b16 %v4535
    %v5171 = vunpack.c.l.b16 %v4536
    %v5172 = vunpack.c.h.b16 %v4536
    %v5173 = vunpack.c.l.b16 %v4537
    %v5174 = vunpack.c.h.b16 %v4537
    %v5175 = vunpack.c.l.b16 %v4538
    %v5176 = vunpack.c.h.b16 %v4538
    %v5177 = vunpack.c.l.b16 %v4539
    %v5178 = vunpack.c.h.b16 %v4539
    %v5179 = vunpack.c.l.b16 %v4540
    %v5180 = vunpack.c.h.b16 %v4540
    %v5181 = vunpack.c.l.b16 %v4541
    %v5182 = vunpack.c.h.b16 %v4541
    %v5183 = vunpack.c.l.b16 %v4542
    %v5184 = vunpack.c.h.b16 %v4542
    %v5185 = vunpack.c.l.b16 %v4543
    %v5186 = vunpack.c.h.b16 %v4543
    %v5187 = vunpack.c.l.b16 %v4544
    %v5188 = vunpack.c.h.b16 %v4544
    %v5189 = vunpack.c.l.b16 %v4545
    %v5190 = vunpack.c.h.b16 %v4545
    %v5191 = vunpack.c.l.b16 %v4546
    %v5192 = vunpack.c.h.b16 %v4546
    %v5193 = vunpack.c.l.b16 %v4547
    %v5194 = vunpack.c.h.b16 %v4547
    %v5195 = vunpack.c.l.b16 %v4548
    %v5196 = vunpack.c.h.b16 %v4548
    %v5197 = vunpack.c.l.b16 %v4549
    %v5198 = vunpack.c.h.b16 %v4549
    %v5199 = vunpack.c.l.b16 %v4550
    %v5200 = vunpack.c.h.b16 %v4550
    %v5201 = vunpack.c.l.b16 %v4551
    %v5202 = vunpack.c.h.b16 %v4551
    %v5203 = vunpack.c.l.b16 %v4552
    %v5204 = vunpack.c.h.b16 %v4552
    %v5205 = vunpack.c.l.b16 %v4553
    %v5206 = vunpack.c.h.b16 %v4553
    %v5207 = vunpack.c.l.b16 %v4554
    %v5208 = vunpack.c.h.b16 %v4554
    %v5209 = vunpack.c.l.b16 %v4555
    %v5210 = vunpack.c.h.b16 %v4555
    %v5211 = vunpack.c.l.b16 %v4556
    %v5212 = vunpack.c.h.b16 %v4556
    %v5213 = vunpack.c.l.b16 %v4557
    %v5214 = vunpack.c.h.b16 %v4557
    %v5215 = vunpack.c.l.b16 %v4558
    %v5216 = vunpack.c.h.b16 %v4558
    %v5217 = vunpack.c.l.b16 %v4559
    %v5218 = vunpack.c.h.b16 %v4559
    %v5219 = vunpack.c.l.b16 %v4560
    %v5220 = vunpack.c.h.b16 %v4560
    %v5221 = vunpack.c.l.b16 %v4561
    %v5222 = vunpack.c.h.b16 %v4561
    %v5223 = vunpack.c.l.b16 %v4562
    %v5224 = vunpack.c.h.b16 %v4562
    %v5225 = vunpack.c.l.b16 %v4563
    %v5226 = vunpack.c.h.b16 %v4563
    %v5227 = vunpack.c.l.b16 %v4564
    %v5228 = vunpack.c.h.b16 %v4564
    %v5229 = vunpack.c.l.b16 %v4565
    %v5230 = vunpack.c.h.b16 %v4565
    %v5231 = vunpack.c.l.b16 %v4566
    %v5232 = vunpack.c.h.b16 %v4566
    %v5233 = vunpack.c.l.b16 %v4567
    %v5234 = vunpack.c.h.b16 %v4567
    %v5235 = vunpack.c.l.b16 %v4568
    %v5236 = vunpack.c.h.b16 %v4568
    %v5237 = vunpack.c.l.b16 %v4569
    %v5238 = vunpack.c.h.b16 %v4569
    %v5239 = vunpack.c.l.b16 %v4570
    %v5240 = vunpack.c.h.b16 %v4570
    %v5241 = vunpack.c.l.b16 %v4571
    %v5242 = vunpack.c.h.b16 %v4571
    %v5243 = vunpack.c.l.b16 %v4572
    %v5244 = vunpack.c.h.b16 %v4572
    %v5245 = vunpack.c.l.b16 %v4573
    %v5246 = vunpack.c.h.b16 %v4573
    %v5247 = vunpack.c.l.b16 %v4574
    %v5248 = vunpack.c.h.b16 %v4574
    %v5249 = vunpack.c.l.b16 %v4575
    %v5250 = vunpack.c.h.b16 %v4575
    %v5251 = vunpack.c.l.b16 %v4576
    %v5252 = vunpack.c.h.b16 %v4576
    %v5253 = vunpack.c.l.b16 %v4577
    %v5254 = vunpack.c.h.b16 %v4577
    %v5255 = vunpack.c.l.b16 %v4578
    %v5256 = vunpack.c.h.b16 %v4578
    %v5257 = vunpack.c.l.b16 %v4579
    %v5258 = vunpack.c.h.b16 %v4579
    %v5259 = vunpack.c.l.b16 %v4580
    %v5260 = vunpack.c.h.b16 %v4580
    %v5261 = vunpack.c.l.b16 %v4581
    %v5262 = vunpack.c.h.b16 %v4581
    %v5263 = vunpack.c.l.b16 %v4582
    %v5264 = vunpack.c.h.b16 %v4582
    %v5265 = vunpack.c.l.b16 %v4583
    %v5266 = vunpack.c.h.b16 %v4583
    %v5267 = vunpack.c.l.b16 %v4584
    %v5268 = vunpack.c.h.b16 %v4584
    %v5269 = vunpack.c.l.b16 %v4585
    %v5270 = vunpack.c.h.b16 %v4585
    %v5271 = vunpack.c.l.b16 %v4586
    %v5272 = vunpack.c.h.b16 %v4586
    %v5273 = vunpack.c.l.b16 %v4587
    %v5274 = vunpack.c.h.b16 %v4587
    %v5275 = vunpack.c.l.b16 %v4588
    %v5276 = vunpack.c.h.b16 %v4588
    %v5277 = vunpack.c.l.b16 %v4589
    %v5278 = vunpack.c.h.b16 %v4589
    %v5279 = vunpack.c.l.b16 %v4590
    %v5280 = vunpack.c.h.b16 %v4590
    %v5281 = vunpack.c.l.b16 %v4591
    %v5282 = vunpack.c.h.b16 %v4591
    %v5283 = vunpack.c.l.b16 %v4592
    %v5284 = vunpack.c.h.b16 %v4592
    %v5285 = vunpack.c.l.b16 %v4593
    %v5286 = vunpack.c.h.b16 %v4593
    %v5287 = vunpack.c.l.b16 %v4594
    %v5288 = vunpack.c.h.b16 %v4594
    %v5289 = vunpack.c.l.b16 %v4595
    %v5290 = vunpack.c.h.b16 %v4595
    %v5291 = vunpack.c.l.b16 %v4596
    %v5292 = vunpack.c.h.b16 %v4596
    %v5293 = vunpack.c.l.b16 %v4597
    %v5294 = vunpack.c.h.b16 %v4597
    %v5295 = vunpack.c.l.b16 %v4598
    %v5296 = vunpack.c.h.b16 %v4598
    %v5297 = vunpack.c.l.b16 %v4599
    %v5298 = vunpack.c.h.b16 %v4599
    %v5299 = vunpack.c.l.b16 %v4600
    %v5300 = vunpack.c.h.b16 %v4600
    %v5301 = vunpack.c.l.b16 %v4601
    %v5302 = vunpack.c.h.b16 %v4601
    %v5303 = vunpack.c.l.b16 %v4602
    %v5304 = vunpack.c.h.b16 %v4602
    %v5305 = vunpack.c.l.b16 %v4603
    %v5306 = vunpack.c.h.b16 %v4603
    %v5307 = vunpack.c.l.b16 %v4604
    %v5308 = vunpack.c.h.b16 %v4604
    %v5309 = vunpack.c.l.b16 %v4605
    %v5310 = vunpack.c.h.b16 %v4605
    %v5311 = vunpack.c.l.b16 %v4606
    %v5312 = vunpack.c.h.b16 %v4606
    %v5313 = vunpack.c.l.b16 %v4607
    %v5314 = vunpack.c.h.b16 %v4607
    %v5315 = vunpack.c.l.b16 %v4608
    %v5316 = vunpack.c.h.b16 %v4608
    %v5317 = vunpack.c.l.b16 %v4609
    %v5318 = vunpack.c.h.b16 %v4609
    %v5319 = vunpack.c.l.b16 %v4610
    %v5320 = vunpack.c.h.b16 %v4610
    %v5321 = vunpack.c.l.b16 %v4611
    %v5322 = vunpack.c.h.b16 %v4611
    %v5323 = vunpack.c.l.b16 %v4612
    %v5324 = vunpack.c.h.b16 %v4612
    %v5325 = vunpack.c.l.b16 %v4613
    %v5326 = vunpack.c.h.b16 %v4613
    %v5327 = vunpack.c.l.b16 %v4614
    %v5328 = vunpack.c.h.b16 %v4614
    %v5329 = vunpack.c.l.b16 %v4615
    %v5330 = vunpack.c.h.b16 %v4615
    %v5331 = vunpack.c.l.b16 %v4616
    %v5332 = vunpack.c.h.b16 %v4616
    %v5333 = vunpack.c.l.b16 %v4617
    %v5334 = vunpack.c.h.b16 %v4617
    %v5335 = vunpack.c.l.b16 %v4618
    %v5336 = vunpack.c.h.b16 %v4618
    %v5337 = vunpack.c.l.b16 %v4619
    %v5338 = vunpack.c.h.b16 %v4619
    %v5339 = vunpack.c.l.b16 %v4620
    %v5340 = vunpack.c.h.b16 %v4620
    %v5341 = vunpack.c.l.b16 %v4621
    %v5342 = vunpack.c.h.b16 %v4621
    %v5343 = vunpack.c.l.b16 %v4622
    %v5344 = vunpack.c.h.b16 %v4622
    %v5345 = vunpack.c.l.b16 %v4623
    %v5346 = vunpack.c.h.b16 %v4623
    %v5347 = vunpack.c.l.b16 %v4624
    %v5348 = vunpack.c.h.b16 %v4624
    %v5349 = vunpack.c.l.b16 %v4625
    %v5350 = vunpack.c.h.b16 %v4625
    %v5351 = vunpack.c.l.b16 %v4626
    %v5352 = vunpack.c.h.b16 %v4626
    %v5353 = vunpack.c.l.b16 %v4627
    %v5354 = vunpack.c.h.b16 %v4627
    %v5355 = vunpack.c.l.b16 %v4628
    %v5356 = vunpack.c.h.b16 %v4628
    %v5357 = vunpack.c.l.b16 %v4629
    %v5358 = vunpack.c.h.b16 %v4629
    %v5359 = vunpack.c.l.b16 %v4630
    %v5360 = vunpack.c.h.b16 %v4630
    %v5361 = vunpack.c.l.b16 %v4631
    %v5362 = vunpack.c.h.b16 %v4631
    %v5363 = vunpack.c.l.b16 %v4632
    %v5364 = vunpack.c.h.b16 %v4632
    %v5365 = vunpack.c.l.b16 %v4633
    %v5366 = vunpack.c.h.b16 %v4633
    %v5367 = vunpack.c.l.b16 %v4634
    %v5368 = vunpack.c.h.b16 %v4634
    %v5369 = vunpack.c.l.b16 %v4635
    %v5370 = vunpack.c.h.b16 %v4635
    %v5371 = vunpack.c.l.b16 %v4636
    %v5372 = vunpack.c.h.b16 %v4636
    %v5373 = vunpack.c.l.b16 %v4637
    %v5374 = vunpack.c.h.b16 %v4637
    %v5375 = vunpack.c.l.b16 %v4638
    %v5376 = vunpack.c.h.b16 %v4638
    %v5377 = vunpack.c.l.b16 %v4639
    %v5378 = vunpack.c.h.b16 %v4639
    %v5379 = vunpack.c.l.b16 %v4640
    %v5380 = vunpack.c.h.b16 %v4640
    %v5381 = vunpack.c.l.b16 %v4641
    %v5382 = vunpack.c.h.b16 %v4641
    %v5383 = vunpack.c.l.b16 %v4642
    %v5384 = vunpack.c.h.b16 %v4642
    %v5385 = vunpack.c.l.b16 %v4643
    %v5386 = vunpack.c.h.b16 %v4643
    %v5387 = vunpack.c.l.b16 %v4644
    %v5388 = vunpack.c.h.b16 %v4644
    %v5389 = vunpack.c.l.b16 %v4645
    %v5390 = vunpack.c.h.b16 %v4645
    %v5391 = vunpack.c.l.b16 %v4646
    %v5392 = vunpack.c.h.b16 %v4646
    %v5393 = vunpack.c.l.b16 %v4647
    %v5394 = vunpack.c.h.b16 %v4647
    %v5395 = vunpack.c.l.b16 %v4648
    %v5396 = vunpack.c.h.b16 %v4648
    %v5397 = vunpack.c.l.b16 %v4649
    %v5398 = vunpack.c.h.b16 %v4649
    %v5399 = vunpack.c.l.b16 %v4650
    %v5400 = vunpack.c.h.b16 %v4650
    %v5401 = vunpack.c.l.b16 %v4651
    %v5402 = vunpack.c.h.b16 %v4651
    %v5403 = vunpack.c.l.b16 %v4652
    %v5404 = vunpack.c.h.b16 %v4652
    %v5405 = vunpack.c.l.b16 %v4653
    %v5406 = vunpack.c.h.b16 %v4653
    %v5407 = vunpack.c.l.b16 %v4654
    %v5408 = vunpack.c.h.b16 %v4654
    %v5409 = vunpack.c.l.b16 %v4655
    %v5410 = vunpack.c.h.b16 %v4655
    %v5411 = vunpack.c.l.b16 %v4656
    %v5412 = vunpack.c.h.b16 %v4656
    %v5413 = vunpack.c.l.b16 %v4657
    %v5414 = vunpack.c.h.b16 %v4657
    %v5415 = vunpack.c.l.b16 %v4658
    %v5416 = vunpack.c.h.b16 %v4658
    %v5417 = vunpack.c.l.b16 %v4659
    %v5418 = vunpack.c.h.b16 %v4659
    %v5419 = vunpack.c.l.b16 %v4660
    %v5420 = vunpack.c.h.b16 %v4660
    %v5421 = vunpack.c.l.b16 %v4661
    %v5422 = vunpack.c.h.b16 %v4661
    %v5423 = vunpack.c.l.b16 %v4662
    %v5424 = vunpack.c.h.b16 %v4662
    %v5425 = vunpack.c.l.b16 %v4663
    %v5426 = vunpack.c.h.b16 %v4663
    %v5427 = vunpack.c.l.b16 %v4664
    %v5428 = vunpack.c.h.b16 %v4664
    %v5429 = vunpack.c.l.b16 %v4665
    %v5430 = vunpack.c.h.b16 %v4665
    %v5431 = vunpack.c.l.b16 %v4666
    %v5432 = vunpack.c.h.b16 %v4666
    %v5433 = vunpack.c.l.b16 %v4667
    %v5434 = vunpack.c.h.b16 %v4667
    %v5435 = vunpack.c.l.b16 %v4668
    %v5436 = vunpack.c.h.b16 %v4668
    %v5437 = vunpack.c.l.b16 %v4669
    %v5438 = vunpack.c.h.b16 %v4669
    %v5439 = vunpack.c.l.b16 %v4670
    %v5440 = vunpack.c.h.b16 %v4670
    %v5441 = vunpack.c.l.b16 %v4671
    %v5442 = vunpack.c.h.b16 %v4671
    %v5443 = vunpack.c.l.b16 %v4672
    %v5444 = vunpack.c.h.b16 %v4672
    %v5445 = vunpack.c.l.b16 %v4673
    %v5446 = vunpack.c.h.b16 %v4673
    %v5447 = vunpack.c.l.b16 %v4674
    %v5448 = vunpack.c.h.b16 %v4674
    %v5449 = vunpack.c.l.b16 %v4675
    %v5450 = vunpack.c.h.b16 %v4675
    %v5451 = vunpack.c.l.b16 %v4676
    %v5452 = vunpack.c.h.b16 %v4676
    %v5453 = vunpack.c.l.b16 %v4677
    %v5454 = vunpack.c.h.b16 %v4677
    %v5455 = vunpack.c.l.b16 %v4678
    %v5456 = vunpack.c.h.b16 %v4678
    %v5457 = vunpack.c.l.b16 %v4679
    %v5458 = vunpack.c.h.b16 %v4679
    %v5459 = vunpack.c.l.b16 %v4680
    %v5460 = vunpack.c.h.b16 %v4680
    %v5461 = vunpack.c.l.b16 %v4681
    %v5462 = vunpack.c.h.b16 %v4681
    %v5463 = vunpack.c.l.b16 %v4682
    %v5464 = vunpack.c.h.b16 %v4682
    %v5465 = vunpack.c.l.b16 %v4683
    %v5466 = vunpack.c.h.b16 %v4683
    %v5467 = vunpack.c.l.b16 %v4684
    %v5468 = vunpack.c.h.b16 %v4684
    %v5469 = vunpack.c.l.b16 %v4685
    %v5470 = vunpack.c.h.b16 %v4685
    %v5471 = vunpack.c.l.b16 %v4686
    %v5472 = vunpack.c.h.b16 %v4686
    %v5473 = vunpack.c.l.b16 %v4687
    %v5474 = vunpack.c.h.b16 %v4687
    %v5475 = vunpack.c.l.b16 %v4688
    %v5476 = vunpack.c.h.b16 %v4688
    %v5477 = vunpack.c.l.b16 %v4689
    %v5478 = vunpack.c.h.b16 %v4689
    %v5479 = vunpack.c.l.b16 %v4690
    %v5480 = vunpack.c.h.b16 %v4690
    %v5481 = vunpack.c.l.b16 %v4691
    %v5482 = vunpack.c.h.b16 %v4691
    %v5483 = vunpack.c.l.b16 %v4692
    %v5484 = vunpack.c.h.b16 %v4692
    %v5485 = vunpack.c.l.b16 %v4693
    %v5486 = vunpack.c.h.b16 %v4693
    %v5487 = vunpack.c.l.b16 %v4694
    %v5488 = vunpack.c.h.b16 %v4694
    %v5489 = vunpack.c.l.b16 %v4695
    %v5490 = vunpack.c.h.b16 %v4695
    %v5491 = vunpack.c.l.b16 %v4696
    %v5492 = vunpack.c.h.b16 %v4696
    %v5493 = vunpack.c.l.b16 %v4697
    %v5494 = vunpack.c.h.b16 %v4697
    %v5495 = vunpack.c.l.b16 %v4698
    %v5496 = vunpack.c.h.b16 %v4698
    %v5497 = vunpack.c.l.b16 %v4699
    %v5498 = vunpack.c.h.b16 %v4699
    %v5499 = vunpack.c.l.b16 %v4700
    %v5500 = vunpack.c.h.b16 %v4700
    %v5501 = vunpack.c.l.b16 %v4701
    %v5502 = vunpack.c.h.b16 %v4701
    %v5503 = vunpack.c.l.b16 %v4702
    %v5504 = vunpack.c.h.b16 %v4702
    %v5505 = vunpack.c.l.b16 %v4703
    %v5506 = vunpack.c.h.b16 %v4703
    %v5507 = vunpack.c.l.b16 %v4704
    %v5508 = vunpack.c.h.b16 %v4704
    %v5509 = vunpack.c.l.b16 %v4705
    %v5510 = vunpack.c.h.b16 %v4705
    %v5511 = vunpack.c.l.b16 %v4706
    %v5512 = vunpack.c.h.b16 %v4706
    %v5513 = vunpack.c.l.b16 %v4707
    %v5514 = vunpack.c.h.b16 %v4707
    %v5515 = vunpack.c.l.b16 %v4708
    %v5516 = vunpack.c.h.b16 %v4708
    %v5517 = vunpack.c.l.b16 %v4709
    %v5518 = vunpack.c.h.b16 %v4709
    %v5519 = vunpack.c.l.b16 %v4710
    %v5520 = vunpack.c.h.b16 %v4710
    %v5521 = vpack.c.b16 %v5017, %v5009
    %v5522 = vpack.c.b16 %v5018, %v5010
    %v5523 = vpack.c.b16 %v5019, %v5011
    %v5524 = vpack.c.b16 %v5020, %v5012
    %v5525 = vpack.c.b16 %v5021, %v5013
    %v5526 = vpack.c.b16 %v5022, %v5014
    %v5527 = vpack.c.b16 %v5023, %v5015
    %v5528 = vpack.c.b16 %v5024, %v5016
    %v5529 = vpack.c.b16 %v5033, %v5025
    %v5530 = vpack.c.b16 %v5034, %v5026
    %v5531 = vpack.c.b16 %v5035, %v5027
    %v5532 = vpack.c.b16 %v5036, %v5028
    %v5533 = vpack.c.b16 %v5037, %v5029
    %v5534 = vpack.c.b16 %v5038, %v5030
    %v5535 = vpack.c.b16 %v5039, %v5031
    %v5536 = vpack.c.b16 %v5040, %v5032
    %v5537 = vpack.c.b16 %v5049, %v5041
    %v5538 = vpack.c.b16 %v5050, %v5042
    %v5539 = vpack.c.b16 %v5051, %v5043
    %v5540 = vpack.c.b16 %v5052, %v5044
    %v5541 = vpack.c.b16 %v5053, %v5045
    %v5542 = vpack.c.b16 %v5054, %v5046
    %v5543 = vpack.c.b16 %v5055, %v5047
    %v5544 = vpack.c.b16 %v5056, %v5048
    %v5545 = vpack.c.b16 %v5065, %v5057
    %v5546 = vpack.c.b16 %v5066, %v5058
    %v5547 = vpack.c.b16 %v5067, %v5059
    %v5548 = vpack.c.b16 %v5068, %v5060
    %v5549 = vpack.c.b16 %v5069, %v5061
    %v5550 = vpack.c.b16 %v5070, %v5062
    %v5551 = vpack.c.b16 %v5071, %v5063
    %v5552 = vpack.c.b16 %v5072, %v5064
    %v5553 = vpack.c.b16 %v5081, %v5073
    %v5554 = vpack.c.b16 %v5082, %v5074
    %v5555 = vpack.c.b16 %v5083, %v5075
    %v5556 = vpack.c.b16 %v5084, %v5076
    %v5557 = vpack.c.b16 %v5085, %v5077
    %v5558 = vpack.c.b16 %v5086, %v5078
    %v5559 = vpack.c.b16 %v5087, %v5079
    %v5560 = vpack.c.b16 %v5088, %v5080
    %v5561 = vpack.c.b16 %v5097, %v5089
    %v5562 = vpack.c.b16 %v5098, %v5090
    %v5563 = vpack.c.b16 %v5099, %v5091
    %v5564 = vpack.c.b16 %v5100, %v5092
    %v5565 = vpack.c.b16 %v5101, %v5093
    %v5566 = vpack.c.b16 %v5102, %v5094
    %v5567 = vpack.c.b16 %v5103, %v5095
    %v5568 = vpack.c.b16 %v5104, %v5096
    %v5569 = vpack.c.b16 %v5113, %v5105
    %v5570 = vpack.c.b16 %v5114, %v5106
    %v5571 = vpack.c.b16 %v5115, %v5107
    %v5572 = vpack.c.b16 %v5116, %v5108
    %v5573 = vpack.c.b16 %v5117, %v5109
    %v5574 = vpack.c.b16 %v5118, %v5110
    %v5575 = vpack.c.b16 %v5119, %v5111
    %v5576 = vpack.c.b16 %v5120, %v5112
    %v5577 = vpack.c.b16 %v5129, %v5121
    %v5578 = vpack.c.b16 %v5130, %v5122
    %v5579 = vpack.c.b16 %v5131, %v5123
    %v5580 = vpack.c.b16 %v5132, %v5124
    %v5581 = vpack.c.b16 %v5133, %v5125
    %v5582 = vpack.c.b16 %v5134, %v5126
    %v5583 = vpack.c.b16 %v5135, %v5127
    %v5584 = vpack.c.b16 %v5136, %v5128
    %v5585 = vpack.c.b16 %v5145, %v5137
    %v5586 = vpack.c.b16 %v5146, %v5138
    %v5587 = vpack.c.b16 %v5147, %v5139
    %v5588 = vpack.c.b16 %v5148, %v5140
    %v5589 = vpack.c.b16 %v5149, %v5141
    %v5590 = vpack.c.b16 %v5150, %v5142
    %v5591 = vpack.c.b16 %v5151, %v5143
    %v5592 = vpack.c.b16 %v5152, %v5144
    %v5593 = vpack.c.b16 %v5161, %v5153
    %v5594 = vpack.c.b16 %v5162, %v5154
    %v5595 = vpack.c.b16 %v5163, %v5155
    %v5596 = vpack.c.b16 %v5164, %v5156
    %v5597 = vpack.c.b16 %v5165, %v5157
    %v5598 = vpack.c.b16 %v5166, %v5158
    %v5599 = vpack.c.b16 %v5167, %v5159
    %v5600 = vpack.c.b16 %v5168, %v5160
    %v5601 = vpack.c.b16 %v5177, %v5169
    %v5602 = vpack.c.b16 %v5178, %v5170
    %v5603 = vpack.c.b16 %v5179, %v5171
    %v5604 = vpack.c.b16 %v5180, %v5172
    %v5605 = vpack.c.b16 %v5181, %v5173
    %v5606 = vpack.c.b16 %v5182, %v5174
    %v5607 = vpack.c.b16 %v5183, %v5175
    %v5608 = vpack.c.b16 %v5184, %v5176
    %v5609 = vpack.c.b16 %v5193, %v5185
    %v5610 = vpack.c.b16 %v5194, %v5186
    %v5611 = vpack.c.b16 %v5195, %v5187
    %v5612 = vpack.c.b16 %v5196, %v5188
    %v5613 = vpack.c.b16 %v5197, %v5189
    %v5614 = vpack.c.b16 %v5198, %v5190
    %v5615 = vpack.c.b16 %v5199, %v5191
    %v5616 = vpack.c.b16 %v5200, %v5192
    %v5617 = vpack.c.b16 %v5209, %v5201
    %v5618 = vpack.c.b16 %v5210, %v5202
    %v5619 = vpack.c.b16 %v5211, %v5203
    %v5620 = vpack.c.b16 %v5212, %v5204
    %v5621 = vpack.c.b16 %v5213, %v5205
    %v5622 = vpack.c.b16 %v5214, %v5206
    %v5623 = vpack.c.b16 %v5215, %v5207
    %v5624 = vpack.c.b16 %v5216, %v5208
    %v5625 = vpack.c.b16 %v5225, %v5217
    %v5626 = vpack.c.b16 %v5226, %v5218
    %v5627 = vpack.c.b16 %v5227, %v5219
    %v5628 = vpack.c.b16 %v5228, %v5220
    %v5629 = vpack.c.b16 %v5229, %v5221
    %v5630 = vpack.c.b16 %v5230, %v5222
    %v5631 = vpack.c.b16 %v5231, %v5223
    %v5632 = vpack.c.b16 %v5232, %v5224
    %v5633 = vpack.c.b16 %v5241, %v5233
    %v5634 = vpack.c.b16 %v5242, %v5234
    %v5635 = vpack.c.b16 %v5243, %v5235
    %v5636 = vpack.c.b16 %v5244, %v5236
    %v5637 = vpack.c.b16 %v5245, %v5237
    %v5638 = vpack.c.b16 %v5246, %v5238
    %v5639 = vpack.c.b16 %v5247, %v5239
    %v5640 = vpack.c.b16 %v5248, %v5240
    %v5641 = vpack.c.b16 %v5257, %v5249
    %v5642 = vpack.c.b16 %v5258, %v5250
    %v5643 = vpack.c.b16 %v5259, %v5251
    %v5644 = vpack.c.b16 %v5260, %v5252
    %v5645 = vpack.c.b16 %v5261, %v5253
    %v5646 = vpack.c.b16 %v5262, %v5254
    %v5647 = vpack.c.b16 %v5263, %v5255
    %v5648 = vpack.c.b16 %v5264, %v5256
    %v5649 = vpack.c.b16 %v5273, %v5265
    %v5650 = vpack.c.b16 %v5274, %v5266
    %v5651 = vpack.c.b16 %v5275, %v5267
    %v5652 = vpack.c.b16 %v5276, %v5268
    %v5653 = vpack.c.b16 %v5277, %v5269
    %v5654 = vpack.c.b16 %v5278, %v5270
    %v5655 = vpack.c.b16 %v5279, %v5271
    %v5656 = vpack.c.b16 %v5280, %v5272
    %v5657 = vpack.c.b16 %v5289, %v5281
    %v5658 = vpack.c.b16 %v5290, %v5282
    %v5659 = vpack.c.b16 %v5291, %v5283
    %v5660 = vpack.c.b16 %v5292, %v5284
    %v5661 = vpack.c.b16 %v5293, %v5285
    %v5662 = vpack.c.b16 %v5294, %v5286
    %v5663 = vpack.c.b16 %v5295, %v5287
    %v5664 = vpack.c.b16 %v5296, %v5288
    %v5665 = vpack.c.b16 %v5305, %v5297
    %v5666 = vpack.c.b16 %v5306, %v5298
    %v5667 = vpack.c.b16 %v5307, %v5299
    %v5668 = vpack.c.b16 %v5308, %v5300
    %v5669 = vpack.c.b16 %v5309, %v5301
    %v5670 = vpack.c.b16 %v5310, %v5302
    %v5671 = vpack.c.b16 %v5311, %v5303
    %v5672 = vpack.c.b16 %v5312, %v5304
    %v5673 = vpack.c.b16 %v5321, %v5313
    %v5674 = vpack.c.b16 %v5322, %v5314
    %v5675 = vpack.c.b16 %v5323, %v5315
    %v5676 = vpack.c.b16 %v5324, %v5316
    %v5677 = vpack.c.b16 %v5325, %v5317
    %v5678 = vpack.c.b16 %v5326, %v5318
    %v5679 = vpack.c.b16 %v5327, %v5319
    %v5680 = vpack.c.b16 %v5328, %v5320
    %v5681 = vpack.c.b16 %v5337, %v5329
    %v5682 = vpack.c.b16 %v5338, %v5330
    %v5683 = vpack.c.b16 %v5339, %v5331
    %v5684 = vpack.c.b16 %v5340, %v5332
    %v5685 = vpack.c.b16 %v5341, %v5333
    %v5686 = vpack.c.b16 %v5342, %v5334
    %v5687 = vpack.c.b16 %v5343, %v5335
    %v5688 = vpack.c.b16 %v5344, %v5336
    %v5689 = vpack.c.b16 %v5353, %v5345
    %v5690 = vpack.c.b16 %v5354, %v5346
    %v5691 = vpack.c.b16 %v5355, %v5347
    %v5692 = vpack.c.b16 %v5356, %v5348
    %v5693 = vpack.c.b16 %v5357, %v5349
    %v5694 = vpack.c.b16 %v5358, %v5350
    %v5695 = vpack.c.b16 %v5359, %v5351
    %v5696 = vpack.c.b16 %v5360, %v5352
    %v5697 = vpack.c.b16 %v5369, %v5361
    %v5698 = vpack.c.b16 %v5370, %v5362
    %v5699 = vpack.c.b16 %v5371, %v5363
    %v5700 = vpack.c.b16 %v5372, %v5364
    %v5701 = vpack.c.b16 %v5373, %v5365
    %v5702 = vpack.c.b16 %v5374, %v5366
    %v5703 = vpack.c.b16 %v5375, %v5367
    %v5704 = vpack.c.b16 %v5376, %v5368
    %v5705 = vpack.c.b16 %v5385, %v5377
    %v5706 = vpack.c.b16 %v5386, %v5378
    %v5707 = vpack.c.b16 %v5387, %v5379
    %v5708 = vpack.c.b16 %v5388, %v5380
    %v5709 = vpack.c.b16 %v5389, %v5381
    %v5710 = vpack.c.b16 %v5390, %v5382
    %v5711 = vpack.c.b16 %v5391, %v5383
    %v5712 = vpack.c.b16 %v5392, %v5384
    %v5713 = vpack.c.b16 %v5401, %v5393
    %v5714 = vpack.c.b16 %v5402, %v5394
    %v5715 = vpack.c.b16 %v5403, %v5395
    %v5716 = vpack.c.b16 %v5404, %v5396
    %v5717 = vpack.c.b16 %v5405, %v5397
    %v5718 = vpack.c.b16 %v5406, %v5398
    %v5719 = vpack.c.b16 %v5407, %v5399
    %v5720 = vpack.c.b16 %v5408, %v5400
    %v5721 = vpack.c.b16 %v5417, %v5409
    %v5722 = vpack.c.b16 %v5418, %v5410
    %v5723 = vpack.c.b16 %v5419, %v5411
    %v5724 = vpack.c.b16 %v5420, %v5412
    %v5725 = vpack.c.b16 %v5421, %v5413
    %v5726 = vpack.c.b16 %v5422, %v5414
    %v5727 = vpack.c.b16 %v5423, %v5415
    %v5728 = vpack.c.b16 %v5424, %v5416
    %v5729 = vpack.c.b16 %v5433, %v5425
    %v5730 = vpack.c.b16 %v5434, %v5426
    %v5731 = vpack.c.b16 %v5435, %v5427
    %v5732 = vpack.c.b16 %v5436, %v5428
    %v5733 = vpack.c.b16 %v5437, %v5429
    %v5734 = vpack.c.b16 %v5438, %v5430
    %v5735 = vpack.c.b16 %v5439, %v5431
    %v5736 = vpack.c.b16 %v5440, %v5432
    %v5737 = vpack.c.b16 %v5449, %v5441
    %v5738 = vpack.c.b16 %v5450, %v5442
    %v5739 = vpack.c.b16 %v5451, %v5443
    %v5740 = vpack.c.b16 %v5452, %v5444
    %v5741 = vpack.c.b16 %v5453, %v5445
    %v5742 = vpack.c.b16 %v5454, %v5446
    %v5743 = vpack.c.b16 %v5455, %v5447
    %v5744 = vpack.c.b16 %v5456, %v5448
    %v5745 = vpack.c.b16 %v5465, %v5457
    %v5746 = vpack.c.b16 %v5466, %v5458
    %v5747 = vpack.c.b16 %v5467, %v5459
    %v5748 = vpack.c.b16 %v5468, %v5460
    %v5749 = vpack.c.b16 %v5469, %v5461
    %v5750 = vpack.c.b16 %v5470, %v5462
    %v5751 = vpack.c.b16 %v5471, %v5463
    %v5752 = vpack.c.b16 %v5472, %v5464
    %v5753 = vpack.c.b16 %v5481, %v5473
    %v5754 = vpack.c.b16 %v5482, %v5474
    %v5755 = vpack.c.b16 %v5483, %v5475
    %v5756 = vpack.c.b16 %v5484, %v5476
    %v5757 = vpack.c.b16 %v5485, %v5477
    %v5758 = vpack.c.b16 %v5486, %v5478
    %v5759 = vpack.c.b16 %v5487, %v5479
    %v5760 = vpack.c.b16 %v5488, %v5480
    %v5761 = vpack.c.b16 %v5497, %v5489
    %v5762 = vpack.c.b16 %v5498, %v5490
    %v5763 = vpack.c.b16 %v5499, %v5491
    %v5764 = vpack.c.b16 %v5500, %v5492
    %v5765 = vpack.c.b16 %v5501, %v5493
    %v5766 = vpack.c.b16 %v5502, %v5494
    %v5767 = vpack.c.b16 %v5503, %v5495
    %v5768 = vpack.c.b16 %v5504, %v5496
    %v5769 = vpack.c.b16 %v5513, %v5505
    %v5770 = vpack.c.b16 %v5514, %v5506
    %v5771 = vpack.c.b16 %v5515, %v5507
    %v5772 = vpack.c.b16 %v5516, %v5508
    %v5773 = vpack.c.b16 %v5517, %v5509
    %v5774 = vpack.c.b16 %v5518, %v5510
    %v5775 = vpack.c.b16 %v5519, %v5511
    %v5776 = vpack.c.b16 %v5520, %v5512
    %6033 = vmatprep.subr.bf16.mxu0 %v5522
    %6034 = vmatpush1.bf16.msra.mxu0 %v5521
    %6035 = vmatprep.subr.bf16.mxu0 %v5530
    %6036 = vmatpush1.bf16.msra.mxu0 %v5529
    %6037 = vmatprep.subr.bf16.mxu0 %v5538
    %6038 = vmatpush1.bf16.msra.mxu0 %v5537
    %6039 = vmatprep.subr.bf16.mxu0 %v5546
    %6040 = vmatpush1.bf16.msra.mxu0 %v5545
    %6041 = vmatprep.subr.bf16.mxu0 %v5554
    %6042 = vmatpush1.bf16.msra.mxu0 %v5553
    %6043 = vmatprep.subr.bf16.mxu0 %v5562
    %6044 = vmatpush1.bf16.msra.mxu0 %v5561
    %6045 = vmatprep.subr.bf16.mxu0 %v5570
    %6046 = vmatpush1.bf16.msra.mxu0 %v5569
    %6047 = vmatprep.subr.bf16.mxu0 %v5578
    %6048 = vmatpush1.bf16.msra.mxu0 %v5577
    %6049 = vmatprep.subr.bf16.mxu0 %v5586
    %6050 = vmatpush1.bf16.msra.mxu0 %v5585
    %6051 = vmatprep.subr.bf16.mxu0 %v5594
    %6052 = vmatpush1.bf16.msra.mxu0 %v5593
    %6053 = vmatprep.subr.bf16.mxu0 %v5602
    %6054 = vmatpush1.bf16.msra.mxu0 %v5601
    %6055 = vmatprep.subr.bf16.mxu0 %v5610
    %6056 = vmatpush1.bf16.msra.mxu0 %v5609
    %6057 = vmatprep.subr.bf16.mxu0 %v5618
    %6058 = vmatpush1.bf16.msra.mxu0 %v5617
    %6059 = vmatprep.subr.bf16.mxu0 %v5626
    %6060 = vmatpush1.bf16.msra.mxu0 %v5625
    %6061 = vmatprep.subr.bf16.mxu0 %v5634
    %6062 = vmatpush1.bf16.msra.mxu0 %v5633
    %6063 = vmatprep.subr.bf16.mxu0 %v5642
    %6064 = vmatpush1.bf16.msra.mxu0 %v5641
    %6065 = vmatprep.mubr.bf16.mxu0 %v4452
    %6066 = vmatmul.mubr.bf16.gmra.mrb[0].mxu0 %v4451
    %v6067 = vpop.f32.mrb[0].mxu0
    %v6068 = vadd.f32 %v4716, %v6067
    %v6069 = vpop.f32.mrb[0].mxu0
    %v6070 = vadd.f32 %v4720, %v6069
    %v6071 = vpop.f32.mrb[0].mxu0
    %v6072 = vpop.f32.mrb[0].mxu0
    %6073 = vdwg.mxu0
    %6074 = vmatprep.subr.bf16.mxu0 %v5650
    %6075 = vmatpush1.bf16.msra.mxu0 %v5649
    %6076 = vmatprep.subr.bf16.mxu0 %v5658
    %6077 = vmatpush1.bf16.msra.mxu0 %v5657
    %6078 = vmatprep.subr.bf16.mxu0 %v5666
    %6079 = vmatpush1.bf16.msra.mxu0 %v5665
    %6080 = vmatprep.subr.bf16.mxu0 %v5674
    %6081 = vmatpush1.bf16.msra.mxu0 %v5673
    %6082 = vmatprep.subr.bf16.mxu0 %v5682
    %6083 = vmatpush1.bf16.msra.mxu0 %v5681
    %6084 = vmatprep.subr.bf16.mxu0 %v5690
    %6085 = vmatpush1.bf16.msra.mxu0 %v5689
    %6086 = vmatprep.subr.bf16.mxu0 %v5698
    %6087 = vmatpush1.bf16.msra.mxu0 %v5697
    %6088 = vmatprep.subr.bf16.mxu0 %v5706
    %6089 = vmatpush1.bf16.msra.mxu0 %v5705
    %6090 = vmatprep.subr.bf16.mxu0 %v5714
    %6091 = vmatpush1.bf16.msra.mxu0 %v5713
    %6092 = vmatprep.subr.bf16.mxu0 %v5722
    %6093 = vmatpush1.bf16.msra.mxu0 %v5721
    %6094 = vmatprep.subr.bf16.mxu0 %v5730
    %6095 = vmatpush1.bf16.msra.mxu0 %v5729
    %6096 = vmatprep.subr.bf16.mxu0 %v5738
    %6097 = vmatpush1.bf16.msra.mxu0 %v5737
    %6098 = vmatprep.subr.bf16.mxu0 %v5746
    %6099 = vmatpush1.bf16.msra.mxu0 %v5745
    %6100 = vmatprep.subr.bf16.mxu0 %v5754
    %6101 = vmatpush1.bf16.msra.mxu0 %v5753
    %6102 = vmatprep.subr.bf16.mxu0 %v5762
    %6103 = vmatpush1.bf16.msra.mxu0 %v5761
    %6104 = vmatprep.subr.bf16.mxu0 %v5770
    %6105 = vmatpush1.bf16.msra.mxu0 %v5769
    %6106 = vmatprep.mubr.bf16.mxu0 %v4454
    %6107 = vmatmul.mubr.bf16.gmra.mrb[0].mxu0 %v4453
    %v6108 = vpop.f32.mrb[0].mxu0
    %v6109 = vadd.f32 %v6068, %v6108
    %v6110 = vpop.f32.mrb[0].mxu0
    %v6111 = vadd.f32 %v6070, %v6110
    %v6112 = vpop.f32.mrb[0].mxu0
    %v6113 = vpop.f32.mrb[0].mxu0
    %6114 = vdwg.mxu0
    %6115 = vmatprep.subr.bf16.mxu0 %v5524
    %6116 = vmatpush1.bf16.msra.mxu0 %v5523
    %6117 = vmatprep.subr.bf16.mxu0 %v5532
    %6118 = vmatpush1.bf16.msra.mxu0 %v5531
    %6119 = vmatprep.subr.bf16.mxu0 %v5540
    %6120 = vmatpush1.bf16.msra.mxu0 %v5539
    %6121 = vmatprep.subr.bf16.mxu0 %v5548
    %6122 = vmatpush1.bf16.msra.mxu0 %v5547
    %6123 = vmatprep.subr.bf16.mxu0 %v5556
    %6124 = vmatpush1.bf16.msra.mxu0 %v5555
    %6125 = vmatprep.subr.bf16.mxu0 %v5564
    %6126 = vmatpush1.bf16.msra.mxu0 %v5563
    %6127 = vmatprep.subr.bf16.mxu0 %v5572
    %6128 = vmatpush1.bf16.msra.mxu0 %v5571
    %6129 = vmatprep.subr.bf16.mxu0 %v5580
    %6130 = vmatpush1.bf16.msra.mxu0 %v5579
    %6131 = vmatprep.subr.bf16.mxu0 %v5588
    %6132 = vmatpush1.bf16.msra.mxu0 %v5587
    %6133 = vmatprep.subr.bf16.mxu0 %v5596
    %6134 = vmatpush1.bf16.msra.mxu0 %v5595
    %6135 = vmatprep.subr.bf16.mxu0 %v5604
    %6136 = vmatpush1.bf16.msra.mxu0 %v5603
    %6137 = vmatprep.subr.bf16.mxu0 %v5612
    %6138 = vmatpush1.bf16.msra.mxu0 %v5611
    %6139 = vmatprep.subr.bf16.mxu0 %v5620
    %6140 = vmatpush1.bf16.msra.mxu0 %v5619
    %6141 = vmatprep.subr.bf16.mxu0 %v5628
    %6142 = vmatpush1.bf16.msra.mxu0 %v5627
    %6143 = vmatprep.subr.bf16.mxu0 %v5636
    %6144 = vmatpush1.bf16.msra.mxu0 %v5635
    %6145 = vmatprep.subr.bf16.mxu0 %v5644
    %6146 = vmatpush1.bf16.msra.mxu0 %v5643
    %6147 = vmatprep.mubr.bf16.mxu0 %v4452
    %6148 = vmatmul.mubr.bf16.gmra.mrb[0].mxu0 %v4451
    %v6149 = vpop.f32.mrb[0].mxu0
    %v6150 = vadd.f32 %v4724, %v6149
    %v6151 = vpop.f32.mrb[0].mxu0
    %v6152 = vadd.f32 %v4728, %v6151
    %v6153 = vpop.f32.mrb[0].mxu0
    %v6154 = vpop.f32.mrb[0].mxu0
    %6155 = vdwg.mxu0
    %6156 = vmatprep.subr.bf16.mxu0 %v5652
    %6157 = vmatpush1.bf16.msra.mxu0 %v5651
    %6158 = vmatprep.subr.bf16.mxu0 %v5660
    %6159 = vmatpush1.bf16.msra.mxu0 %v5659
    %6160 = vmatprep.subr.bf16.mxu0 %v5668
    %6161 = vmatpush1.bf16.msra.mxu0 %v5667
    %6162 = vmatprep.subr.bf16.mxu0 %v5676
    %6163 = vmatpush1.bf16.msra.mxu0 %v5675
    %6164 = vmatprep.subr.bf16.mxu0 %v5684
    %6165 = vmatpush1.bf16.msra.mxu0 %v5683
    %6166 = vmatprep.subr.bf16.mxu0 %v5692
    %6167 = vmatpush1.bf16.msra.mxu0 %v5691
    %6168 = vmatprep.subr.bf16.mxu0 %v5700
    %6169 = vmatpush1.bf16.msra.mxu0 %v5699
    %6170 = vmatprep.subr.bf16.mxu0 %v5708
    %6171 = vmatpush1.bf16.msra.mxu0 %v5707
    %6172 = vmatprep.subr.bf16.mxu0 %v5716
    %6173 = vmatpush1.bf16.msra.mxu0 %v5715
    %6174 = vmatprep.subr.bf16.mxu0 %v5724
    %6175 = vmatpush1.bf16.msra.mxu0 %v5723
    %6176 = vmatprep.subr.bf16.mxu0 %v5732
    %6177 = vmatpush1.bf16.msra.mxu0 %v5731
    %6178 = vmatprep.subr.bf16.mxu0 %v5740
    %6179 = vmatpush1.bf16.msra.mxu0 %v5739
    %6180 = vmatprep.subr.bf16.mxu0 %v5748
    %6181 = vmatpush1.bf16.msra.mxu0 %v5747
    %6182 = vmatprep.subr.bf16.mxu0 %v5756
    %6183 = vmatpush1.bf16.msra.mxu0 %v5755
    %6184 = vmatprep.subr.bf16.mxu0 %v5764
    %6185 = vmatpush1.bf16.msra.mxu0 %v5763
    %6186 = vmatprep.subr.bf16.mxu0 %v5772
    %6187 = vmatpush1.bf16.msra.mxu0 %v5771
    %6188 = vmatprep.mubr.bf16.mxu0 %v4454
    %6189 = vmatmul.mubr.bf16.gmra.mrb[0].mxu0 %v4453
    %v6190 = vpop.f32.mrb[0].mxu0
    %v6191 = vadd.f32 %v6150, %v6190
    %v6192 = vpop.f32.mrb[0].mxu0
    %v6193 = vadd.f32 %v6152, %v6192
    %v6194 = vpop.f32.mrb[0].mxu0
    %v6195 = vpop.f32.mrb[0].mxu0
    %6196 = vdwg.mxu0
    %6197 = vmatprep.subr.bf16.mxu0 %v5526
    %6198 = vmatpush1.bf16.msra.mxu0 %v5525
    %6199 = vmatprep.subr.bf16.mxu0 %v5534
    %6200 = vmatpush1.bf16.msra.mxu0 %v5533
    %6201 = vmatprep.subr.bf16.mxu0 %v5542
    %6202 = vmatpush1.bf16.msra.mxu0 %v5541
    %6203 = vmatprep.subr.bf16.mxu0 %v5550
    %6204 = vmatpush1.bf16.msra.mxu0 %v5549
    %6205 = vmatprep.subr.bf16.mxu0 %v5558
    %6206 = vmatpush1.bf16.msra.mxu0 %v5557
    %6207 = vmatprep.subr.bf16.mxu0 %v5566
    %6208 = vmatpush1.bf16.msra.mxu0 %v5565
    %6209 = vmatprep.subr.bf16.mxu0 %v5574
    %6210 = vmatpush1.bf16.msra.mxu0 %v5573
    %6211 = vmatprep.subr.bf16.mxu0 %v5582
    %6212 = vmatpush1.bf16.msra.mxu0 %v5581
    %6213 = vmatprep.subr.bf16.mxu0 %v5590
    %6214 = vmatpush1.bf16.msra.mxu0 %v5589
    %6215 = vmatprep.subr.bf16.mxu0 %v5598
    %6216 = vmatpush1.bf16.msra.mxu0 %v5597
    %6217 = vmatprep.subr.bf16.mxu0 %v5606
    %6218 = vmatpush1.bf16.msra.mxu0 %v5605
    %6219 = vmatprep.subr.bf16.mxu0 %v5614
    %6220 = vmatpush1.bf16.msra.mxu0 %v5613
    %6221 = vmatprep.subr.bf16.mxu0 %v5622
    %6222 = vmatpush1.bf16.msra.mxu0 %v5621
    %6223 = vmatprep.subr.bf16.mxu0 %v5630
    %6224 = vmatpush1.bf16.msra.mxu0 %v5629
    %6225 = vmatprep.subr.bf16.mxu0 %v5638
    %6226 = vmatpush1.bf16.msra.mxu0 %v5637
    %6227 = vmatprep.subr.bf16.mxu0 %v5646
    %6228 = vmatpush1.bf16.msra.mxu0 %v5645
    %6229 = vmatprep.mubr.bf16.mxu0 %v4452
    %6230 = vmatmul.mubr.bf16.gmra.mrb[0].mxu0 %v4451
    %v6231 = vpop.f32.mrb[0].mxu0
    %v6232 = vadd.f32 %v4732, %v6231
    %v6233 = vpop.f32.mrb[0].mxu0
    %v6234 = vadd.f32 %v4736, %v6233
    %v6235 = vpop.f32.mrb[0].mxu0
    %v6236 = vpop.f32.mrb[0].mxu0
    %6237 = vdwg.mxu0
    %6238 = vmatprep.subr.bf16.mxu0 %v5654
    %6239 = vmatpush1.bf16.msra.mxu0 %v5653
    %6240 = vmatprep.subr.bf16.mxu0 %v5662
    %6241 = vmatpush1.bf16.msra.mxu0 %v5661
    %6242 = vmatprep.subr.bf16.mxu0 %v5670
    %6243 = vmatpush1.bf16.msra.mxu0 %v5669
    %6244 = vmatprep.subr.bf16.mxu0 %v5678
    %6245 = vmatpush1.bf16.msra.mxu0 %v5677
    %6246 = vmatprep.subr.bf16.mxu0 %v5686
    %6247 = vmatpush1.bf16.msra.mxu0 %v5685
    %6248 = vmatprep.subr.bf16.mxu0 %v5694
    %6249 = vmatpush1.bf16.msra.mxu0 %v5693
    %6250 = vmatprep.subr.bf16.mxu0 %v5702
    %6251 = vmatpush1.bf16.msra.mxu0 %v5701
    %6252 = vmatprep.subr.bf16.mxu0 %v5710
    %6253 = vmatpush1.bf16.msra.mxu0 %v5709
    %6254 = vmatprep.subr.bf16.mxu0 %v5718
    %6255 = vmatpush1.bf16.msra.mxu0 %v5717
    %6256 = vmatprep.subr.bf16.mxu0 %v5726
    %6257 = vmatpush1.bf16.msra.mxu0 %v5725
    %6258 = vmatprep.subr.bf16.mxu0 %v5734
    %6259 = vmatpush1.bf16.msra.mxu0 %v5733
    %6260 = vmatprep.subr.bf16.mxu0 %v5742
    %6261 = vmatpush1.bf16.msra.mxu0 %v5741
    %6262 = vmatprep.subr.bf16.mxu0 %v5750
    %6263 = vmatpush1.bf16.msra.mxu0 %v5749
    %6264 = vmatprep.subr.bf16.mxu0 %v5758
    %6265 = vmatpush1.bf16.msra.mxu0 %v5757
    %6266 = vmatprep.subr.bf16.mxu0 %v5766
    %6267 = vmatpush1.bf16.msra.mxu0 %v5765
    %6268 = vmatprep.subr.bf16.mxu0 %v5774
    %6269 = vmatpush1.bf16.msra.mxu0 %v5773
    %6270 = vmatprep.mubr.bf16.mxu0 %v4454
    %6271 = vmatmul.mubr.bf16.gmra.mrb[0].mxu0 %v4453
    %v6272 = vpop.f32.mrb[0].mxu0
    %v6273 = vadd.f32 %v6232, %v6272
    %v6274 = vpop.f32.mrb[0].mxu0
    %v6275 = vadd.f32 %v6234, %v6274
    %v6276 = vpop.f32.mrb[0].mxu0
    %v6277 = vpop.f32.mrb[0].mxu0
    %6278 = vdwg.mxu0
    %6279 = vmatprep.subr.bf16.mxu0 %v5528
    %6280 = vmatpush1.bf16.msra.mxu0 %v5527
    %6281 = vmatprep.subr.bf16.mxu0 %v5536
    %6282 = vmatpush1.bf16.msra.mxu0 %v5535
    %6283 = vmatprep.subr.bf16.mxu0 %v5544
    %6284 = vmatpush1.bf16.msra.mxu0 %v5543
    %6285 = vmatprep.subr.bf16.mxu0 %v5552
    %6286 = vmatpush1.bf16.msra.mxu0 %v5551
    %6287 = vmatprep.subr.bf16.mxu0 %v5560
    %6288 = vmatpush1.bf16.msra.mxu0 %v5559
    %6289 = vmatprep.subr.bf16.mxu0 %v5568
    %6290 = vmatpush1.bf16.msra.mxu0 %v5567
    %6291 = vmatprep.subr.bf16.mxu0 %v5576
    %6292 = vmatpush1.bf16.msra.mxu0 %v5575
    %6293 = vmatprep.subr.bf16.mxu0 %v5584
    %6294 = vmatpush1.bf16.msra.mxu0 %v5583
    %6295 = vmatprep.subr.bf16.mxu0 %v5592
    %6296 = vmatpush1.bf16.msra.mxu0 %v5591
    %6297 = vmatprep.subr.bf16.mxu0 %v5600
    %6298 = vmatpush1.bf16.msra.mxu0 %v5599
    %6299 = vmatprep.subr.bf16.mxu0 %v5608
    %6300 = vmatpush1.bf16.msra.mxu0 %v5607
    %6301 = vmatprep.subr.bf16.mxu0 %v5616
    %6302 = vmatpush1.bf16.msra.mxu0 %v5615
    %6303 = vmatprep.subr.bf16.mxu0 %v5624
    %6304 = vmatpush1.bf16.msra.mxu0 %v5623
    %6305 = vmatprep.subr.bf16.mxu0 %v5632
    %6306 = vmatpush1.bf16.msra.mxu0 %v5631
    %6307 = vmatprep.subr.bf16.mxu0 %v5640
    %6308 = vmatpush1.bf16.msra.mxu0 %v5639
    %6309 = vmatprep.subr.bf16.mxu0 %v5648
    %6310 = vmatpush1.bf16.msra.mxu0 %v5647
    %6311 = vmatprep.mubr.bf16.mxu0 %v4452
    %6312 = vmatmul.mubr.bf16.gmra.mrb[0].mxu0 %v4451
    %v6313 = vpop.f32.mrb[0].mxu0
    %v6314 = vadd.f32 %v4740, %v6313
    %v6315 = vpop.f32.mrb[0].mxu0
    %v6316 = vadd.f32 %v4744, %v6315
    %v6317 = vpop.f32.mrb[0].mxu0
    %v6318 = vpop.f32.mrb[0].mxu0
    %6319 = vdwg.mxu0
    %6320 = vmatprep.subr.bf16.mxu0 %v5656
    %6321 = vmatpush1.bf16.msra.mxu0 %v5655
    %6322 = vmatprep.subr.bf16.mxu0 %v5664
    %6323 = vmatpush1.bf16.msra.mxu0 %v5663
    %6324 = vmatprep.subr.bf16.mxu0 %v5672
    %6325 = vmatpush1.bf16.msra.mxu0 %v5671
    %6326 = vmatprep.subr.bf16.mxu0 %v5680
    %6327 = vmatpush1.bf16.msra.mxu0 %v5679
    %6328 = vmatprep.subr.bf16.mxu0 %v5688
    %6329 = vmatpush1.bf16.msra.mxu0 %v5687
    %6330 = vmatprep.subr.bf16.mxu0 %v5696
    %6331 = vmatpush1.bf16.msra.mxu0 %v5695
    %6332 = vmatprep.subr.bf16.mxu0 %v5704
    %6333 = vmatpush1.bf16.msra.mxu0 %v5703
    %6334 = vmatprep.subr.bf16.mxu0 %v5712
    %6335 = vmatpush1.bf16.msra.mxu0 %v5711
    %6336 = vmatprep.subr.bf16.mxu0 %v5720
    %6337 = vmatpush1.bf16.msra.mxu0 %v5719
    %6338 = vmatprep.subr.bf16.mxu0 %v5728
    %6339 = vmatpush1.bf16.msra.mxu0 %v5727
    %6340 = vmatprep.subr.bf16.mxu0 %v5736
    %6341 = vmatpush1.bf16.msra.mxu0 %v5735
    %6342 = vmatprep.subr.bf16.mxu0 %v5744
    %6343 = vmatpush1.bf16.msra.mxu0 %v5743
    %6344 = vmatprep.subr.bf16.mxu0 %v5752
    %6345 = vmatpush1.bf16.msra.mxu0 %v5751
    %6346 = vmatprep.subr.bf16.mxu0 %v5760
    %6347 = vmatpush1.bf16.msra.mxu0 %v5759
    %6348 = vmatprep.subr.bf16.mxu0 %v5768
    %6349 = vmatpush1.bf16.msra.mxu0 %v5767
    %6350 = vmatprep.subr.bf16.mxu0 %v5776
    %6351 = vmatpush1.bf16.msra.mxu0 %v5775
    %6352 = vmatprep.mubr.bf16.mxu0 %v4454
    %6353 = vmatmul.mubr.bf16.gmra.mrb[0].mxu0 %v4453
    %v6354 = vpop.f32.mrb[0].mxu0
    %v6355 = vadd.f32 %v6314, %v6354
    %v6356 = vpop.f32.mrb[0].mxu0
    %v6357 = vadd.f32 %v6316, %v6356
    %v6358 = vpop.f32.mrb[0].mxu0
    %v6359 = vpop.f32.mrb[0].mxu0
    %6360 = vdwg.mxu0
    %v6361 = vxor.u32 %v6109, 2147483648
    %v6362 = vxor.u32 %v6111, 2147483648
    %v6363 = vmul.f32 %v6361, 1.442695
    %v6364 = vpow.pop %v6363
    %v6365 = vmul.f32 %v6362, 1.442695
    %v6366 = vpow.pop %v6365
    %v6367 = vadd.f32 %v6364, 1.0
    %v6368 = vadd.f32 %v6366, 1.0
    %v6369 = vrcp.pop %v6367
    %v6370 = vmul.f32 1.0, %v6369
    %v6371 = vrcp.pop %v6368
    %v6372 = vmul.f32 1.0, %v6371
    %v6373 = vxor.u32 %v6191, 2147483648
    %v6374 = vxor.u32 %v6193, 2147483648
    %v6375 = vmul.f32 %v6373, 1.442695
    %v6376 = vpow.pop %v6375
    %v6377 = vmul.f32 %v6374, 1.442695
    %v6378 = vpow.pop %v6377
    %v6379 = vadd.f32 %v6376, 1.0
    %v6380 = vadd.f32 %v6378, 1.0
    %v6381 = vrcp.pop %v6379
    %v6382 = vmul.f32 1.0, %v6381
    %v6383 = vrcp.pop %v6380
    %v6384 = vmul.f32 1.0, %v6383
    %v6385 = vtanh.pop %v6273
    %v6386 = vtanh.pop %v6275
    %v6387 = vxor.u32 %v6355, 2147483648
    %v6388 = vxor.u32 %v6357, 2147483648
    %v6389 = vmul.f32 %v6387, 1.442695
    %v6390 = vpow.pop %v6389
    %v6391 = vmul.f32 %v6388, 1.442695
    %v6392 = vpow.pop %v6391
    %v6393 = vadd.f32 %v6390, 1.0
    %v6394 = vadd.f32 %v6392, 1.0
    %v6395 = vrcp.pop %v6393
    %v6396 = vmul.f32 1.0, %v6395
    %v6397 = vrcp.pop %v6394
    %v6398 = vmul.f32 1.0, %v6397
    %v6401 = vunpack.c.l.s4 1983009808
    %v6402 = vunpack.c.0.s8 %v6401
    %v6403 = vlaneseq
    %v6404 = vshrl.u32 %v6403, 7
    %v6405 = vsub.s32 %v6402, %v6404
    %v6406 = vrot.slane %v4395, %v6405
    %v6407 = vcombine.high %v6406, %v6406
    %v6410 = vmul.f32 %v6382, %v6406
    %v6411 = vmul.f32 %v6384, %v6407
    %v6412 = vmul.f32 %v6370, %v6385
    %v6413 = vmul.f32 %v6372, %v6386
    %v6414 = vadd.f32 %v6410, %v6412
    %v6415 = vadd.f32 %v6411, %v6413
    %v6416 = vtanh.pop %v6414
    %v6417 = vtanh.pop %v6415
    %v6418 = vmul.f32 %v6396, %v6416
    %v6419 = vmul.f32 %v6398, %v6417
    %6420 = vst [vmem:[#allocation44] sm:$0xf] %v4386
    %6421 = vst [vmem:[#allocation44 + $0x4] sm:$0xf] %v4387
    %6422 = vst [vmem:[#allocation44 + $0x8] sm:$0xf] %v4388
    %v6423 = vld [vmem:[#allocation9] sm:$0xf]
    %v6424 = vld [vmem:[#allocation9 + $0x4] sm:$0xf]
    %v6425 = vld [vmem:[#allocation9 + $0x8] sm:$0xf]
    %6426 = vst [vmem:[#allocation45] sm:$0xf] %v6423
    %6427 = vst [vmem:[#allocation45 + $0x4] sm:$0xf] %v6424
    %6428 = vst [vmem:[#allocation45 + $0x8] sm:$0xf] %v6425
    %v6431 = vcombine.low %v6418, %v6419
    %v6433 = vunpack.c.l.s4 1983009808
    %v6434 = vunpack.c.0.s8 %v6433
    %v6435 = vlaneseq
    %v6436 = vshrl.u32 %v6435, 7
    %v6437 = vsub.s32 %v6434, %v6436
    %v6438 = vrot.slane %v6431, %v6437
    %s6440 = smul.addr %s4389, 2
    %s6441 = scalar_lea.vmem [#allocation44], %s6440
    %6442 = vst [vmem:[%s6441] sm:$0xf] %v6438
    %v6445 = vcombine.low %v6414, %v6415
    %v6447 = vunpack.c.l.s4 1983009808
    %v6448 = vunpack.c.0.s8 %v6447
    %v6449 = vlaneseq
    %v6450 = vshrl.u32 %v6449, 7
    %v6451 = vsub.s32 %v6448, %v6450
    %v6452 = vrot.slane %v6445, %v6451
    %s6454 = smul.addr %s4389, 2
    %s6455 = scalar_lea.vmem [#allocation45], %s6454
    %6456 = vst [vmem:[%s6455] sm:$0xf] %v6452
    %v6457 = vsub.f32 %v4434, %v4447
    %v6458 = vsub.f32 %v4439, %v4448
    %v6459 = vadd.f32 %v6418, %v6457
    %v6460 = vadd.f32 %v6419, %v6458
    %v6461 = vmul.f32 %v6459, 0.33333334
    %v6462 = vmul.f32 %v6460, 0.33333334
    %v6463 = vmul.f32 %v6461, %v6461
    %v6464 = vmul.f32 %v6462, %v6462
    %v6465 = vsel %vm4429, %v6463, 0.0
    %v6466 = vsel %vm4429, %v6464, 0.0
    %v6467 = vadd.f32 %v6465, %v6466
    %6468 = vadd.xlane.f32.xlu0 %v6467
    %v6469 = vpop.xlane.xlu0 %6468
    %v6470 = vmax.f32 %v6469, 1e-24
    %v6471 = vrsqrt.pop %v6470
    %v6472 = vmul.f32 %v6461, %v6471
    %v6473 = vmul.f32 %v6462, %v6471
    %v6474 = vld [vmem:[%s3] sm:$0x3]
    %s6475 = scalar_lea.vmem [#allocation14], 4
    %v6476 = vld [vmem:[%s6475] sm:$0xf]
    %v6477 = vld [vmem:[%s6475 + $0x4] sm:$0xf]
    %v6478 = vld [vmem:[%s6475 + $0x8] sm:$0xf]
    %6480 = vset.pattern.permute.xlu0 0
    %6481 = vperm.xlu0 %6480, %v6474
    %v6482 = vpop.permute.xlu0 %6481
    %v6484 = vunpack.c.l.s4 269488144
    %v6485 = vunpack.c.0.s8 %v6484
    %v6486 = vlaneseq
    %v6487 = vshrl.u32 %v6486, 7
    %v6488 = vsub.s32 %v6485, %v6487
    %v6489 = vrot.slane %v6482, %v6488
    %v6491 = vmul.f32 %v6476, %v6489
    %v6492 = vmul.f32 %v6477, %v6489
    %v6493 = vmul.f32 %v6478, %v6489
    %v6498 = vunpack.c.l.s4 1983009808
    %v6499 = vunpack.c.0.s8 %v6498
    %v6500 = vlaneseq
    %v6501 = vshrl.u32 %v6500, 7
    %v6502 = vsub.s32 %v6499, %v6501
    %v6503 = vrot.slane %v6491, %v6502
    %v6504 = vcombine.high %v6503, %v6503
    %v6506 = vunpack.c.l.s4 1983009808
    %v6507 = vunpack.c.0.s8 %v6506
    %v6508 = vlaneseq
    %v6509 = vshrl.u32 %v6508, 7
    %v6510 = vsub.s32 %v6507, %v6509
    %v6511 = vrot.slane %v6492, %v6510
    %v6512 = vcombine.high %v6511, %v6511
    %v6514 = vunpack.c.l.s4 1983009808
    %v6515 = vunpack.c.0.s8 %v6514
    %v6516 = vlaneseq
    %v6517 = vshrl.u32 %v6516, 7
    %v6518 = vsub.s32 %v6515, %v6517
    %v6519 = vrot.slane %v6493, %v6518
    %v6520 = vcombine.high %v6519, %v6519
    %v6527 = vsel %vm4429, %v6503, 0.0
    %v6528 = vsel %vm4429, %v6511, 0.0
    %v6529 = vadd.f32 %v6527, %v6528
    %v6530 = vsel %vm4429, %v6519, 0.0
    %v6531 = vadd.f32 %v6529, %v6530
    %v6532 = vsel %vm4429, %v6504, 0.0
    %v6533 = vsel %vm4429, %v6512, 0.0
    %v6534 = vadd.f32 %v6532, %v6533
    %v6535 = vsel %vm4429, %v6520, 0.0
    %v6536 = vadd.f32 %v6534, %v6535
    %v6537 = vadd.f32 %v6472, %v6531
    %v6538 = vadd.f32 %v6473, %v6536
    %6539 = vst [vmem:[#allocation50] sm:$0xf] %v6491
    %6540 = vst [vmem:[#allocation50 + $0x4] sm:$0xf] %v6492
    %6541 = vst [vmem:[#allocation50 + $0x8] sm:$0xf] %v6493
    %v6544 = vcombine.low %v6472, %v6473
    %v6546 = vunpack.c.l.s4 1983009808
    %v6547 = vunpack.c.0.s8 %v6546
    %v6548 = vlaneseq
    %v6549 = vshrl.u32 %v6548, 7
    %v6550 = vsub.s32 %v6547, %v6549
    %v6551 = vrot.slane %v6544, %v6550
    %s6553 = scalar_lea.vmem [#allocation50], 12
    %6554 = vst [vmem:[%s6553] sm:$0xf] %v6551
    %s6555 = scalar_lea.vmem [#allocation15], 4
    %v6556 = vld [vmem:[%s6555] sm:$0xf]
    %v6557 = vld [vmem:[%s6555 + $0x4] sm:$0xf]
    %v6558 = vld [vmem:[%s6555 + $0x8] sm:$0xf]
    %6559 = vst [vmem:[#allocation51] sm:$0xf] %v6556
    %6560 = vst [vmem:[#allocation51 + $0x4] sm:$0xf] %v6557
    %6561 = vst [vmem:[#allocation51 + $0x8] sm:$0xf] %v6558
    %v6564 = vcombine.low %v4383, %v4384
    %v6566 = vunpack.c.l.s4 1983009808
    %v6567 = vunpack.c.0.s8 %v6566
    %v6568 = vlaneseq
    %v6569 = vshrl.u32 %v6568, 7
    %v6570 = vsub.s32 %v6567, %v6569
    %v6571 = vrot.slane %v6564, %v6570
    %s6573 = scalar_lea.vmem [#allocation51], 12
    %6574 = vst [vmem:[%s6573] sm:$0xf] %v6571
    %v6575 = vld [vmem:[#allocation11] sm:$0x3]
    %v6576 = vld [vmem:[#allocation12] sm:$0x3]
    %v6577 = vpack.c.bf16 %v6575, %v6575
    %v6578 = vld [vmem:[#allocation33] sm:$0xff]
    %v6579 = vld [vmem:[#allocation33 + $0x8] sm:$0xff]
    %v6580 = vld [vmem:[#allocation33 + $0x10] sm:$0xff]
    %v6581 = vld [vmem:[#allocation33 + $0x18] sm:$0xff]
    %v6582 = vld [vmem:[#allocation33 + $0x20] sm:$0xff]
    %v6583 = vld [vmem:[#allocation33 + $0x28] sm:$0xff]
    %v6584 = vld [vmem:[#allocation33 + $0x30] sm:$0xff]
    %v6585 = vld [vmem:[#allocation33 + $0x38] sm:$0xff]
    %v6586 = vld [vmem:[#allocation33 + $0x40] sm:$0xff]
    %v6587 = vld [vmem:[#allocation33 + $0x48] sm:$0xff]
    %v6588 = vld [vmem:[#allocation33 + $0x50] sm:$0xff]
    %v6589 = vld [vmem:[#allocation33 + $0x58] sm:$0xff]
    %v6590 = vld [vmem:[#allocation33 + $0x60] sm:$0xff]
    %v6591 = vld [vmem:[#allocation33 + $0x68] sm:$0xff]
    %v6592 = vld [vmem:[#allocation33 + $0x70] sm:$0xff]
    %v6593 = vld [vmem:[#allocation33 + $0x78] sm:$0xff]
    %v6594 = vld [vmem:[#allocation33 + $0x80] sm:$0xff]
    %v6595 = vld [vmem:[#allocation33 + $0x88] sm:$0xff]
    %v6596 = vld [vmem:[#allocation33 + $0x90] sm:$0xff]
    %v6597 = vld [vmem:[#allocation33 + $0x98] sm:$0xff]
    %v6598 = vld [vmem:[#allocation33 + $0xa0] sm:$0xff]
    %v6599 = vld [vmem:[#allocation33 + $0xa8] sm:$0xff]
    %v6600 = vld [vmem:[#allocation33 + $0xb0] sm:$0xff]
    %v6601 = vld [vmem:[#allocation33 + $0xb8] sm:$0xff]
    %v6602 = vld [vmem:[#allocation33 + $0xc0] sm:$0xff]
    %v6603 = vld [vmem:[#allocation33 + $0xc8] sm:$0xff]
    %v6604 = vld [vmem:[#allocation33 + $0xd0] sm:$0xff]
    %v6605 = vld [vmem:[#allocation33 + $0xd8] sm:$0xff]
    %v6606 = vld [vmem:[#allocation33 + $0xe0] sm:$0xff]
    %v6607 = vld [vmem:[#allocation33 + $0xe8] sm:$0xff]
    %v6608 = vld [vmem:[#allocation33 + $0xf0] sm:$0xff]
    %v6609 = vld [vmem:[#allocation33 + $0xf8] sm:$0xff]
    %v6610 = vld [vmem:[#allocation33 + $0x100] sm:$0xff]
    %v6611 = vld [vmem:[#allocation33 + $0x108] sm:$0xff]
    %v6612 = vld [vmem:[#allocation33 + $0x110] sm:$0xff]
    %v6613 = vld [vmem:[#allocation33 + $0x118] sm:$0xff]
    %v6614 = vld [vmem:[#allocation33 + $0x120] sm:$0xff]
    %v6615 = vld [vmem:[#allocation33 + $0x128] sm:$0xff]
    %v6616 = vld [vmem:[#allocation33 + $0x130] sm:$0xff]
    %v6617 = vld [vmem:[#allocation33 + $0x138] sm:$0xff]
    %v6618 = vld [vmem:[#allocation33 + $0x140] sm:$0xff]
    %v6619 = vld [vmem:[#allocation33 + $0x148] sm:$0xff]
    %v6620 = vld [vmem:[#allocation33 + $0x150] sm:$0xff]
    %v6621 = vld [vmem:[#allocation33 + $0x158] sm:$0xff]
    %v6622 = vld [vmem:[#allocation33 + $0x160] sm:$0xff]
    %v6623 = vld [vmem:[#allocation33 + $0x168] sm:$0xff]
    %v6624 = vld [vmem:[#allocation33 + $0x170] sm:$0xff]
    %v6625 = vld [vmem:[#allocation33 + $0x178] sm:$0xff]
    %v6626 = vld [vmem:[#allocation33 + $0x180] sm:$0xff]
    %v6627 = vld [vmem:[#allocation33 + $0x188] sm:$0xff]
    %v6628 = vld [vmem:[#allocation33 + $0x190] sm:$0xff]
    %v6629 = vld [vmem:[#allocation33 + $0x198] sm:$0xff]
    %v6630 = vld [vmem:[#allocation33 + $0x1a0] sm:$0xff]
    %v6631 = vld [vmem:[#allocation33 + $0x1a8] sm:$0xff]
    %v6632 = vld [vmem:[#allocation33 + $0x1b0] sm:$0xff]
    %v6633 = vld [vmem:[#allocation33 + $0x1b8] sm:$0xff]
    %v6634 = vld [vmem:[#allocation33 + $0x1c0] sm:$0xff]
    %v6635 = vld [vmem:[#allocation33 + $0x1c8] sm:$0xff]
    %v6636 = vld [vmem:[#allocation33 + $0x1d0] sm:$0xff]
    %v6637 = vld [vmem:[#allocation33 + $0x1d8] sm:$0xff]
    %v6638 = vld [vmem:[#allocation33 + $0x1e0] sm:$0xff]
    %v6639 = vld [vmem:[#allocation33 + $0x1e8] sm:$0xff]
    %v6640 = vld [vmem:[#allocation33 + $0x1f0] sm:$0xff]
    %v6641 = vld [vmem:[#allocation33 + $0x1f8] sm:$0xff]
    %v6642 = vld [vmem:[#allocation33 + $0x200] sm:$0xff]
    %v6643 = vld [vmem:[#allocation33 + $0x208] sm:$0xff]
    %v6644 = vld [vmem:[#allocation33 + $0x210] sm:$0xff]
    %v6645 = vld [vmem:[#allocation33 + $0x218] sm:$0xff]
    %v6646 = vld [vmem:[#allocation33 + $0x220] sm:$0xff]
    %v6647 = vld [vmem:[#allocation33 + $0x228] sm:$0xff]
    %v6648 = vld [vmem:[#allocation33 + $0x230] sm:$0xff]
    %v6649 = vld [vmem:[#allocation33 + $0x238] sm:$0xff]
    %v6650 = vld [vmem:[#allocation33 + $0x240] sm:$0xff]
    %v6651 = vld [vmem:[#allocation33 + $0x248] sm:$0xff]
    %v6652 = vld [vmem:[#allocation33 + $0x250] sm:$0xff]
    %v6653 = vld [vmem:[#allocation33 + $0x258] sm:$0xff]
    %v6654 = vld [vmem:[#allocation33 + $0x260] sm:$0xff]
    %v6655 = vld [vmem:[#allocation33 + $0x268] sm:$0xff]
    %v6656 = vld [vmem:[#allocation33 + $0x270] sm:$0xff]
    %v6657 = vld [vmem:[#allocation33 + $0x278] sm:$0xff]
    %v6658 = vld [vmem:[#allocation33 + $0x280] sm:$0xff]
    %v6659 = vld [vmem:[#allocation33 + $0x288] sm:$0xff]
    %v6660 = vld [vmem:[#allocation33 + $0x290] sm:$0xff]
    %v6661 = vld [vmem:[#allocation33 + $0x298] sm:$0xff]
    %v6662 = vld [vmem:[#allocation33 + $0x2a0] sm:$0xff]
    %v6663 = vld [vmem:[#allocation33 + $0x2a8] sm:$0xff]
    %v6664 = vld [vmem:[#allocation33 + $0x2b0] sm:$0xff]
    %v6665 = vld [vmem:[#allocation33 + $0x2b8] sm:$0xff]
    %v6666 = vld [vmem:[#allocation33 + $0x2c0] sm:$0xff]
    %v6667 = vld [vmem:[#allocation33 + $0x2c8] sm:$0xff]
    %v6668 = vld [vmem:[#allocation33 + $0x2d0] sm:$0xff]
    %v6669 = vld [vmem:[#allocation33 + $0x2d8] sm:$0xff]
    %v6670 = vld [vmem:[#allocation33 + $0x2e0] sm:$0xff]
    %v6671 = vld [vmem:[#allocation33 + $0x2e8] sm:$0xff]
    %v6672 = vld [vmem:[#allocation33 + $0x2f0] sm:$0xff]
    %v6673 = vld [vmem:[#allocation33 + $0x2f8] sm:$0xff]
    %v6674 = vld [vmem:[#allocation35] sm:$0xf]
    %v6676 = vlaneseq
    %v6677 = vshrl.u32 %v6676, 7
    %v6678 = vsub.s32 0, %v6677
    %v6679 = vrot.slane %v6674, %v6678
    %v6680 = vlaneseq
    %v6681 = vshrl.u32 %v6680, 7
    %v6682 = vsub.s32 1, %v6681
    %v6683 = vrot.slane %v6674, %v6682
    %v6684 = vlaneseq
    %v6685 = vshrl.u32 %v6684, 7
    %v6686 = vsub.s32 2, %v6685
    %v6687 = vrot.slane %v6674, %v6686
    %v6688 = vlaneseq
    %v6689 = vshrl.u32 %v6688, 7
    %v6690 = vsub.s32 3, %v6689
    %v6691 = vrot.slane %v6674, %v6690
    %v6792 = vunpack.c.l.b16 %v6578
    %v6793 = vunpack.c.h.b16 %v6578
    %v6794 = vunpack.c.l.b16 %v6579
    %v6795 = vunpack.c.h.b16 %v6579
    %v6796 = vunpack.c.l.b16 %v6580
    %v6797 = vunpack.c.h.b16 %v6580
    %v6798 = vunpack.c.l.b16 %v6581
    %v6799 = vunpack.c.h.b16 %v6581
    %v6800 = vunpack.c.l.b16 %v6582
    %v6801 = vunpack.c.h.b16 %v6582
    %v6802 = vunpack.c.l.b16 %v6583
    %v6803 = vunpack.c.h.b16 %v6583
    %v6804 = vunpack.c.l.b16 %v6584
    %v6805 = vunpack.c.h.b16 %v6584
    %v6806 = vunpack.c.l.b16 %v6585
    %v6807 = vunpack.c.h.b16 %v6585
    %v6808 = vunpack.c.l.b16 %v6586
    %v6809 = vunpack.c.h.b16 %v6586
    %v6810 = vunpack.c.l.b16 %v6587
    %v6811 = vunpack.c.h.b16 %v6587
    %v6812 = vunpack.c.l.b16 %v6588
    %v6813 = vunpack.c.h.b16 %v6588
    %v6814 = vunpack.c.l.b16 %v6589
    %v6815 = vunpack.c.h.b16 %v6589
    %v6816 = vunpack.c.l.b16 %v6590
    %v6817 = vunpack.c.h.b16 %v6590
    %v6818 = vunpack.c.l.b16 %v6591
    %v6819 = vunpack.c.h.b16 %v6591
    %v6820 = vunpack.c.l.b16 %v6592
    %v6821 = vunpack.c.h.b16 %v6592
    %v6822 = vunpack.c.l.b16 %v6593
    %v6823 = vunpack.c.h.b16 %v6593
    %v6824 = vunpack.c.l.b16 %v6594
    %v6825 = vunpack.c.h.b16 %v6594
    %v6826 = vunpack.c.l.b16 %v6595
    %v6827 = vunpack.c.h.b16 %v6595
    %v6828 = vunpack.c.l.b16 %v6596
    %v6829 = vunpack.c.h.b16 %v6596
    %v6830 = vunpack.c.l.b16 %v6597
    %v6831 = vunpack.c.h.b16 %v6597
    %v6832 = vunpack.c.l.b16 %v6598
    %v6833 = vunpack.c.h.b16 %v6598
    %v6834 = vunpack.c.l.b16 %v6599
    %v6835 = vunpack.c.h.b16 %v6599
    %v6836 = vunpack.c.l.b16 %v6600
    %v6837 = vunpack.c.h.b16 %v6600
    %v6838 = vunpack.c.l.b16 %v6601
    %v6839 = vunpack.c.h.b16 %v6601
    %v6840 = vunpack.c.l.b16 %v6602
    %v6841 = vunpack.c.h.b16 %v6602
    %v6842 = vunpack.c.l.b16 %v6603
    %v6843 = vunpack.c.h.b16 %v6603
    %v6844 = vunpack.c.l.b16 %v6604
    %v6845 = vunpack.c.h.b16 %v6604
    %v6846 = vunpack.c.l.b16 %v6605
    %v6847 = vunpack.c.h.b16 %v6605
    %v6848 = vunpack.c.l.b16 %v6606
    %v6849 = vunpack.c.h.b16 %v6606
    %v6850 = vunpack.c.l.b16 %v6607
    %v6851 = vunpack.c.h.b16 %v6607
    %v6852 = vunpack.c.l.b16 %v6608
    %v6853 = vunpack.c.h.b16 %v6608
    %v6854 = vunpack.c.l.b16 %v6609
    %v6855 = vunpack.c.h.b16 %v6609
    %v6856 = vunpack.c.l.b16 %v6610
    %v6857 = vunpack.c.h.b16 %v6610
    %v6858 = vunpack.c.l.b16 %v6611
    %v6859 = vunpack.c.h.b16 %v6611
    %v6860 = vunpack.c.l.b16 %v6612
    %v6861 = vunpack.c.h.b16 %v6612
    %v6862 = vunpack.c.l.b16 %v6613
    %v6863 = vunpack.c.h.b16 %v6613
    %v6864 = vunpack.c.l.b16 %v6614
    %v6865 = vunpack.c.h.b16 %v6614
    %v6866 = vunpack.c.l.b16 %v6615
    %v6867 = vunpack.c.h.b16 %v6615
    %v6868 = vunpack.c.l.b16 %v6616
    %v6869 = vunpack.c.h.b16 %v6616
    %v6870 = vunpack.c.l.b16 %v6617
    %v6871 = vunpack.c.h.b16 %v6617
    %v6872 = vunpack.c.l.b16 %v6618
    %v6873 = vunpack.c.h.b16 %v6618
    %v6874 = vunpack.c.l.b16 %v6619
    %v6875 = vunpack.c.h.b16 %v6619
    %v6876 = vunpack.c.l.b16 %v6620
    %v6877 = vunpack.c.h.b16 %v6620
    %v6878 = vunpack.c.l.b16 %v6621
    %v6879 = vunpack.c.h.b16 %v6621
    %v6880 = vunpack.c.l.b16 %v6622
    %v6881 = vunpack.c.h.b16 %v6622
    %v6882 = vunpack.c.l.b16 %v6623
    %v6883 = vunpack.c.h.b16 %v6623
    %v6884 = vunpack.c.l.b16 %v6624
    %v6885 = vunpack.c.h.b16 %v6624
    %v6886 = vunpack.c.l.b16 %v6625
    %v6887 = vunpack.c.h.b16 %v6625
    %v6888 = vunpack.c.l.b16 %v6626
    %v6889 = vunpack.c.h.b16 %v6626
    %v6890 = vunpack.c.l.b16 %v6627
    %v6891 = vunpack.c.h.b16 %v6627
    %v6892 = vunpack.c.l.b16 %v6628
    %v6893 = vunpack.c.h.b16 %v6628
    %v6894 = vunpack.c.l.b16 %v6629
    %v6895 = vunpack.c.h.b16 %v6629
    %v6896 = vunpack.c.l.b16 %v6630
    %v6897 = vunpack.c.h.b16 %v6630
    %v6898 = vunpack.c.l.b16 %v6631
    %v6899 = vunpack.c.h.b16 %v6631
    %v6900 = vunpack.c.l.b16 %v6632
    %v6901 = vunpack.c.h.b16 %v6632
    %v6902 = vunpack.c.l.b16 %v6633
    %v6903 = vunpack.c.h.b16 %v6633
    %v6904 = vunpack.c.l.b16 %v6634
    %v6905 = vunpack.c.h.b16 %v6634
    %v6906 = vunpack.c.l.b16 %v6635
    %v6907 = vunpack.c.h.b16 %v6635
    %v6908 = vunpack.c.l.b16 %v6636
    %v6909 = vunpack.c.h.b16 %v6636
    %v6910 = vunpack.c.l.b16 %v6637
    %v6911 = vunpack.c.h.b16 %v6637
    %v6912 = vunpack.c.l.b16 %v6638
    %v6913 = vunpack.c.h.b16 %v6638
    %v6914 = vunpack.c.l.b16 %v6639
    %v6915 = vunpack.c.h.b16 %v6639
    %v6916 = vunpack.c.l.b16 %v6640
    %v6917 = vunpack.c.h.b16 %v6640
    %v6918 = vunpack.c.l.b16 %v6641
    %v6919 = vunpack.c.h.b16 %v6641
    %v6920 = vunpack.c.l.b16 %v6642
    %v6921 = vunpack.c.h.b16 %v6642
    %v6922 = vunpack.c.l.b16 %v6643
    %v6923 = vunpack.c.h.b16 %v6643
    %v6924 = vunpack.c.l.b16 %v6644
    %v6925 = vunpack.c.h.b16 %v6644
    %v6926 = vunpack.c.l.b16 %v6645
    %v6927 = vunpack.c.h.b16 %v6645
    %v6928 = vunpack.c.l.b16 %v6646
    %v6929 = vunpack.c.h.b16 %v6646
    %v6930 = vunpack.c.l.b16 %v6647
    %v6931 = vunpack.c.h.b16 %v6647
    %v6932 = vunpack.c.l.b16 %v6648
    %v6933 = vunpack.c.h.b16 %v6648
    %v6934 = vunpack.c.l.b16 %v6649
    %v6935 = vunpack.c.h.b16 %v6649
    %v6936 = vunpack.c.l.b16 %v6650
    %v6937 = vunpack.c.h.b16 %v6650
    %v6938 = vunpack.c.l.b16 %v6651
    %v6939 = vunpack.c.h.b16 %v6651
    %v6940 = vunpack.c.l.b16 %v6652
    %v6941 = vunpack.c.h.b16 %v6652
    %v6942 = vunpack.c.l.b16 %v6653
    %v6943 = vunpack.c.h.b16 %v6653
    %v6944 = vunpack.c.l.b16 %v6654
    %v6945 = vunpack.c.h.b16 %v6654
    %v6946 = vunpack.c.l.b16 %v6655
    %v6947 = vunpack.c.h.b16 %v6655
    %v6948 = vunpack.c.l.b16 %v6656
    %v6949 = vunpack.c.h.b16 %v6656
    %v6950 = vunpack.c.l.b16 %v6657
    %v6951 = vunpack.c.h.b16 %v6657
    %v6952 = vunpack.c.l.b16 %v6658
    %v6953 = vunpack.c.h.b16 %v6658
    %v6954 = vunpack.c.l.b16 %v6659
    %v6955 = vunpack.c.h.b16 %v6659
    %v6956 = vunpack.c.l.b16 %v6660
    %v6957 = vunpack.c.h.b16 %v6660
    %v6958 = vunpack.c.l.b16 %v6661
    %v6959 = vunpack.c.h.b16 %v6661
    %v6960 = vunpack.c.l.b16 %v6662
    %v6961 = vunpack.c.h.b16 %v6662
    %v6962 = vunpack.c.l.b16 %v6663
    %v6963 = vunpack.c.h.b16 %v6663
    %v6964 = vunpack.c.l.b16 %v6664
    %v6965 = vunpack.c.h.b16 %v6664
    %v6966 = vunpack.c.l.b16 %v6665
    %v6967 = vunpack.c.h.b16 %v6665
    %v6968 = vunpack.c.l.b16 %v6666
    %v6969 = vunpack.c.h.b16 %v6666
    %v6970 = vunpack.c.l.b16 %v6667
    %v6971 = vunpack.c.h.b16 %v6667
    %v6972 = vunpack.c.l.b16 %v6668
    %v6973 = vunpack.c.h.b16 %v6668
    %v6974 = vunpack.c.l.b16 %v6669
    %v6975 = vunpack.c.h.b16 %v6669
    %v6976 = vunpack.c.l.b16 %v6670
    %v6977 = vunpack.c.h.b16 %v6670
    %v6978 = vunpack.c.l.b16 %v6671
    %v6979 = vunpack.c.h.b16 %v6671
    %v6980 = vunpack.c.l.b16 %v6672
    %v6981 = vunpack.c.h.b16 %v6672
    %v6982 = vunpack.c.l.b16 %v6673
    %v6983 = vunpack.c.h.b16 %v6673
    %v6984 = vpack.c.b16 %v6796, %v6792
    %v6985 = vpack.c.b16 %v6797, %v6793
    %v6986 = vpack.c.b16 %v6798, %v6794
    %v6987 = vpack.c.b16 %v6799, %v6795
    %v6988 = vpack.c.b16 %v6804, %v6800
    %v6989 = vpack.c.b16 %v6805, %v6801
    %v6990 = vpack.c.b16 %v6806, %v6802
    %v6991 = vpack.c.b16 %v6807, %v6803
    %v6992 = vpack.c.b16 %v6812, %v6808
    %v6993 = vpack.c.b16 %v6813, %v6809
    %v6994 = vpack.c.b16 %v6814, %v6810
    %v6995 = vpack.c.b16 %v6815, %v6811
    %v6996 = vpack.c.b16 %v6820, %v6816
    %v6997 = vpack.c.b16 %v6821, %v6817
    %v6998 = vpack.c.b16 %v6822, %v6818
    %v6999 = vpack.c.b16 %v6823, %v6819
    %v7000 = vpack.c.b16 %v6828, %v6824
    %v7001 = vpack.c.b16 %v6829, %v6825
    %v7002 = vpack.c.b16 %v6830, %v6826
    %v7003 = vpack.c.b16 %v6831, %v6827
    %v7004 = vpack.c.b16 %v6836, %v6832
    %v7005 = vpack.c.b16 %v6837, %v6833
    %v7006 = vpack.c.b16 %v6838, %v6834
    %v7007 = vpack.c.b16 %v6839, %v6835
    %v7008 = vpack.c.b16 %v6844, %v6840
    %v7009 = vpack.c.b16 %v6845, %v6841
    %v7010 = vpack.c.b16 %v6846, %v6842
    %v7011 = vpack.c.b16 %v6847, %v6843
    %v7012 = vpack.c.b16 %v6852, %v6848
    %v7013 = vpack.c.b16 %v6853, %v6849
    %v7014 = vpack.c.b16 %v6854, %v6850
    %v7015 = vpack.c.b16 %v6855, %v6851
    %v7016 = vpack.c.b16 %v6860, %v6856
    %v7017 = vpack.c.b16 %v6861, %v6857
    %v7018 = vpack.c.b16 %v6862, %v6858
    %v7019 = vpack.c.b16 %v6863, %v6859
    %v7020 = vpack.c.b16 %v6868, %v6864
    %v7021 = vpack.c.b16 %v6869, %v6865
    %v7022 = vpack.c.b16 %v6870, %v6866
    %v7023 = vpack.c.b16 %v6871, %v6867
    %v7024 = vpack.c.b16 %v6876, %v6872
    %v7025 = vpack.c.b16 %v6877, %v6873
    %v7026 = vpack.c.b16 %v6878, %v6874
    %v7027 = vpack.c.b16 %v6879, %v6875
    %v7028 = vpack.c.b16 %v6884, %v6880
    %v7029 = vpack.c.b16 %v6885, %v6881
    %v7030 = vpack.c.b16 %v6886, %v6882
    %v7031 = vpack.c.b16 %v6887, %v6883
    %v7032 = vpack.c.b16 %v6892, %v6888
    %v7033 = vpack.c.b16 %v6893, %v6889
    %v7034 = vpack.c.b16 %v6894, %v6890
    %v7035 = vpack.c.b16 %v6895, %v6891
    %v7036 = vpack.c.b16 %v6900, %v6896
    %v7037 = vpack.c.b16 %v6901, %v6897
    %v7038 = vpack.c.b16 %v6902, %v6898
    %v7039 = vpack.c.b16 %v6903, %v6899
    %v7040 = vpack.c.b16 %v6908, %v6904
    %v7041 = vpack.c.b16 %v6909, %v6905
    %v7042 = vpack.c.b16 %v6910, %v6906
    %v7043 = vpack.c.b16 %v6911, %v6907
    %v7044 = vpack.c.b16 %v6916, %v6912
    %v7045 = vpack.c.b16 %v6917, %v6913
    %v7046 = vpack.c.b16 %v6918, %v6914
    %v7047 = vpack.c.b16 %v6919, %v6915
    %v7048 = vpack.c.b16 %v6924, %v6920
    %v7049 = vpack.c.b16 %v6925, %v6921
    %v7050 = vpack.c.b16 %v6926, %v6922
    %v7051 = vpack.c.b16 %v6927, %v6923
    %v7052 = vpack.c.b16 %v6932, %v6928
    %v7053 = vpack.c.b16 %v6933, %v6929
    %v7054 = vpack.c.b16 %v6934, %v6930
    %v7055 = vpack.c.b16 %v6935, %v6931
    %v7056 = vpack.c.b16 %v6940, %v6936
    %v7057 = vpack.c.b16 %v6941, %v6937
    %v7058 = vpack.c.b16 %v6942, %v6938
    %v7059 = vpack.c.b16 %v6943, %v6939
    %v7060 = vpack.c.b16 %v6948, %v6944
    %v7061 = vpack.c.b16 %v6949, %v6945
    %v7062 = vpack.c.b16 %v6950, %v6946
    %v7063 = vpack.c.b16 %v6951, %v6947
    %v7064 = vpack.c.b16 %v6956, %v6952
    %v7065 = vpack.c.b16 %v6957, %v6953
    %v7066 = vpack.c.b16 %v6958, %v6954
    %v7067 = vpack.c.b16 %v6959, %v6955
    %v7068 = vpack.c.b16 %v6964, %v6960
    %v7069 = vpack.c.b16 %v6965, %v6961
    %v7070 = vpack.c.b16 %v6966, %v6962
    %v7071 = vpack.c.b16 %v6967, %v6963
    %v7072 = vpack.c.b16 %v6972, %v6968
    %v7073 = vpack.c.b16 %v6973, %v6969
    %v7074 = vpack.c.b16 %v6974, %v6970
    %v7075 = vpack.c.b16 %v6975, %v6971
    %v7076 = vpack.c.b16 %v6980, %v6976
    %v7077 = vpack.c.b16 %v6981, %v6977
    %v7078 = vpack.c.b16 %v6982, %v6978
    %v7079 = vpack.c.b16 %v6983, %v6979
    %7176 = vmatprep.subr.bf16.mxu0 %v6985
    %7177 = vmatpush1.bf16.msra.mxu0 %v6984
    %7178 = vmatprep.subr.bf16.mxu0 %v6989
    %7179 = vmatpush1.bf16.msra.mxu0 %v6988
    %7180 = vmatprep.subr.bf16.mxu0 %v6993
    %7181 = vmatpush1.bf16.msra.mxu0 %v6992
    %7182 = vmatprep.subr.bf16.mxu0 %v6997
    %7183 = vmatpush1.bf16.msra.mxu0 %v6996
    %7184 = vmatprep.subr.bf16.mxu0 %v7001
    %7185 = vmatpush1.bf16.msra.mxu0 %v7000
    %7186 = vmatprep.subr.bf16.mxu0 %v7005
    %7187 = vmatpush1.bf16.msra.mxu0 %v7004
    %7188 = vmatprep.subr.bf16.mxu0 %v7009
    %7189 = vmatpush1.bf16.msra.mxu0 %v7008
    %7190 = vmatprep.subr.bf16.mxu0 %v7013
    %7191 = vmatpush1.bf16.msra.mxu0 %v7012
    %7192 = vmatprep.subr.bf16.mxu0 %v7017
    %7193 = vmatpush1.bf16.msra.mxu0 %v7016
    %7194 = vmatprep.subr.bf16.mxu0 %v7021
    %7195 = vmatpush1.bf16.msra.mxu0 %v7020
    %7196 = vmatprep.subr.bf16.mxu0 %v7025
    %7197 = vmatpush1.bf16.msra.mxu0 %v7024
    %7198 = vmatprep.subr.bf16.mxu0 %v7029
    %7199 = vmatpush1.bf16.msra.mxu0 %v7028
    %7200 = vmatprep.subr.bf16.mxu0 %v7033
    %7201 = vmatpush1.bf16.msra.mxu0 %v7032
    %7202 = vmatprep.subr.bf16.mxu0 %v7037
    %7203 = vmatpush1.bf16.msra.mxu0 %v7036
    %7204 = vmatprep.subr.bf16.mxu0 %v7041
    %7205 = vmatpush1.bf16.msra.mxu0 %v7040
    %7206 = vmatprep.subr.bf16.mxu0 %v7045
    %7207 = vmatpush1.bf16.msra.mxu0 %v7044
    %7208 = vmatprep.mubr.bf16.mxu0 %v4137
    %7209 = vmatmul.mubr.bf16.gmra.mrb[0].mxu0 %v4136
    %v7210 = vpop.f32.mrb[0].mxu0
    %v7211 = vadd.f32 %v6679, %v7210
    %v7212 = vpop.f32.mrb[0].mxu0
    %v7213 = vadd.f32 %v6683, %v7212
    %v7214 = vpop.f32.mrb[0].mxu0
    %v7215 = vpop.f32.mrb[0].mxu0
    %7216 = vdwg.mxu0
    %7217 = vmatprep.subr.bf16.mxu0 %v7049
    %7218 = vmatpush1.bf16.msra.mxu0 %v7048
    %7219 = vmatprep.subr.bf16.mxu0 %v7053
    %7220 = vmatpush1.bf16.msra.mxu0 %v7052
    %7221 = vmatprep.subr.bf16.mxu0 %v7057
    %7222 = vmatpush1.bf16.msra.mxu0 %v7056
    %7223 = vmatprep.subr.bf16.mxu0 %v7061
    %7224 = vmatpush1.bf16.msra.mxu0 %v7060
    %7225 = vmatprep.subr.bf16.mxu0 %v7065
    %7226 = vmatpush1.bf16.msra.mxu0 %v7064
    %7227 = vmatprep.subr.bf16.mxu0 %v7069
    %7228 = vmatpush1.bf16.msra.mxu0 %v7068
    %7229 = vmatprep.subr.bf16.mxu0 %v7073
    %7230 = vmatpush1.bf16.msra.mxu0 %v7072
    %7231 = vmatprep.subr.bf16.mxu0 %v7077
    %7232 = vmatpush1.bf16.msra.mxu0 %v7076
    %7233 = vmatprep.subr.bf16.mxu0 0
    %7234 = vmatpush1.bf16.msra.mxu0 0
    %7235 = vmatprep.subr.bf16.mxu0 0
    %7236 = vmatpush1.bf16.msra.mxu0 0
    %7237 = vmatprep.subr.bf16.mxu0 0
    %7238 = vmatpush1.bf16.msra.mxu0 0
    %7239 = vmatprep.subr.bf16.mxu0 0
    %7240 = vmatpush1.bf16.msra.mxu0 0
    %7241 = vmatprep.subr.bf16.mxu0 0
    %7242 = vmatpush1.bf16.msra.mxu0 0
    %7243 = vmatprep.subr.bf16.mxu0 0
    %7244 = vmatpush1.bf16.msra.mxu0 0
    %7245 = vmatprep.subr.bf16.mxu0 0
    %7246 = vmatpush1.bf16.msra.mxu0 0
    %7247 = vmatprep.subr.bf16.mxu0 0
    %7248 = vmatpush1.bf16.msra.mxu0 0
    %7249 = vmatprep.mubr.bf16.mxu0 0
    %7250 = vmatmul.mubr.bf16.gmra.mrb[0].mxu0 %v6577
    %v7251 = vpop.f32.mrb[0].mxu0
    %v7252 = vadd.f32 %v7211, %v7251
    %v7253 = vpop.f32.mrb[0].mxu0
    %v7254 = vadd.f32 %v7213, %v7253
    %v7255 = vpop.f32.mrb[0].mxu0
    %v7256 = vpop.f32.mrb[0].mxu0
    %7257 = vdwg.mxu0
    %7258 = vmatprep.subr.bf16.mxu0 %v6987
    %7259 = vmatpush1.bf16.msra.mxu0 %v6986
    %7260 = vmatprep.subr.bf16.mxu0 %v6991
    %7261 = vmatpush1.bf16.msra.mxu0 %v6990
    %7262 = vmatprep.subr.bf16.mxu0 %v6995
    %7263 = vmatpush1.bf16.msra.mxu0 %v6994
    %7264 = vmatprep.subr.bf16.mxu0 %v6999
    %7265 = vmatpush1.bf16.msra.mxu0 %v6998
    %7266 = vmatprep.subr.bf16.mxu0 %v7003
    %7267 = vmatpush1.bf16.msra.mxu0 %v7002
    %7268 = vmatprep.subr.bf16.mxu0 %v7007
    %7269 = vmatpush1.bf16.msra.mxu0 %v7006
    %7270 = vmatprep.subr.bf16.mxu0 %v7011
    %7271 = vmatpush1.bf16.msra.mxu0 %v7010
    %7272 = vmatprep.subr.bf16.mxu0 %v7015
    %7273 = vmatpush1.bf16.msra.mxu0 %v7014
    %7274 = vmatprep.subr.bf16.mxu0 %v7019
    %7275 = vmatpush1.bf16.msra.mxu0 %v7018
    %7276 = vmatprep.subr.bf16.mxu0 %v7023
    %7277 = vmatpush1.bf16.msra.mxu0 %v7022
    %7278 = vmatprep.subr.bf16.mxu0 %v7027
    %7279 = vmatpush1.bf16.msra.mxu0 %v7026
    %7280 = vmatprep.subr.bf16.mxu0 %v7031
    %7281 = vmatpush1.bf16.msra.mxu0 %v7030
    %7282 = vmatprep.subr.bf16.mxu0 %v7035
    %7283 = vmatpush1.bf16.msra.mxu0 %v7034
    %7284 = vmatprep.subr.bf16.mxu0 %v7039
    %7285 = vmatpush1.bf16.msra.mxu0 %v7038
    %7286 = vmatprep.subr.bf16.mxu0 %v7043
    %7287 = vmatpush1.bf16.msra.mxu0 %v7042
    %7288 = vmatprep.subr.bf16.mxu0 %v7047
    %7289 = vmatpush1.bf16.msra.mxu0 %v7046
    %7290 = vmatprep.mubr.bf16.mxu0 %v4137
    %7291 = vmatmul.mubr.bf16.gmra.mrb[0].mxu0 %v4136
    %v7292 = vpop.f32.mrb[0].mxu0
    %v7293 = vadd.f32 %v6687, %v7292
    %v7294 = vpop.f32.mrb[0].mxu0
    %v7295 = vadd.f32 %v6691, %v7294
    %v7296 = vpop.f32.mrb[0].mxu0
    %v7297 = vpop.f32.mrb[0].mxu0
    %7298 = vdwg.mxu0
    %7299 = vmatprep.subr.bf16.mxu0 %v7051
    %7300 = vmatpush1.bf16.msra.mxu0 %v7050
    %7301 = vmatprep.subr.bf16.mxu0 %v7055
    %7302 = vmatpush1.bf16.msra.mxu0 %v7054
    %7303 = vmatprep.subr.bf16.mxu0 %v7059
    %7304 = vmatpush1.bf16.msra.mxu0 %v7058
    %7305 = vmatprep.subr.bf16.mxu0 %v7063
    %7306 = vmatpush1.bf16.msra.mxu0 %v7062
    %7307 = vmatprep.subr.bf16.mxu0 %v7067
    %7308 = vmatpush1.bf16.msra.mxu0 %v7066
    %7309 = vmatprep.subr.bf16.mxu0 %v7071
    %7310 = vmatpush1.bf16.msra.mxu0 %v7070
    %7311 = vmatprep.subr.bf16.mxu0 %v7075
    %7312 = vmatpush1.bf16.msra.mxu0 %v7074
    %7313 = vmatprep.subr.bf16.mxu0 %v7079
    %7314 = vmatpush1.bf16.msra.mxu0 %v7078
    %7315 = vmatprep.subr.bf16.mxu0 0
    %7316 = vmatpush1.bf16.msra.mxu0 0
    %7317 = vmatprep.subr.bf16.mxu0 0
    %7318 = vmatpush1.bf16.msra.mxu0 0
    %7319 = vmatprep.subr.bf16.mxu0 0
    %7320 = vmatpush1.bf16.msra.mxu0 0
    %7321 = vmatprep.subr.bf16.mxu0 0
    %7322 = vmatpush1.bf16.msra.mxu0 0
    %7323 = vmatprep.subr.bf16.mxu0 0
    %7324 = vmatpush1.bf16.msra.mxu0 0
    %7325 = vmatprep.subr.bf16.mxu0 0
    %7326 = vmatpush1.bf16.msra.mxu0 0
    %7327 = vmatprep.subr.bf16.mxu0 0
    %7328 = vmatpush1.bf16.msra.mxu0 0
    %7329 = vmatprep.subr.bf16.mxu0 0
    %7330 = vmatpush1.bf16.msra.mxu0 0
    %7331 = vmatprep.mubr.bf16.mxu0 0
    %7332 = vmatmul.mubr.bf16.gmra.mrb[0].mxu0 %v6577
    %v7333 = vpop.f32.mrb[0].mxu0
    %v7334 = vadd.f32 %v7293, %v7333
    %v7335 = vpop.f32.mrb[0].mxu0
    %v7336 = vadd.f32 %v7295, %v7335
    %v7337 = vpop.f32.mrb[0].mxu0
    %v7338 = vpop.f32.mrb[0].mxu0
    %7339 = vdwg.mxu0
    %v7340 = vxor.u32 %v7252, 2147483648
    %v7341 = vmul.f32 %v7340, 1.442695
    %v7342 = vpow.pop %v7341
    %v7343 = vadd.f32 %v7342, 1.0
    %v7344 = vrcp.pop %v7343
    %v7345 = vmul.f32 1.0, %v7344
    %v7346 = vxor.u32 %v7254, 2147483648
    %v7347 = vmul.f32 %v7346, 1.442695
    %v7348 = vpow.pop %v7347
    %v7349 = vadd.f32 %v7348, 1.0
    %v7350 = vrcp.pop %v7349
    %v7351 = vmul.f32 1.0, %v7350
    %v7352 = vtanh.pop %v7334
    %v7353 = vxor.u32 %v7336, 2147483648
    %v7354 = vmul.f32 %v7353, 1.442695
    %v7355 = vpow.pop %v7354
    %v7356 = vadd.f32 %v7355, 1.0
    %v7357 = vrcp.pop %v7356
    %v7358 = vmul.f32 1.0, %v7357
    %v7359 = vmul.f32 %v7351, %v6576
    %v7360 = vmul.f32 %v7345, %v7352
    %v7361 = vadd.f32 %v7359, %v7360
    %v7362 = vtanh.pop %v7361
    %v7363 = vmul.f32 %v7358, %v7362
    %7364 = vst [vmem:[#allocation47] sm:$0x3] %v7363
    %7365 = vst [vmem:[#allocation48] sm:$0x3] %v7361
    %v7366 = vld [vmem:[#allocation36] sm:$0xf]
    %v7367 = vld [vmem:[#allocation36 + $0x4] sm:$0xf]
    %v7368 = vld [vmem:[#allocation36 + $0x8] sm:$0xf]
    %v7369 = vld [vmem:[#allocation36 + $0xc] sm:$0xf]
    %v7370 = vld [vmem:[#allocation36 + $0x10] sm:$0xf]
    %v7371 = vld [vmem:[#allocation36 + $0x14] sm:$0xf]
    %v7372 = vld [vmem:[#allocation36 + $0x18] sm:$0xf]
    %v7373 = vld [vmem:[#allocation36 + $0x1c] sm:$0xf]
    %v7374 = vld [vmem:[#allocation36 + $0x20] sm:$0xf]
    %v7375 = vld [vmem:[#allocation36 + $0x24] sm:$0xf]
    %v7376 = vld [vmem:[#allocation36 + $0x28] sm:$0xf]
    %v7377 = vld [vmem:[#allocation36 + $0x2c] sm:$0xf]
    %v7378 = vld [vmem:[#allocation36 + $0x30] sm:$0xf]
    %v7379 = vld [vmem:[#allocation36 + $0x34] sm:$0xf]
    %v7380 = vld [vmem:[#allocation36 + $0x38] sm:$0xf]
    %v7381 = vld [vmem:[#allocation36 + $0x3c] sm:$0xf]
    %v7382 = vld [vmem:[#allocation36 + $0x40] sm:$0xf]
    %v7383 = vld [vmem:[#allocation36 + $0x44] sm:$0xf]
    %v7384 = vld [vmem:[#allocation36 + $0x48] sm:$0xf]
    %v7385 = vld [vmem:[#allocation36 + $0x4c] sm:$0xf]
    %v7386 = vld [vmem:[#allocation36 + $0x50] sm:$0xf]
    %v7387 = vld [vmem:[#allocation36 + $0x54] sm:$0xf]
    %v7388 = vld [vmem:[#allocation36 + $0x58] sm:$0xf]
    %v7389 = vld [vmem:[#allocation36 + $0x5c] sm:$0xf]
    %v7390 = vld [vmem:[#allocation36 + $0x60] sm:$0xf]
    %v7391 = vld [vmem:[#allocation36 + $0x64] sm:$0xf]
    %v7392 = vld [vmem:[#allocation36 + $0x68] sm:$0xf]
    %v7393 = vld [vmem:[#allocation36 + $0x6c] sm:$0xf]
    %v7394 = vld [vmem:[#allocation36 + $0x70] sm:$0xf]
    %v7395 = vld [vmem:[#allocation36 + $0x74] sm:$0xf]
    %v7396 = vld [vmem:[#allocation36 + $0x78] sm:$0xf]
    %v7397 = vld [vmem:[#allocation36 + $0x7c] sm:$0xf]
    %v7398 = vld [vmem:[#allocation38] sm:$0x1]
    %v7400 = vlaneseq
    %v7401 = vshrl.u32 %v7400, 7
    %v7402 = vsub.s32 0, %v7401
    %v7403 = vrot.slane %v7398, %v7402
    %v7437 = vunpack.c.l.b16 %v7366
    %v7438 = vunpack.c.l.b16 %v7367
    %v7439 = vunpack.c.l.b16 %v7368
    %v7440 = vunpack.c.l.b16 %v7369
    %v7441 = vunpack.c.l.b16 %v7370
    %v7442 = vunpack.c.l.b16 %v7371
    %v7443 = vunpack.c.l.b16 %v7372
    %v7444 = vunpack.c.l.b16 %v7373
    %v7445 = vunpack.c.l.b16 %v7374
    %v7446 = vunpack.c.l.b16 %v7375
    %v7447 = vunpack.c.l.b16 %v7376
    %v7448 = vunpack.c.l.b16 %v7377
    %v7449 = vunpack.c.l.b16 %v7378
    %v7450 = vunpack.c.l.b16 %v7379
    %v7451 = vunpack.c.l.b16 %v7380
    %v7452 = vunpack.c.l.b16 %v7381
    %v7453 = vunpack.c.l.b16 %v7382
    %v7454 = vunpack.c.l.b16 %v7383
    %v7455 = vunpack.c.l.b16 %v7384
    %v7456 = vunpack.c.l.b16 %v7385
    %v7457 = vunpack.c.l.b16 %v7386
    %v7458 = vunpack.c.l.b16 %v7387
    %v7459 = vunpack.c.l.b16 %v7388
    %v7460 = vunpack.c.l.b16 %v7389
    %v7461 = vunpack.c.l.b16 %v7390
    %v7462 = vunpack.c.l.b16 %v7391
    %v7463 = vunpack.c.l.b16 %v7392
    %v7464 = vunpack.c.l.b16 %v7393
    %v7465 = vunpack.c.l.b16 %v7394
    %v7466 = vunpack.c.l.b16 %v7395
    %v7467 = vunpack.c.l.b16 %v7396
    %v7468 = vunpack.c.l.b16 %v7397
    %v7469 = vpack.c.b16 %v7438, %v7437
    %v7470 = vpack.c.b16 %v7440, %v7439
    %v7471 = vpack.c.b16 %v7442, %v7441
    %v7472 = vpack.c.b16 %v7444, %v7443
    %v7473 = vpack.c.b16 %v7446, %v7445
    %v7474 = vpack.c.b16 %v7448, %v7447
    %v7475 = vpack.c.b16 %v7450, %v7449
    %v7476 = vpack.c.b16 %v7452, %v7451
    %v7477 = vpack.c.b16 %v7454, %v7453
    %v7478 = vpack.c.b16 %v7456, %v7455
    %v7479 = vpack.c.b16 %v7458, %v7457
    %v7480 = vpack.c.b16 %v7460, %v7459
    %v7481 = vpack.c.b16 %v7462, %v7461
    %v7482 = vpack.c.b16 %v7464, %v7463
    %v7483 = vpack.c.b16 %v7466, %v7465
    %v7484 = vpack.c.b16 %v7468, %v7467
    %7501 = vmatprep.subr.bf16.mxu0 0
    %7502 = vmatpush1.bf16.msra.mxu0 %v7469
    %7503 = vmatprep.subr.bf16.mxu0 0
    %7504 = vmatpush1.bf16.msra.mxu0 %v7470
    %7505 = vmatprep.subr.bf16.mxu0 0
    %7506 = vmatpush1.bf16.msra.mxu0 %v7471
    %7507 = vmatprep.subr.bf16.mxu0 0
    %7508 = vmatpush1.bf16.msra.mxu0 %v7472
    %7509 = vmatprep.subr.bf16.mxu0 0
    %7510 = vmatpush1.bf16.msra.mxu0 %v7473
    %7511 = vmatprep.subr.bf16.mxu0 0
    %7512 = vmatpush1.bf16.msra.mxu0 %v7474
    %7513 = vmatprep.subr.bf16.mxu0 0
    %7514 = vmatpush1.bf16.msra.mxu0 %v7475
    %7515 = vmatprep.subr.bf16.mxu0 0
    %7516 = vmatpush1.bf16.msra.mxu0 %v7476
    %7517 = vmatprep.subr.bf16.mxu0 0
    %7518 = vmatpush1.bf16.msra.mxu0 %v7477
    %7519 = vmatprep.subr.bf16.mxu0 0
    %7520 = vmatpush1.bf16.msra.mxu0 %v7478
    %7521 = vmatprep.subr.bf16.mxu0 0
    %7522 = vmatpush1.bf16.msra.mxu0 %v7479
    %7523 = vmatprep.subr.bf16.mxu0 0
    %7524 = vmatpush1.bf16.msra.mxu0 %v7480
    %7525 = vmatprep.subr.bf16.mxu0 0
    %7526 = vmatpush1.bf16.msra.mxu0 %v7481
    %7527 = vmatprep.subr.bf16.mxu0 0
    %7528 = vmatpush1.bf16.msra.mxu0 %v7482
    %7529 = vmatprep.subr.bf16.mxu0 0
    %7530 = vmatpush1.bf16.msra.mxu0 %v7483
    %7531 = vmatprep.subr.bf16.mxu0 0
    %7532 = vmatpush1.bf16.msra.mxu0 %v7484
    %7533 = vmatprep.mubr.bf16.mxu0 %v4137
    %7534 = vmatmul.mubr.bf16.gmra.mrb[0].mxu0 %v4136
    %v7535 = vpop.f32.mrb[0].mxu0
    %v7536 = vadd.f32 %v7403, %v7535
    %v7537 = vpop.f32.mrb[0].mxu0
    %v7538 = vpop.f32.mrb[0].mxu0
    %v7539 = vpop.f32.mrb[0].mxu0
    %7540 = vdwg.mxu0
    %v7541 = vpack.c.bf16 %v6537, %v6537
    %v7542 = vpack.c.bf16 %v6538, %v6538
    %v7543 = vld [vmem:[#allocation39] sm:$0xf]
    %v7544 = vld [vmem:[#allocation39 + $0x4] sm:$0xf]
    %v7545 = vld [vmem:[#allocation39 + $0x8] sm:$0xf]
    %v7546 = vld [vmem:[#allocation39 + $0xc] sm:$0xf]
    %v7547 = vld [vmem:[#allocation39 + $0x10] sm:$0xf]
    %v7548 = vld [vmem:[#allocation39 + $0x14] sm:$0xf]
    %v7549 = vld [vmem:[#allocation39 + $0x18] sm:$0xf]
    %v7550 = vld [vmem:[#allocation39 + $0x1c] sm:$0xf]
    %v7551 = vld [vmem:[#allocation39 + $0x20] sm:$0xf]
    %v7552 = vld [vmem:[#allocation39 + $0x24] sm:$0xf]
    %v7553 = vld [vmem:[#allocation39 + $0x28] sm:$0xf]
    %v7554 = vld [vmem:[#allocation39 + $0x2c] sm:$0xf]
    %v7555 = vld [vmem:[#allocation39 + $0x30] sm:$0xf]
    %v7556 = vld [vmem:[#allocation39 + $0x34] sm:$0xf]
    %v7557 = vld [vmem:[#allocation39 + $0x38] sm:$0xf]
    %v7558 = vld [vmem:[#allocation39 + $0x3c] sm:$0xf]
    %v7559 = vld [vmem:[#allocation39 + $0x40] sm:$0xf]
    %v7560 = vld [vmem:[#allocation39 + $0x44] sm:$0xf]
    %v7561 = vld [vmem:[#allocation39 + $0x48] sm:$0xf]
    %v7562 = vld [vmem:[#allocation39 + $0x4c] sm:$0xf]
    %v7563 = vld [vmem:[#allocation39 + $0x50] sm:$0xf]
    %v7564 = vld [vmem:[#allocation39 + $0x54] sm:$0xf]
    %v7565 = vld [vmem:[#allocation39 + $0x58] sm:$0xf]
    %v7566 = vld [vmem:[#allocation39 + $0x5c] sm:$0xf]
    %v7567 = vld [vmem:[#allocation39 + $0x60] sm:$0xf]
    %v7568 = vld [vmem:[#allocation39 + $0x64] sm:$0xf]
    %v7569 = vld [vmem:[#allocation39 + $0x68] sm:$0xf]
    %v7570 = vld [vmem:[#allocation39 + $0x6c] sm:$0xf]
    %v7571 = vld [vmem:[#allocation39 + $0x70] sm:$0xf]
    %v7572 = vld [vmem:[#allocation39 + $0x74] sm:$0xf]
    %v7573 = vld [vmem:[#allocation39 + $0x78] sm:$0xf]
    %v7574 = vld [vmem:[#allocation39 + $0x7c] sm:$0xf]
    %v7607 = vunpack.c.l.b16 %v7543
    %v7608 = vunpack.c.l.b16 %v7544
    %v7609 = vunpack.c.l.b16 %v7545
    %v7610 = vunpack.c.l.b16 %v7546
    %v7611 = vunpack.c.l.b16 %v7547
    %v7612 = vunpack.c.l.b16 %v7548
    %v7613 = vunpack.c.l.b16 %v7549
    %v7614 = vunpack.c.l.b16 %v7550
    %v7615 = vunpack.c.l.b16 %v7551
    %v7616 = vunpack.c.l.b16 %v7552
    %v7617 = vunpack.c.l.b16 %v7553
    %v7618 = vunpack.c.l.b16 %v7554
    %v7619 = vunpack.c.l.b16 %v7555
    %v7620 = vunpack.c.l.b16 %v7556
    %v7621 = vunpack.c.l.b16 %v7557
    %v7622 = vunpack.c.l.b16 %v7558
    %v7623 = vunpack.c.l.b16 %v7559
    %v7624 = vunpack.c.l.b16 %v7560
    %v7625 = vunpack.c.l.b16 %v7561
    %v7626 = vunpack.c.l.b16 %v7562
    %v7627 = vunpack.c.l.b16 %v7563
    %v7628 = vunpack.c.l.b16 %v7564
    %v7629 = vunpack.c.l.b16 %v7565
    %v7630 = vunpack.c.l.b16 %v7566
    %v7631 = vunpack.c.l.b16 %v7567
    %v7632 = vunpack.c.l.b16 %v7568
    %v7633 = vunpack.c.l.b16 %v7569
    %v7634 = vunpack.c.l.b16 %v7570
    %v7635 = vunpack.c.l.b16 %v7571
    %v7636 = vunpack.c.l.b16 %v7572
    %v7637 = vunpack.c.l.b16 %v7573
    %v7638 = vunpack.c.l.b16 %v7574
    %v7639 = vpack.c.b16 %v7608, %v7607
    %v7640 = vpack.c.b16 %v7610, %v7609
    %v7641 = vpack.c.b16 %v7612, %v7611
    %v7642 = vpack.c.b16 %v7614, %v7613
    %v7643 = vpack.c.b16 %v7616, %v7615
    %v7644 = vpack.c.b16 %v7618, %v7617
    %v7645 = vpack.c.b16 %v7620, %v7619
    %v7646 = vpack.c.b16 %v7622, %v7621
    %v7647 = vpack.c.b16 %v7624, %v7623
    %v7648 = vpack.c.b16 %v7626, %v7625
    %v7649 = vpack.c.b16 %v7628, %v7627
    %v7650 = vpack.c.b16 %v7630, %v7629
    %v7651 = vpack.c.b16 %v7632, %v7631
    %v7652 = vpack.c.b16 %v7634, %v7633
    %v7653 = vpack.c.b16 %v7636, %v7635
    %v7654 = vpack.c.b16 %v7638, %v7637
    %7671 = vmatprep.subr.bf16.mxu0 0
    %7672 = vmatpush1.bf16.msra.mxu0 %v7639
    %7673 = vmatprep.subr.bf16.mxu0 0
    %7674 = vmatpush1.bf16.msra.mxu0 %v7640
    %7675 = vmatprep.subr.bf16.mxu0 0
    %7676 = vmatpush1.bf16.msra.mxu0 %v7641
    %7677 = vmatprep.subr.bf16.mxu0 0
    %7678 = vmatpush1.bf16.msra.mxu0 %v7642
    %7679 = vmatprep.subr.bf16.mxu0 0
    %7680 = vmatpush1.bf16.msra.mxu0 %v7643
    %7681 = vmatprep.subr.bf16.mxu0 0
    %7682 = vmatpush1.bf16.msra.mxu0 %v7644
    %7683 = vmatprep.subr.bf16.mxu0 0
    %7684 = vmatpush1.bf16.msra.mxu0 %v7645
    %7685 = vmatprep.subr.bf16.mxu0 0
    %7686 = vmatpush1.bf16.msra.mxu0 %v7646
    %7687 = vmatprep.subr.bf16.mxu0 0
    %7688 = vmatpush1.bf16.msra.mxu0 %v7647
    %7689 = vmatprep.subr.bf16.mxu0 0
    %7690 = vmatpush1.bf16.msra.mxu0 %v7648
    %7691 = vmatprep.subr.bf16.mxu0 0
    %7692 = vmatpush1.bf16.msra.mxu0 %v7649
    %7693 = vmatprep.subr.bf16.mxu0 0
    %7694 = vmatpush1.bf16.msra.mxu0 %v7650
    %7695 = vmatprep.subr.bf16.mxu0 0
    %7696 = vmatpush1.bf16.msra.mxu0 %v7651
    %7697 = vmatprep.subr.bf16.mxu0 0
    %7698 = vmatpush1.bf16.msra.mxu0 %v7652
    %7699 = vmatprep.subr.bf16.mxu0 0
    %7700 = vmatpush1.bf16.msra.mxu0 %v7653
    %7701 = vmatprep.subr.bf16.mxu0 0
    %7702 = vmatpush1.bf16.msra.mxu0 %v7654
    %7703 = vmatprep.mubr.bf16.mxu0 %v7542
    %7704 = vmatmul.mubr.bf16.gmra.mrb[0].mxu0 %v7541
    %v7705 = vpop.f32.mrb[0].mxu0
    %v7706 = vadd.f32 0.0, %v7705
    %v7707 = vpop.f32.mrb[0].mxu0
    %v7708 = vpop.f32.mrb[0].mxu0
    %v7709 = vpop.f32.mrb[0].mxu0
    %7710 = vdwg.mxu0
    %v7711 = vmul.f32 %v7363, %v7706
    %v7712 = vld [vmem:[#allocation41] sm:$0xff]
    %v7713 = vld [vmem:[#allocation41 + $0x8] sm:$0xff]
    %v7714 = vld [vmem:[#allocation41 + $0x10] sm:$0xff]
    %v7715 = vld [vmem:[#allocation41 + $0x18] sm:$0xff]
    %v7716 = vld [vmem:[#allocation41 + $0x20] sm:$0xff]
    %v7717 = vld [vmem:[#allocation41 + $0x28] sm:$0xff]
    %v7718 = vld [vmem:[#allocation41 + $0x30] sm:$0xff]
    %v7719 = vld [vmem:[#allocation41 + $0x38] sm:$0xff]
    %v7720 = vld [vmem:[#allocation41 + $0x40] sm:$0xff]
    %v7721 = vld [vmem:[#allocation41 + $0x48] sm:$0xff]
    %v7722 = vld [vmem:[#allocation41 + $0x50] sm:$0xff]
    %v7723 = vld [vmem:[#allocation41 + $0x58] sm:$0xff]
    %v7724 = vld [vmem:[#allocation41 + $0x60] sm:$0xff]
    %v7725 = vld [vmem:[#allocation41 + $0x68] sm:$0xff]
    %v7726 = vld [vmem:[#allocation41 + $0x70] sm:$0xff]
    %v7727 = vld [vmem:[#allocation41 + $0x78] sm:$0xff]
    %v7728 = vld [vmem:[#allocation42] sm:$0x1]
    %v7730 = vlaneseq
    %v7731 = vshrl.u32 %v7730, 7
    %v7732 = vsub.s32 0, %v7731
    %v7733 = vrot.slane %v7728, %v7732
    %7735 = vmatprep.subr.mxu0 0.0
    %7736 = vmatpush1.msra.mxu0 %v7712
    %7737 = vmatprep.subr.mxu0 0.0
    %7738 = vmatpush1.msra.mxu0 %v7713
    %7739 = vmatprep.subr.mxu0 0.0
    %7740 = vmatpush1.msra.mxu0 %v7714
    %7741 = vmatprep.subr.mxu0 0.0
    %7742 = vmatpush1.msra.mxu0 %v7715
    %7743 = vmatprep.subr.mxu0 0.0
    %7744 = vmatpush1.msra.mxu0 %v7716
    %7745 = vmatprep.subr.mxu0 0.0
    %7746 = vmatpush1.msra.mxu0 %v7717
    %7747 = vmatprep.subr.mxu0 0.0
    %7748 = vmatpush1.msra.mxu0 %v7718
    %7749 = vmatprep.subr.mxu0 0.0
    %7750 = vmatpush1.msra.mxu0 %v7719
    %7751 = vmatprep.subr.mxu0 0.0
    %7752 = vmatpush1.msra.mxu0 %v7720
    %7753 = vmatprep.subr.mxu0 0.0
    %7754 = vmatpush1.msra.mxu0 %v7721
    %7755 = vmatprep.subr.mxu0 0.0
    %7756 = vmatpush1.msra.mxu0 %v7722
    %7757 = vmatprep.subr.mxu0 0.0
    %7758 = vmatpush1.msra.mxu0 %v7723
    %7759 = vmatprep.subr.mxu0 0.0
    %7760 = vmatpush1.msra.mxu0 %v7724
    %7761 = vmatprep.subr.mxu0 0.0
    %7762 = vmatpush1.msra.mxu0 %v7725
    %7763 = vmatprep.subr.mxu0 0.0
    %7764 = vmatpush1.msra.mxu0 %v7726
    %7765 = vmatprep.subr.mxu0 0.0
    %7766 = vmatpush1.msra.mxu0 %v7727
    %7767 = vmatprep.subr.mxu0 0.0
    %7768 = vmatpush1.msra.mxu0 0.0
    %7769 = vmatprep.subr.mxu0 0.0
    %7770 = vmatpush1.msra.mxu0 0.0
    %7771 = vmatprep.subr.mxu0 0.0
    %7772 = vmatpush1.msra.mxu0 0.0
    %7773 = vmatprep.subr.mxu0 0.0
    %7774 = vmatpush1.msra.mxu0 0.0
    %7775 = vmatprep.subr.mxu0 0.0
    %7776 = vmatpush1.msra.mxu0 0.0
    %7777 = vmatprep.subr.mxu0 0.0
    %7778 = vmatpush1.msra.mxu0 0.0
    %7779 = vmatprep.subr.mxu0 0.0
    %7780 = vmatpush1.msra.mxu0 0.0
    %7781 = vmatprep.subr.mxu0 0.0
    %7782 = vmatpush1.msra.mxu0 0.0
    %7783 = vmatprep.subr.mxu0 0.0
    %7784 = vmatpush1.msra.mxu0 0.0
    %7785 = vmatprep.subr.mxu0 0.0
    %7786 = vmatpush1.msra.mxu0 0.0
    %7787 = vmatprep.subr.mxu0 0.0
    %7788 = vmatpush1.msra.mxu0 0.0
    %7789 = vmatprep.subr.mxu0 0.0
    %7790 = vmatpush1.msra.mxu0 0.0
    %7791 = vmatprep.subr.mxu0 0.0
    %7792 = vmatpush1.msra.mxu0 0.0
    %7793 = vmatprep.subr.mxu0 0.0
    %7794 = vmatpush1.msra.mxu0 0.0
    %7795 = vmatprep.subr.mxu0 0.0
    %7796 = vmatpush1.msra.mxu0 0.0
    %7797 = vmatprep.subr.mxu0 0.0
    %7798 = vmatpush1.msra.mxu0 0.0
    %7799 = vmatprep.mubr.f32.mxu0 0.0
    %7800 = vmatmul.mubr.f32.gmra.mrb[0].mxu0 %v7711
    %v7801 = vpop.f32.mrb[0].mxu0
    %v7802 = vadd.f32 %v7733, %v7801
    %v7803 = vpop.f32.mrb[0].mxu0
    %7804 = vdwg.mxu0
    %v7805 = vsel %vm4429, %v7802, -inf
    %7806 = vmax.xlane.f32.xlu0 %v7805
    %v7807 = vpop.xlane.xlu0 %7806
    %v7808 = vsub.f32 %v7802, %v7807
    %v7809 = vmul.f32 %v7808, 1.442695
    %v7810 = vpow.pop %v7809
    %v7811 = vsel %vm4429, %v7810, 0.0
    %7812 = vadd.xlane.f32.xlu0 %v7811
    %v7813 = vpop.xlane.xlu0 %7812
    %v7814 = vrcp.pop %v7813
    %v7815 = vmul.f32 %v7810, %v7814
    %v7816 = vadd.f32 %v7536, %v7815
    %7817 = vst [vmem:[%s57] sm:$0x3] %v7816
    // Predicated region
    $region210: #{feudal_forward.1} parent=1 // pred_check
      _
    $region211: #{feudal_forward.1} parent=1 // pred_check_branch
      %7819 = sbr.rel (0) target = $region213
    $region212: #{feudal_forward.1} parent=1 // pred_region
      _
    $region213: #{feudal_forward.1} parent=1 // pred_fallthru
      _
    // Predicated region
    $region214: #{feudal_forward.1} parent=1 // pred_check
      _
    $region215: #{feudal_forward.1} parent=1 // pred_check_branch
      %7821 = sbr.rel (0) target = $region217
    $region216: #{feudal_forward.1} parent=1 // pred_region
      %s7823 = ssub.s32 192, 192
      %7824 = vsyncadd [#allocation8], %s7823
      %s7825 = sshll.u32 [#allocation44], 4
      %s7826 = int_to_ptr.vmem [resolvable:$true] %s7825
      %7831 = dma.vmem_to_hbm [thread:$0]  %s7826, 192, %s59, [#allocation8], 64, 64, 4
    $region217: #{feudal_forward.1} parent=1 // pred_fallthru
      _
    // Predicated region
    $region218: #{feudal_forward.1} parent=1 // pred_check
      _
    $region219: #{feudal_forward.1} parent=1 // pred_check_branch
      %7833 = sbr.rel (0) target = $region221
    $region220: #{feudal_forward.1} parent=1 // pred_region
      %s7835 = ssub.s32 192, 192
      %7836 = vsyncadd [#allocation46], %s7835
      %s7837 = sshll.u32 [#allocation45], 4
      %s7838 = int_to_ptr.vmem [resolvable:$true] %s7837
      %7843 = dma.vmem_to_hbm [thread:$0]  %s7838, 192, %s61, [#allocation46], 64, 64, 4
    $region221: #{feudal_forward.1} parent=1 // pred_fallthru
      _
    // Predicated region
    $region222: #{feudal_forward.1} parent=1 // pred_check
      _
    $region223: #{feudal_forward.1} parent=1 // pred_check_branch
      %7845 = sbr.rel (0) target = $region225
    $region224: #{feudal_forward.1} parent=1 // pred_region
      %s7847 = ssub.s32 32, 32
      %7848 = vsyncadd [#allocation46], %s7847
      %s7850 = sshll.u32 [#allocation47], 4
      %s7851 = int_to_ptr.vmem [resolvable:$true] %s7850
      %7853 = dma.vmem_to_hbm [thread:$0]  %s7851, 32, %s63, [#allocation46]
    $region225: #{feudal_forward.1} parent=1 // pred_fallthru
      _
    // Predicated region
    $region226: #{feudal_forward.1} parent=1 // pred_check
      _
    $region227: #{feudal_forward.1} parent=1 // pred_check_branch
      %7855 = sbr.rel (0) target = $region229
    $region228: #{feudal_forward.1} parent=1 // pred_region
      %s7857 = ssub.s32 32, 32
      %7858 = vsyncadd [#allocation49], %s7857
      %s7860 = sshll.u32 [#allocation48], 4
      %s7861 = int_to_ptr.vmem [resolvable:$true] %s7860
      %7863 = dma.vmem_to_hbm [thread:$0]  %s7861, 32, %s65, [#allocation49]
    $region229: #{feudal_forward.1} parent=1 // pred_fallthru
      _
    // Predicated region
    $region230: #{feudal_forward.1} parent=1 // pred_check
      _
    $region231: #{feudal_forward.1} parent=1 // pred_check_branch
      %7865 = sbr.rel (0) target = $region233
    $region232: #{feudal_forward.1} parent=1 // pred_region
      %s7867 = ssub.s32 256, 256
      %7868 = vsyncadd [#allocation49], %s7867
      %s7869 = sshll.u32 [#allocation50], 4
      %s7870 = int_to_ptr.vmem [resolvable:$true] %s7869
      %7875 = dma.vmem_to_hbm [thread:$0]  %s7870, 256, %s67, [#allocation49], 64, 64, 4
    $region233: #{feudal_forward.1} parent=1 // pred_fallthru
      _
    // Predicated region
    $region234: #{feudal_forward.1} parent=1 // pred_check
      _
    $region235: #{feudal_forward.1} parent=1 // pred_check_branch
      %7877 = sbr.rel (0) target = $region237
    $region236: #{feudal_forward.1} parent=1 // pred_region
      %s7879 = ssub.s32 256, 256
      %7880 = vsyncadd [#allocation52], %s7879
      %s7881 = sshll.u32 [#allocation51], 4
      %s7882 = int_to_ptr.vmem [resolvable:$true] %s7881
      %7887 = dma.vmem_to_hbm [thread:$0]  %s7882, 256, %s69, [#allocation52], 64, 64, 4
    $region237: #{feudal_forward.1} parent=1 // pred_fallthru
      _
    // Predicated region
    $region238: #{feudal_forward.1} parent=1 // pred_check
      _
    $region239: #{feudal_forward.1} parent=1 // pred_check_branch
      %7889 = sbr.rel (0) target = $region241
    $region240: #{feudal_forward.1} parent=1 // pred_region
      _
    $region241: #{feudal_forward.1} parent=1 // pred_fallthru
      _
    // Predicated region
    $region242: #{feudal_forward.1} parent=1 // pred_check
      _
    $region243: #{feudal_forward.1} parent=1 // pred_check_branch
      %7891 = sbr.rel (0) target = $region245
    $region244: #{feudal_forward.1} parent=1 // pred_region
      %7892 = dma.done [#allocation8], 192
    $region245: #{feudal_forward.1} parent=1 // pred_fallthru
      _
    // Predicated region
    $region246: #{feudal_forward.1} parent=1 // pred_check
      _
    $region247: #{feudal_forward.1} parent=1 // pred_check_branch
      %7894 = sbr.rel (0) target = $region249
    $region248: #{feudal_forward.1} parent=1 // pred_region
      %7895 = dma.done [#allocation46], 192
    $region249: #{feudal_forward.1} parent=1 // pred_fallthru
      _
    // Predicated region
    $region250: #{feudal_forward.1} parent=1 // pred_check
      _
    $region251: #{feudal_forward.1} parent=1 // pred_check_branch
      %7897 = sbr.rel (0) target = $region253
    $region252: #{feudal_forward.1} parent=1 // pred_region
      %7898 = dma.done [#allocation46], 32
    $region253: #{feudal_forward.1} parent=1 // pred_fallthru
      _
    // Predicated region
    $region254: #{feudal_forward.1} parent=1 // pred_check
      _
    $region255: #{feudal_forward.1} parent=1 // pred_check_branch
      %7900 = sbr.rel (0) target = $region257
    $region256: #{feudal_forward.1} parent=1 // pred_region
      %7901 = dma.done [#allocation49], 32
    $region257: #{feudal_forward.1} parent=1 // pred_fallthru
      _
    // Predicated region
    $region258: #{feudal_forward.1} parent=1 // pred_check
      _
    $region259: #{feudal_forward.1} parent=1 // pred_check_branch
      %7903 = sbr.rel (0) target = $region261
    $region260: #{feudal_forward.1} parent=1 // pred_region
      %7904 = dma.done [#allocation49], 256
    $region261: #{feudal_forward.1} parent=1 // pred_fallthru
      _
    // Predicated region
    $region262: #{feudal_forward.1} parent=1 // pred_check
      _
    $region263: #{feudal_forward.1} parent=1 // pred_check_branch
      %7906 = sbr.rel (0) target = $region265
    $region264: #{feudal_forward.1} parent=1 // pred_region
      %7907 = dma.done [#allocation52], 256
    $region265: #{feudal_forward.1} parent=1 // pred_fallthru
      _
    %7908 = vsyncpa [#allocation7], 1
    %7909 = vsyncpa [#allocation10], 1
    %7910 = vsyncpa [#allocation13], 1
    %7911 = vsyncpa [#allocation16], 1
    %7912 = vsyncpa [#allocation19], 1
    %7913 = vsyncpa [#allocation22], 1
    %7914 = vsyncpa [#allocation25], 1
    %7915 = vsyncpa [#allocation28], 1
    %7916 = vsyncpa [#allocation31], 1
    %7917 = vsyncpa [#allocation34], 1
    %7918 = vsyncpa [#allocation37], 1
    %7919 = vsyncpa [#allocation40], 1
    %7920 = vsyncpa [#allocation43], 1
    %7921 = vsyncpa [#allocation8], 1
    %7922 = vsyncpa [#allocation46], 1
    %7923 = vsyncpa [#allocation49], 1
    %7924 = vsyncpa [#allocation52], 1

</llo_original>
